<compile_context>
chip_gen: v5e
topology: v5e:2x2
jax: 0.10.0
libtpu: 0.0.40
codegen_flags: <defaults>
</compile_context>

<pallas_src>
import functools

import jax
import jax.numpy as jnp
from jax.experimental import pallas as pl
from jax.experimental.pallas import tpu as pltpu


# ----------------------------------------------------------------------------
# Kernels
# ----------------------------------------------------------------------------
def _reduce_kernel(x_ref, w_ref, s_ref, b_ref, o_ref):
    # dense 1x1 conv (bf16 matmul, f32 accumulate) + folded BN + ReLU6
    y = jnp.dot(x_ref[...], w_ref[...], preferred_element_type=jnp.float32)
    y = y * s_ref[...] + b_ref[...]
    o_ref[...] = jnp.clip(y, 0.0, 6.0).astype(o_ref.dtype)


def _fused_branch_kernel(rp_ref, w0_ref, b0_ref, wdw_ref, bdw_ref, wexp_ref,
                         c4_ref, sf_ref, bf_ref, o_ref, *, dilations, dm, H, W):
    """All post-reduce branches + grouped final conv for one image.

    rp_ref : (1, H+2dm, W+2dm, C) bf16   r padded once with dm = max(dilations)
    w0_ref : (1, C)  depthwise-1x1 weight with BN scale folded in
    b0_ref : (1, C)  branch-0 BN bias
    wdw_ref: (nd, 9, C) dilated 3x3 taps with BN scale folded in
    bdw_ref: (nd, C) dilated-branch BN biases
    wexp_ref: ((nd+1)*C, C) expanded grouped final-conv weight (branches 0..nd)
    c4_ref : (1, 1, C) precomputed global-pool branch contribution to the mix
    sf_ref, bf_ref : (1, C) final BN scale / bias
    o_ref  : (1, H, W, C) f32
    """
    C = o_ref.shape[-1]

    def window(dy, dx):
        return rp_ref[:, dm + dy: dm + dy + H,
                      dm + dx: dm + dx + W, :].astype(jnp.float32)

    # ---- branch 0: depthwise 1x1 (+ folded BN) + ReLU6 ----------------------
    br = jnp.clip(window(0, 0) * w0_ref[...] + b0_ref[...], 0.0, 6.0)
    acc = jnp.dot(br.reshape(H * W, C), wexp_ref[0:C, :],
                  preferred_element_type=jnp.float32)

    # ---- branches 1..nd: depthwise dilated 3x3 (+ folded BN) + ReLU6 --------
    for k, d in enumerate(dilations):
        conv = jnp.zeros((1, H, W, C), jnp.float32)
        for i in range(3):
            for j in range(3):
                conv = conv + window((i - 1) * d, (j - 1) * d) * wdw_ref[k, 3 * i + j, :]
        br = jnp.clip(conv + bdw_ref[k, :], 0.0, 6.0)
        acc = acc + jnp.dot(br.reshape(H * W, C),
                            wexp_ref[(k + 1) * C:(k + 2) * C, :],
                            preferred_element_type=jnp.float32)

    # ---- branch nd+1 (global pool): spatially constant, precomputed --------
    acc = acc + c4_ref[0]

    # ---- grouped final conv already applied by the matmuls; final BN + ReLU6
    y = jnp.clip(acc * sf_ref[...] + bf_ref[...], 0.0, 6.0)
    o_ref[...] = y.reshape(1, H, W, C).astype(o_ref.dtype)


# ----------------------------------------------------------------------------
# pallas_call wrappers
# ----------------------------------------------------------------------------
_VMEM_LIMIT = 48 * 1024 * 1024


def conv_reduce(x2d, w, scale, bias, *, tm=512):
    """(M, Cin) bf16 @ (Cin, Cout) bf16 + folded BN + ReLU6 -> (M, Cout) bf16."""
    M, Cin = x2d.shape
    Cout = w.shape[1]
    Mp = ((M + tm - 1) // tm) * tm
    if Mp != M:                      # pad rows so every grid step is a full tile
        x2d = jnp.pad(x2d, ((0, Mp - M), (0, 0)))
    out = pl.pallas_call(
        _reduce_kernel,
        out_shape=jax.ShapeDtypeStruct((Mp, Cout), jnp.bfloat16),
        grid=(Mp // tm,),
        in_specs=[
            pl.BlockSpec((tm, Cin), lambda i: (i, 0)),
            pl.BlockSpec((Cin, Cout), lambda i: (0, 0)),   # weight resident
            pl.BlockSpec((1, Cout), lambda i: (0, 0)),
            pl.BlockSpec((1, Cout), lambda i: (0, 0)),
        ],
        out_specs=pl.BlockSpec((tm, Cout), lambda i: (i, 0)),
        compiler_params=pltpu.CompilerParams(
            dimension_semantics=("parallel",),
            vmem_limit_bytes=_VMEM_LIMIT),
        cost_estimate=pl.CostEstimate(
            flops=2 * Mp * Cin * Cout,
            transcendentals=0,
            bytes_accessed=Mp * Cin * 2 + Cin * Cout * 2 + Mp * Cout * 2),
    )(x2d, w, scale, bias)
    return out[:M] if Mp != M else out


def fused_branches(rp, w0, b0, wdw, bdw, wexp_main, contrib4, sf, bf,
                   *, dilations, H, W):
    N, Hp, Wp, C = rp.shape
    nd = len(dilations)
    dm = (Hp - H) // 2
    kern = functools.partial(_fused_branch_kernel, dilations=tuple(dilations),
                             dm=dm, H=H, W=W)
    flops_per_img = H * W * C * (2 * 9 * nd + 4) + 2 * H * W * C * C * (nd + 1)
    return pl.pallas_call(
        kern,
        out_shape=jax.ShapeDtypeStruct((N, H, W, C), jnp.float32),
        grid=(N,),
        in_specs=[
            pl.BlockSpec((1, Hp, Wp, C), lambda n: (n, 0, 0, 0)),
            pl.BlockSpec((1, C), lambda n: (0, 0)),
            pl.BlockSpec((1, C), lambda n: (0, 0)),
            pl.BlockSpec((nd, 9, C), lambda n: (0, 0, 0)),
            pl.BlockSpec((nd, C), lambda n: (0, 0)),
            pl.BlockSpec(((nd + 1) * C, C), lambda n: (0, 0)),
            pl.BlockSpec((1, 1, C), lambda n: (n, 0, 0)),
            pl.BlockSpec((1, C), lambda n: (0, 0)),
            pl.BlockSpec((1, C), lambda n: (0, 0)),
        ],
        out_specs=pl.BlockSpec((1, H, W, C), lambda n: (n, 0, 0, 0)),
        compiler_params=pltpu.CompilerParams(
            dimension_semantics=("parallel",),
            vmem_limit_bytes=_VMEM_LIMIT),
        cost_estimate=pl.CostEstimate(
            flops=N * flops_per_img,
            transcendentals=0,
            bytes_accessed=N * (Hp * Wp * C * 2 + H * W * C * 4)
                           + (nd + 1) * C * C * 4),
    )(rp, w0, b0, wdw, bdw, wexp_main, contrib4, sf, bf)


# ----------------------------------------------------------------------------
# Glue helpers
# ----------------------------------------------------------------------------
def _expand_grouped_weight(w_final):
    """(nb, C) grouped-conv taps -> dense (nb*C, C): row nb*o+k holds w[k, o]."""
    nb, C = w_final.shape
    onehot = jax.nn.one_hot(jnp.arange(nb * C) // nb, C, dtype=jnp.float32)
    vals = jnp.transpose(w_final).reshape(nb * C)
    return onehot * vals[:, None]


# ----------------------------------------------------------------------------
# Full ASPPMnet forward
# ----------------------------------------------------------------------------
def aspp_mnet_forward(x_nchw, p, dilation_series=(6, 12, 18)):
    N, Cin, H, W = x_nchw.shape
    C = p["w_reduce"].shape[1]
    nd = len(dilation_series)
    dm = max(dilation_series)

    # NCHW -> NHWC, bf16 activations (network is HBM-bound -> halve the bytes).
    x = jnp.transpose(x_nchw, (0, 2, 3, 1)).astype(jnp.bfloat16)
    M = N * H * W

    # 1) dense 1x1 reduce + BN + ReLU6 on the MXU.
    r2d = conv_reduce(x.reshape(M, Cin), p["w_reduce"].astype(jnp.bfloat16),
                      p["bn_reduce_scale"], p["bn_reduce_bias"])
    r = r2d.reshape(N, H, W, C)                                   # bf16

    # 2) global-pool branch is O(N*C): do it in glue, fold its contribution to
    #    the grouped final conv into a per-image (1, C) constant.
    pooled = jnp.mean(r, axis=(1, 2), dtype=jnp.float32)          # (N, C)
    b4 = jnp.clip(pooled * p["w_b4"][0] * p["bn_b4_scale"][0]
                  + p["bn_b4_bias"][0], 0.0, 6.0)                 # (N, C)

    # 3) expand grouped (groups=C) final conv -> dense (nb*C, C) matrix once;
    #    the cross-branch channel mix becomes an MXU matmul inside the fused
    #    kernel (no stride-5 gathers, no (N,H,W,5C) concat in HBM).
    wexp = _expand_grouped_weight(p["w_final"])                   # (nb*C, C)
    contrib4 = (b4 @ wexp[(nd + 1) * C:]).reshape(N, 1, C)        # (N, 1, C)

    # per-branch weights with BN scale folded in.
    w0 = (p["w_b0"] * p["bn_b0_scale"]).astype(jnp.float32)       # (1, C)
    b0 = p["bn_b0_bias"]
    wdw = jnp.stack([p[f"w_b{i+1}"] * p[f"bn_b{i+1}_scale"] for i in range(nd)],
                    axis=0)                                       # (nd, 9, C)
    bdw = jnp.concatenate([p[f"bn_b{i+1}_bias"] for i in range(nd)], axis=0)

    # 4) pad ONCE with the max dilation; all dilated branches share the halo.
    rp = jnp.pad(r, ((0, 0), (dm, dm), (dm, dm), (0, 0)))

    out = fused_branches(rp, w0, b0, wdw, bdw, wexp[:(nd + 1) * C], contrib4,
                         p["bn_final_scale"], p["bn_final_bias"],
                         dilations=dilation_series, H=H, W=W)
    return jnp.transpose(out, (0, 3, 1, 2))                       # back to NCHW


# ----------------------------------------------------------------------------
# Deterministic parameter initialization (synthetic; no checkpoint load)
# ----------------------------------------------------------------------------
def init_params(key, in_f, out_f, dilation_series=(6, 12, 18)):
    nd = len(dilation_series)
    nb = nd + 2
    keys = iter(jax.random.split(key, 16 + 2 * nd))

    def bn_fold(k):
        k1, k2, k3, k4 = jax.random.split(k, 4)
        gamma = 1.0 + 0.1 * jax.random.normal(k1, (out_f,))
        beta = 0.1 * jax.random.normal(k2, (out_f,))
        mean = 0.1 * jax.random.normal(k3, (out_f,))
        var = jnp.abs(jax.random.normal(k4, (out_f,))) + 0.5
        scale = gamma / jnp.sqrt(var + 1e-5)
        bias = beta - mean * scale
        return (scale.reshape(1, out_f).astype(jnp.float32),
                bias.reshape(1, out_f).astype(jnp.float32))

    p = {}
    p["w_reduce"] = (jax.random.normal(next(keys), (in_f, out_f))
                     / jnp.sqrt(float(in_f))).astype(jnp.float32)
    p["bn_reduce_scale"], p["bn_reduce_bias"] = bn_fold(next(keys))

    p["w_b0"] = jax.random.normal(next(keys), (1, out_f)).astype(jnp.float32)
    p["bn_b0_scale"], p["bn_b0_bias"] = bn_fold(next(keys))

    for bi in range(nd):
        p[f"w_b{bi+1}"] = (jax.random.normal(next(keys), (9, out_f)) / 3.0
                           ).astype(jnp.float32)
        p[f"bn_b{bi+1}_scale"], p[f"bn_b{bi+1}_bias"] = bn_fold(next(keys))

    p["w_b4"] = jax.random.normal(next(keys), (1, out_f)).astype(jnp.float32)
    p["bn_b4_scale"], p["bn_b4_bias"] = bn_fold(next(keys))

    p["w_final"] = (jax.random.normal(next(keys), (nb, out_f))
                    / jnp.sqrt(float(nb))).astype(jnp.float32)
    p["bn_final_scale"], p["bn_final_bias"] = bn_fold(next(keys))
    return p


# ----------------------------------------------------------------------------
# Pure-JAX reference (mirrors the bf16 storage choices of the Pallas path)
# ----------------------------------------------------------------------------
def reference_forward(x_nchw, p, dilation_series=(6, 12, 18)):
    relu6 = lambda v: jnp.clip(v, 0.0, 6.0)
    hi = jax.lax.Precision.HIGHEST
    x = jnp.transpose(x_nchw, (0, 2, 3, 1)).astype(jnp.bfloat16).astype(jnp.float32)
    wr = p["w_reduce"].astype(jnp.bfloat16).astype(jnp.float32)
    N, H, W, _ = x.shape
    C = p["w_reduce"].shape[1]

    r = relu6(jnp.einsum("nhwc,cd->nhwd", x, wr, precision=hi)
              * p["bn_reduce_scale"][0] + p["bn_reduce_bias"][0])
    r = r.astype(jnp.bfloat16).astype(jnp.float32)   # mirror bf16 activation storage

    interm = [relu6(r * p["w_b0"][0] * p["bn_b0_scale"][0] + p["bn_b0_bias"][0])]
    for bi, d in enumerate(dilation_series):
        w = p[f"w_b{bi+1}"].reshape(3, 3, C)[:, :, None, :]   # HWIO, I=1 depthwise
        y = jax.lax.conv_general_dilated(
            r, w, window_strides=(1, 1), padding=((d, d), (d, d)),
            rhs_dilation=(d, d), dimension_numbers=("NHWC", "HWIO", "NHWC"),
            feature_group_count=C, precision=hi)
        interm.append(relu6(y * p[f"bn_b{bi+1}_scale"][0] + p[f"bn_b{bi+1}_bias"][0]))

    pooled = jnp.mean(r, axis=(1, 2))
    y = relu6(pooled * p["w_b4"][0] * p["bn_b4_scale"][0] + p["bn_b4_bias"][0])
    interm.append(jnp.broadcast_to(y[:, None, None, :], (N, H, W, C)))

    nb = len(interm)
    cat = jnp.concatenate(interm, axis=-1).reshape(N, H, W, C, nb)
    y = jnp.einsum("nhwok,ko->nhwo", cat, p["w_final"], precision=hi)
    y = relu6(y * p["bn_final_scale"][0] + p["bn_final_bias"][0])
    return jnp.transpose(y, (0, 3, 1, 2))


# ----------------------------------------------------------------------------
# Main
# ----------------------------------------------------------------------------
if __name__ == "__main__":
    # Small shapes consistent with the module (in_f=320, out_f=256 scaled down).
    N, IN_F, OUT_F, H, W = 2, 16, 32, 16, 16
    DILATIONS = (6, 12, 18)

    key = jax.random.PRNGKey(0)
    kx, kp = jax.random.split(key)
    x = jax.random.normal(kx, (N, IN_F, H, W), dtype=jnp.float32)  # NCHW like PyTorch
    params = init_params(kp, IN_F, OUT_F, DILATIONS)

    fwd = jax.jit(functools.partial(aspp_mnet_forward, dilation_series=DILATIONS))
    out = jax.block_until_ready(fwd(x, params))
    assert out.shape == (N, OUT_F, H, W), out.shape

    ref = jax.block_until_ready(reference_forward(x, params, DILATIONS))
    err = jnp.abs(out.astype(jnp.float32) - ref)
    tol = 1e-1 + 5e-2 * jnp.abs(ref)   # absolute + relative (bf16 activations)
    if not bool(jnp.all(err <= tol)):
        raise AssertionError(
            f"Pallas output mismatch: max abs err = {float(jnp.max(err))}")

    print("KERNEL_OK")
</pallas_src>

<mosaic_0001>
module attributes {stable_mosaic.version = 11 : i64} {
  func.func @_reduce_kernel(%arg0: i32, %arg1: memref<512x16xbf16, #tpu.memory_space<vmem>>, %arg2: memref<16x32xbf16, #tpu.memory_space<vmem>>, %arg3: memref<1x32xf32, #tpu.memory_space<vmem>>, %arg4: memref<1x32xf32, #tpu.memory_space<vmem>>, %arg5: memref<512x32xbf16, #tpu.memory_space<vmem>>) attributes {dimension_semantics = [#tpu.dimension_semantics<parallel>], iteration_bounds = array<i64: 1>, scalar_prefetch = 0 : i64, scratch_operands = 0 : i64, tpu.core_type = #tpu.core_type<tc>, window_params = [{transform_indices = @transform_0, window_bounds = array<i64: 512, 16>}, {pipeline_mode = #tpu.pipeline_mode<synchronous>, transform_indices = @transform_1, window_bounds = array<i64: 16, 32>}, {pipeline_mode = #tpu.pipeline_mode<synchronous>, transform_indices = @transform_2, window_bounds = array<i64: 1, 32>}, {pipeline_mode = #tpu.pipeline_mode<synchronous>, transform_indices = @transform_3, window_bounds = array<i64: 1, 32>}, {transform_indices = @transform_4, window_bounds = array<i64: 512, 32>}]} {
    %c0 = arith.constant 0 : index
    %c0_0 = arith.constant 0 : index
    %0 = vector.load %arg1[%c0, %c0_0] : memref<512x16xbf16, #tpu.memory_space<vmem>>, vector<512x16xbf16>
    %c0_1 = arith.constant 0 : index
    %c0_2 = arith.constant 0 : index
    %1 = vector.load %arg2[%c0_1, %c0_2] : memref<16x32xbf16, #tpu.memory_space<vmem>>, vector<16x32xbf16>
    %cst = arith.constant dense<0.000000e+00> : vector<512x32xf32>
    %2 = tpu.matmul %0, %1, %cst {dimension_numbers = #tpu.dot_dimension_numbers<[1], [0], [0], [1], [0, 0, 1, 1], [], []>} : vector<512x16xbf16>, vector<16x32xbf16>, vector<512x32xf32> -> vector<512x32xf32>
    %c0_3 = arith.constant 0 : index
    %c0_4 = arith.constant 0 : index
    %3 = vector.load %arg3[%c0_3, %c0_4] : memref<1x32xf32, #tpu.memory_space<vmem>>, vector<1x32xf32>
    %4 = vector.broadcast %3 : vector<1x32xf32> to vector<512x32xf32>
    %5 = arith.mulf %2, %4 : vector<512x32xf32>
    %c0_5 = arith.constant 0 : index
    %c0_6 = arith.constant 0 : index
    %6 = vector.load %arg4[%c0_5, %c0_6] : memref<1x32xf32, #tpu.memory_space<vmem>>, vector<1x32xf32>
    %7 = vector.broadcast %6 : vector<1x32xf32> to vector<512x32xf32>
    %8 = arith.addf %5, %7 : vector<512x32xf32>
    %cst_7 = arith.constant 0.000000e+00 : f32
    %cst_8 = arith.constant 6.000000e+00 : f32
    %9 = vector.broadcast %cst_7 : f32 to vector<512x32xf32>
    %10 = arith.maximumf %9, %8 : vector<512x32xf32>
    %11 = vector.broadcast %cst_8 : f32 to vector<512x32xf32>
    %12 = arith.minimumf %11, %10 : vector<512x32xf32>
    %13 = arith.truncf %12 : vector<512x32xf32> to vector<512x32xbf16>
    %c0_9 = arith.constant 0 : index
    %c0_10 = arith.constant 0 : index
    %14 = vector.load %arg5[%c0_9, %c0_10] : memref<512x32xbf16, #tpu.memory_space<vmem>>, vector<512x32xbf16>
    tpu.vector_store %arg5[%c0_9, %c0_10], %13 {strides = array<i32>} : memref<512x32xbf16, #tpu.memory_space<vmem>>, vector<512x32xbf16>,
    return
  }
  func.func @transform_0(%arg0: i32) -> (i32, i32) {
    %c0_i32 = arith.constant 0 : i32
    %c0_i32_0 = arith.constant 0 : i32
    return %arg0, %c0_i32 : i32, i32
  }
  func.func @transform_1(%arg0: i32) -> (i32, i32) {
    %c0_i32 = arith.constant 0 : i32
    %c0_i32_0 = arith.constant 0 : i32
    %c0_i32_1 = arith.constant 0 : i32
    return %c0_i32, %c0_i32_0 : i32, i32
  }
  func.func @transform_2(%arg0: i32) -> (i32, i32) {
    %c0_i32 = arith.constant 0 : i32
    %c0_i32_0 = arith.constant 0 : i32
    %c0_i32_1 = arith.constant 0 : i32
    return %c0_i32, %c0_i32_0 : i32, i32
  }
  func.func @transform_3(%arg0: i32) -> (i32, i32) {
    %c0_i32 = arith.constant 0 : i32
    %c0_i32_0 = arith.constant 0 : i32
    %c0_i32_1 = arith.constant 0 : i32
    return %c0_i32, %c0_i32_0 : i32, i32
  }
  func.func @transform_4(%arg0: i32) -> (i32, i32) {
    %c0_i32 = arith.constant 0 : i32
    %c0_i32_0 = arith.constant 0 : i32
    return %arg0, %c0_i32 : i32, i32
  }
}

module attributes {stable_mosaic.version = 11 : i64} {
  func.func @_fused_branch_kernel(%arg0: i32, %arg1: memref<1x52x52x32xbf16, #tpu.memory_space<vmem>>, %arg2: memref<1x32xf32, #tpu.memory_space<vmem>>, %arg3: memref<1x32xf32, #tpu.memory_space<vmem>>, %arg4: memref<3x9x32xf32, #tpu.memory_space<vmem>>, %arg5: memref<3x32xf32, #tpu.memory_space<vmem>>, %arg6: memref<128x32xf32, #tpu.memory_space<vmem>>, %arg7: memref<1x1x32xf32, #tpu.memory_space<vmem>>, %arg8: memref<1x32xf32, #tpu.memory_space<vmem>>, %arg9: memref<1x32xf32, #tpu.memory_space<vmem>>, %arg10: memref<1x16x16x32xf32, #tpu.memory_space<vmem>>) attributes {dimension_semantics = [#tpu.dimension_semantics<parallel>], iteration_bounds = array<i64: 2>, scalar_prefetch = 0 : i64, scratch_operands = 0 : i64, tpu.core_type = #tpu.core_type<tc>, window_params = [{transform_indices = @transform_0, window_bounds = array<i64: 1, 52, 52, 32>}, {pipeline_mode = #tpu.pipeline_mode<synchronous>, transform_indices = @transform_1, window_bounds = array<i64: 1, 32>}, {pipeline_mode = #tpu.pipeline_mode<synchronous>, transform_indices = @transform_2, window_bounds = array<i64: 1, 32>}, {pipeline_mode = #tpu.pipeline_mode<synchronous>, transform_indices = @transform_3, window_bounds = array<i64: 3, 9, 32>}, {pipeline_mode = #tpu.pipeline_mode<synchronous>, transform_indices = @transform_4, window_bounds = array<i64: 3, 32>}, {pipeline_mode = #tpu.pipeline_mode<synchronous>, transform_indices = @transform_5, window_bounds = array<i64: 128, 32>}, {transform_indices = @transform_6, window_bounds = array<i64: 1, 1, 32>}, {pipeline_mode = #tpu.pipeline_mode<synchronous>, transform_indices = @transform_7, window_bounds = array<i64: 1, 32>}, {pipeline_mode = #tpu.pipeline_mode<synchronous>, transform_indices = @transform_8, window_bounds = array<i64: 1, 32>}, {transform_indices = @transform_9, window_bounds = array<i64: 1, 16, 16, 32>}]} {
    %c0 = arith.constant 0 : index
    %c18 = arith.constant 18 : index
    %c18_0 = arith.constant 18 : index
    %c0_1 = arith.constant 0 : index
    %0 = vector.load %arg1[%c0, %c18, %c18_0, %c0_1] : memref<1x52x52x32xbf16, #tpu.memory_space<vmem>>, vector<1x16x16x32xbf16>
    %1 = arith.extf %0 : vector<1x16x16x32xbf16> to vector<1x16x16x32xf32>
    %c0_2 = arith.constant 0 : index
    %c0_3 = arith.constant 0 : index
    %2 = vector.load %arg2[%c0_2, %c0_3] : memref<1x32xf32, #tpu.memory_space<vmem>>, vector<1x32xf32>
    %3 = vector.shape_cast %2 : vector<1x32xf32> to vector<1x1x1x32xf32>
    %4 = vector.broadcast %3 : vector<1x1x1x32xf32> to vector<1x16x16x32xf32>
    %5 = arith.mulf %1, %4 : vector<1x16x16x32xf32>
    %c0_4 = arith.constant 0 : index
    %c0_5 = arith.constant 0 : index
    %6 = vector.load %arg3[%c0_4, %c0_5] : memref<1x32xf32, #tpu.memory_space<vmem>>, vector<1x32xf32>
    %7 = vector.shape_cast %6 : vector<1x32xf32> to vector<1x1x1x32xf32>
    %8 = vector.broadcast %7 : vector<1x1x1x32xf32> to vector<1x16x16x32xf32>
    %9 = arith.addf %5, %8 : vector<1x16x16x32xf32>
    %cst = arith.constant 0.000000e+00 : f32
    %cst_6 = arith.constant 6.000000e+00 : f32
    %10 = vector.broadcast %cst : f32 to vector<1x16x16x32xf32>
    %11 = arith.maximumf %10, %9 : vector<1x16x16x32xf32>
    %12 = vector.broadcast %cst_6 : f32 to vector<1x16x16x32xf32>
    %13 = arith.minimumf %12, %11 : vector<1x16x16x32xf32>
    %14 = vector.shape_cast %13 : vector<1x16x16x32xf32> to vector<256x32xf32>
    %c0_7 = arith.constant 0 : index
    %c0_8 = arith.constant 0 : index
    %15 = vector.load %arg6[%c0_7, %c0_8] : memref<128x32xf32, #tpu.memory_space<vmem>>, vector<32x32xf32>
    %cst_9 = arith.constant dense<0.000000e+00> : vector<256x32xf32>
    %16 = tpu.matmul %14, %15, %cst_9 {dimension_numbers = #tpu.dot_dimension_numbers<[1], [0], [0], [1], [0, 0, 1, 1], [], []>} : vector<256x32xf32>, vector<32x32xf32>, vector<256x32xf32> -> vector<256x32xf32>
    %cst_10 = arith.constant 0.000000e+00 : f32
    %17 = vector.broadcast %cst_10 : f32 to vector<1x16x16x32xf32>
    %c0_11 = arith.constant 0 : index
    %c12 = arith.constant 12 : index
    %c12_12 = arith.constant 12 : index
    %c0_13 = arith.constant 0 : index
    %18 = vector.load %arg1[%c0_11, %c12, %c12_12, %c0_13] : memref<1x52x52x32xbf16, #tpu.memory_space<vmem>>, vector<1x16x16x32xbf16>
    %19 = arith.extf %18 : vector<1x16x16x32xbf16> to vector<1x16x16x32xf32>
    %c0_14 = arith.constant 0 : index
    %c0_15 = arith.constant 0 : index
    %c0_16 = arith.constant 0 : index
    %20 = vector.load %arg4[%c0_14, %c0_15, %c0_16] : memref<3x9x32xf32, #tpu.memory_space<vmem>>, vector<1x1x32xf32>
    %21 = vector.shape_cast %20 : vector<1x1x32xf32> to vector<32xf32>
    %22 = vector.shape_cast %21 : vector<32xf32> to vector<1x1x1x32xf32>
    %23 = vector.broadcast %22 : vector<1x1x1x32xf32> to vector<1x16x16x32xf32>
    %24 = arith.mulf %19, %23 : vector<1x16x16x32xf32>
    %25 = arith.addf %17, %24 : vector<1x16x16x32xf32>
    %c0_17 = arith.constant 0 : index
    %c12_18 = arith.constant 12 : index
    %c18_19 = arith.constant 18 : index
    %c0_20 = arith.constant 0 : index
    %26 = vector.load %arg1[%c0_17, %c12_18, %c18_19, %c0_20] : memref<1x52x52x32xbf16, #tpu.memory_space<vmem>>, vector<1x16x16x32xbf16>
    %27 = arith.extf %26 : vector<1x16x16x32xbf16> to vector<1x16x16x32xf32>
    %c0_21 = arith.constant 0 : index
    %c1 = arith.constant 1 : index
    %c0_22 = arith.constant 0 : index
    %28 = vector.load %arg4[%c0_21, %c1, %c0_22] : memref<3x9x32xf32, #tpu.memory_space<vmem>>, vector<1x1x32xf32>
    %29 = vector.shape_cast %28 : vector<1x1x32xf32> to vector<32xf32>
    %30 = vector.shape_cast %29 : vector<32xf32> to vector<1x1x1x32xf32>
    %31 = vector.broadcast %30 : vector<1x1x1x32xf32> to vector<1x16x16x32xf32>
    %32 = arith.mulf %27, %31 : vector<1x16x16x32xf32>
    %33 = arith.addf %25, %32 : vector<1x16x16x32xf32>
    %c0_23 = arith.constant 0 : index
    %c12_24 = arith.constant 12 : index
    %c24 = arith.constant 24 : index
    %c0_25 = arith.constant 0 : index
    %34 = vector.load %arg1[%c0_23, %c12_24, %c24, %c0_25] : memref<1x52x52x32xbf16, #tpu.memory_space<vmem>>, vector<1x16x16x32xbf16>
    %35 = arith.extf %34 : vector<1x16x16x32xbf16> to vector<1x16x16x32xf32>
    %c0_26 = arith.constant 0 : index
    %c2 = arith.constant 2 : index
    %c0_27 = arith.constant 0 : index
    %36 = vector.load %arg4[%c0_26, %c2, %c0_27] : memref<3x9x32xf32, #tpu.memory_space<vmem>>, vector<1x1x32xf32>
    %37 = vector.shape_cast %36 : vector<1x1x32xf32> to vector<32xf32>
    %38 = vector.shape_cast %37 : vector<32xf32> to vector<1x1x1x32xf32>
    %39 = vector.broadcast %38 : vector<1x1x1x32xf32> to vector<1x16x16x32xf32>
    %40 = arith.mulf %35, %39 : vector<1x16x16x32xf32>
    %41 = arith.addf %33, %40 : vector<1x16x16x32xf32>
    %c0_28 = arith.constant 0 : index
    %c18_29 = arith.constant 18 : index
    %c12_30 = arith.constant 12 : index
    %c0_31 = arith.constant 0 : index
    %42 = vector.load %arg1[%c0_28, %c18_29, %c12_30, %c0_31] : memref<1x52x52x32xbf16, #tpu.memory_space<vmem>>, vector<1x16x16x32xbf16>
    %43 = arith.extf %42 : vector<1x16x16x32xbf16> to vector<1x16x16x32xf32>
    %c0_32 = arith.constant 0 : index
    %c3 = arith.constant 3 : index
    %c0_33 = arith.constant 0 : index
    %44 = vector.load %arg4[%c0_32, %c3, %c0_33] : memref<3x9x32xf32, #tpu.memory_space<vmem>>, vector<1x1x32xf32>
    %45 = vector.shape_cast %44 : vector<1x1x32xf32> to vector<32xf32>
    %46 = vector.shape_cast %45 : vector<32xf32> to vector<1x1x1x32xf32>
    %47 = vector.broadcast %46 : vector<1x1x1x32xf32> to vector<1x16x16x32xf32>
    %48 = arith.mulf %43, %47 : vector<1x16x16x32xf32>
    %49 = arith.addf %41, %48 : vector<1x16x16x32xf32>
    %c0_34 = arith.constant 0 : index
    %c18_35 = arith.constant 18 : index
    %c18_36 = arith.constant 18 : index
    %c0_37 = arith.constant 0 : index
    %50 = vector.load %arg1[%c0_34, %c18_35, %c18_36, %c0_37] : memref<1x52x52x32xbf16, #tpu.memory_space<vmem>>, vector<1x16x16x32xbf16>
    %51 = arith.extf %50 : vector<1x16x16x32xbf16> to vector<1x16x16x32xf32>
    %c0_38 = arith.constant 0 : index
    %c4 = arith.constant 4 : index
    %c0_39 = arith.constant 0 : index
    %52 = vector.load %arg4[%c0_38, %c4, %c0_39] : memref<3x9x32xf32, #tpu.memory_space<vmem>>, vector<1x1x32xf32>
    %53 = vector.shape_cast %52 : vector<1x1x32xf32> to vector<32xf32>
    %54 = vector.shape_cast %53 : vector<32xf32> to vector<1x1x1x32xf32>
    %55 = vector.broadcast %54 : vector<1x1x1x32xf32> to vector<1x16x16x32xf32>
    %56 = arith.mulf %51, %55 : vector<1x16x16x32xf32>
    %57 = arith.addf %49, %56 : vector<1x16x16x32xf32>
    %c0_40 = arith.constant 0 : index
    %c18_41 = arith.constant 18 : index
    %c24_42 = arith.constant 24 : index
    %c0_43 = arith.constant 0 : index
    %58 = vector.load %arg1[%c0_40, %c18_41, %c24_42, %c0_43] : memref<1x52x52x32xbf16, #tpu.memory_space<vmem>>, vector<1x16x16x32xbf16>
    %59 = arith.extf %58 : vector<1x16x16x32xbf16> to vector<1x16x16x32xf32>
    %c0_44 = arith.constant 0 : index
    %c5 = arith.constant 5 : index
    %c0_45 = arith.constant 0 : index
    %60 = vector.load %arg4[%c0_44, %c5, %c0_45] : memref<3x9x32xf32, #tpu.memory_space<vmem>>, vector<1x1x32xf32>
    %61 = vector.shape_cast %60 : vector<1x1x32xf32> to vector<32xf32>
    %62 = vector.shape_cast %61 : vector<32xf32> to vector<1x1x1x32xf32>
    %63 = vector.broadcast %62 : vector<1x1x1x32xf32> to vector<1x16x16x32xf32>
    %64 = arith.mulf %59, %63 : vector<1x16x16x32xf32>
    %65 = arith.addf %57, %64 : vector<1x16x16x32xf32>
    %c0_46 = arith.constant 0 : index
    %c24_47 = arith.constant 24 : index
    %c12_48 = arith.constant 12 : index
    %c0_49 = arith.constant 0 : index
    %66 = vector.load %arg1[%c0_46, %c24_47, %c12_48, %c0_49] : memref<1x52x52x32xbf16, #tpu.memory_space<vmem>>, vector<1x16x16x32xbf16>
    %67 = arith.extf %66 : vector<1x16x16x32xbf16> to vector<1x16x16x32xf32>
    %c0_50 = arith.constant 0 : index
    %c6 = arith.constant 6 : index
    %c0_51 = arith.constant 0 : index
    %68 = vector.load %arg4[%c0_50, %c6, %c0_51] : memref<3x9x32xf32, #tpu.memory_space<vmem>>, vector<1x1x32xf32>
    %69 = vector.shape_cast %68 : vector<1x1x32xf32> to vector<32xf32>
    %70 = vector.shape_cast %69 : vector<32xf32> to vector<1x1x1x32xf32>
    %71 = vector.broadcast %70 : vector<1x1x1x32xf32> to vector<1x16x16x32xf32>
    %72 = arith.mulf %67, %71 : vector<1x16x16x32xf32>
    %73 = arith.addf %65, %72 : vector<1x16x16x32xf32>
    %c0_52 = arith.constant 0 : index
    %c24_53 = arith.constant 24 : index
    %c18_54 = arith.constant 18 : index
    %c0_55 = arith.constant 0 : index
    %74 = vector.load %arg1[%c0_52, %c24_53, %c18_54, %c0_55] : memref<1x52x52x32xbf16, #tpu.memory_space<vmem>>, vector<1x16x16x32xbf16>
    %75 = arith.extf %74 : vector<1x16x16x32xbf16> to vector<1x16x16x32xf32>
    %c0_56 = arith.constant 0 : index
    %c7 = arith.constant 7 : index
    %c0_57 = arith.constant 0 : index
    %76 = vector.load %arg4[%c0_56, %c7, %c0_57] : memref<3x9x32xf32, #tpu.memory_space<vmem>>, vector<1x1x32xf32>
    %77 = vector.shape_cast %76 : vector<1x1x32xf32> to vector<32xf32>
    %78 = vector.shape_cast %77 : vector<32xf32> to vector<1x1x1x32xf32>
    %79 = vector.broadcast %78 : vector<1x1x1x32xf32> to vector<1x16x16x32xf32>
    %80 = arith.mulf %75, %79 : vector<1x16x16x32xf32>
    %81 = arith.addf %73, %80 : vector<1x16x16x32xf32>
    %c0_58 = arith.constant 0 : index
    %c24_59 = arith.constant 24 : index
    %c24_60 = arith.constant 24 : index
    %c0_61 = arith.constant 0 : index
    %82 = vector.load %arg1[%c0_58, %c24_59, %c24_60, %c0_61] : memref<1x52x52x32xbf16, #tpu.memory_space<vmem>>, vector<1x16x16x32xbf16>
    %83 = arith.extf %82 : vector<1x16x16x32xbf16> to vector<1x16x16x32xf32>
    %c0_62 = arith.constant 0 : index
    %c8 = arith.constant 8 : index
    %c0_63 = arith.constant 0 : index
    %84 = vector.load %arg4[%c0_62, %c8, %c0_63] : memref<3x9x32xf32, #tpu.memory_space<vmem>>, vector<1x1x32xf32>
    %85 = vector.shape_cast %84 : vector<1x1x32xf32> to vector<32xf32>
    %86 = vector.shape_cast %85 : vector<32xf32> to vector<1x1x1x32xf32>
    %87 = vector.broadcast %86 : vector<1x1x1x32xf32> to vector<1x16x16x32xf32>
    %88 = arith.mulf %83, %87 : vector<1x16x16x32xf32>
    %89 = arith.addf %81, %88 : vector<1x16x16x32xf32>
    %c0_64 = arith.constant 0 : index
    %c0_65 = arith.constant 0 : index
    %90 = vector.load %arg5[%c0_64, %c0_65] : memref<3x32xf32, #tpu.memory_space<vmem>>, vector<1x32xf32>
    %91 = vector.shape_cast %90 : vector<1x32xf32> to vector<32xf32>
    %92 = vector.shape_cast %91 : vector<32xf32> to vector<1x1x1x32xf32>
    %93 = vector.broadcast %92 : vector<1x1x1x32xf32> to vector<1x16x16x32xf32>
    %94 = arith.addf %89, %93 : vector<1x16x16x32xf32>
    %cst_66 = arith.constant 0.000000e+00 : f32
    %cst_67 = arith.constant 6.000000e+00 : f32
    %95 = vector.broadcast %cst_66 : f32 to vector<1x16x16x32xf32>
    %96 = arith.maximumf %95, %94 : vector<1x16x16x32xf32>
    %97 = vector.broadcast %cst_67 : f32 to vector<1x16x16x32xf32>
    %98 = arith.minimumf %97, %96 : vector<1x16x16x32xf32>
    %99 = vector.shape_cast %98 : vector<1x16x16x32xf32> to vector<256x32xf32>
    %c32 = arith.constant 32 : index
    %c0_68 = arith.constant 0 : index
    %100 = vector.load %arg6[%c32, %c0_68] : memref<128x32xf32, #tpu.memory_space<vmem>>, vector<32x32xf32>
    %cst_69 = arith.constant dense<0.000000e+00> : vector<256x32xf32>
    %101 = tpu.matmul %99, %100, %cst_69 {dimension_numbers = #tpu.dot_dimension_numbers<[1], [0], [0], [1], [0, 0, 1, 1], [], []>} : vector<256x32xf32>, vector<32x32xf32>, vector<256x32xf32> -> vector<256x32xf32>
    %102 = arith.addf %16, %101 : vector<256x32xf32>
    %cst_70 = arith.constant 0.000000e+00 : f32
    %103 = vector.broadcast %cst_70 : f32 to vector<1x16x16x32xf32>
    %c0_71 = arith.constant 0 : index
    %c6_72 = arith.constant 6 : index
    %c6_73 = arith.constant 6 : index
    %c0_74 = arith.constant 0 : index
    %104 = vector.load %arg1[%c0_71, %c6_72, %c6_73, %c0_74] : memref<1x52x52x32xbf16, #tpu.memory_space<vmem>>, vector<1x16x16x32xbf16>
    %105 = arith.extf %104 : vector<1x16x16x32xbf16> to vector<1x16x16x32xf32>
    %c1_75 = arith.constant 1 : index
    %c0_76 = arith.constant 0 : index
    %c0_77 = arith.constant 0 : index
    %106 = vector.load %arg4[%c1_75, %c0_76, %c0_77] : memref<3x9x32xf32, #tpu.memory_space<vmem>>, vector<1x1x32xf32>
    %107 = vector.shape_cast %106 : vector<1x1x32xf32> to vector<32xf32>
    %108 = vector.shape_cast %107 : vector<32xf32> to vector<1x1x1x32xf32>
    %109 = vector.broadcast %108 : vector<1x1x1x32xf32> to vector<1x16x16x32xf32>
    %110 = arith.mulf %105, %109 : vector<1x16x16x32xf32>
    %111 = arith.addf %103, %110 : vector<1x16x16x32xf32>
    %c0_78 = arith.constant 0 : index
    %c6_79 = arith.constant 6 : index
    %c18_80 = arith.constant 18 : index
    %c0_81 = arith.constant 0 : index
    %112 = vector.load %arg1[%c0_78, %c6_79, %c18_80, %c0_81] : memref<1x52x52x32xbf16, #tpu.memory_space<vmem>>, vector<1x16x16x32xbf16>
    %113 = arith.extf %112 : vector<1x16x16x32xbf16> to vector<1x16x16x32xf32>
    %c1_82 = arith.constant 1 : index
    %c1_83 = arith.constant 1 : index
    %c0_84 = arith.constant 0 : index
    %114 = vector.load %arg4[%c1_82, %c1_83, %c0_84] : memref<3x9x32xf32, #tpu.memory_space<vmem>>, vector<1x1x32xf32>
    %115 = vector.shape_cast %114 : vector<1x1x32xf32> to vector<32xf32>
    %116 = vector.shape_cast %115 : vector<32xf32> to vector<1x1x1x32xf32>
    %117 = vector.broadcast %116 : vector<1x1x1x32xf32> to vector<1x16x16x32xf32>
    %118 = arith.mulf %113, %117 : vector<1x16x16x32xf32>
    %119 = arith.addf %111, %118 : vector<1x16x16x32xf32>
    %c0_85 = arith.constant 0 : index
    %c6_86 = arith.constant 6 : index
    %c30 = arith.constant 30 : index
    %c0_87 = arith.constant 0 : index
    %120 = vector.load %arg1[%c0_85, %c6_86, %c30, %c0_87] : memref<1x52x52x32xbf16, #tpu.memory_space<vmem>>, vector<1x16x16x32xbf16>
    %121 = arith.extf %120 : vector<1x16x16x32xbf16> to vector<1x16x16x32xf32>
    %c1_88 = arith.constant 1 : index
    %c2_89 = arith.constant 2 : index
    %c0_90 = arith.constant 0 : index
    %122 = vector.load %arg4[%c1_88, %c2_89, %c0_90] : memref<3x9x32xf32, #tpu.memory_space<vmem>>, vector<1x1x32xf32>
    %123 = vector.shape_cast %122 : vector<1x1x32xf32> to vector<32xf32>
    %124 = vector.shape_cast %123 : vector<32xf32> to vector<1x1x1x32xf32>
    %125 = vector.broadcast %124 : vector<1x1x1x32xf32> to vector<1x16x16x32xf32>
    %126 = arith.mulf %121, %125 : vector<1x16x16x32xf32>
    %127 = arith.addf %119, %126 : vector<1x16x16x32xf32>
    %c0_91 = arith.constant 0 : index
    %c18_92 = arith.constant 18 : index
    %c6_93 = arith.constant 6 : index
    %c0_94 = arith.constant 0 : index
    %128 = vector.load %arg1[%c0_91, %c18_92, %c6_93, %c0_94] : memref<1x52x52x32xbf16, #tpu.memory_space<vmem>>, vector<1x16x16x32xbf16>
    %129 = arith.extf %128 : vector<1x16x16x32xbf16> to vector<1x16x16x32xf32>
    %c1_95 = arith.constant 1 : index
    %c3_96 = arith.constant 3 : index
    %c0_97 = arith.constant 0 : index
    %130 = vector.load %arg4[%c1_95, %c3_96, %c0_97] : memref<3x9x32xf32, #tpu.memory_space<vmem>>, vector<1x1x32xf32>
    %131 = vector.shape_cast %130 : vector<1x1x32xf32> to vector<32xf32>
    %132 = vector.shape_cast %131 : vector<32xf32> to vector<1x1x1x32xf32>
    %133 = vector.broadcast %132 : vector<1x1x1x32xf32> to vector<1x16x16x32xf32>
    %134 = arith.mulf %129, %133 : vector<1x16x16x32xf32>
    %135 = arith.addf %127, %134 : vector<1x16x16x32xf32>
    %c0_98 = arith.constant 0 : index
    %c18_99 = arith.constant 18 : index
    %c18_100 = arith.constant 18 : index
    %c0_101 = arith.constant 0 : index
    %136 = vector.load %arg1[%c0_98, %c18_99, %c18_100, %c0_101] : memref<1x52x52x32xbf16, #tpu.memory_space<vmem>>, vector<1x16x16x32xbf16>
    %137 = arith.extf %136 : vector<1x16x16x32xbf16> to vector<1x16x16x32xf32>
    %c1_102 = arith.constant 1 : index
    %c4_103 = arith.constant 4 : index
    %c0_104 = arith.constant 0 : index
    %138 = vector.load %arg4[%c1_102, %c4_103, %c0_104] : memref<3x9x32xf32, #tpu.memory_space<vmem>>, vector<1x1x32xf32>
    %139 = vector.shape_cast %138 : vector<1x1x32xf32> to vector<32xf32>
    %140 = vector.shape_cast %139 : vector<32xf32> to vector<1x1x1x32xf32>
    %141 = vector.broadcast %140 : vector<1x1x1x32xf32> to vector<1x16x16x32xf32>
    %142 = arith.mulf %137, %141 : vector<1x16x16x32xf32>
    %143 = arith.addf %135, %142 : vector<1x16x16x32xf32>
    %c0_105 = arith.constant 0 : index
    %c18_106 = arith.constant 18 : index
    %c30_107 = arith.constant 30 : index
    %c0_108 = arith.constant 0 : index
    %144 = vector.load %arg1[%c0_105, %c18_106, %c30_107, %c0_108] : memref<1x52x52x32xbf16, #tpu.memory_space<vmem>>, vector<1x16x16x32xbf16>
    %145 = arith.extf %144 : vector<1x16x16x32xbf16> to vector<1x16x16x32xf32>
    %c1_109 = arith.constant 1 : index
    %c5_110 = arith.constant 5 : index
    %c0_111 = arith.constant 0 : index
    %146 = vector.load %arg4[%c1_109, %c5_110, %c0_111] : memref<3x9x32xf32, #tpu.memory_space<vmem>>, vector<1x1x32xf32>
    %147 = vector.shape_cast %146 : vector<1x1x32xf32> to vector<32xf32>
    %148 = vector.shape_cast %147 : vector<32xf32> to vector<1x1x1x32xf32>
    %149 = vector.broadcast %148 : vector<1x1x1x32xf32> to vector<1x16x16x32xf32>
    %150 = arith.mulf %145, %149 : vector<1x16x16x32xf32>
    %151 = arith.addf %143, %150 : vector<1x16x16x32xf32>
    %c0_112 = arith.constant 0 : index
    %c30_113 = arith.constant 30 : index
    %c6_114 = arith.constant 6 : index
    %c0_115 = arith.constant 0 : index
    %152 = vector.load %arg1[%c0_112, %c30_113, %c6_114, %c0_115] : memref<1x52x52x32xbf16, #tpu.memory_space<vmem>>, vector<1x16x16x32xbf16>
    %153 = arith.extf %152 : vector<1x16x16x32xbf16> to vector<1x16x16x32xf32>
    %c1_116 = arith.constant 1 : index
    %c6_117 = arith.constant 6 : index
    %c0_118 = arith.constant 0 : index
    %154 = vector.load %arg4[%c1_116, %c6_117, %c0_118] : memref<3x9x32xf32, #tpu.memory_space<vmem>>, vector<1x1x32xf32>
    %155 = vector.shape_cast %154 : vector<1x1x32xf32> to vector<32xf32>
    %156 = vector.shape_cast %155 : vector<32xf32> to vector<1x1x1x32xf32>
    %157 = vector.broadcast %156 : vector<1x1x1x32xf32> to vector<1x16x16x32xf32>
    %158 = arith.mulf %153, %157 : vector<1x16x16x32xf32>
    %159 = arith.addf %151, %158 : vector<1x16x16x32xf32>
    %c0_119 = arith.constant 0 : index
    %c30_120 = arith.constant 30 : index
    %c18_121 = arith.constant 18 : index
    %c0_122 = arith.constant 0 : index
    %160 = vector.load %arg1[%c0_119, %c30_120, %c18_121, %c0_122] : memref<1x52x52x32xbf16, #tpu.memory_space<vmem>>, vector<1x16x16x32xbf16>
    %161 = arith.extf %160 : vector<1x16x16x32xbf16> to vector<1x16x16x32xf32>
    %c1_123 = arith.constant 1 : index
    %c7_124 = arith.constant 7 : index
    %c0_125 = arith.constant 0 : index
    %162 = vector.load %arg4[%c1_123, %c7_124, %c0_125] : memref<3x9x32xf32, #tpu.memory_space<vmem>>, vector<1x1x32xf32>
    %163 = vector.shape_cast %162 : vector<1x1x32xf32> to vector<32xf32>
    %164 = vector.shape_cast %163 : vector<32xf32> to vector<1x1x1x32xf32>
    %165 = vector.broadcast %164 : vector<1x1x1x32xf32> to vector<1x16x16x32xf32>
    %166 = arith.mulf %161, %165 : vector<1x16x16x32xf32>
    %167 = arith.addf %159, %166 : vector<1x16x16x32xf32>
    %c0_126 = arith.constant 0 : index
    %c30_127 = arith.constant 30 : index
    %c30_128 = arith.constant 30 : index
    %c0_129 = arith.constant 0 : index
    %168 = vector.load %arg1[%c0_126, %c30_127, %c30_128, %c0_129] : memref<1x52x52x32xbf16, #tpu.memory_space<vmem>>, vector<1x16x16x32xbf16>
    %169 = arith.extf %168 : vector<1x16x16x32xbf16> to vector<1x16x16x32xf32>
    %c1_130 = arith.constant 1 : index
    %c8_131 = arith.constant 8 : index
    %c0_132 = arith.constant 0 : index
    %170 = vector.load %arg4[%c1_130, %c8_131, %c0_132] : memref<3x9x32xf32, #tpu.memory_space<vmem>>, vector<1x1x32xf32>
    %171 = vector.shape_cast %170 : vector<1x1x32xf32> to vector<32xf32>
    %172 = vector.shape_cast %171 : vector<32xf32> to vector<1x1x1x32xf32>
    %173 = vector.broadcast %172 : vector<1x1x1x32xf32> to vector<1x16x16x32xf32>
    %174 = arith.mulf %169, %173 : vector<1x16x16x32xf32>
    %175 = arith.addf %167, %174 : vector<1x16x16x32xf32>
    %c1_133 = arith.constant 1 : index
    %c0_134 = arith.constant 0 : index
    %176 = vector.load %arg5[%c1_133, %c0_134] : memref<3x32xf32, #tpu.memory_space<vmem>>, vector<1x32xf32>
    %177 = vector.shape_cast %176 : vector<1x32xf32> to vector<32xf32>
    %178 = vector.shape_cast %177 : vector<32xf32> to vector<1x1x1x32xf32>
    %179 = vector.broadcast %178 : vector<1x1x1x32xf32> to vector<1x16x16x32xf32>
    %180 = arith.addf %175, %179 : vector<1x16x16x32xf32>
    %cst_135 = arith.constant 0.000000e+00 : f32
    %cst_136 = arith.constant 6.000000e+00 : f32
    %181 = vector.broadcast %cst_135 : f32 to vector<1x16x16x32xf32>
    %182 = arith.maximumf %181, %180 : vector<1x16x16x32xf32>
    %183 = vector.broadcast %cst_136 : f32 to vector<1x16x16x32xf32>
    %184 = arith.minimumf %183, %182 : vector<1x16x16x32xf32>
    %185 = vector.shape_cast %184 : vector<1x16x16x32xf32> to vector<256x32xf32>
    %c64 = arith.constant 64 : index
    %c0_137 = arith.constant 0 : index
    %186 = vector.load %arg6[%c64, %c0_137] : memref<128x32xf32, #tpu.memory_space<vmem>>, vector<32x32xf32>
    %cst_138 = arith.constant dense<0.000000e+00> : vector<256x32xf32>
    %187 = tpu.matmul %185, %186, %cst_138 {dimension_numbers = #tpu.dot_dimension_numbers<[1], [0], [0], [1], [0, 0, 1, 1], [], []>} : vector<256x32xf32>, vector<32x32xf32>, vector<256x32xf32> -> vector<256x32xf32>
    %188 = arith.addf %102, %187 : vector<256x32xf32>
    %cst_139 = arith.constant 0.000000e+00 : f32
    %189 = vector.broadcast %cst_139 : f32 to vector<1x16x16x32xf32>
    %c0_140 = arith.constant 0 : index
    %c0_141 = arith.constant 0 : index
    %c0_142 = arith.constant 0 : index
    %c0_143 = arith.constant 0 : index
    %190 = vector.load %arg1[%c0_140, %c0_141, %c0_142, %c0_143] : memref<1x52x52x32xbf16, #tpu.memory_space<vmem>>, vector<1x16x16x32xbf16>
    %191 = arith.extf %190 : vector<1x16x16x32xbf16> to vector<1x16x16x32xf32>
    %c2_144 = arith.constant 2 : index
    %c0_145 = arith.constant 0 : index
    %c0_146 = arith.constant 0 : index
    %192 = vector.load %arg4[%c2_144, %c0_145, %c0_146] : memref<3x9x32xf32, #tpu.memory_space<vmem>>, vector<1x1x32xf32>
    %193 = vector.shape_cast %192 : vector<1x1x32xf32> to vector<32xf32>
    %194 = vector.shape_cast %193 : vector<32xf32> to vector<1x1x1x32xf32>
    %195 = vector.broadcast %194 : vector<1x1x1x32xf32> to vector<1x16x16x32xf32>
    %196 = arith.mulf %191, %195 : vector<1x16x16x32xf32>
    %197 = arith.addf %189, %196 : vector<1x16x16x32xf32>
    %c0_147 = arith.constant 0 : index
    %c0_148 = arith.constant 0 : index
    %c18_149 = arith.constant 18 : index
    %c0_150 = arith.constant 0 : index
    %198 = vector.load %arg1[%c0_147, %c0_148, %c18_149, %c0_150] : memref<1x52x52x32xbf16, #tpu.memory_space<vmem>>, vector<1x16x16x32xbf16>
    %199 = arith.extf %198 : vector<1x16x16x32xbf16> to vector<1x16x16x32xf32>
    %c2_151 = arith.constant 2 : index
    %c1_152 = arith.constant 1 : index
    %c0_153 = arith.constant 0 : index
    %200 = vector.load %arg4[%c2_151, %c1_152, %c0_153] : memref<3x9x32xf32, #tpu.memory_space<vmem>>, vector<1x1x32xf32>
    %201 = vector.shape_cast %200 : vector<1x1x32xf32> to vector<32xf32>
    %202 = vector.shape_cast %201 : vector<32xf32> to vector<1x1x1x32xf32>
    %203 = vector.broadcast %202 : vector<1x1x1x32xf32> to vector<1x16x16x32xf32>
    %204 = arith.mulf %199, %203 : vector<1x16x16x32xf32>
    %205 = arith.addf %197, %204 : vector<1x16x16x32xf32>
    %c0_154 = arith.constant 0 : index
    %c0_155 = arith.constant 0 : index
    %c36 = arith.constant 36 : index
    %c0_156 = arith.constant 0 : index
    %206 = vector.load %arg1[%c0_154, %c0_155, %c36, %c0_156] : memref<1x52x52x32xbf16, #tpu.memory_space<vmem>>, vector<1x16x16x32xbf16>
    %207 = arith.extf %206 : vector<1x16x16x32xbf16> to vector<1x16x16x32xf32>
    %c2_157 = arith.constant 2 : index
    %c2_158 = arith.constant 2 : index
    %c0_159 = arith.constant 0 : index
    %208 = vector.load %arg4[%c2_157, %c2_158, %c0_159] : memref<3x9x32xf32, #tpu.memory_space<vmem>>, vector<1x1x32xf32>
    %209 = vector.shape_cast %208 : vector<1x1x32xf32> to vector<32xf32>
    %210 = vector.shape_cast %209 : vector<32xf32> to vector<1x1x1x32xf32>
    %211 = vector.broadcast %210 : vector<1x1x1x32xf32> to vector<1x16x16x32xf32>
    %212 = arith.mulf %207, %211 : vector<1x16x16x32xf32>
    %213 = arith.addf %205, %212 : vector<1x16x16x32xf32>
    %c0_160 = arith.constant 0 : index
    %c18_161 = arith.constant 18 : index
    %c0_162 = arith.constant 0 : index
    %c0_163 = arith.constant 0 : index
    %214 = vector.load %arg1[%c0_160, %c18_161, %c0_162, %c0_163] : memref<1x52x52x32xbf16, #tpu.memory_space<vmem>>, vector<1x16x16x32xbf16>
    %215 = arith.extf %214 : vector<1x16x16x32xbf16> to vector<1x16x16x32xf32>
    %c2_164 = arith.constant 2 : index
    %c3_165 = arith.constant 3 : index
    %c0_166 = arith.constant 0 : index
    %216 = vector.load %arg4[%c2_164, %c3_165, %c0_166] : memref<3x9x32xf32, #tpu.memory_space<vmem>>, vector<1x1x32xf32>
    %217 = vector.shape_cast %216 : vector<1x1x32xf32> to vector<32xf32>
    %218 = vector.shape_cast %217 : vector<32xf32> to vector<1x1x1x32xf32>
    %219 = vector.broadcast %218 : vector<1x1x1x32xf32> to vector<1x16x16x32xf32>
    %220 = arith.mulf %215, %219 : vector<1x16x16x32xf32>
    %221 = arith.addf %213, %220 : vector<1x16x16x32xf32>
    %c0_167 = arith.constant 0 : index
    %c18_168 = arith.constant 18 : index
    %c18_169 = arith.constant 18 : index
    %c0_170 = arith.constant 0 : index
    %222 = vector.load %arg1[%c0_167, %c18_168, %c18_169, %c0_170] : memref<1x52x52x32xbf16, #tpu.memory_space<vmem>>, vector<1x16x16x32xbf16>
    %223 = arith.extf %222 : vector<1x16x16x32xbf16> to vector<1x16x16x32xf32>
    %c2_171 = arith.constant 2 : index
    %c4_172 = arith.constant 4 : index
    %c0_173 = arith.constant 0 : index
    %224 = vector.load %arg4[%c2_171, %c4_172, %c0_173] : memref<3x9x32xf32, #tpu.memory_space<vmem>>, vector<1x1x32xf32>
    %225 = vector.shape_cast %224 : vector<1x1x32xf32> to vector<32xf32>
    %226 = vector.shape_cast %225 : vector<32xf32> to vector<1x1x1x32xf32>
    %227 = vector.broadcast %226 : vector<1x1x1x32xf32> to vector<1x16x16x32xf32>
    %228 = arith.mulf %223, %227 : vector<1x16x16x32xf32>
    %229 = arith.addf %221, %228 : vector<1x16x16x32xf32>
    %c0_174 = arith.constant 0 : index
    %c18_175 = arith.constant 18 : index
    %c36_176 = arith.constant 36 : index
    %c0_177 = arith.constant 0 : index
    %230 = vector.load %arg1[%c0_174, %c18_175, %c36_176, %c0_177] : memref<1x52x52x32xbf16, #tpu.memory_space<vmem>>, vector<1x16x16x32xbf16>
    %231 = arith.extf %230 : vector<1x16x16x32xbf16> to vector<1x16x16x32xf32>
    %c2_178 = arith.constant 2 : index
    %c5_179 = arith.constant 5 : index
    %c0_180 = arith.constant 0 : index
    %232 = vector.load %arg4[%c2_178, %c5_179, %c0_180] : memref<3x9x32xf32, #tpu.memory_space<vmem>>, vector<1x1x32xf32>
    %233 = vector.shape_cast %232 : vector<1x1x32xf32> to vector<32xf32>
    %234 = vector.shape_cast %233 : vector<32xf32> to vector<1x1x1x32xf32>
    %235 = vector.broadcast %234 : vector<1x1x1x32xf32> to vector<1x16x16x32xf32>
    %236 = arith.mulf %231, %235 : vector<1x16x16x32xf32>
    %237 = arith.addf %229, %236 : vector<1x16x16x32xf32>
    %c0_181 = arith.constant 0 : index
    %c36_182 = arith.constant 36 : index
    %c0_183 = arith.constant 0 : index
    %c0_184 = arith.constant 0 : index
    %238 = vector.load %arg1[%c0_181, %c36_182, %c0_183, %c0_184] : memref<1x52x52x32xbf16, #tpu.memory_space<vmem>>, vector<1x16x16x32xbf16>
    %239 = arith.extf %238 : vector<1x16x16x32xbf16> to vector<1x16x16x32xf32>
    %c2_185 = arith.constant 2 : index
    %c6_186 = arith.constant 6 : index
    %c0_187 = arith.constant 0 : index
    %240 = vector.load %arg4[%c2_185, %c6_186, %c0_187] : memref<3x9x32xf32, #tpu.memory_space<vmem>>, vector<1x1x32xf32>
    %241 = vector.shape_cast %240 : vector<1x1x32xf32> to vector<32xf32>
    %242 = vector.shape_cast %241 : vector<32xf32> to vector<1x1x1x32xf32>
    %243 = vector.broadcast %242 : vector<1x1x1x32xf32> to vector<1x16x16x32xf32>
    %244 = arith.mulf %239, %243 : vector<1x16x16x32xf32>
    %245 = arith.addf %237, %244 : vector<1x16x16x32xf32>
    %c0_188 = arith.constant 0 : index
    %c36_189 = arith.constant 36 : index
    %c18_190 = arith.constant 18 : index
    %c0_191 = arith.constant 0 : index
    %246 = vector.load %arg1[%c0_188, %c36_189, %c18_190, %c0_191] : memref<1x52x52x32xbf16, #tpu.memory_space<vmem>>, vector<1x16x16x32xbf16>
    %247 = arith.extf %246 : vector<1x16x16x32xbf16> to vector<1x16x16x32xf32>
    %c2_192 = arith.constant 2 : index
    %c7_193 = arith.constant 7 : index
    %c0_194 = arith.constant 0 : index
    %248 = vector.load %arg4[%c2_192, %c7_193, %c0_194] : memref<3x9x32xf32, #tpu.memory_space<vmem>>, vector<1x1x32xf32>
    %249 = vector.shape_cast %248 : vector<1x1x32xf32> to vector<32xf32>
    %250 = vector.shape_cast %249 : vector<32xf32> to vector<1x1x1x32xf32>
    %251 = vector.broadcast %250 : vector<1x1x1x32xf32> to vector<1x16x16x32xf32>
    %252 = arith.mulf %247, %251 : vector<1x16x16x32xf32>
    %253 = arith.addf %245, %252 : vector<1x16x16x32xf32>
    %c0_195 = arith.constant 0 : index
    %c36_196 = arith.constant 36 : index
    %c36_197 = arith.constant 36 : index
    %c0_198 = arith.constant 0 : index
    %254 = vector.load %arg1[%c0_195, %c36_196, %c36_197, %c0_198] : memref<1x52x52x32xbf16, #tpu.memory_space<vmem>>, vector<1x16x16x32xbf16>
    %255 = arith.extf %254 : vector<1x16x16x32xbf16> to vector<1x16x16x32xf32>
    %c2_199 = arith.constant 2 : index
    %c8_200 = arith.constant 8 : index
    %c0_201 = arith.constant 0 : index
    %256 = vector.load %arg4[%c2_199, %c8_200, %c0_201] : memref<3x9x32xf32, #tpu.memory_space<vmem>>, vector<1x1x32xf32>
    %257 = vector.shape_cast %256 : vector<1x1x32xf32> to vector<32xf32>
    %258 = vector.shape_cast %257 : vector<32xf32> to vector<1x1x1x32xf32>
    %259 = vector.broadcast %258 : vector<1x1x1x32xf32> to vector<1x16x16x32xf32>
    %260 = arith.mulf %255, %259 : vector<1x16x16x32xf32>
    %261 = arith.addf %253, %260 : vector<1x16x16x32xf32>
    %c2_202 = arith.constant 2 : index
    %c0_203 = arith.constant 0 : index
    %262 = vector.load %arg5[%c2_202, %c0_203] : memref<3x32xf32, #tpu.memory_space<vmem>>, vector<1x32xf32>
    %263 = vector.shape_cast %262 : vector<1x32xf32> to vector<32xf32>
    %264 = vector.shape_cast %263 : vector<32xf32> to vector<1x1x1x32xf32>
    %265 = vector.broadcast %264 : vector<1x1x1x32xf32> to vector<1x16x16x32xf32>
    %266 = arith.addf %261, %265 : vector<1x16x16x32xf32>
    %cst_204 = arith.constant 0.000000e+00 : f32
    %cst_205 = arith.constant 6.000000e+00 : f32
    %267 = vector.broadcast %cst_204 : f32 to vector<1x16x16x32xf32>
    %268 = arith.maximumf %267, %266 : vector<1x16x16x32xf32>
    %269 = vector.broadcast %cst_205 : f32 to vector<1x16x16x32xf32>
    %270 = arith.minimumf %269, %268 : vector<1x16x16x32xf32>
    %271 = vector.shape_cast %270 : vector<1x16x16x32xf32> to vector<256x32xf32>
    %c96 = arith.constant 96 : index
    %c0_206 = arith.constant 0 : index
    %272 = vector.load %arg6[%c96, %c0_206] : memref<128x32xf32, #tpu.memory_space<vmem>>, vector<32x32xf32>
    %cst_207 = arith.constant dense<0.000000e+00> : vector<256x32xf32>
    %273 = tpu.matmul %271, %272, %cst_207 {dimension_numbers = #tpu.dot_dimension_numbers<[1], [0], [0], [1], [0, 0, 1, 1], [], []>} : vector<256x32xf32>, vector<32x32xf32>, vector<256x32xf32> -> vector<256x32xf32>
    %274 = arith.addf %188, %273 : vector<256x32xf32>
    %c0_208 = arith.constant 0 : index
    %c0_209 = arith.constant 0 : index
    %c0_210 = arith.constant 0 : index
    %275 = vector.load %arg7[%c0_208, %c0_209, %c0_210] : memref<1x1x32xf32, #tpu.memory_space<vmem>>, vector<1x1x32xf32>
    %276 = vector.shape_cast %275 : vector<1x1x32xf32> to vector<1x32xf32>
    %277 = vector.broadcast %276 : vector<1x32xf32> to vector<256x32xf32>
    %278 = arith.addf %274, %277 : vector<256x32xf32>
    %c0_211 = arith.constant 0 : index
    %c0_212 = arith.constant 0 : index
    %279 = vector.load %arg8[%c0_211, %c0_212] : memref<1x32xf32, #tpu.memory_space<vmem>>, vector<1x32xf32>
    %280 = vector.broadcast %279 : vector<1x32xf32> to vector<256x32xf32>
    %281 = arith.mulf %278, %280 : vector<256x32xf32>
    %c0_213 = arith.constant 0 : index
    %c0_214 = arith.constant 0 : index
    %282 = vector.load %arg9[%c0_213, %c0_214] : memref<1x32xf32, #tpu.memory_space<vmem>>, vector<1x32xf32>
    %283 = vector.broadcast %282 : vector<1x32xf32> to vector<256x32xf32>
    %284 = arith.addf %281, %283 : vector<256x32xf32>
    %cst_215 = arith.constant 0.000000e+00 : f32
    %cst_216 = arith.constant 6.000000e+00 : f32
    %285 = vector.broadcast %cst_215 : f32 to vector<256x32xf32>
    %286 = arith.maximumf %285, %284 : vector<256x32xf32>
    %287 = vector.broadcast %cst_216 : f32 to vector<256x32xf32>
    %288 = arith.minimumf %287, %286 : vector<256x32xf32>
    %289 = vector.shape_cast %288 : vector<256x32xf32> to vector<1x16x16x32xf32>
    %c0_217 = arith.constant 0 : index
    %c0_218 = arith.constant 0 : index
    %c0_219 = arith.constant 0 : index
    %c0_220 = arith.constant 0 : index
    %290 = vector.load %arg10[%c0_217, %c0_218, %c0_219, %c0_220] : memref<1x16x16x32xf32, #tpu.memory_space<vmem>>, vector<1x16x16x32xf32>
    tpu.vector_store %arg10[%c0_217, %c0_218, %c0_219, %c0_220], %289 {strides = array<i32>} : memref<1x16x16x32xf32, #tpu.memory_space<vmem>>, vector<1x16x16x32xf32>,
    return
  }
  func.func @transform_0(%arg0: i32) -> (i32, i32, i32, i32) {
    %c0_i32 = arith.constant 0 : i32
    %c0_i32_0 = arith.constant 0 : i32
    %c0_i32_1 = arith.constant 0 : i32
    %c0_i32_2 = arith.constant 0 : i32
    return %arg0, %c0_i32, %c0_i32_0, %c0_i32_1 : i32, i32, i32, i32
  }
  func.func @transform_1(%arg0: i32) -> (i32, i32) {
    %c0_i32 = arith.constant 0 : i32
    %c0_i32_0 = arith.constant 0 : i32
    %c0_i32_1 = arith.constant 0 : i32
    return %c0_i32, %c0_i32_0 : i32, i32
  }
  func.func @transform_2(%arg0: i32) -> (i32, i32) {
    %c0_i32 = arith.constant 0 : i32
    %c0_i32_0 = arith.constant 0 : i32
    %c0_i32_1 = arith.constant 0 : i32
    return %c0_i32, %c0_i32_0 : i32, i32
  }
  func.func @transform_3(%arg0: i32) -> (i32, i32, i32) {
    %c0_i32 = arith.constant 0 : i32
    %c0_i32_0 = arith.constant 0 : i32
    %c0_i32_1 = arith.constant 0 : i32
    %c0_i32_2 = arith.constant 0 : i32
    return %c0_i32, %c0_i32_0, %c0_i32_1 : i32, i32, i32
  }
  func.func @transform_4(%arg0: i32) -> (i32, i32) {
    %c0_i32 = arith.constant 0 : i32
    %c0_i32_0 = arith.constant 0 : i32
    %c0_i32_1 = arith.constant 0 : i32
    return %c0_i32, %c0_i32_0 : i32, i32
  }
  func.func @transform_5(%arg0: i32) -> (i32, i32) {
    %c0_i32 = arith.constant 0 : i32
    %c0_i32_0 = arith.constant 0 : i32
    %c0_i32_1 = arith.constant 0 : i32
    return %c0_i32, %c0_i32_0 : i32, i32
  }
  func.func @transform_6(%arg0: i32) -> (i32, i32, i32) {
    %c0_i32 = arith.constant 0 : i32
    %c0_i32_0 = arith.constant 0 : i32
    %c0_i32_1 = arith.constant 0 : i32
    return %arg0, %c0_i32, %c0_i32_0 : i32, i32, i32
  }
  func.func @transform_7(%arg0: i32) -> (i32, i32) {
    %c0_i32 = arith.constant 0 : i32
    %c0_i32_0 = arith.constant 0 : i32
    %c0_i32_1 = arith.constant 0 : i32
    return %c0_i32, %c0_i32_0 : i32, i32
  }
  func.func @transform_8(%arg0: i32) -> (i32, i32) {
    %c0_i32 = arith.constant 0 : i32
    %c0_i32_0 = arith.constant 0 : i32
    %c0_i32_1 = arith.constant 0 : i32
    return %c0_i32, %c0_i32_0 : i32, i32
  }
  func.func @transform_9(%arg0: i32) -> (i32, i32, i32, i32) {
    %c0_i32 = arith.constant 0 : i32
    %c0_i32_0 = arith.constant 0 : i32
    %c0_i32_1 = arith.constant 0 : i32
    %c0_i32_2 = arith.constant 0 : i32
    return %arg0, %c0_i32, %c0_i32_0, %c0_i32_1 : i32, i32, i32, i32
  }
}

</mosaic_0001>

<llo_original>
// kernel: mul.37
$region0: #{mul.37}
  #allocation4 [shape = 's32[1]{0}', space=sflag, size = 0x4, scoped, tag = 'scoped memory for mul.37']
  %s0 = inlined_call_operand.hbm [shape: f32[1,32], index: 0, kind: input, shape index: {}]
  %s1 = inlined_call_operand.hbm [shape: f32[1,32], index: 1, kind: input, shape index: {}]
  %s2 = inlined_call_operand.vmem [shape: f32[1,32], index: 2, kind: output, shape index: {}]
  $region1: #{mul.37} parent=0
    #allocation0 [shape = 'u8[512]{0}', space=vmem, size = 0x400, scoped, tag = 'operand span for operand 0']
    #allocation1 [shape = 's32[1]{0}', space=sflag, size = 0x4, scoped, tag = 'scoped memory for mul.37']
    #allocation2 [shape = 'u8[512]{0}', space=vmem, size = 0x400, scoped, tag = 'operand span for operand 1']
    #allocation3 [shape = 's32[1]{0}', space=sflag, size = 0x4, scoped, tag = 'scoped memory for mul.37']
    %3 = vsyncpa [#allocation1], 0
    %4 = vsyncpa [#allocation3], 0
    %6 = vsyncadd [#allocation1], 0
    %s8 = sshll.u32 %s0, 4
    %s9 = int_to_ptr.hbm [resolvable:$true] %s8
    %s10 = sshll.u32 [#allocation0], 4
    %s11 = int_to_ptr.vmem [resolvable:$true] %s10
    %13 = dma.hbm_to_vmem [thread:$0]  %s9, 16, %s11, [#allocation1]
    %15 = vsyncadd [#allocation3], 0
    %s17 = sshll.u32 %s1, 4
    %s18 = int_to_ptr.hbm [resolvable:$true] %s17
    %s19 = sshll.u32 [#allocation2], 4
    %s20 = int_to_ptr.vmem [resolvable:$true] %s19
    %22 = dma.hbm_to_vmem [thread:$0]  %s18, 16, %s20, [#allocation3]
    %24 = dma.done [#allocation1], 16
    %26 = dma.done [#allocation3], 16
    %v27 = vld [vmem:[#allocation0] sm:$0x1]
    %v28 = vld [vmem:[#allocation2] sm:$0x1]
    %29 = xla_tuple %v27, %v28
    %30 = xla_tuple %29
    %v31 = vmul.f32 %v27, %v28
    %32 = xla_tuple %v31
    %33 = vst [vmem:[%s2] sm:$0x1] %v31
    %34 = vsyncpa [#allocation1], 1
    %35 = vsyncpa [#allocation3], 1

// kernel: mul.34
$region0: #{mul.34}
  %s0 = inlined_call_operand.vmem [shape: f32[32,5], index: 0, kind: input, shape index: {}]
  %s1 = inlined_call_operand.vmem [shape: f32[160], index: 1, kind: output, shape index: {}]
  $region1: #{mul.34} parent=0
    #allocation0 [shape = 'u8[4096]{0}', space=vmem, size = 0x1000, scoped, tag = 'scoped mem for output reshape']
    %v2 = vld [vmem:[%s0] sm:$0x1]
    %vm3 = vcmask 39936
    %4 = vst.msk [vmem:[#allocation0] sm:$0x1] %vm3, %v2
    %s5 = scalar_lea.vmem %s0, 25
    %v6 = vld [vmem:[%s5] sm:$0x1]
    %s7 = scalar_lea.vmem %s0, 25
    %v8 = vld [vmem:[%s7] sm:$0x1]
    %vm9 = vcmask 23552
    %v10 = vsel %vm9, %v8, %v6
    %11 = vrot.lane.b32.xlu0 %v10, 125
    %v12 = vpop.permute.xlu0 %11
    %vm13 = vcmask 15360
    %s14 = scalar_lea.vmem [#allocation0], 1
    %15 = vst.msk [vmem:[%s14] sm:$0x1] %vm13, %v12
    %vm16 = vcmask 1048552
    %17 = vst.msk [vmem:[#allocation0] sm:$0x1] %vm16, %v12
    %s18 = scalar_lea.vmem %s0, 24
    %v19 = vld [vmem:[%s18] sm:$0x1]
    %20 = vrot.lane.b32.xlu0 %v19, 120
    %v21 = vpop.permute.xlu0 %20
    %vm22 = vcmask 1023936
    %23 = vst.msk [vmem:[#allocation0] sm:$0x1] %vm22, %v21
    %s24 = scalar_lea.vmem %s0, 23
    %v25 = vld [vmem:[%s24] sm:$0x1]
    %26 = vrot.lane.b32.xlu0 %v25, 115
    %v27 = vpop.permute.xlu0 %26
    %vm28 = vcmask 982936
    %29 = vst.msk [vmem:[#allocation0] sm:$0x1] %vm28, %v27
    %s30 = scalar_lea.vmem %s0, 22
    %v31 = vld [vmem:[%s30] sm:$0x1]
    %32 = vrot.lane.b32.xlu0 %v31, 110
    %v33 = vpop.permute.xlu0 %32
    %vm34 = vcmask 941936
    %35 = vst.msk [vmem:[#allocation0] sm:$0x1] %vm34, %v33
    %s36 = scalar_lea.vmem %s0, 21
    %v37 = vld [vmem:[%s36] sm:$0x1]
    %38 = vrot.lane.b32.xlu0 %v37, 105
    %v39 = vpop.permute.xlu0 %38
    %vm40 = vcmask 900936
    %41 = vst.msk [vmem:[#allocation0] sm:$0x1] %vm40, %v39
    %s42 = scalar_lea.vmem %s0, 20
    %v43 = vld [vmem:[%s42] sm:$0x1]
    %44 = vrot.lane.b32.xlu0 %v43, 100
    %v45 = vpop.permute.xlu0 %44
    %vm46 = vcmask 859936
    %47 = vst.msk [vmem:[#allocation0] sm:$0x1] %vm46, %v45
    %s48 = scalar_lea.vmem %s0, 19
    %v49 = vld [vmem:[%s48] sm:$0x1]
    %50 = vrot.lane.b32.xlu0 %v49, 95
    %v51 = vpop.permute.xlu0 %50
    %vm52 = vcmask 818936
    %53 = vst.msk [vmem:[#allocation0] sm:$0x1] %vm52, %v51
    %s54 = scalar_lea.vmem %s0, 18
    %v55 = vld [vmem:[%s54] sm:$0x1]
    %56 = vrot.lane.b32.xlu0 %v55, 90
    %v57 = vpop.permute.xlu0 %56
    %vm58 = vcmask 777936
    %59 = vst.msk [vmem:[#allocation0] sm:$0x1] %vm58, %v57
    %s60 = scalar_lea.vmem %s0, 17
    %v61 = vld [vmem:[%s60] sm:$0x1]
    %62 = vrot.lane.b32.xlu0 %v61, 85
    %v63 = vpop.permute.xlu0 %62
    %vm64 = vcmask 736936
    %65 = vst.msk [vmem:[#allocation0] sm:$0x1] %vm64, %v63
    %s66 = scalar_lea.vmem %s0, 16
    %v67 = vld [vmem:[%s66] sm:$0x1]
    %68 = vrot.lane.b32.xlu0 %v67, 80
    %v69 = vpop.permute.xlu0 %68
    %vm70 = vcmask 695936
    %71 = vst.msk [vmem:[#allocation0] sm:$0x1] %vm70, %v69
    %s72 = scalar_lea.vmem %s0, 15
    %v73 = vld [vmem:[%s72] sm:$0x1]
    %74 = vrot.lane.b32.xlu0 %v73, 75
    %v75 = vpop.permute.xlu0 %74
    %vm76 = vcmask 654936
    %77 = vst.msk [vmem:[#allocation0] sm:$0x1] %vm76, %v75
    %s78 = scalar_lea.vmem %s0, 14
    %v79 = vld [vmem:[%s78] sm:$0x1]
    %80 = vrot.lane.b32.xlu0 %v79, 70
    %v81 = vpop.permute.xlu0 %80
    %vm82 = vcmask 613936
    %83 = vst.msk [vmem:[#allocation0] sm:$0x1] %vm82, %v81
    %s84 = scalar_lea.vmem %s0, 13
    %v85 = vld [vmem:[%s84] sm:$0x1]
    %86 = vrot.lane.b32.xlu0 %v85, 65
    %v87 = vpop.permute.xlu0 %86
    %vm88 = vcmask 572936
    %89 = vst.msk [vmem:[#allocation0] sm:$0x1] %vm88, %v87
    %s90 = scalar_lea.vmem %s0, 12
    %v91 = vld [vmem:[%s90] sm:$0x1]
    %92 = vrot.lane.b32.xlu0 %v91, 60
    %v93 = vpop.permute.xlu0 %92
    %vm94 = vcmask 531936
    %95 = vst.msk [vmem:[#allocation0] sm:$0x1] %vm94, %v93
    %s96 = scalar_lea.vmem %s0, 11
    %v97 = vld [vmem:[%s96] sm:$0x1]
    %98 = vrot.lane.b32.xlu0 %v97, 55
    %v99 = vpop.permute.xlu0 %98
    %vm100 = vcmask 490936
    %101 = vst.msk [vmem:[#allocation0] sm:$0x1] %vm100, %v99
    %s102 = scalar_lea.vmem %s0, 10
    %v103 = vld [vmem:[%s102] sm:$0x1]
    %104 = vrot.lane.b32.xlu0 %v103, 50
    %v105 = vpop.permute.xlu0 %104
    %vm106 = vcmask 449936
    %107 = vst.msk [vmem:[#allocation0] sm:$0x1] %vm106, %v105
    %s108 = scalar_lea.vmem %s0, 9
    %v109 = vld [vmem:[%s108] sm:$0x1]
    %110 = vrot.lane.b32.xlu0 %v109, 45
    %v111 = vpop.permute.xlu0 %110
    %vm112 = vcmask 408936
    %113 = vst.msk [vmem:[#allocation0] sm:$0x1] %vm112, %v111
    %s114 = scalar_lea.vmem %s0, 8
    %v115 = vld [vmem:[%s114] sm:$0x1]
    %116 = vrot.lane.b32.xlu0 %v115, 40
    %v117 = vpop.permute.xlu0 %116
    %vm118 = vcmask 367936
    %119 = vst.msk [vmem:[#allocation0] sm:$0x1] %vm118, %v117
    %s120 = scalar_lea.vmem %s0, 7
    %v121 = vld [vmem:[%s120] sm:$0x1]
    %122 = vrot.lane.b32.xlu0 %v121, 35
    %v123 = vpop.permute.xlu0 %122
    %vm124 = vcmask 326936
    %125 = vst.msk [vmem:[#allocation0] sm:$0x1] %vm124, %v123
    %s126 = scalar_lea.vmem %s0, 6
    %v127 = vld [vmem:[%s126] sm:$0x1]
    %128 = vrot.lane.b32.xlu0 %v127, 30
    %v129 = vpop.permute.xlu0 %128
    %vm130 = vcmask 285936
    %131 = vst.msk [vmem:[#allocation0] sm:$0x1] %vm130, %v129
    %s132 = scalar_lea.vmem %s0, 31
    %v133 = vld [vmem:[%s132] sm:$0x1]
    %134 = vrot.lane.b32.xlu0 %v133, 27
    %v135 = vpop.permute.xlu0 %134
    %vm136 = vcmask 261336
    %s137 = scalar_lea.vmem [#allocation0], 1
    %138 = vst.msk [vmem:[%s137] sm:$0x1] %vm136, %v135
    %s139 = scalar_lea.vmem %s0, 5
    %v140 = vld [vmem:[%s139] sm:$0x1]
    %141 = vrot.lane.b32.xlu0 %v140, 25
    %v142 = vpop.permute.xlu0 %141
    %vm143 = vcmask 244936
    %144 = vst.msk [vmem:[#allocation0] sm:$0x1] %vm143, %v142
    %s145 = scalar_lea.vmem %s0, 30
    %v146 = vld [vmem:[%s145] sm:$0x1]
    %147 = vrot.lane.b32.xlu0 %v146, 22
    %v148 = vpop.permute.xlu0 %147
    %vm149 = vcmask 220336
    %s150 = scalar_lea.vmem [#allocation0], 1
    %151 = vst.msk [vmem:[%s150] sm:$0x1] %vm149, %v148
    %s152 = scalar_lea.vmem %s0, 4
    %v153 = vld [vmem:[%s152] sm:$0x1]
    %154 = vrot.lane.b32.xlu0 %v153, 20
    %v155 = vpop.permute.xlu0 %154
    %vm156 = vcmask 203936
    %157 = vst.msk [vmem:[#allocation0] sm:$0x1] %vm156, %v155
    %s158 = scalar_lea.vmem %s0, 29
    %v159 = vld [vmem:[%s158] sm:$0x1]
    %160 = vrot.lane.b32.xlu0 %v159, 17
    %v161 = vpop.permute.xlu0 %160
    %vm162 = vcmask 179336
    %s163 = scalar_lea.vmem [#allocation0], 1
    %164 = vst.msk [vmem:[%s163] sm:$0x1] %vm162, %v161
    %s165 = scalar_lea.vmem %s0, 3
    %v166 = vld [vmem:[%s165] sm:$0x1]
    %167 = vrot.lane.b32.xlu0 %v166, 15
    %v168 = vpop.permute.xlu0 %167
    %vm169 = vcmask 162936
    %170 = vst.msk [vmem:[#allocation0] sm:$0x1] %vm169, %v168
    %s171 = scalar_lea.vmem %s0, 28
    %v172 = vld [vmem:[%s171] sm:$0x1]
    %173 = vrot.lane.b32.xlu0 %v172, 12
    %v174 = vpop.permute.xlu0 %173
    %vm175 = vcmask 138336
    %s176 = scalar_lea.vmem [#allocation0], 1
    %177 = vst.msk [vmem:[%s176] sm:$0x1] %vm175, %v174
    %s178 = scalar_lea.vmem %s0, 2
    %v179 = vld [vmem:[%s178] sm:$0x1]
    %180 = vrot.lane.b32.xlu0 %v179, 10
    %v181 = vpop.permute.xlu0 %180
    %vm182 = vcmask 121936
    %183 = vst.msk [vmem:[#allocation0] sm:$0x1] %vm182, %v181
    %s184 = scalar_lea.vmem %s0, 27
    %v185 = vld [vmem:[%s184] sm:$0x1]
    %186 = vrot.lane.b32.xlu0 %v185, 7
    %v187 = vpop.permute.xlu0 %186
    %vm188 = vcmask 97336
    %s189 = scalar_lea.vmem [#allocation0], 1
    %190 = vst.msk [vmem:[%s189] sm:$0x1] %vm188, %v187
    %s191 = scalar_lea.vmem %s0, 1
    %v192 = vld [vmem:[%s191] sm:$0x1]
    %193 = vrot.lane.b32.xlu0 %v192, 5
    %v194 = vpop.permute.xlu0 %193
    %vm195 = vcmask 80936
    %196 = vst.msk [vmem:[#allocation0] sm:$0x1] %vm195, %v194
    %s197 = scalar_lea.vmem %s0, 26
    %v198 = vld [vmem:[%s197] sm:$0x1]
    %199 = vrot.lane.b32.xlu0 %v198, 2
    %v200 = vpop.permute.xlu0 %199
    %vm201 = vcmask 56336
    %s202 = scalar_lea.vmem [#allocation0], 1
    %203 = vst.msk [vmem:[%s202] sm:$0x1] %vm201, %v200
    %s205 = ssub.s32 4, 1
    %v206 = vld [vmem:[#allocation0] sm:%s205]
    %s208 = ssub.s32 4, 1
    %209 = vst [vmem:[%s1] sm:%s208] %v206

// kernel: aspp_mnet_forward.2
$region0: #{aspp_mnet_forward.2}
  #allocation0 [shape = 'u32[]', space=smem, size = 0x4, offset = 0x4, fixed_abs, tag = 'smem constant byte address 0x4 - core index']
  #allocation1 [shape = 'u32[72,128]{1,0:T(1,128)}', space=vmem, size = 0x9000, scoped, tag = 'internal scratch']
  %s0 = inlined_call_operand.vmem [shape: bf16[512,16], index: 0, kind: input, shape index: {}]
  %s1 = inlined_call_operand.vmem [shape: bf16[16,32], index: 1, kind: input, shape index: {}]
  %s2 = inlined_call_operand.hbm [shape: f32[1,32], index: 2, kind: input, shape index: {}]
  %s3 = inlined_call_operand.hbm [shape: f32[1,32], index: 3, kind: input, shape index: {}]
  %s4 = inlined_call_operand.vmem [shape: bf16[512,32], index: 4, kind: output, shape index: {}]
  %s5 = sld [smem:[#allocation0]]
  $region34: #{aspp_mnet_forward.2} parent=0
    _
  %s7 = ssub.s32 1, %s5
  %s8 = scalar_select 0, %s7, %s5
  $region1: #{aspp_mnet_forward.2} parent=0
    #allocation2 [shape = 'u8[512]{0}', space=vmem, size = 0x400, scoped, tag = 'input window, operand 2, single buffered']
    #allocation3 [shape = 's32[1]{0}', space=sflag, size = 0x4, scoped, tag = 'scoped memory for aspp_mnet_forward.2']
    #allocation4 [shape = 'u8[512]{0}', space=vmem, size = 0x400, scoped, tag = 'input window, operand 3, single buffered']
    #allocation5 [shape = 's32[1]{0}', space=sflag, size = 0x4, scoped, tag = 'scoped memory for aspp_mnet_forward.2']
    %9 = vsyncpa [#allocation3], 0
    %10 = vsyncpa [#allocation5], 0
    // Predicated region
    $region2: #{aspp_mnet_forward.2} parent=1 // pred_check
      _
    $region3: #{aspp_mnet_forward.2} parent=1 // pred_check_branch
      %12 = sbr.rel (0) target = $region5
    $region4: #{aspp_mnet_forward.2} parent=1 // pred_region
      _
    $region5: #{aspp_mnet_forward.2} parent=1 // pred_fallthru
      _
    // Predicated region
    $region6: #{aspp_mnet_forward.2} parent=1 // pred_check
      _
    $region7: #{aspp_mnet_forward.2} parent=1 // pred_check_branch
      %14 = sbr.rel (0) target = $region9
    $region8: #{aspp_mnet_forward.2} parent=1 // pred_region
      _
    $region9: #{aspp_mnet_forward.2} parent=1 // pred_fallthru
      _
    // Predicated region
    $region10: #{aspp_mnet_forward.2} parent=1 // pred_check
      _
    $region11: #{aspp_mnet_forward.2} parent=1 // pred_check_branch
      %16 = sbr.rel (0) target = $region13
    $region12: #{aspp_mnet_forward.2} parent=1 // pred_region
      %18 = vsyncadd [#allocation3], 0
      %s20 = sshll.u32 %s2, 4
      %s21 = int_to_ptr.hbm [resolvable:$true] %s20
      %s22 = sshll.u32 [#allocation2], 4
      %s23 = int_to_ptr.vmem [resolvable:$true] %s22
      %25 = dma.hbm_to_vmem [thread:$0]  %s21, 16, %s23, [#allocation3]
    $region13: #{aspp_mnet_forward.2} parent=1 // pred_fallthru
      _
    // Predicated region
    $region14: #{aspp_mnet_forward.2} parent=1 // pred_check
      _
    $region15: #{aspp_mnet_forward.2} parent=1 // pred_check_branch
      %27 = sbr.rel (0) target = $region17
    $region16: #{aspp_mnet_forward.2} parent=1 // pred_region
      %29 = vsyncadd [#allocation5], 0
      %s31 = sshll.u32 %s3, 4
      %s32 = int_to_ptr.hbm [resolvable:$true] %s31
      %s33 = sshll.u32 [#allocation4], 4
      %s34 = int_to_ptr.vmem [resolvable:$true] %s33
      %36 = dma.hbm_to_vmem [thread:$0]  %s32, 16, %s34, [#allocation5]
    $region17: #{aspp_mnet_forward.2} parent=1 // pred_fallthru
      _
    // Predicated region
    $region18: #{aspp_mnet_forward.2} parent=1 // pred_check
      _
    $region19: #{aspp_mnet_forward.2} parent=1 // pred_check_branch
      %38 = sbr.rel (0) target = $region21
    $region20: #{aspp_mnet_forward.2} parent=1 // pred_region
      %40 = dma.done [#allocation3], 16
    $region21: #{aspp_mnet_forward.2} parent=1 // pred_fallthru
      _
    // Predicated region
    $region22: #{aspp_mnet_forward.2} parent=1 // pred_check
      _
    $region23: #{aspp_mnet_forward.2} parent=1 // pred_check_branch
      %42 = sbr.rel (0) target = $region25
    $region24: #{aspp_mnet_forward.2} parent=1 // pred_region
      %44 = dma.done [#allocation5], 16
    $region25: #{aspp_mnet_forward.2} parent=1 // pred_fallthru
      _
    %v46 = vld [vmem:[%s0] sm:$0xf]
    %v47 = vld [vmem:[%s0 + $0x4] sm:$0xf]
    %v48 = vld [vmem:[%s0 + $0x8] sm:$0xf]
    %v49 = vld [vmem:[%s0 + $0xc] sm:$0xf]
    %v50 = vld [vmem:[%s0 + $0x10] sm:$0xf]
    %v51 = vld [vmem:[%s0 + $0x14] sm:$0xf]
    %v52 = vld [vmem:[%s0 + $0x18] sm:$0xf]
    %v53 = vld [vmem:[%s0 + $0x1c] sm:$0xf]
    %v54 = vld [vmem:[%s0 + $0x20] sm:$0xf]
    %v55 = vld [vmem:[%s0 + $0x24] sm:$0xf]
    %v56 = vld [vmem:[%s0 + $0x28] sm:$0xf]
    %v57 = vld [vmem:[%s0 + $0x2c] sm:$0xf]
    %v58 = vld [vmem:[%s0 + $0x30] sm:$0xf]
    %v59 = vld [vmem:[%s0 + $0x34] sm:$0xf]
    %v60 = vld [vmem:[%s0 + $0x38] sm:$0xf]
    %v61 = vld [vmem:[%s0 + $0x3c] sm:$0xf]
    %v62 = vld [vmem:[%s0 + $0x40] sm:$0xf]
    %v63 = vld [vmem:[%s0 + $0x44] sm:$0xf]
    %v64 = vld [vmem:[%s0 + $0x48] sm:$0xf]
    %v65 = vld [vmem:[%s0 + $0x4c] sm:$0xf]
    %v66 = vld [vmem:[%s0 + $0x50] sm:$0xf]
    %v67 = vld [vmem:[%s0 + $0x54] sm:$0xf]
    %v68 = vld [vmem:[%s0 + $0x58] sm:$0xf]
    %v69 = vld [vmem:[%s0 + $0x5c] sm:$0xf]
    %v70 = vld [vmem:[%s0 + $0x60] sm:$0xf]
    %v71 = vld [vmem:[%s0 + $0x64] sm:$0xf]
    %v72 = vld [vmem:[%s0 + $0x68] sm:$0xf]
    %v73 = vld [vmem:[%s0 + $0x6c] sm:$0xf]
    %v74 = vld [vmem:[%s0 + $0x70] sm:$0xf]
    %v75 = vld [vmem:[%s0 + $0x74] sm:$0xf]
    %v76 = vld [vmem:[%s0 + $0x78] sm:$0xf]
    %v77 = vld [vmem:[%s0 + $0x7c] sm:$0xf]
    %v78 = vld [vmem:[%s0 + $0x80] sm:$0xf]
    %v79 = vld [vmem:[%s0 + $0x84] sm:$0xf]
    %v80 = vld [vmem:[%s0 + $0x88] sm:$0xf]
    %v81 = vld [vmem:[%s0 + $0x8c] sm:$0xf]
    %v82 = vld [vmem:[%s0 + $0x90] sm:$0xf]
    %v83 = vld [vmem:[%s0 + $0x94] sm:$0xf]
    %v84 = vld [vmem:[%s0 + $0x98] sm:$0xf]
    %v85 = vld [vmem:[%s0 + $0x9c] sm:$0xf]
    %v86 = vld [vmem:[%s0 + $0xa0] sm:$0xf]
    %v87 = vld [vmem:[%s0 + $0xa4] sm:$0xf]
    %v88 = vld [vmem:[%s0 + $0xa8] sm:$0xf]
    %v89 = vld [vmem:[%s0 + $0xac] sm:$0xf]
    %v90 = vld [vmem:[%s0 + $0xb0] sm:$0xf]
    %v91 = vld [vmem:[%s0 + $0xb4] sm:$0xf]
    %v92 = vld [vmem:[%s0 + $0xb8] sm:$0xf]
    %v93 = vld [vmem:[%s0 + $0xbc] sm:$0xf]
    %v94 = vld [vmem:[%s0 + $0xc0] sm:$0xf]
    %v95 = vld [vmem:[%s0 + $0xc4] sm:$0xf]
    %v96 = vld [vmem:[%s0 + $0xc8] sm:$0xf]
    %v97 = vld [vmem:[%s0 + $0xcc] sm:$0xf]
    %v98 = vld [vmem:[%s0 + $0xd0] sm:$0xf]
    %v99 = vld [vmem:[%s0 + $0xd4] sm:$0xf]
    %v100 = vld [vmem:[%s0 + $0xd8] sm:$0xf]
    %v101 = vld [vmem:[%s0 + $0xdc] sm:$0xf]
    %v102 = vld [vmem:[%s0 + $0xe0] sm:$0xf]
    %v103 = vld [vmem:[%s0 + $0xe4] sm:$0xf]
    %v104 = vld [vmem:[%s0 + $0xe8] sm:$0xf]
    %v105 = vld [vmem:[%s0 + $0xec] sm:$0xf]
    %v106 = vld [vmem:[%s0 + $0xf0] sm:$0xf]
    %v107 = vld [vmem:[%s0 + $0xf4] sm:$0xf]
    %v108 = vld [vmem:[%s0 + $0xf8] sm:$0xf]
    %v109 = vld [vmem:[%s0 + $0xfc] sm:$0xf]
    %v110 = vld [vmem:[%s1] sm:$0xf]
    %v111 = vld [vmem:[%s1 + $0x4] sm:$0xf]
    %v176 = vunpack.c.l.b16 %v46
    %v177 = vunpack.c.l.b16 %v47
    %v178 = vunpack.c.l.b16 %v48
    %v179 = vunpack.c.l.b16 %v49
    %v180 = vunpack.c.l.b16 %v50
    %v181 = vunpack.c.l.b16 %v51
    %v182 = vunpack.c.l.b16 %v52
    %v183 = vunpack.c.l.b16 %v53
    %v184 = vunpack.c.l.b16 %v54
    %v185 = vunpack.c.l.b16 %v55
    %v186 = vunpack.c.l.b16 %v56
    %v187 = vunpack.c.l.b16 %v57
    %v188 = vunpack.c.l.b16 %v58
    %v189 = vunpack.c.l.b16 %v59
    %v190 = vunpack.c.l.b16 %v60
    %v191 = vunpack.c.l.b16 %v61
    %v192 = vunpack.c.l.b16 %v62
    %v193 = vunpack.c.l.b16 %v63
    %v194 = vunpack.c.l.b16 %v64
    %v195 = vunpack.c.l.b16 %v65
    %v196 = vunpack.c.l.b16 %v66
    %v197 = vunpack.c.l.b16 %v67
    %v198 = vunpack.c.l.b16 %v68
    %v199 = vunpack.c.l.b16 %v69
    %v200 = vunpack.c.l.b16 %v70
    %v201 = vunpack.c.l.b16 %v71
    %v202 = vunpack.c.l.b16 %v72
    %v203 = vunpack.c.l.b16 %v73
    %v204 = vunpack.c.l.b16 %v74
    %v205 = vunpack.c.l.b16 %v75
    %v206 = vunpack.c.l.b16 %v76
    %v207 = vunpack.c.l.b16 %v77
    %v208 = vunpack.c.l.b16 %v78
    %v209 = vunpack.c.l.b16 %v79
    %v210 = vunpack.c.l.b16 %v80
    %v211 = vunpack.c.l.b16 %v81
    %v212 = vunpack.c.l.b16 %v82
    %v213 = vunpack.c.l.b16 %v83
    %v214 = vunpack.c.l.b16 %v84
    %v215 = vunpack.c.l.b16 %v85
    %v216 = vunpack.c.l.b16 %v86
    %v217 = vunpack.c.l.b16 %v87
    %v218 = vunpack.c.l.b16 %v88
    %v219 = vunpack.c.l.b16 %v89
    %v220 = vunpack.c.l.b16 %v90
    %v221 = vunpack.c.l.b16 %v91
    %v222 = vunpack.c.l.b16 %v92
    %v223 = vunpack.c.l.b16 %v93
    %v224 = vunpack.c.l.b16 %v94
    %v225 = vunpack.c.l.b16 %v95
    %v226 = vunpack.c.l.b16 %v96
    %v227 = vunpack.c.l.b16 %v97
    %v228 = vunpack.c.l.b16 %v98
    %v229 = vunpack.c.l.b16 %v99
    %v230 = vunpack.c.l.b16 %v100
    %v231 = vunpack.c.l.b16 %v101
    %v232 = vunpack.c.l.b16 %v102
    %v233 = vunpack.c.l.b16 %v103
    %v234 = vunpack.c.l.b16 %v104
    %v235 = vunpack.c.l.b16 %v105
    %v236 = vunpack.c.l.b16 %v106
    %v237 = vunpack.c.l.b16 %v107
    %v238 = vunpack.c.l.b16 %v108
    %v239 = vunpack.c.l.b16 %v109
    %v240 = vpack.c.b16 %v177, %v176
    %v241 = vpack.c.b16 %v179, %v178
    %v242 = vpack.c.b16 %v181, %v180
    %v243 = vpack.c.b16 %v183, %v182
    %v244 = vpack.c.b16 %v185, %v184
    %v245 = vpack.c.b16 %v187, %v186
    %v246 = vpack.c.b16 %v189, %v188
    %v247 = vpack.c.b16 %v191, %v190
    %v248 = vpack.c.b16 %v193, %v192
    %v249 = vpack.c.b16 %v195, %v194
    %v250 = vpack.c.b16 %v197, %v196
    %v251 = vpack.c.b16 %v199, %v198
    %v252 = vpack.c.b16 %v201, %v200
    %v253 = vpack.c.b16 %v203, %v202
    %v254 = vpack.c.b16 %v205, %v204
    %v255 = vpack.c.b16 %v207, %v206
    %v256 = vpack.c.b16 %v209, %v208
    %v257 = vpack.c.b16 %v211, %v210
    %v258 = vpack.c.b16 %v213, %v212
    %v259 = vpack.c.b16 %v215, %v214
    %v260 = vpack.c.b16 %v217, %v216
    %v261 = vpack.c.b16 %v219, %v218
    %v262 = vpack.c.b16 %v221, %v220
    %v263 = vpack.c.b16 %v223, %v222
    %v264 = vpack.c.b16 %v225, %v224
    %v265 = vpack.c.b16 %v227, %v226
    %v266 = vpack.c.b16 %v229, %v228
    %v267 = vpack.c.b16 %v231, %v230
    %v268 = vpack.c.b16 %v233, %v232
    %v269 = vpack.c.b16 %v235, %v234
    %v270 = vpack.c.b16 %v237, %v236
    %v271 = vpack.c.b16 %v239, %v238
    %v274 = vunpack.c.l.b16 %v110
    %v275 = vunpack.c.l.b16 %v111
    %v276 = vpack.c.b16 %v275, %v274
    %vm278 = vcmask 130048
    %v280 = vsel %vm278, %v240, 0
    %v283 = vsel %vm278, %v241, 0
    %v286 = vsel %vm278, %v242, 0
    %v289 = vsel %vm278, %v243, 0
    %v292 = vsel %vm278, %v244, 0
    %v295 = vsel %vm278, %v245, 0
    %v298 = vsel %vm278, %v246, 0
    %v301 = vsel %vm278, %v247, 0
    %v304 = vsel %vm278, %v248, 0
    %v307 = vsel %vm278, %v249, 0
    %v310 = vsel %vm278, %v250, 0
    %v313 = vsel %vm278, %v251, 0
    %v316 = vsel %vm278, %v252, 0
    %v319 = vsel %vm278, %v253, 0
    %v322 = vsel %vm278, %v254, 0
    %v325 = vsel %vm278, %v255, 0
    %v328 = vsel %vm278, %v256, 0
    %v331 = vsel %vm278, %v257, 0
    %v334 = vsel %vm278, %v258, 0
    %v337 = vsel %vm278, %v259, 0
    %v340 = vsel %vm278, %v260, 0
    %v343 = vsel %vm278, %v261, 0
    %v346 = vsel %vm278, %v262, 0
    %v349 = vsel %vm278, %v263, 0
    %v352 = vsel %vm278, %v264, 0
    %v355 = vsel %vm278, %v265, 0
    %v358 = vsel %vm278, %v266, 0
    %v361 = vsel %vm278, %v267, 0
    %v364 = vsel %vm278, %v268, 0
    %v367 = vsel %vm278, %v269, 0
    %v370 = vsel %vm278, %v270, 0
    %v373 = vsel %vm278, %v271, 0
    %375 = vmatpush.bf16.msra.mxu0 0
    %376 = vmatpush.bf16.msra.mxu0 0
    %377 = vmatpush.bf16.msra.mxu0 0
    %378 = vmatpush.bf16.msra.mxu0 0
    %379 = vmatpush.bf16.msra.mxu0 0
    %380 = vmatpush.bf16.msra.mxu0 0
    %381 = vmatpush.bf16.msra.mxu0 0
    %382 = vmatpush.bf16.msra.mxu0 %v276
    %383 = vmatmul.bf16.gmra.mxu0 %v280
    %v384 = vpop.f32.mrf.mxu0
    %v385 = vadd.f32 0.0, %v384
    %v386 = vpop.f32.mrf.mxu0
    %v387 = vadd.f32 0.0, %v386
    %388 = vmatmul.bf16.gmra.mxu0 %v283
    %v389 = vpop.f32.mrf.mxu0
    %v390 = vadd.f32 0.0, %v389
    %v391 = vpop.f32.mrf.mxu0
    %v392 = vadd.f32 0.0, %v391
    %393 = vmatmul.bf16.gmra.mxu0 %v286
    %v394 = vpop.f32.mrf.mxu0
    %v395 = vadd.f32 0.0, %v394
    %v396 = vpop.f32.mrf.mxu0
    %v397 = vadd.f32 0.0, %v396
    %398 = vmatmul.bf16.gmra.mxu0 %v289
    %v399 = vpop.f32.mrf.mxu0
    %v400 = vadd.f32 0.0, %v399
    %v401 = vpop.f32.mrf.mxu0
    %v402 = vadd.f32 0.0, %v401
    %403 = vmatmul.bf16.gmra.mxu0 %v292
    %v404 = vpop.f32.mrf.mxu0
    %v405 = vadd.f32 0.0, %v404
    %v406 = vpop.f32.mrf.mxu0
    %v407 = vadd.f32 0.0, %v406
    %408 = vmatmul.bf16.gmra.mxu0 %v295
    %v409 = vpop.f32.mrf.mxu0
    %v410 = vadd.f32 0.0, %v409
    %v411 = vpop.f32.mrf.mxu0
    %v412 = vadd.f32 0.0, %v411
    %413 = vmatmul.bf16.gmra.mxu0 %v298
    %v414 = vpop.f32.mrf.mxu0
    %v415 = vadd.f32 0.0, %v414
    %v416 = vpop.f32.mrf.mxu0
    %v417 = vadd.f32 0.0, %v416
    %418 = vmatmul.bf16.gmra.mxu0 %v301
    %v419 = vpop.f32.mrf.mxu0
    %v420 = vadd.f32 0.0, %v419
    %v421 = vpop.f32.mrf.mxu0
    %v422 = vadd.f32 0.0, %v421
    %423 = vmatmul.bf16.gmra.mxu0 %v304
    %v424 = vpop.f32.mrf.mxu0
    %v425 = vadd.f32 0.0, %v424
    %v426 = vpop.f32.mrf.mxu0
    %v427 = vadd.f32 0.0, %v426
    %428 = vmatmul.bf16.gmra.mxu0 %v307
    %v429 = vpop.f32.mrf.mxu0
    %v430 = vadd.f32 0.0, %v429
    %v431 = vpop.f32.mrf.mxu0
    %v432 = vadd.f32 0.0, %v431
    %433 = vmatmul.bf16.gmra.mxu0 %v310
    %v434 = vpop.f32.mrf.mxu0
    %v435 = vadd.f32 0.0, %v434
    %v436 = vpop.f32.mrf.mxu0
    %v437 = vadd.f32 0.0, %v436
    %438 = vmatmul.bf16.gmra.mxu0 %v313
    %v439 = vpop.f32.mrf.mxu0
    %v440 = vadd.f32 0.0, %v439
    %v441 = vpop.f32.mrf.mxu0
    %v442 = vadd.f32 0.0, %v441
    %443 = vmatmul.bf16.gmra.mxu0 %v316
    %v444 = vpop.f32.mrf.mxu0
    %v445 = vadd.f32 0.0, %v444
    %v446 = vpop.f32.mrf.mxu0
    %v447 = vadd.f32 0.0, %v446
    %448 = vmatmul.bf16.gmra.mxu0 %v319
    %v449 = vpop.f32.mrf.mxu0
    %v450 = vadd.f32 0.0, %v449
    %v451 = vpop.f32.mrf.mxu0
    %v452 = vadd.f32 0.0, %v451
    %453 = vmatmul.bf16.gmra.mxu0 %v322
    %v454 = vpop.f32.mrf.mxu0
    %v455 = vadd.f32 0.0, %v454
    %v456 = vpop.f32.mrf.mxu0
    %v457 = vadd.f32 0.0, %v456
    %458 = vmatmul.bf16.gmra.mxu0 %v325
    %v459 = vpop.f32.mrf.mxu0
    %v460 = vadd.f32 0.0, %v459
    %v461 = vpop.f32.mrf.mxu0
    %v462 = vadd.f32 0.0, %v461
    %463 = vmatmul.bf16.gmra.mxu0 %v328
    %v464 = vpop.f32.mrf.mxu0
    %v465 = vadd.f32 0.0, %v464
    %v466 = vpop.f32.mrf.mxu0
    %v467 = vadd.f32 0.0, %v466
    %468 = vmatmul.bf16.gmra.mxu0 %v331
    %v469 = vpop.f32.mrf.mxu0
    %v470 = vadd.f32 0.0, %v469
    %v471 = vpop.f32.mrf.mxu0
    %v472 = vadd.f32 0.0, %v471
    %473 = vmatmul.bf16.gmra.mxu0 %v334
    %v474 = vpop.f32.mrf.mxu0
    %v475 = vadd.f32 0.0, %v474
    %v476 = vpop.f32.mrf.mxu0
    %v477 = vadd.f32 0.0, %v476
    %478 = vmatmul.bf16.gmra.mxu0 %v337
    %v479 = vpop.f32.mrf.mxu0
    %v480 = vadd.f32 0.0, %v479
    %v481 = vpop.f32.mrf.mxu0
    %v482 = vadd.f32 0.0, %v481
    %483 = vmatmul.bf16.gmra.mxu0 %v340
    %v484 = vpop.f32.mrf.mxu0
    %v485 = vadd.f32 0.0, %v484
    %v486 = vpop.f32.mrf.mxu0
    %v487 = vadd.f32 0.0, %v486
    %488 = vmatmul.bf16.gmra.mxu0 %v343
    %v489 = vpop.f32.mrf.mxu0
    %v490 = vadd.f32 0.0, %v489
    %v491 = vpop.f32.mrf.mxu0
    %v492 = vadd.f32 0.0, %v491
    %493 = vmatmul.bf16.gmra.mxu0 %v346
    %v494 = vpop.f32.mrf.mxu0
    %v495 = vadd.f32 0.0, %v494
    %v496 = vpop.f32.mrf.mxu0
    %v497 = vadd.f32 0.0, %v496
    %498 = vmatmul.bf16.gmra.mxu0 %v349
    %v499 = vpop.f32.mrf.mxu0
    %v500 = vadd.f32 0.0, %v499
    %v501 = vpop.f32.mrf.mxu0
    %v502 = vadd.f32 0.0, %v501
    %503 = vmatmul.bf16.gmra.mxu0 %v352
    %v504 = vpop.f32.mrf.mxu0
    %v505 = vadd.f32 0.0, %v504
    %v506 = vpop.f32.mrf.mxu0
    %v507 = vadd.f32 0.0, %v506
    %508 = vmatmul.bf16.gmra.mxu0 %v355
    %v509 = vpop.f32.mrf.mxu0
    %v510 = vadd.f32 0.0, %v509
    %v511 = vpop.f32.mrf.mxu0
    %v512 = vadd.f32 0.0, %v511
    %513 = vmatmul.bf16.gmra.mxu0 %v358
    %v514 = vpop.f32.mrf.mxu0
    %v515 = vadd.f32 0.0, %v514
    %v516 = vpop.f32.mrf.mxu0
    %v517 = vadd.f32 0.0, %v516
    %518 = vmatmul.bf16.gmra.mxu0 %v361
    %v519 = vpop.f32.mrf.mxu0
    %v520 = vadd.f32 0.0, %v519
    %v521 = vpop.f32.mrf.mxu0
    %v522 = vadd.f32 0.0, %v521
    %523 = vmatmul.bf16.gmra.mxu0 %v364
    %v524 = vpop.f32.mrf.mxu0
    %v525 = vadd.f32 0.0, %v524
    %v526 = vpop.f32.mrf.mxu0
    %v527 = vadd.f32 0.0, %v526
    %528 = vmatmul.bf16.gmra.mxu0 %v367
    %v529 = vpop.f32.mrf.mxu0
    %v530 = vadd.f32 0.0, %v529
    %v531 = vpop.f32.mrf.mxu0
    %v532 = vadd.f32 0.0, %v531
    %533 = vmatmul.bf16.gmra.mxu0 %v370
    %v534 = vpop.f32.mrf.mxu0
    %v535 = vadd.f32 0.0, %v534
    %v536 = vpop.f32.mrf.mxu0
    %v537 = vadd.f32 0.0, %v536
    %538 = vmatmul.bf16.gmra.mxu0 %v373
    %v539 = vpop.f32.mrf.mxu0
    %v540 = vadd.f32 0.0, %v539
    %v541 = vpop.f32.mrf.mxu0
    %v542 = vadd.f32 0.0, %v541
    %543 = vdwg.mxu0
    %v544 = vld [vmem:[#allocation2] sm:$0x1]
    %v546 = vperm.slane %v544, 0
    %v548 = vmul.f32 %v385, %v546
    %v549 = vmul.f32 %v387, %v546
    %v550 = vmul.f32 %v390, %v546
    %v551 = vmul.f32 %v392, %v546
    %v552 = vmul.f32 %v395, %v546
    %v553 = vmul.f32 %v397, %v546
    %v554 = vmul.f32 %v400, %v546
    %v555 = vmul.f32 %v402, %v546
    %v556 = vmul.f32 %v405, %v546
    %v557 = vmul.f32 %v407, %v546
    %v558 = vmul.f32 %v410, %v546
    %v559 = vmul.f32 %v412, %v546
    %v560 = vmul.f32 %v415, %v546
    %v561 = vmul.f32 %v417, %v546
    %v562 = vmul.f32 %v420, %v546
    %v563 = vmul.f32 %v422, %v546
    %v564 = vmul.f32 %v425, %v546
    %v565 = vmul.f32 %v427, %v546
    %v566 = vmul.f32 %v430, %v546
    %v567 = vmul.f32 %v432, %v546
    %v568 = vmul.f32 %v435, %v546
    %v569 = vmul.f32 %v437, %v546
    %v570 = vmul.f32 %v440, %v546
    %v571 = vmul.f32 %v442, %v546
    %v572 = vmul.f32 %v445, %v546
    %v573 = vmul.f32 %v447, %v546
    %v574 = vmul.f32 %v450, %v546
    %v575 = vmul.f32 %v452, %v546
    %v576 = vmul.f32 %v455, %v546
    %v577 = vmul.f32 %v457, %v546
    %v578 = vmul.f32 %v460, %v546
    %v579 = vmul.f32 %v462, %v546
    %v580 = vmul.f32 %v465, %v546
    %v581 = vmul.f32 %v467, %v546
    %v582 = vmul.f32 %v470, %v546
    %v583 = vmul.f32 %v472, %v546
    %v584 = vmul.f32 %v475, %v546
    %v585 = vmul.f32 %v477, %v546
    %v586 = vmul.f32 %v480, %v546
    %v587 = vmul.f32 %v482, %v546
    %v588 = vmul.f32 %v485, %v546
    %v589 = vmul.f32 %v487, %v546
    %v590 = vmul.f32 %v490, %v546
    %v591 = vmul.f32 %v492, %v546
    %v592 = vmul.f32 %v495, %v546
    %v593 = vmul.f32 %v497, %v546
    %v594 = vmul.f32 %v500, %v546
    %v595 = vmul.f32 %v502, %v546
    %v596 = vmul.f32 %v505, %v546
    %v597 = vmul.f32 %v507, %v546
    %v598 = vmul.f32 %v510, %v546
    %v599 = vmul.f32 %v512, %v546
    %v600 = vmul.f32 %v515, %v546
    %v601 = vmul.f32 %v517, %v546
    %v602 = vmul.f32 %v520, %v546
    %v603 = vmul.f32 %v522, %v546
    %v604 = vmul.f32 %v525, %v546
    %v605 = vmul.f32 %v527, %v546
    %v606 = vmul.f32 %v530, %v546
    %v607 = vmul.f32 %v532, %v546
    %v608 = vmul.f32 %v535, %v546
    %v609 = vmul.f32 %v537, %v546
    %v610 = vmul.f32 %v540, %v546
    %v611 = vmul.f32 %v542, %v546
    %v612 = vld [vmem:[#allocation4] sm:$0x1]
    %v614 = vperm.slane %v612, 0
    %v616 = vadd.f32 %v548, %v614
    %v617 = vadd.f32 %v549, %v614
    %v618 = vadd.f32 %v550, %v614
    %v619 = vadd.f32 %v551, %v614
    %v620 = vadd.f32 %v552, %v614
    %v621 = vadd.f32 %v553, %v614
    %v622 = vadd.f32 %v554, %v614
    %v623 = vadd.f32 %v555, %v614
    %v624 = vadd.f32 %v556, %v614
    %v625 = vadd.f32 %v557, %v614
    %v626 = vadd.f32 %v558, %v614
    %v627 = vadd.f32 %v559, %v614
    %v628 = vadd.f32 %v560, %v614
    %v629 = vadd.f32 %v561, %v614
    %v630 = vadd.f32 %v562, %v614
    %v631 = vadd.f32 %v563, %v614
    %v632 = vadd.f32 %v564, %v614
    %v633 = vadd.f32 %v565, %v614
    %v634 = vadd.f32 %v566, %v614
    %v635 = vadd.f32 %v567, %v614
    %v636 = vadd.f32 %v568, %v614
    %v637 = vadd.f32 %v569, %v614
    %v638 = vadd.f32 %v570, %v614
    %v639 = vadd.f32 %v571, %v614
    %v640 = vadd.f32 %v572, %v614
    %v641 = vadd.f32 %v573, %v614
    %v642 = vadd.f32 %v574, %v614
    %v643 = vadd.f32 %v575, %v614
    %v644 = vadd.f32 %v576, %v614
    %v645 = vadd.f32 %v577, %v614
    %v646 = vadd.f32 %v578, %v614
    %v647 = vadd.f32 %v579, %v614
    %v648 = vadd.f32 %v580, %v614
    %v649 = vadd.f32 %v581, %v614
    %v650 = vadd.f32 %v582, %v614
    %v651 = vadd.f32 %v583, %v614
    %v652 = vadd.f32 %v584, %v614
    %v653 = vadd.f32 %v585, %v614
    %v654 = vadd.f32 %v586, %v614
    %v655 = vadd.f32 %v587, %v614
    %v656 = vadd.f32 %v588, %v614
    %v657 = vadd.f32 %v589, %v614
    %v658 = vadd.f32 %v590, %v614
    %v659 = vadd.f32 %v591, %v614
    %v660 = vadd.f32 %v592, %v614
    %v661 = vadd.f32 %v593, %v614
    %v662 = vadd.f32 %v594, %v614
    %v663 = vadd.f32 %v595, %v614
    %v664 = vadd.f32 %v596, %v614
    %v665 = vadd.f32 %v597, %v614
    %v666 = vadd.f32 %v598, %v614
    %v667 = vadd.f32 %v599, %v614
    %v668 = vadd.f32 %v600, %v614
    %v669 = vadd.f32 %v601, %v614
    %v670 = vadd.f32 %v602, %v614
    %v671 = vadd.f32 %v603, %v614
    %v672 = vadd.f32 %v604, %v614
    %v673 = vadd.f32 %v605, %v614
    %v674 = vadd.f32 %v606, %v614
    %v675 = vadd.f32 %v607, %v614
    %v676 = vadd.f32 %v608, %v614
    %v677 = vadd.f32 %v609, %v614
    %v678 = vadd.f32 %v610, %v614
    %v679 = vadd.f32 %v611, %v614
    %v680 = vmax.f32 %v616, 0.0
    %v681 = vmax.f32 %v617, 0.0
    %v682 = vmax.f32 %v618, 0.0
    %v683 = vmax.f32 %v619, 0.0
    %v684 = vmax.f32 %v620, 0.0
    %v685 = vmax.f32 %v621, 0.0
    %v686 = vmax.f32 %v622, 0.0
    %v687 = vmax.f32 %v623, 0.0
    %v688 = vmax.f32 %v624, 0.0
    %v689 = vmax.f32 %v625, 0.0
    %v690 = vmax.f32 %v626, 0.0
    %v691 = vmax.f32 %v627, 0.0
    %v692 = vmax.f32 %v628, 0.0
    %v693 = vmax.f32 %v629, 0.0
    %v694 = vmax.f32 %v630, 0.0
    %v695 = vmax.f32 %v631, 0.0
    %v696 = vmax.f32 %v632, 0.0
    %v697 = vmax.f32 %v633, 0.0
    %v698 = vmax.f32 %v634, 0.0
    %v699 = vmax.f32 %v635, 0.0
    %v700 = vmax.f32 %v636, 0.0
    %v701 = vmax.f32 %v637, 0.0
    %v702 = vmax.f32 %v638, 0.0
    %v703 = vmax.f32 %v639, 0.0
    %v704 = vmax.f32 %v640, 0.0
    %v705 = vmax.f32 %v641, 0.0
    %v706 = vmax.f32 %v642, 0.0
    %v707 = vmax.f32 %v643, 0.0
    %v708 = vmax.f32 %v644, 0.0
    %v709 = vmax.f32 %v645, 0.0
    %v710 = vmax.f32 %v646, 0.0
    %v711 = vmax.f32 %v647, 0.0
    %v712 = vmax.f32 %v648, 0.0
    %v713 = vmax.f32 %v649, 0.0
    %v714 = vmax.f32 %v650, 0.0
    %v715 = vmax.f32 %v651, 0.0
    %v716 = vmax.f32 %v652, 0.0
    %v717 = vmax.f32 %v653, 0.0
    %v718 = vmax.f32 %v654, 0.0
    %v719 = vmax.f32 %v655, 0.0
    %v720 = vmax.f32 %v656, 0.0
    %v721 = vmax.f32 %v657, 0.0
    %v722 = vmax.f32 %v658, 0.0
    %v723 = vmax.f32 %v659, 0.0
    %v724 = vmax.f32 %v660, 0.0
    %v725 = vmax.f32 %v661, 0.0
    %v726 = vmax.f32 %v662, 0.0
    %v727 = vmax.f32 %v663, 0.0
    %v728 = vmax.f32 %v664, 0.0
    %v729 = vmax.f32 %v665, 0.0
    %v730 = vmax.f32 %v666, 0.0
    %v731 = vmax.f32 %v667, 0.0
    %v732 = vmax.f32 %v668, 0.0
    %v733 = vmax.f32 %v669, 0.0
    %v734 = vmax.f32 %v670, 0.0
    %v735 = vmax.f32 %v671, 0.0
    %v736 = vmax.f32 %v672, 0.0
    %v737 = vmax.f32 %v673, 0.0
    %v738 = vmax.f32 %v674, 0.0
    %v739 = vmax.f32 %v675, 0.0
    %v740 = vmax.f32 %v676, 0.0
    %v741 = vmax.f32 %v677, 0.0
    %v742 = vmax.f32 %v678, 0.0
    %v743 = vmax.f32 %v679, 0.0
    %v744 = vmin.f32 %v680, 6.0
    %v745 = vmin.f32 %v681, 6.0
    %v746 = vmin.f32 %v682, 6.0
    %v747 = vmin.f32 %v683, 6.0
    %v748 = vmin.f32 %v684, 6.0
    %v749 = vmin.f32 %v685, 6.0
    %v750 = vmin.f32 %v686, 6.0
    %v751 = vmin.f32 %v687, 6.0
    %v752 = vmin.f32 %v688, 6.0
    %v753 = vmin.f32 %v689, 6.0
    %v754 = vmin.f32 %v690, 6.0
    %v755 = vmin.f32 %v691, 6.0
    %v756 = vmin.f32 %v692, 6.0
    %v757 = vmin.f32 %v693, 6.0
    %v758 = vmin.f32 %v694, 6.0
    %v759 = vmin.f32 %v695, 6.0
    %v760 = vmin.f32 %v696, 6.0
    %v761 = vmin.f32 %v697, 6.0
    %v762 = vmin.f32 %v698, 6.0
    %v763 = vmin.f32 %v699, 6.0
    %v764 = vmin.f32 %v700, 6.0
    %v765 = vmin.f32 %v701, 6.0
    %v766 = vmin.f32 %v702, 6.0
    %v767 = vmin.f32 %v703, 6.0
    %v768 = vmin.f32 %v704, 6.0
    %v769 = vmin.f32 %v705, 6.0
    %v770 = vmin.f32 %v706, 6.0
    %v771 = vmin.f32 %v707, 6.0
    %v772 = vmin.f32 %v708, 6.0
    %v773 = vmin.f32 %v709, 6.0
    %v774 = vmin.f32 %v710, 6.0
    %v775 = vmin.f32 %v711, 6.0
    %v776 = vmin.f32 %v712, 6.0
    %v777 = vmin.f32 %v713, 6.0
    %v778 = vmin.f32 %v714, 6.0
    %v779 = vmin.f32 %v715, 6.0
    %v780 = vmin.f32 %v716, 6.0
    %v781 = vmin.f32 %v717, 6.0
    %v782 = vmin.f32 %v718, 6.0
    %v783 = vmin.f32 %v719, 6.0
    %v784 = vmin.f32 %v720, 6.0
    %v785 = vmin.f32 %v721, 6.0
    %v786 = vmin.f32 %v722, 6.0
    %v787 = vmin.f32 %v723, 6.0
    %v788 = vmin.f32 %v724, 6.0
    %v789 = vmin.f32 %v725, 6.0
    %v790 = vmin.f32 %v726, 6.0
    %v791 = vmin.f32 %v727, 6.0
    %v792 = vmin.f32 %v728, 6.0
    %v793 = vmin.f32 %v729, 6.0
    %v794 = vmin.f32 %v730, 6.0
    %v795 = vmin.f32 %v731, 6.0
    %v796 = vmin.f32 %v732, 6.0
    %v797 = vmin.f32 %v733, 6.0
    %v798 = vmin.f32 %v734, 6.0
    %v799 = vmin.f32 %v735, 6.0
    %v800 = vmin.f32 %v736, 6.0
    %v801 = vmin.f32 %v737, 6.0
    %v802 = vmin.f32 %v738, 6.0
    %v803 = vmin.f32 %v739, 6.0
    %v804 = vmin.f32 %v740, 6.0
    %v805 = vmin.f32 %v741, 6.0
    %v806 = vmin.f32 %v742, 6.0
    %v807 = vmin.f32 %v743, 6.0
    %v808 = vpack.c.bf16 %v744, %v744
    %v809 = vpack.c.bf16 %v745, %v745
    %v810 = vpack.c.bf16 %v746, %v746
    %v811 = vpack.c.bf16 %v747, %v747
    %v812 = vpack.c.bf16 %v748, %v748
    %v813 = vpack.c.bf16 %v749, %v749
    %v814 = vpack.c.bf16 %v750, %v750
    %v815 = vpack.c.bf16 %v751, %v751
    %v816 = vpack.c.bf16 %v752, %v752
    %v817 = vpack.c.bf16 %v753, %v753
    %v818 = vpack.c.bf16 %v754, %v754
    %v819 = vpack.c.bf16 %v755, %v755
    %v820 = vpack.c.bf16 %v756, %v756
    %v821 = vpack.c.bf16 %v757, %v757
    %v822 = vpack.c.bf16 %v758, %v758
    %v823 = vpack.c.bf16 %v759, %v759
    %v824 = vpack.c.bf16 %v760, %v760
    %v825 = vpack.c.bf16 %v761, %v761
    %v826 = vpack.c.bf16 %v762, %v762
    %v827 = vpack.c.bf16 %v763, %v763
    %v828 = vpack.c.bf16 %v764, %v764
    %v829 = vpack.c.bf16 %v765, %v765
    %v830 = vpack.c.bf16 %v766, %v766
    %v831 = vpack.c.bf16 %v767, %v767
    %v832 = vpack.c.bf16 %v768, %v768
    %v833 = vpack.c.bf16 %v769, %v769
    %v834 = vpack.c.bf16 %v770, %v770
    %v835 = vpack.c.bf16 %v771, %v771
    %v836 = vpack.c.bf16 %v772, %v772
    %v837 = vpack.c.bf16 %v773, %v773
    %v838 = vpack.c.bf16 %v774, %v774
    %v839 = vpack.c.bf16 %v775, %v775
    %v840 = vpack.c.bf16 %v776, %v776
    %v841 = vpack.c.bf16 %v777, %v777
    %v842 = vpack.c.bf16 %v778, %v778
    %v843 = vpack.c.bf16 %v779, %v779
    %v844 = vpack.c.bf16 %v780, %v780
    %v845 = vpack.c.bf16 %v781, %v781
    %v846 = vpack.c.bf16 %v782, %v782
    %v847 = vpack.c.bf16 %v783, %v783
    %v848 = vpack.c.bf16 %v784, %v784
    %v849 = vpack.c.bf16 %v785, %v785
    %v850 = vpack.c.bf16 %v786, %v786
    %v851 = vpack.c.bf16 %v787, %v787
    %v852 = vpack.c.bf16 %v788, %v788
    %v853 = vpack.c.bf16 %v789, %v789
    %v854 = vpack.c.bf16 %v790, %v790
    %v855 = vpack.c.bf16 %v791, %v791
    %v856 = vpack.c.bf16 %v792, %v792
    %v857 = vpack.c.bf16 %v793, %v793
    %v858 = vpack.c.bf16 %v794, %v794
    %v859 = vpack.c.bf16 %v795, %v795
    %v860 = vpack.c.bf16 %v796, %v796
    %v861 = vpack.c.bf16 %v797, %v797
    %v862 = vpack.c.bf16 %v798, %v798
    %v863 = vpack.c.bf16 %v799, %v799
    %v864 = vpack.c.bf16 %v800, %v800
    %v865 = vpack.c.bf16 %v801, %v801
    %v866 = vpack.c.bf16 %v802, %v802
    %v867 = vpack.c.bf16 %v803, %v803
    %v868 = vpack.c.bf16 %v804, %v804
    %v869 = vpack.c.bf16 %v805, %v805
    %v870 = vpack.c.bf16 %v806, %v806
    %v871 = vpack.c.bf16 %v807, %v807
    %vm872 = vcmask 257024
    %873 = vst.msk [vmem:[%s4] sm:$0xf] %vm872, %v808
    %874 = vst.msk [vmem:[%s4 + $0x4] sm:$0xf] %vm872, %v809
    %875 = vst.msk [vmem:[%s4 + $0x8] sm:$0xf] %vm872, %v810
    %876 = vst.msk [vmem:[%s4 + $0xc] sm:$0xf] %vm872, %v811
    %877 = vst.msk [vmem:[%s4 + $0x10] sm:$0xf] %vm872, %v812
    %878 = vst.msk [vmem:[%s4 + $0x14] sm:$0xf] %vm872, %v813
    %879 = vst.msk [vmem:[%s4 + $0x18] sm:$0xf] %vm872, %v814
    %880 = vst.msk [vmem:[%s4 + $0x1c] sm:$0xf] %vm872, %v815
    %881 = vst.msk [vmem:[%s4 + $0x20] sm:$0xf] %vm872, %v816
    %882 = vst.msk [vmem:[%s4 + $0x24] sm:$0xf] %vm872, %v817
    %883 = vst.msk [vmem:[%s4 + $0x28] sm:$0xf] %vm872, %v818
    %884 = vst.msk [vmem:[%s4 + $0x2c] sm:$0xf] %vm872, %v819
    %885 = vst.msk [vmem:[%s4 + $0x30] sm:$0xf] %vm872, %v820
    %886 = vst.msk [vmem:[%s4 + $0x34] sm:$0xf] %vm872, %v821
    %887 = vst.msk [vmem:[%s4 + $0x38] sm:$0xf] %vm872, %v822
    %888 = vst.msk [vmem:[%s4 + $0x3c] sm:$0xf] %vm872, %v823
    %889 = vst.msk [vmem:[%s4 + $0x40] sm:$0xf] %vm872, %v824
    %890 = vst.msk [vmem:[%s4 + $0x44] sm:$0xf] %vm872, %v825
    %891 = vst.msk [vmem:[%s4 + $0x48] sm:$0xf] %vm872, %v826
    %892 = vst.msk [vmem:[%s4 + $0x4c] sm:$0xf] %vm872, %v827
    %893 = vst.msk [vmem:[%s4 + $0x50] sm:$0xf] %vm872, %v828
    %894 = vst.msk [vmem:[%s4 + $0x54] sm:$0xf] %vm872, %v829
    %895 = vst.msk [vmem:[%s4 + $0x58] sm:$0xf] %vm872, %v830
    %896 = vst.msk [vmem:[%s4 + $0x5c] sm:$0xf] %vm872, %v831
    %897 = vst.msk [vmem:[%s4 + $0x60] sm:$0xf] %vm872, %v832
    %898 = vst.msk [vmem:[%s4 + $0x64] sm:$0xf] %vm872, %v833
    %899 = vst.msk [vmem:[%s4 + $0x68] sm:$0xf] %vm872, %v834
    %900 = vst.msk [vmem:[%s4 + $0x6c] sm:$0xf] %vm872, %v835
    %901 = vst.msk [vmem:[%s4 + $0x70] sm:$0xf] %vm872, %v836
    %902 = vst.msk [vmem:[%s4 + $0x74] sm:$0xf] %vm872, %v837
    %903 = vst.msk [vmem:[%s4 + $0x78] sm:$0xf] %vm872, %v838
    %904 = vst.msk [vmem:[%s4 + $0x7c] sm:$0xf] %vm872, %v839
    %905 = vst.msk [vmem:[%s4 + $0x80] sm:$0xf] %vm872, %v840
    %906 = vst.msk [vmem:[%s4 + $0x84] sm:$0xf] %vm872, %v841
    %907 = vst.msk [vmem:[%s4 + $0x88] sm:$0xf] %vm872, %v842
    %908 = vst.msk [vmem:[%s4 + $0x8c] sm:$0xf] %vm872, %v843
    %909 = vst.msk [vmem:[%s4 + $0x90] sm:$0xf] %vm872, %v844
    %910 = vst.msk [vmem:[%s4 + $0x94] sm:$0xf] %vm872, %v845
    %911 = vst.msk [vmem:[%s4 + $0x98] sm:$0xf] %vm872, %v846
    %912 = vst.msk [vmem:[%s4 + $0x9c] sm:$0xf] %vm872, %v847
    %913 = vst.msk [vmem:[%s4 + $0xa0] sm:$0xf] %vm872, %v848
    %914 = vst.msk [vmem:[%s4 + $0xa4] sm:$0xf] %vm872, %v849
    %915 = vst.msk [vmem:[%s4 + $0xa8] sm:$0xf] %vm872, %v850
    %916 = vst.msk [vmem:[%s4 + $0xac] sm:$0xf] %vm872, %v851
    %917 = vst.msk [vmem:[%s4 + $0xb0] sm:$0xf] %vm872, %v852
    %918 = vst.msk [vmem:[%s4 + $0xb4] sm:$0xf] %vm872, %v853
    %919 = vst.msk [vmem:[%s4 + $0xb8] sm:$0xf] %vm872, %v854
    %920 = vst.msk [vmem:[%s4 + $0xbc] sm:$0xf] %vm872, %v855
    %921 = vst.msk [vmem:[%s4 + $0xc0] sm:$0xf] %vm872, %v856
    %922 = vst.msk [vmem:[%s4 + $0xc4] sm:$0xf] %vm872, %v857
    %923 = vst.msk [vmem:[%s4 + $0xc8] sm:$0xf] %vm872, %v858
    %924 = vst.msk [vmem:[%s4 + $0xcc] sm:$0xf] %vm872, %v859
    %925 = vst.msk [vmem:[%s4 + $0xd0] sm:$0xf] %vm872, %v860
    %926 = vst.msk [vmem:[%s4 + $0xd4] sm:$0xf] %vm872, %v861
    %927 = vst.msk [vmem:[%s4 + $0xd8] sm:$0xf] %vm872, %v862
    %928 = vst.msk [vmem:[%s4 + $0xdc] sm:$0xf] %vm872, %v863
    %929 = vst.msk [vmem:[%s4 + $0xe0] sm:$0xf] %vm872, %v864
    %930 = vst.msk [vmem:[%s4 + $0xe4] sm:$0xf] %vm872, %v865
    %931 = vst.msk [vmem:[%s4 + $0xe8] sm:$0xf] %vm872, %v866
    %932 = vst.msk [vmem:[%s4 + $0xec] sm:$0xf] %vm872, %v867
    %933 = vst.msk [vmem:[%s4 + $0xf0] sm:$0xf] %vm872, %v868
    %934 = vst.msk [vmem:[%s4 + $0xf4] sm:$0xf] %vm872, %v869
    %935 = vst.msk [vmem:[%s4 + $0xf8] sm:$0xf] %vm872, %v870
    %936 = vst.msk [vmem:[%s4 + $0xfc] sm:$0xf] %vm872, %v871
    // Predicated region
    $region26: #{aspp_mnet_forward.2} parent=1 // pred_check
      _
    $region27: #{aspp_mnet_forward.2} parent=1 // pred_check_branch
      %938 = sbr.rel (0) target = $region29
    $region28: #{aspp_mnet_forward.2} parent=1 // pred_region
      _
    $region29: #{aspp_mnet_forward.2} parent=1 // pred_fallthru
      _
    // Predicated region
    $region30: #{aspp_mnet_forward.2} parent=1 // pred_check
      _
    $region31: #{aspp_mnet_forward.2} parent=1 // pred_check_branch
      %940 = sbr.rel (0) target = $region33
    $region32: #{aspp_mnet_forward.2} parent=1 // pred_region
      _
    $region33: #{aspp_mnet_forward.2} parent=1 // pred_fallthru
      _
    %941 = vsyncpa [#allocation3], 1
    %942 = vsyncpa [#allocation5], 1

// kernel: aspp_mnet_forward.3
$region0: #{aspp_mnet_forward.3}
  #allocation0 [shape = 'u32[]', space=smem, size = 0x4, offset = 0x4, fixed_abs, tag = 'smem constant byte address 0x4 - core index']
  #allocation1 [shape = 'u32[72,128]{1,0:T(1,128)}', space=vmem, size = 0x9000, scoped, tag = 'internal scratch']
  %s0 = inlined_call_operand.vmem [shape: bf16[2,52,52,32], index: 0, kind: input, shape index: {}]
  %s1 = inlined_call_operand.vmem [shape: f32[1,32], index: 1, kind: input, shape index: {}]
  %s2 = inlined_call_operand.vmem [shape: f32[1,32], index: 2, kind: input, shape index: {}]
  %s3 = inlined_call_operand.vmem [shape: f32[3,9,32], index: 3, kind: input, shape index: {}]
  %s4 = inlined_call_operand.vmem [shape: f32[3,32], index: 4, kind: input, shape index: {}]
  %s5 = inlined_call_operand.vmem [shape: f32[128,32], index: 5, kind: input, shape index: {}]
  %s6 = inlined_call_operand.vmem [shape: f32[2,1,32], index: 6, kind: input, shape index: {}]
  %s7 = inlined_call_operand.vmem [shape: f32[1,32], index: 7, kind: input, shape index: {}]
  %s8 = inlined_call_operand.vmem [shape: f32[1,32], index: 8, kind: input, shape index: {}]
  %s9 = inlined_call_operand.hbm [shape: f32[2,16,16,32], index: 9, kind: output, shape index: {}]
  %s10 = sld [smem:[#allocation0]]
  $region69: #{aspp_mnet_forward.3} parent=0
    _
  %s12 = ssub.s32 1, %s10
  %s13 = scalar_select 0, %s12, %s10
  $region1: #{aspp_mnet_forward.3} parent=0
    #allocation2 [shape = 'u8[262144]{0}', space=vmem, size = 0x40000, scoped, tag = 'output window, operand 0']
    #allocation3 [shape = 's32[2]{0}', space=sflag, size = 0x8, scoped, tag = 'scoped memory for aspp_mnet_forward.3']
    %14 = vsyncpa [#allocation3], 0
    %s15 = scalar_lea.sflag [#allocation3], 1
    %16 = vsyncpa %s15, 0
    loop: start=0, step=1, limit=4
    $region2: #{aspp_mnet_forward.3} parent=1 // loop_pre_header
      _
    $region3: #{aspp_mnet_forward.3} parent=1 // loop_header
      %s18 = sphi 0, %s22
      %p19 = scmp.ge.s32.totalorder %s18, 4
      %s28 = sphi 0, %s30
      %s31 = sphi 0, %s28
      %s32 = sphi 0, %s31
      %s48 = sphi 0, %s32
      %s52 = sphi 0, %s52
      %s54 = sphi 0, %s52
      %s55 = sphi 0, %s54
      %s69 = sphi 0, %s55
      %s73 = sphi 0, %s73
      %s75 = sphi 0, %s73
      %s76 = sphi 0, %s75
      %s90 = sphi 0, %s76
      %s94 = sphi 0, %s94
      %s96 = sphi 0, %s94
      %s97 = sphi 0, %s96
      %s111 = sphi 0, %s97
      %s115 = sphi 0, %s115
      %s117 = sphi 0, %s115
      %s118 = sphi 0, %s117
      %s132 = sphi 0, %s118
      %s136 = sphi 0, %s136
      %s138 = sphi 0, %s136
      %s139 = sphi 0, %s138
      %s153 = sphi 0, %s139
      %s159 = sphi 0, %s161
      %s162 = sphi 0, %s159
      %s163 = sphi 0, %s162
      %s179 = sphi 0, %s163
      %s183 = sphi 0, %s183
      %s185 = sphi 0, %s183
      %s186 = sphi 0, %s185
      %s200 = sphi 0, %s186
      %s204 = sphi 0, %s204
      %s206 = sphi 0, %s204
      %s207 = sphi 0, %s206
      %s221 = sphi 0, %s207
      %s227 = sphi 0, %s229
      %s230 = sphi 0, %s227
      %s231 = sphi 0, %s230
      %s247 = sphi 0, %s231
    $region4: #{aspp_mnet_forward.3} parent=1 // loop_header_branch
      %21 = sbr.rel (%p19) target = $region8
    $region5: #{aspp_mnet_forward.3} parent=1 // loop_body
      %s23 = ssub.s32 %s18, 1
      %s24 = ssub.s32 %s18, 2
      %s25 = sadd.s32 %s18, 1
      %s26 = ssub.s32 %s18, %s25
      %p27 = scmp.eq.s32.totalorder %s26, 0
      %s29 = sadd.s32 %s28, 1
      %s30 = scalar_select %p27, %s28, %s29
      %p33 = pneg %p27
      %p34 = scmp.eq.s32.totalorder %s18, 1
      %p35 = por %p33, %p34
      %p36 = scmp.ne.s32.totalorder %s28, %s31
      %p37 = scmp.eq.s32.totalorder %s18, 0
      %p38 = por %p36, %p37
      %p39 = scmp.ne.s32.totalorder %s28, %s31
      %p40 = scmp.eq.s32.totalorder %s23, 1
      %p41 = por %p39, %p40
      %p42 = scmp.ne.s32.totalorder %s31, %s32
      %p43 = scmp.eq.s32.totalorder %s23, 0
      %p44 = por %p42, %p43
      %p45 = scmp.ne.s32.totalorder %s31, %s32
      %p46 = scmp.eq.s32.totalorder %s24, 1
      %p47 = por %p45, %p46
      %p49 = scmp.ne.s32.totalorder %s32, %s48
      %p50 = scmp.eq.s32.totalorder %s24, 0
      %p51 = por %p49, %p50
      %s53 = sadd.s32 %s52, 1
      %p56 = scmp.eq.s32.totalorder %s18, 1
      %p57 = scmp.ne.s32.totalorder %s52, %s54
      %p58 = scmp.eq.s32.totalorder %s18, 0
      %p59 = por %p57, %p58
      %p60 = scmp.ne.s32.totalorder %s52, %s54
      %p61 = scmp.eq.s32.totalorder %s23, 1
      %p62 = por %p60, %p61
      %p63 = scmp.ne.s32.totalorder %s54, %s55
      %p64 = scmp.eq.s32.totalorder %s23, 0
      %p65 = por %p63, %p64
      %p66 = scmp.ne.s32.totalorder %s54, %s55
      %p67 = scmp.eq.s32.totalorder %s24, 1
      %p68 = por %p66, %p67
      %p70 = scmp.ne.s32.totalorder %s55, %s69
      %p71 = scmp.eq.s32.totalorder %s24, 0
      %p72 = por %p70, %p71
      %s74 = sadd.s32 %s73, 1
      %p77 = scmp.eq.s32.totalorder %s18, 1
      %p78 = scmp.ne.s32.totalorder %s73, %s75
      %p79 = scmp.eq.s32.totalorder %s18, 0
      %p80 = por %p78, %p79
      %p81 = scmp.ne.s32.totalorder %s73, %s75
      %p82 = scmp.eq.s32.totalorder %s23, 1
      %p83 = por %p81, %p82
      %p84 = scmp.ne.s32.totalorder %s75, %s76
      %p85 = scmp.eq.s32.totalorder %s23, 0
      %p86 = por %p84, %p85
      %p87 = scmp.ne.s32.totalorder %s75, %s76
      %p88 = scmp.eq.s32.totalorder %s24, 1
      %p89 = por %p87, %p88
      %p91 = scmp.ne.s32.totalorder %s76, %s90
      %p92 = scmp.eq.s32.totalorder %s24, 0
      %p93 = por %p91, %p92
      %s95 = sadd.s32 %s94, 1
      %p98 = scmp.eq.s32.totalorder %s18, 1
      %p99 = scmp.ne.s32.totalorder %s94, %s96
      %p100 = scmp.eq.s32.totalorder %s18, 0
      %p101 = por %p99, %p100
      %p102 = scmp.ne.s32.totalorder %s94, %s96
      %p103 = scmp.eq.s32.totalorder %s23, 1
      %p104 = por %p102, %p103
      %p105 = scmp.ne.s32.totalorder %s96, %s97
      %p106 = scmp.eq.s32.totalorder %s23, 0
      %p107 = por %p105, %p106
      %p108 = scmp.ne.s32.totalorder %s96, %s97
      %p109 = scmp.eq.s32.totalorder %s24, 1
      %p110 = por %p108, %p109
      %p112 = scmp.ne.s32.totalorder %s97, %s111
      %p113 = scmp.eq.s32.totalorder %s24, 0
      %p114 = por %p112, %p113
      %s116 = sadd.s32 %s115, 1
      %p119 = scmp.eq.s32.totalorder %s18, 1
      %p120 = scmp.ne.s32.totalorder %s115, %s117
      %p121 = scmp.eq.s32.totalorder %s18, 0
      %p122 = por %p120, %p121
      %p123 = scmp.ne.s32.totalorder %s115, %s117
      %p124 = scmp.eq.s32.totalorder %s23, 1
      %p125 = por %p123, %p124
      %p126 = scmp.ne.s32.totalorder %s117, %s118
      %p127 = scmp.eq.s32.totalorder %s23, 0
      %p128 = por %p126, %p127
      %p129 = scmp.ne.s32.totalorder %s117, %s118
      %p130 = scmp.eq.s32.totalorder %s24, 1
      %p131 = por %p129, %p130
      %p133 = scmp.ne.s32.totalorder %s118, %s132
      %p134 = scmp.eq.s32.totalorder %s24, 0
      %p135 = por %p133, %p134
      %s137 = sadd.s32 %s136, 1
      %p140 = scmp.eq.s32.totalorder %s18, 1
      %p141 = scmp.ne.s32.totalorder %s136, %s138
      %p142 = scmp.eq.s32.totalorder %s18, 0
      %p143 = por %p141, %p142
      %p144 = scmp.ne.s32.totalorder %s136, %s138
      %p145 = scmp.eq.s32.totalorder %s23, 1
      %p146 = por %p144, %p145
      %p147 = scmp.ne.s32.totalorder %s138, %s139
      %p148 = scmp.eq.s32.totalorder %s23, 0
      %p149 = por %p147, %p148
      %p150 = scmp.ne.s32.totalorder %s138, %s139
      %p151 = scmp.eq.s32.totalorder %s24, 1
      %p152 = por %p150, %p151
      %p154 = scmp.ne.s32.totalorder %s139, %s153
      %p155 = scmp.eq.s32.totalorder %s24, 0
      %p156 = por %p154, %p155
      %s157 = ssub.s32 %s18, %s25
      %p158 = scmp.eq.s32.totalorder %s157, 0
      %s160 = sadd.s32 %s159, 1
      %s161 = scalar_select %p158, %s159, %s160
      %p164 = pneg %p158
      %p165 = scmp.eq.s32.totalorder %s18, 1
      %p166 = por %p164, %p165
      %p167 = scmp.ne.s32.totalorder %s159, %s162
      %p168 = scmp.eq.s32.totalorder %s18, 0
      %p169 = por %p167, %p168
      %p170 = scmp.ne.s32.totalorder %s159, %s162
      %p171 = scmp.eq.s32.totalorder %s23, 1
      %p172 = por %p170, %p171
      %p173 = scmp.ne.s32.totalorder %s162, %s163
      %p174 = scmp.eq.s32.totalorder %s23, 0
      %p175 = por %p173, %p174
      %p176 = scmp.ne.s32.totalorder %s162, %s163
      %p177 = scmp.eq.s32.totalorder %s24, 1
      %p178 = por %p176, %p177
      %p180 = scmp.ne.s32.totalorder %s163, %s179
      %p181 = scmp.eq.s32.totalorder %s24, 0
      %p182 = por %p180, %p181
      %s184 = sadd.s32 %s183, 1
      %p187 = scmp.eq.s32.totalorder %s18, 1
      %p188 = scmp.ne.s32.totalorder %s183, %s185
      %p189 = scmp.eq.s32.totalorder %s18, 0
      %p190 = por %p188, %p189
      %p191 = scmp.ne.s32.totalorder %s183, %s185
      %p192 = scmp.eq.s32.totalorder %s23, 1
      %p193 = por %p191, %p192
      %p194 = scmp.ne.s32.totalorder %s185, %s186
      %p195 = scmp.eq.s32.totalorder %s23, 0
      %p196 = por %p194, %p195
      %p197 = scmp.ne.s32.totalorder %s185, %s186
      %p198 = scmp.eq.s32.totalorder %s24, 1
      %p199 = por %p197, %p198
      %p201 = scmp.ne.s32.totalorder %s186, %s200
      %p202 = scmp.eq.s32.totalorder %s24, 0
      %p203 = por %p201, %p202
      %s205 = sadd.s32 %s204, 1
      %p208 = scmp.eq.s32.totalorder %s18, 1
      %p209 = scmp.ne.s32.totalorder %s204, %s206
      %p210 = scmp.eq.s32.totalorder %s18, 0
      %p211 = por %p209, %p210
      %p212 = scmp.ne.s32.totalorder %s204, %s206
      %p213 = scmp.eq.s32.totalorder %s23, 1
      %p214 = por %p212, %p213
      %p215 = scmp.ne.s32.totalorder %s206, %s207
      %p216 = scmp.eq.s32.totalorder %s23, 0
      %p217 = por %p215, %p216
      %p218 = scmp.ne.s32.totalorder %s206, %s207
      %p219 = scmp.eq.s32.totalorder %s24, 1
      %p220 = por %p218, %p219
      %p222 = scmp.ne.s32.totalorder %s207, %s221
      %p223 = scmp.eq.s32.totalorder %s24, 0
      %p224 = por %p222, %p223
      %s225 = ssub.s32 %s18, %s25
      %p226 = scmp.eq.s32.totalorder %s225, 0
      %s228 = sadd.s32 %s227, 1
      %s229 = scalar_select %p226, %s227, %s228
      %p232 = pneg %p226
      %p233 = scmp.eq.s32.totalorder %s18, 1
      %p234 = por %p232, %p233
      %p235 = scmp.ne.s32.totalorder %s227, %s230
      %p236 = scmp.eq.s32.totalorder %s18, 0
      %p237 = por %p235, %p236
      %p238 = scmp.ne.s32.totalorder %s227, %s230
      %p239 = scmp.eq.s32.totalorder %s23, 1
      %p240 = por %p238, %p239
      %p241 = scmp.ne.s32.totalorder %s230, %s231
      %p242 = scmp.eq.s32.totalorder %s23, 0
      %p243 = por %p241, %p242
      %p244 = scmp.ne.s32.totalorder %s230, %s231
      %p245 = scmp.eq.s32.totalorder %s24, 1
      %p246 = por %p244, %p245
      %p248 = scmp.ne.s32.totalorder %s231, %s247
      %p249 = scmp.eq.s32.totalorder %s24, 0
      %p250 = por %p248, %p249
      %p251 = scmp.le.s32.totalorder 1, %s18
      %p252 = scmp.lt.s32.totalorder %s18, 3
      %p253 = pnand %p251, %p252
      %p254 = pneg %p253
      // Predicated region
      $region9: #{aspp_mnet_forward.3} parent=5 // pred_check
        _
      $region10: #{aspp_mnet_forward.3} parent=5 // pred_check_branch
        %256 = sbr.rel (%p253) target = $region12
      $region11: #{aspp_mnet_forward.3} parent=5 // pred_region
        %s257 = ssub.s32 %s18, 1
        // Predicated region
        $region13: #{aspp_mnet_forward.3} parent=11 // pred_check
          %p258 = pneg %p65
        $region14: #{aspp_mnet_forward.3} parent=11 // pred_check_branch
          %260 = sbr.rel (%p258) target = $region16
        $region15: #{aspp_mnet_forward.3} parent=11 // pred_region
          _
        $region16: #{aspp_mnet_forward.3} parent=11 // pred_fallthru
          _
        // Predicated region
        $region17: #{aspp_mnet_forward.3} parent=11 // pred_check
          %p261 = pneg %p86
        $region18: #{aspp_mnet_forward.3} parent=11 // pred_check_branch
          %263 = sbr.rel (%p261) target = $region20
        $region19: #{aspp_mnet_forward.3} parent=11 // pred_region
          _
        $region20: #{aspp_mnet_forward.3} parent=11 // pred_fallthru
          _
        // Predicated region
        $region21: #{aspp_mnet_forward.3} parent=11 // pred_check
          %p264 = pneg %p107
        $region22: #{aspp_mnet_forward.3} parent=11 // pred_check_branch
          %266 = sbr.rel (%p264) target = $region24
        $region23: #{aspp_mnet_forward.3} parent=11 // pred_region
          _
        $region24: #{aspp_mnet_forward.3} parent=11 // pred_fallthru
          _
        // Predicated region
        $region25: #{aspp_mnet_forward.3} parent=11 // pred_check
          %p267 = pneg %p128
        $region26: #{aspp_mnet_forward.3} parent=11 // pred_check_branch
          %269 = sbr.rel (%p267) target = $region28
        $region27: #{aspp_mnet_forward.3} parent=11 // pred_region
          _
        $region28: #{aspp_mnet_forward.3} parent=11 // pred_fallthru
          _
        // Predicated region
        $region29: #{aspp_mnet_forward.3} parent=11 // pred_check
          %p270 = pneg %p149
        $region30: #{aspp_mnet_forward.3} parent=11 // pred_check_branch
          %272 = sbr.rel (%p270) target = $region32
        $region31: #{aspp_mnet_forward.3} parent=11 // pred_region
          _
        $region32: #{aspp_mnet_forward.3} parent=11 // pred_fallthru
          _
        // Predicated region
        $region33: #{aspp_mnet_forward.3} parent=11 // pred_check
          %p273 = pneg %p196
        $region34: #{aspp_mnet_forward.3} parent=11 // pred_check_branch
          %275 = sbr.rel (%p273) target = $region36
        $region35: #{aspp_mnet_forward.3} parent=11 // pred_region
          _
        $region36: #{aspp_mnet_forward.3} parent=11 // pred_fallthru
          _
        // Predicated region
        $region37: #{aspp_mnet_forward.3} parent=11 // pred_check
          %p276 = pneg %p217
        $region38: #{aspp_mnet_forward.3} parent=11 // pred_check_branch
          %278 = sbr.rel (%p276) target = $region40
        $region39: #{aspp_mnet_forward.3} parent=11 // pred_region
          _
        $region40: #{aspp_mnet_forward.3} parent=11 // pred_fallthru
          _
      $region12: #{aspp_mnet_forward.3} parent=5 // pred_fallthru
        _
      %p279 = scmp.lt.s32.totalorder %s18, 2
      // Predicated region
      $region41: #{aspp_mnet_forward.3} parent=5 // pred_check
        %p280 = pneg %p279
      $region42: #{aspp_mnet_forward.3} parent=5 // pred_check_branch
        %282 = sbr.rel (%p280) target = $region44
      $region43: #{aspp_mnet_forward.3} parent=5 // pred_region
        // Predicated region
        $region45: #{aspp_mnet_forward.3} parent=43 // pred_check
          %p283 = pneg %p38
        $region46: #{aspp_mnet_forward.3} parent=43 // pred_check_branch
          %285 = sbr.rel (%p283) target = $region48
        $region47: #{aspp_mnet_forward.3} parent=43 // pred_region
          %p286 = scmp.lt.s32.totalorder %s18, 1
          %s287 = scalar_select %p286, %s18, 1
          %s288 = smul.addr %s287, 364
          %s289 = smul.addr %s288, 4
          %s290 = scalar_lea.vmem %s0, %s289
        $region48: #{aspp_mnet_forward.3} parent=43 // pred_fallthru
          _
        // Predicated region
        $region49: #{aspp_mnet_forward.3} parent=43 // pred_check
          %p291 = pneg %p169
        $region50: #{aspp_mnet_forward.3} parent=43 // pred_check_branch
          %293 = sbr.rel (%p291) target = $region52
        $region51: #{aspp_mnet_forward.3} parent=43 // pred_region
          %p294 = scmp.lt.s32.totalorder %s18, 1
          %s295 = scalar_select %p294, %s18, 1
          %s296 = scalar_lea.vmem %s6, %s295
        $region52: #{aspp_mnet_forward.3} parent=43 // pred_fallthru
          _
      $region44: #{aspp_mnet_forward.3} parent=5 // pred_fallthru
        _
      %p297 = scmp.le.s32.totalorder 1, %s18
      %p298 = scmp.lt.s32.totalorder %s18, 3
      %p299 = pnand %p297, %p298
      %p300 = pneg %p299
      // Predicated region
      $region53: #{aspp_mnet_forward.3} parent=5 // pred_check
        _
      $region54: #{aspp_mnet_forward.3} parent=5 // pred_check_branch
        %302 = sbr.rel (%p299) target = $region56
      $region55: #{aspp_mnet_forward.3} parent=5 // pred_region
        %s303 = ssub.s32 %s18, 1
        %p304 = scmp.lt.s32.totalorder %s23, 1
        %s305 = scalar_select %p304, %s23, 1
        %s306 = smul.addr %s305, 364
        %s307 = smul.addr %s306, 4
        %s308 = scalar_lea.vmem %s0, %s307
        %p309 = pneg %p44
        %p310 = pneg %p41
        %p311 = pneg %p65
        %p312 = pneg %p62
        %p313 = pneg %p86
        %p314 = pneg %p83
        %p315 = pneg %p107
        %p316 = pneg %p104
        %p317 = pneg %p128
        %p318 = pneg %p125
        %p319 = pneg %p149
        %p320 = pneg %p146
        %p321 = scmp.lt.s32.totalorder %s23, 1
        %s322 = scalar_select %p321, %s23, 1
        %s323 = scalar_lea.vmem %s6, %s322
        %p324 = pneg %p175
        %p325 = pneg %p172
        %p326 = pneg %p196
        %p327 = pneg %p193
        %p328 = pneg %p217
        %p329 = pneg %p214
        %p330 = pneg %p243
        %p331 = pneg %p240
        %s332 = sand.u32 %s230, 1
        %s333 = scalar_lea.sflag [#allocation3], %s332
        %s334 = sand.u32 %s230, 1
        %s335 = smul.addr %s334, 256
        %s336 = scalar_lea.vmem [#allocation2], %s335
        %p337 = scmp.lt.s32.totalorder %s23, 1
        %s338 = scalar_select %p337, %s23, 1
        %s339 = smul.addr %s338, 364
        %s340 = smul.addr %s339, 4
        %s341 = scalar_lea.vmem %s0, %s340
        %p342 = scmp.lt.s32.totalorder %s23, 1
        %s343 = scalar_select %p342, %s23, 1
        %s344 = scalar_lea.vmem %s6, %s343
        %s345 = scalar_lea.vmem %s341, 504
        %v346 = vld [vmem:[%s345 + $0x8] sm:$0xe]
        %v347 = vld [vmem:[%s345 + $0xc] sm:$0xf]
        %v348 = vld [vmem:[%s345 + $0x10] sm:$0x1]
        %v349 = vld [vmem:[%s345 + $0x24] sm:$0xe]
        %v350 = vld [vmem:[%s345 + $0x28] sm:$0xf]
        %v351 = vld [vmem:[%s345 + $0x2c] sm:$0x1]
        %v352 = vld [vmem:[%s345 + $0x40] sm:$0xe]
        %v353 = vld [vmem:[%s345 + $0x44] sm:$0xf]
        %v354 = vld [vmem:[%s345 + $0x48] sm:$0x1]
        %v355 = vld [vmem:[%s345 + $0x5c] sm:$0xe]
        %v356 = vld [vmem:[%s345 + $0x60] sm:$0xf]
        %v357 = vld [vmem:[%s345 + $0x64] sm:$0x1]
        %v358 = vld [vmem:[%s345 + $0x78] sm:$0xe]
        %v359 = vld [vmem:[%s345 + $0x7c] sm:$0xf]
        %v360 = vld [vmem:[%s345 + $0x80] sm:$0x1]
        %v361 = vld [vmem:[%s345 + $0x94] sm:$0xe]
        %v362 = vld [vmem:[%s345 + $0x98] sm:$0xf]
        %v363 = vld [vmem:[%s345 + $0x9c] sm:$0x1]
        %v364 = vld [vmem:[%s345 + $0xb0] sm:$0xe]
        %v365 = vld [vmem:[%s345 + $0xb4] sm:$0xf]
        %v366 = vld [vmem:[%s345 + $0xb8] sm:$0x1]
        %v367 = vld [vmem:[%s345 + $0xcc] sm:$0xe]
        %v368 = vld [vmem:[%s345 + $0xd0] sm:$0xf]
        %v369 = vld [vmem:[%s345 + $0xd4] sm:$0x1]
        %v370 = vld [vmem:[%s345 + $0xe8] sm:$0xe]
        %v371 = vld [vmem:[%s345 + $0xec] sm:$0xf]
        %v372 = vld [vmem:[%s345 + $0xf0] sm:$0x1]
        %v373 = vld [vmem:[%s345 + $0x104] sm:$0xe]
        %v374 = vld [vmem:[%s345 + $0x108] sm:$0xf]
        %v375 = vld [vmem:[%s345 + $0x10c] sm:$0x1]
        %v376 = vld [vmem:[%s345 + $0x120] sm:$0xe]
        %v377 = vld [vmem:[%s345 + $0x124] sm:$0xf]
        %v378 = vld [vmem:[%s345 + $0x128] sm:$0x1]
        %v379 = vld [vmem:[%s345 + $0x13c] sm:$0xe]
        %v380 = vld [vmem:[%s345 + $0x140] sm:$0xf]
        %v381 = vld [vmem:[%s345 + $0x144] sm:$0x1]
        %v382 = vld [vmem:[%s345 + $0x158] sm:$0xe]
        %v383 = vld [vmem:[%s345 + $0x15c] sm:$0xf]
        %v384 = vld [vmem:[%s345 + $0x160] sm:$0x1]
        %v385 = vld [vmem:[%s345 + $0x174] sm:$0xe]
        %v386 = vld [vmem:[%s345 + $0x178] sm:$0xf]
        %v387 = vld [vmem:[%s345 + $0x17c] sm:$0x1]
        %v388 = vld [vmem:[%s345 + $0x190] sm:$0xe]
        %v389 = vld [vmem:[%s345 + $0x194] sm:$0xf]
        %v390 = vld [vmem:[%s345 + $0x198] sm:$0x1]
        %v391 = vld [vmem:[%s345 + $0x1ac] sm:$0xe]
        %v392 = vld [vmem:[%s345 + $0x1b0] sm:$0xf]
        %v393 = vld [vmem:[%s345 + $0x1b4] sm:$0x1]
        %v394 = vunpack.c.l.bf16 %v346
        %v395 = vunpack.c.l.bf16 %v347
        %v396 = vunpack.c.l.bf16 %v348
        %v397 = vunpack.c.l.bf16 %v349
        %v398 = vunpack.c.l.bf16 %v350
        %v399 = vunpack.c.l.bf16 %v351
        %v400 = vunpack.c.l.bf16 %v352
        %v401 = vunpack.c.l.bf16 %v353
        %v402 = vunpack.c.l.bf16 %v354
        %v403 = vunpack.c.l.bf16 %v355
        %v404 = vunpack.c.l.bf16 %v356
        %v405 = vunpack.c.l.bf16 %v357
        %v406 = vunpack.c.l.bf16 %v358
        %v407 = vunpack.c.l.bf16 %v359
        %v408 = vunpack.c.l.bf16 %v360
        %v409 = vunpack.c.l.bf16 %v361
        %v410 = vunpack.c.l.bf16 %v362
        %v411 = vunpack.c.l.bf16 %v363
        %v412 = vunpack.c.l.bf16 %v364
        %v413 = vunpack.c.l.bf16 %v365
        %v414 = vunpack.c.l.bf16 %v366
        %v415 = vunpack.c.l.bf16 %v367
        %v416 = vunpack.c.l.bf16 %v368
        %v417 = vunpack.c.l.bf16 %v369
        %v418 = vunpack.c.l.bf16 %v370
        %v419 = vunpack.c.l.bf16 %v371
        %v420 = vunpack.c.l.bf16 %v372
        %v421 = vunpack.c.l.bf16 %v373
        %v422 = vunpack.c.l.bf16 %v374
        %v423 = vunpack.c.l.bf16 %v375
        %v424 = vunpack.c.l.bf16 %v376
        %v425 = vunpack.c.l.bf16 %v377
        %v426 = vunpack.c.l.bf16 %v378
        %v427 = vunpack.c.l.bf16 %v379
        %v428 = vunpack.c.l.bf16 %v380
        %v429 = vunpack.c.l.bf16 %v381
        %v430 = vunpack.c.l.bf16 %v382
        %v431 = vunpack.c.l.bf16 %v383
        %v432 = vunpack.c.l.bf16 %v384
        %v433 = vunpack.c.l.bf16 %v385
        %v434 = vunpack.c.l.bf16 %v386
        %v435 = vunpack.c.l.bf16 %v387
        %v436 = vunpack.c.l.bf16 %v388
        %v437 = vunpack.c.l.bf16 %v389
        %v438 = vunpack.c.l.bf16 %v390
        %v439 = vunpack.c.l.bf16 %v391
        %v440 = vunpack.c.l.bf16 %v392
        %v441 = vunpack.c.l.bf16 %v393
        %v442 = vld [vmem:[%s1] sm:$0x1]
        %v444 = vperm.slane %v442, 0
        %v446 = vmul.f32 %v394, %v444
        %v447 = vmul.f32 %v395, %v444
        %v448 = vmul.f32 %v396, %v444
        %v449 = vmul.f32 %v397, %v444
        %v450 = vmul.f32 %v398, %v444
        %v451 = vmul.f32 %v399, %v444
        %v452 = vmul.f32 %v400, %v444
        %v453 = vmul.f32 %v401, %v444
        %v454 = vmul.f32 %v402, %v444
        %v455 = vmul.f32 %v403, %v444
        %v456 = vmul.f32 %v404, %v444
        %v457 = vmul.f32 %v405, %v444
        %v458 = vmul.f32 %v406, %v444
        %v459 = vmul.f32 %v407, %v444
        %v460 = vmul.f32 %v408, %v444
        %v461 = vmul.f32 %v409, %v444
        %v462 = vmul.f32 %v410, %v444
        %v463 = vmul.f32 %v411, %v444
        %v464 = vmul.f32 %v412, %v444
        %v465 = vmul.f32 %v413, %v444
        %v466 = vmul.f32 %v414, %v444
        %v467 = vmul.f32 %v415, %v444
        %v468 = vmul.f32 %v416, %v444
        %v469 = vmul.f32 %v417, %v444
        %v470 = vmul.f32 %v418, %v444
        %v471 = vmul.f32 %v419, %v444
        %v472 = vmul.f32 %v420, %v444
        %v473 = vmul.f32 %v421, %v444
        %v474 = vmul.f32 %v422, %v444
        %v475 = vmul.f32 %v423, %v444
        %v476 = vmul.f32 %v424, %v444
        %v477 = vmul.f32 %v425, %v444
        %v478 = vmul.f32 %v426, %v444
        %v479 = vmul.f32 %v427, %v444
        %v480 = vmul.f32 %v428, %v444
        %v481 = vmul.f32 %v429, %v444
        %v482 = vmul.f32 %v430, %v444
        %v483 = vmul.f32 %v431, %v444
        %v484 = vmul.f32 %v432, %v444
        %v485 = vmul.f32 %v433, %v444
        %v486 = vmul.f32 %v434, %v444
        %v487 = vmul.f32 %v435, %v444
        %v488 = vmul.f32 %v436, %v444
        %v489 = vmul.f32 %v437, %v444
        %v490 = vmul.f32 %v438, %v444
        %v491 = vmul.f32 %v439, %v444
        %v492 = vmul.f32 %v440, %v444
        %v493 = vmul.f32 %v441, %v444
        %v494 = vld [vmem:[%s2] sm:$0x1]
        %v496 = vperm.slane %v494, 0
        %v498 = vadd.f32 %v446, %v496
        %v499 = vadd.f32 %v447, %v496
        %v500 = vadd.f32 %v448, %v496
        %v501 = vadd.f32 %v449, %v496
        %v502 = vadd.f32 %v450, %v496
        %v503 = vadd.f32 %v451, %v496
        %v504 = vadd.f32 %v452, %v496
        %v505 = vadd.f32 %v453, %v496
        %v506 = vadd.f32 %v454, %v496
        %v507 = vadd.f32 %v455, %v496
        %v508 = vadd.f32 %v456, %v496
        %v509 = vadd.f32 %v457, %v496
        %v510 = vadd.f32 %v458, %v496
        %v511 = vadd.f32 %v459, %v496
        %v512 = vadd.f32 %v460, %v496
        %v513 = vadd.f32 %v461, %v496
        %v514 = vadd.f32 %v462, %v496
        %v515 = vadd.f32 %v463, %v496
        %v516 = vadd.f32 %v464, %v496
        %v517 = vadd.f32 %v465, %v496
        %v518 = vadd.f32 %v466, %v496
        %v519 = vadd.f32 %v467, %v496
        %v520 = vadd.f32 %v468, %v496
        %v521 = vadd.f32 %v469, %v496
        %v522 = vadd.f32 %v470, %v496
        %v523 = vadd.f32 %v471, %v496
        %v524 = vadd.f32 %v472, %v496
        %v525 = vadd.f32 %v473, %v496
        %v526 = vadd.f32 %v474, %v496
        %v527 = vadd.f32 %v475, %v496
        %v528 = vadd.f32 %v476, %v496
        %v529 = vadd.f32 %v477, %v496
        %v530 = vadd.f32 %v478, %v496
        %v531 = vadd.f32 %v479, %v496
        %v532 = vadd.f32 %v480, %v496
        %v533 = vadd.f32 %v481, %v496
        %v534 = vadd.f32 %v482, %v496
        %v535 = vadd.f32 %v483, %v496
        %v536 = vadd.f32 %v484, %v496
        %v537 = vadd.f32 %v485, %v496
        %v538 = vadd.f32 %v486, %v496
        %v539 = vadd.f32 %v487, %v496
        %v540 = vadd.f32 %v488, %v496
        %v541 = vadd.f32 %v489, %v496
        %v542 = vadd.f32 %v490, %v496
        %v543 = vadd.f32 %v491, %v496
        %v544 = vadd.f32 %v492, %v496
        %v545 = vadd.f32 %v493, %v496
        %v546 = vmax.f32 %v498, 0.0
        %v547 = vmax.f32 %v499, 0.0
        %v548 = vmax.f32 %v500, 0.0
        %v549 = vmax.f32 %v501, 0.0
        %v550 = vmax.f32 %v502, 0.0
        %v551 = vmax.f32 %v503, 0.0
        %v552 = vmax.f32 %v504, 0.0
        %v553 = vmax.f32 %v505, 0.0
        %v554 = vmax.f32 %v506, 0.0
        %v555 = vmax.f32 %v507, 0.0
        %v556 = vmax.f32 %v508, 0.0
        %v557 = vmax.f32 %v509, 0.0
        %v558 = vmax.f32 %v510, 0.0
        %v559 = vmax.f32 %v511, 0.0
        %v560 = vmax.f32 %v512, 0.0
        %v561 = vmax.f32 %v513, 0.0
        %v562 = vmax.f32 %v514, 0.0
        %v563 = vmax.f32 %v515, 0.0
        %v564 = vmax.f32 %v516, 0.0
        %v565 = vmax.f32 %v517, 0.0
        %v566 = vmax.f32 %v518, 0.0
        %v567 = vmax.f32 %v519, 0.0
        %v568 = vmax.f32 %v520, 0.0
        %v569 = vmax.f32 %v521, 0.0
        %v570 = vmax.f32 %v522, 0.0
        %v571 = vmax.f32 %v523, 0.0
        %v572 = vmax.f32 %v524, 0.0
        %v573 = vmax.f32 %v525, 0.0
        %v574 = vmax.f32 %v526, 0.0
        %v575 = vmax.f32 %v527, 0.0
        %v576 = vmax.f32 %v528, 0.0
        %v577 = vmax.f32 %v529, 0.0
        %v578 = vmax.f32 %v530, 0.0
        %v579 = vmax.f32 %v531, 0.0
        %v580 = vmax.f32 %v532, 0.0
        %v581 = vmax.f32 %v533, 0.0
        %v582 = vmax.f32 %v534, 0.0
        %v583 = vmax.f32 %v535, 0.0
        %v584 = vmax.f32 %v536, 0.0
        %v585 = vmax.f32 %v537, 0.0
        %v586 = vmax.f32 %v538, 0.0
        %v587 = vmax.f32 %v539, 0.0
        %v588 = vmax.f32 %v540, 0.0
        %v589 = vmax.f32 %v541, 0.0
        %v590 = vmax.f32 %v542, 0.0
        %v591 = vmax.f32 %v543, 0.0
        %v592 = vmax.f32 %v544, 0.0
        %v593 = vmax.f32 %v545, 0.0
        %v594 = vmin.f32 %v546, 6.0
        %v595 = vmin.f32 %v547, 6.0
        %v596 = vmin.f32 %v548, 6.0
        %v597 = vmin.f32 %v549, 6.0
        %v598 = vmin.f32 %v550, 6.0
        %v599 = vmin.f32 %v551, 6.0
        %v600 = vmin.f32 %v552, 6.0
        %v601 = vmin.f32 %v553, 6.0
        %v602 = vmin.f32 %v554, 6.0
        %v603 = vmin.f32 %v555, 6.0
        %v604 = vmin.f32 %v556, 6.0
        %v605 = vmin.f32 %v557, 6.0
        %v606 = vmin.f32 %v558, 6.0
        %v607 = vmin.f32 %v559, 6.0
        %v608 = vmin.f32 %v560, 6.0
        %v609 = vmin.f32 %v561, 6.0
        %v610 = vmin.f32 %v562, 6.0
        %v611 = vmin.f32 %v563, 6.0
        %v612 = vmin.f32 %v564, 6.0
        %v613 = vmin.f32 %v565, 6.0
        %v614 = vmin.f32 %v566, 6.0
        %v615 = vmin.f32 %v567, 6.0
        %v616 = vmin.f32 %v568, 6.0
        %v617 = vmin.f32 %v569, 6.0
        %v618 = vmin.f32 %v570, 6.0
        %v619 = vmin.f32 %v571, 6.0
        %v620 = vmin.f32 %v572, 6.0
        %v621 = vmin.f32 %v573, 6.0
        %v622 = vmin.f32 %v574, 6.0
        %v623 = vmin.f32 %v575, 6.0
        %v624 = vmin.f32 %v576, 6.0
        %v625 = vmin.f32 %v577, 6.0
        %v626 = vmin.f32 %v578, 6.0
        %v627 = vmin.f32 %v579, 6.0
        %v628 = vmin.f32 %v580, 6.0
        %v629 = vmin.f32 %v581, 6.0
        %v630 = vmin.f32 %v582, 6.0
        %v631 = vmin.f32 %v583, 6.0
        %v632 = vmin.f32 %v584, 6.0
        %v633 = vmin.f32 %v585, 6.0
        %v634 = vmin.f32 %v586, 6.0
        %v635 = vmin.f32 %v587, 6.0
        %v636 = vmin.f32 %v588, 6.0
        %v637 = vmin.f32 %v589, 6.0
        %v638 = vmin.f32 %v590, 6.0
        %v639 = vmin.f32 %v591, 6.0
        %v640 = vmin.f32 %v592, 6.0
        %v641 = vmin.f32 %v593, 6.0
        %vm690 = vcmask 1045504
        %v691 = vrot.slane %v594, 2
        %v692 = vrot.slane %v595, 2
        %v693 = vsel %vm690, %v691, %v692
        %v694 = vrot.slane %v596, 2
        %v695 = vsel %vm690, %v692, %v694
        %v696 = vrot.slane %v597, 2
        %v697 = vrot.slane %v598, 2
        %v698 = vsel %vm690, %v696, %v697
        %v699 = vrot.slane %v599, 2
        %v700 = vsel %vm690, %v697, %v699
        %v701 = vrot.slane %v600, 2
        %v702 = vrot.slane %v601, 2
        %v703 = vsel %vm690, %v701, %v702
        %v704 = vrot.slane %v602, 2
        %v705 = vsel %vm690, %v702, %v704
        %v706 = vrot.slane %v603, 2
        %v707 = vrot.slane %v604, 2
        %v708 = vsel %vm690, %v706, %v707
        %v709 = vrot.slane %v605, 2
        %v710 = vsel %vm690, %v707, %v709
        %v711 = vrot.slane %v606, 2
        %v712 = vrot.slane %v607, 2
        %v713 = vsel %vm690, %v711, %v712
        %v714 = vrot.slane %v608, 2
        %v715 = vsel %vm690, %v712, %v714
        %v716 = vrot.slane %v609, 2
        %v717 = vrot.slane %v610, 2
        %v718 = vsel %vm690, %v716, %v717
        %v719 = vrot.slane %v611, 2
        %v720 = vsel %vm690, %v717, %v719
        %v721 = vrot.slane %v612, 2
        %v722 = vrot.slane %v613, 2
        %v723 = vsel %vm690, %v721, %v722
        %v724 = vrot.slane %v614, 2
        %v725 = vsel %vm690, %v722, %v724
        %v726 = vrot.slane %v615, 2
        %v727 = vrot.slane %v616, 2
        %v728 = vsel %vm690, %v726, %v727
        %v729 = vrot.slane %v617, 2
        %v730 = vsel %vm690, %v727, %v729
        %v731 = vrot.slane %v618, 2
        %v732 = vrot.slane %v619, 2
        %v733 = vsel %vm690, %v731, %v732
        %v734 = vrot.slane %v620, 2
        %v735 = vsel %vm690, %v732, %v734
        %v736 = vrot.slane %v621, 2
        %v737 = vrot.slane %v622, 2
        %v738 = vsel %vm690, %v736, %v737
        %v739 = vrot.slane %v623, 2
        %v740 = vsel %vm690, %v737, %v739
        %v741 = vrot.slane %v624, 2
        %v742 = vrot.slane %v625, 2
        %v743 = vsel %vm690, %v741, %v742
        %v744 = vrot.slane %v626, 2
        %v745 = vsel %vm690, %v742, %v744
        %v746 = vrot.slane %v627, 2
        %v747 = vrot.slane %v628, 2
        %v748 = vsel %vm690, %v746, %v747
        %v749 = vrot.slane %v629, 2
        %v750 = vsel %vm690, %v747, %v749
        %v751 = vrot.slane %v630, 2
        %v752 = vrot.slane %v631, 2
        %v753 = vsel %vm690, %v751, %v752
        %v754 = vrot.slane %v632, 2
        %v755 = vsel %vm690, %v752, %v754
        %v756 = vrot.slane %v633, 2
        %v757 = vrot.slane %v634, 2
        %v758 = vsel %vm690, %v756, %v757
        %v759 = vrot.slane %v635, 2
        %v760 = vsel %vm690, %v757, %v759
        %v761 = vrot.slane %v636, 2
        %v762 = vrot.slane %v637, 2
        %v763 = vsel %vm690, %v761, %v762
        %v764 = vrot.slane %v638, 2
        %v765 = vsel %vm690, %v762, %v764
        %v766 = vrot.slane %v639, 2
        %v767 = vrot.slane %v640, 2
        %v768 = vsel %vm690, %v766, %v767
        %v769 = vrot.slane %v641, 2
        %v770 = vsel %vm690, %v767, %v769
        %v771 = vld [vmem:[%s5] sm:$0xff]
        %v772 = vld [vmem:[%s5 + $0x8] sm:$0xff]
        %v773 = vld [vmem:[%s5 + $0x10] sm:$0xff]
        %v774 = vld [vmem:[%s5 + $0x18] sm:$0xff]
        %s775 = scalar_lea.vmem %s341, 336
        %v776 = vld [vmem:[%s775 + $0x4] sm:$0xc]
        %v777 = vld [vmem:[%s775 + $0x8] sm:$0xf]
        %v778 = vld [vmem:[%s775 + $0xc] sm:$0x3]
        %v779 = vld [vmem:[%s775 + $0x20] sm:$0xc]
        %v780 = vld [vmem:[%s775 + $0x24] sm:$0xf]
        %v781 = vld [vmem:[%s775 + $0x28] sm:$0x3]
        %v782 = vld [vmem:[%s775 + $0x3c] sm:$0xc]
        %v783 = vld [vmem:[%s775 + $0x40] sm:$0xf]
        %v784 = vld [vmem:[%s775 + $0x44] sm:$0x3]
        %v785 = vld [vmem:[%s775 + $0x58] sm:$0xc]
        %v786 = vld [vmem:[%s775 + $0x5c] sm:$0xf]
        %v787 = vld [vmem:[%s775 + $0x60] sm:$0x3]
        %v788 = vld [vmem:[%s775 + $0x74] sm:$0xc]
        %v789 = vld [vmem:[%s775 + $0x78] sm:$0xf]
        %v790 = vld [vmem:[%s775 + $0x7c] sm:$0x3]
        %v791 = vld [vmem:[%s775 + $0x90] sm:$0xc]
        %v792 = vld [vmem:[%s775 + $0x94] sm:$0xf]
        %v793 = vld [vmem:[%s775 + $0x98] sm:$0x3]
        %v794 = vld [vmem:[%s775 + $0xac] sm:$0xc]
        %v795 = vld [vmem:[%s775 + $0xb0] sm:$0xf]
        %v796 = vld [vmem:[%s775 + $0xb4] sm:$0x3]
        %v797 = vld [vmem:[%s775 + $0xc8] sm:$0xc]
        %v798 = vld [vmem:[%s775 + $0xcc] sm:$0xf]
        %v799 = vld [vmem:[%s775 + $0xd0] sm:$0x3]
        %v800 = vld [vmem:[%s775 + $0xe4] sm:$0xc]
        %v801 = vld [vmem:[%s775 + $0xe8] sm:$0xf]
        %v802 = vld [vmem:[%s775 + $0xec] sm:$0x3]
        %v803 = vld [vmem:[%s775 + $0x100] sm:$0xc]
        %v804 = vld [vmem:[%s775 + $0x104] sm:$0xf]
        %v805 = vld [vmem:[%s775 + $0x108] sm:$0x3]
        %v806 = vld [vmem:[%s775 + $0x11c] sm:$0xc]
        %v807 = vld [vmem:[%s775 + $0x120] sm:$0xf]
        %v808 = vld [vmem:[%s775 + $0x124] sm:$0x3]
        %v809 = vld [vmem:[%s775 + $0x138] sm:$0xc]
        %v810 = vld [vmem:[%s775 + $0x13c] sm:$0xf]
        %v811 = vld [vmem:[%s775 + $0x140] sm:$0x3]
        %v812 = vld [vmem:[%s775 + $0x154] sm:$0xc]
        %v813 = vld [vmem:[%s775 + $0x158] sm:$0xf]
        %v814 = vld [vmem:[%s775 + $0x15c] sm:$0x3]
        %v815 = vld [vmem:[%s775 + $0x170] sm:$0xc]
        %v816 = vld [vmem:[%s775 + $0x174] sm:$0xf]
        %v817 = vld [vmem:[%s775 + $0x178] sm:$0x3]
        %v818 = vld [vmem:[%s775 + $0x18c] sm:$0xc]
        %v819 = vld [vmem:[%s775 + $0x190] sm:$0xf]
        %v820 = vld [vmem:[%s775 + $0x194] sm:$0x3]
        %v821 = vld [vmem:[%s775 + $0x1a8] sm:$0xc]
        %v822 = vld [vmem:[%s775 + $0x1ac] sm:$0xf]
        %v823 = vld [vmem:[%s775 + $0x1b0] sm:$0x3]
        %v824 = vunpack.c.l.bf16 %v776
        %v825 = vunpack.c.l.bf16 %v777
        %v826 = vunpack.c.l.bf16 %v778
        %v827 = vunpack.c.l.bf16 %v779
        %v828 = vunpack.c.l.bf16 %v780
        %v829 = vunpack.c.l.bf16 %v781
        %v830 = vunpack.c.l.bf16 %v782
        %v831 = vunpack.c.l.bf16 %v783
        %v832 = vunpack.c.l.bf16 %v784
        %v833 = vunpack.c.l.bf16 %v785
        %v834 = vunpack.c.l.bf16 %v786
        %v835 = vunpack.c.l.bf16 %v787
        %v836 = vunpack.c.l.bf16 %v788
        %v837 = vunpack.c.l.bf16 %v789
        %v838 = vunpack.c.l.bf16 %v790
        %v839 = vunpack.c.l.bf16 %v791
        %v840 = vunpack.c.l.bf16 %v792
        %v841 = vunpack.c.l.bf16 %v793
        %v842 = vunpack.c.l.bf16 %v794
        %v843 = vunpack.c.l.bf16 %v795
        %v844 = vunpack.c.l.bf16 %v796
        %v845 = vunpack.c.l.bf16 %v797
        %v846 = vunpack.c.l.bf16 %v798
        %v847 = vunpack.c.l.bf16 %v799
        %v848 = vunpack.c.l.bf16 %v800
        %v849 = vunpack.c.l.bf16 %v801
        %v850 = vunpack.c.l.bf16 %v802
        %v851 = vunpack.c.l.bf16 %v803
        %v852 = vunpack.c.l.bf16 %v804
        %v853 = vunpack.c.l.bf16 %v805
        %v854 = vunpack.c.l.bf16 %v806
        %v855 = vunpack.c.l.bf16 %v807
        %v856 = vunpack.c.l.bf16 %v808
        %v857 = vunpack.c.l.bf16 %v809
        %v858 = vunpack.c.l.bf16 %v810
        %v859 = vunpack.c.l.bf16 %v811
        %v860 = vunpack.c.l.bf16 %v812
        %v861 = vunpack.c.l.bf16 %v813
        %v862 = vunpack.c.l.bf16 %v814
        %v863 = vunpack.c.l.bf16 %v815
        %v864 = vunpack.c.l.bf16 %v816
        %v865 = vunpack.c.l.bf16 %v817
        %v866 = vunpack.c.l.bf16 %v818
        %v867 = vunpack.c.l.bf16 %v819
        %v868 = vunpack.c.l.bf16 %v820
        %v869 = vunpack.c.l.bf16 %v821
        %v870 = vunpack.c.l.bf16 %v822
        %v871 = vunpack.c.l.bf16 %v823
        %v872 = vld [vmem:[%s3] sm:$0x1]
        %v873 = vperm.slane %v872, 0
        %v874 = vmul.f32 %v824, %v873
        %v875 = vmul.f32 %v825, %v873
        %v876 = vmul.f32 %v826, %v873
        %v877 = vmul.f32 %v827, %v873
        %v878 = vmul.f32 %v828, %v873
        %v879 = vmul.f32 %v829, %v873
        %v880 = vmul.f32 %v830, %v873
        %v881 = vmul.f32 %v831, %v873
        %v882 = vmul.f32 %v832, %v873
        %v883 = vmul.f32 %v833, %v873
        %v884 = vmul.f32 %v834, %v873
        %v885 = vmul.f32 %v835, %v873
        %v886 = vmul.f32 %v836, %v873
        %v887 = vmul.f32 %v837, %v873
        %v888 = vmul.f32 %v838, %v873
        %v889 = vmul.f32 %v839, %v873
        %v890 = vmul.f32 %v840, %v873
        %v891 = vmul.f32 %v841, %v873
        %v892 = vmul.f32 %v842, %v873
        %v893 = vmul.f32 %v843, %v873
        %v894 = vmul.f32 %v844, %v873
        %v895 = vmul.f32 %v845, %v873
        %v896 = vmul.f32 %v846, %v873
        %v897 = vmul.f32 %v847, %v873
        %v898 = vmul.f32 %v848, %v873
        %v899 = vmul.f32 %v849, %v873
        %v900 = vmul.f32 %v850, %v873
        %v901 = vmul.f32 %v851, %v873
        %v902 = vmul.f32 %v852, %v873
        %v903 = vmul.f32 %v853, %v873
        %v904 = vmul.f32 %v854, %v873
        %v905 = vmul.f32 %v855, %v873
        %v906 = vmul.f32 %v856, %v873
        %v907 = vmul.f32 %v857, %v873
        %v908 = vmul.f32 %v858, %v873
        %v909 = vmul.f32 %v859, %v873
        %v910 = vmul.f32 %v860, %v873
        %v911 = vmul.f32 %v861, %v873
        %v912 = vmul.f32 %v862, %v873
        %v913 = vmul.f32 %v863, %v873
        %v914 = vmul.f32 %v864, %v873
        %v915 = vmul.f32 %v865, %v873
        %v916 = vmul.f32 %v866, %v873
        %v917 = vmul.f32 %v867, %v873
        %v918 = vmul.f32 %v868, %v873
        %v919 = vmul.f32 %v869, %v873
        %v920 = vmul.f32 %v870, %v873
        %v921 = vmul.f32 %v871, %v873
        %v922 = vadd.f32 %v874, 0.0
        %v923 = vadd.f32 %v875, 0.0
        %v924 = vadd.f32 %v876, 0.0
        %v925 = vadd.f32 %v877, 0.0
        %v926 = vadd.f32 %v878, 0.0
        %v927 = vadd.f32 %v879, 0.0
        %v928 = vadd.f32 %v880, 0.0
        %v929 = vadd.f32 %v881, 0.0
        %v930 = vadd.f32 %v882, 0.0
        %v931 = vadd.f32 %v883, 0.0
        %v932 = vadd.f32 %v884, 0.0
        %v933 = vadd.f32 %v885, 0.0
        %v934 = vadd.f32 %v886, 0.0
        %v935 = vadd.f32 %v887, 0.0
        %v936 = vadd.f32 %v888, 0.0
        %v937 = vadd.f32 %v889, 0.0
        %v938 = vadd.f32 %v890, 0.0
        %v939 = vadd.f32 %v891, 0.0
        %v940 = vadd.f32 %v892, 0.0
        %v941 = vadd.f32 %v893, 0.0
        %v942 = vadd.f32 %v894, 0.0
        %v943 = vadd.f32 %v895, 0.0
        %v944 = vadd.f32 %v896, 0.0
        %v945 = vadd.f32 %v897, 0.0
        %v946 = vadd.f32 %v898, 0.0
        %v947 = vadd.f32 %v899, 0.0
        %v948 = vadd.f32 %v900, 0.0
        %v949 = vadd.f32 %v901, 0.0
        %v950 = vadd.f32 %v902, 0.0
        %v951 = vadd.f32 %v903, 0.0
        %v952 = vadd.f32 %v904, 0.0
        %v953 = vadd.f32 %v905, 0.0
        %v954 = vadd.f32 %v906, 0.0
        %v955 = vadd.f32 %v907, 0.0
        %v956 = vadd.f32 %v908, 0.0
        %v957 = vadd.f32 %v909, 0.0
        %v958 = vadd.f32 %v910, 0.0
        %v959 = vadd.f32 %v911, 0.0
        %v960 = vadd.f32 %v912, 0.0
        %v961 = vadd.f32 %v913, 0.0
        %v962 = vadd.f32 %v914, 0.0
        %v963 = vadd.f32 %v915, 0.0
        %v964 = vadd.f32 %v916, 0.0
        %v965 = vadd.f32 %v917, 0.0
        %v966 = vadd.f32 %v918, 0.0
        %v967 = vadd.f32 %v919, 0.0
        %v968 = vadd.f32 %v920, 0.0
        %v969 = vadd.f32 %v921, 0.0
        %v970 = vld [vmem:[%s775 + $0x8] sm:$0xe]
        %v971 = vld [vmem:[%s775 + $0xc] sm:$0xf]
        %v972 = vld [vmem:[%s775 + $0x10] sm:$0x1]
        %v973 = vld [vmem:[%s775 + $0x24] sm:$0xe]
        %v974 = vld [vmem:[%s775 + $0x28] sm:$0xf]
        %v975 = vld [vmem:[%s775 + $0x2c] sm:$0x1]
        %v976 = vld [vmem:[%s775 + $0x40] sm:$0xe]
        %v977 = vld [vmem:[%s775 + $0x44] sm:$0xf]
        %v978 = vld [vmem:[%s775 + $0x48] sm:$0x1]
        %v979 = vld [vmem:[%s775 + $0x5c] sm:$0xe]
        %v980 = vld [vmem:[%s775 + $0x60] sm:$0xf]
        %v981 = vld [vmem:[%s775 + $0x64] sm:$0x1]
        %v982 = vld [vmem:[%s775 + $0x78] sm:$0xe]
        %v983 = vld [vmem:[%s775 + $0x7c] sm:$0xf]
        %v984 = vld [vmem:[%s775 + $0x80] sm:$0x1]
        %v985 = vld [vmem:[%s775 + $0x94] sm:$0xe]
        %v986 = vld [vmem:[%s775 + $0x98] sm:$0xf]
        %v987 = vld [vmem:[%s775 + $0x9c] sm:$0x1]
        %v988 = vld [vmem:[%s775 + $0xb0] sm:$0xe]
        %v989 = vld [vmem:[%s775 + $0xb4] sm:$0xf]
        %v990 = vld [vmem:[%s775 + $0xb8] sm:$0x1]
        %v991 = vld [vmem:[%s775 + $0xcc] sm:$0xe]
        %v992 = vld [vmem:[%s775 + $0xd0] sm:$0xf]
        %v993 = vld [vmem:[%s775 + $0xd4] sm:$0x1]
        %v994 = vld [vmem:[%s775 + $0xe8] sm:$0xe]
        %v995 = vld [vmem:[%s775 + $0xec] sm:$0xf]
        %v996 = vld [vmem:[%s775 + $0xf0] sm:$0x1]
        %v997 = vld [vmem:[%s775 + $0x104] sm:$0xe]
        %v998 = vld [vmem:[%s775 + $0x108] sm:$0xf]
        %v999 = vld [vmem:[%s775 + $0x10c] sm:$0x1]
        %v1000 = vld [vmem:[%s775 + $0x120] sm:$0xe]
        %v1001 = vld [vmem:[%s775 + $0x124] sm:$0xf]
        %v1002 = vld [vmem:[%s775 + $0x128] sm:$0x1]
        %v1003 = vld [vmem:[%s775 + $0x13c] sm:$0xe]
        %v1004 = vld [vmem:[%s775 + $0x140] sm:$0xf]
        %v1005 = vld [vmem:[%s775 + $0x144] sm:$0x1]
        %v1006 = vld [vmem:[%s775 + $0x158] sm:$0xe]
        %v1007 = vld [vmem:[%s775 + $0x15c] sm:$0xf]
        %v1008 = vld [vmem:[%s775 + $0x160] sm:$0x1]
        %v1009 = vld [vmem:[%s775 + $0x174] sm:$0xe]
        %v1010 = vld [vmem:[%s775 + $0x178] sm:$0xf]
        %v1011 = vld [vmem:[%s775 + $0x17c] sm:$0x1]
        %v1012 = vld [vmem:[%s775 + $0x190] sm:$0xe]
        %v1013 = vld [vmem:[%s775 + $0x194] sm:$0xf]
        %v1014 = vld [vmem:[%s775 + $0x198] sm:$0x1]
        %v1015 = vld [vmem:[%s775 + $0x1ac] sm:$0xe]
        %v1016 = vld [vmem:[%s775 + $0x1b0] sm:$0xf]
        %v1017 = vld [vmem:[%s775 + $0x1b4] sm:$0x1]
        %v1018 = vunpack.c.l.bf16 %v970
        %v1019 = vunpack.c.l.bf16 %v971
        %v1020 = vunpack.c.l.bf16 %v972
        %v1021 = vunpack.c.l.bf16 %v973
        %v1022 = vunpack.c.l.bf16 %v974
        %v1023 = vunpack.c.l.bf16 %v975
        %v1024 = vunpack.c.l.bf16 %v976
        %v1025 = vunpack.c.l.bf16 %v977
        %v1026 = vunpack.c.l.bf16 %v978
        %v1027 = vunpack.c.l.bf16 %v979
        %v1028 = vunpack.c.l.bf16 %v980
        %v1029 = vunpack.c.l.bf16 %v981
        %v1030 = vunpack.c.l.bf16 %v982
        %v1031 = vunpack.c.l.bf16 %v983
        %v1032 = vunpack.c.l.bf16 %v984
        %v1033 = vunpack.c.l.bf16 %v985
        %v1034 = vunpack.c.l.bf16 %v986
        %v1035 = vunpack.c.l.bf16 %v987
        %v1036 = vunpack.c.l.bf16 %v988
        %v1037 = vunpack.c.l.bf16 %v989
        %v1038 = vunpack.c.l.bf16 %v990
        %v1039 = vunpack.c.l.bf16 %v991
        %v1040 = vunpack.c.l.bf16 %v992
        %v1041 = vunpack.c.l.bf16 %v993
        %v1042 = vunpack.c.l.bf16 %v994
        %v1043 = vunpack.c.l.bf16 %v995
        %v1044 = vunpack.c.l.bf16 %v996
        %v1045 = vunpack.c.l.bf16 %v997
        %v1046 = vunpack.c.l.bf16 %v998
        %v1047 = vunpack.c.l.bf16 %v999
        %v1048 = vunpack.c.l.bf16 %v1000
        %v1049 = vunpack.c.l.bf16 %v1001
        %v1050 = vunpack.c.l.bf16 %v1002
        %v1051 = vunpack.c.l.bf16 %v1003
        %v1052 = vunpack.c.l.bf16 %v1004
        %v1053 = vunpack.c.l.bf16 %v1005
        %v1054 = vunpack.c.l.bf16 %v1006
        %v1055 = vunpack.c.l.bf16 %v1007
        %v1056 = vunpack.c.l.bf16 %v1008
        %v1057 = vunpack.c.l.bf16 %v1009
        %v1058 = vunpack.c.l.bf16 %v1010
        %v1059 = vunpack.c.l.bf16 %v1011
        %v1060 = vunpack.c.l.bf16 %v1012
        %v1061 = vunpack.c.l.bf16 %v1013
        %v1062 = vunpack.c.l.bf16 %v1014
        %v1063 = vunpack.c.l.bf16 %v1015
        %v1064 = vunpack.c.l.bf16 %v1016
        %v1065 = vunpack.c.l.bf16 %v1017
        %v1066 = vld [vmem:[%s3 + $0x1] sm:$0x1]
        %v1067 = vperm.slane %v1066, 0
        %v1068 = vmul.f32 %v1018, %v1067
        %v1069 = vmul.f32 %v1019, %v1067
        %v1070 = vmul.f32 %v1020, %v1067
        %v1071 = vmul.f32 %v1021, %v1067
        %v1072 = vmul.f32 %v1022, %v1067
        %v1073 = vmul.f32 %v1023, %v1067
        %v1074 = vmul.f32 %v1024, %v1067
        %v1075 = vmul.f32 %v1025, %v1067
        %v1076 = vmul.f32 %v1026, %v1067
        %v1077 = vmul.f32 %v1027, %v1067
        %v1078 = vmul.f32 %v1028, %v1067
        %v1079 = vmul.f32 %v1029, %v1067
        %v1080 = vmul.f32 %v1030, %v1067
        %v1081 = vmul.f32 %v1031, %v1067
        %v1082 = vmul.f32 %v1032, %v1067
        %v1083 = vmul.f32 %v1033, %v1067
        %v1084 = vmul.f32 %v1034, %v1067
        %v1085 = vmul.f32 %v1035, %v1067
        %v1086 = vmul.f32 %v1036, %v1067
        %v1087 = vmul.f32 %v1037, %v1067
        %v1088 = vmul.f32 %v1038, %v1067
        %v1089 = vmul.f32 %v1039, %v1067
        %v1090 = vmul.f32 %v1040, %v1067
        %v1091 = vmul.f32 %v1041, %v1067
        %v1092 = vmul.f32 %v1042, %v1067
        %v1093 = vmul.f32 %v1043, %v1067
        %v1094 = vmul.f32 %v1044, %v1067
        %v1095 = vmul.f32 %v1045, %v1067
        %v1096 = vmul.f32 %v1046, %v1067
        %v1097 = vmul.f32 %v1047, %v1067
        %v1098 = vmul.f32 %v1048, %v1067
        %v1099 = vmul.f32 %v1049, %v1067
        %v1100 = vmul.f32 %v1050, %v1067
        %v1101 = vmul.f32 %v1051, %v1067
        %v1102 = vmul.f32 %v1052, %v1067
        %v1103 = vmul.f32 %v1053, %v1067
        %v1104 = vmul.f32 %v1054, %v1067
        %v1105 = vmul.f32 %v1055, %v1067
        %v1106 = vmul.f32 %v1056, %v1067
        %v1107 = vmul.f32 %v1057, %v1067
        %v1108 = vmul.f32 %v1058, %v1067
        %v1109 = vmul.f32 %v1059, %v1067
        %v1110 = vmul.f32 %v1060, %v1067
        %v1111 = vmul.f32 %v1061, %v1067
        %v1112 = vmul.f32 %v1062, %v1067
        %v1113 = vmul.f32 %v1063, %v1067
        %v1114 = vmul.f32 %v1064, %v1067
        %v1115 = vmul.f32 %v1065, %v1067
        %vm1164 = vcmask 1041408
        %v1165 = vrot.slane %v1068, 6
        %v1166 = vrot.slane %v1069, 6
        %v1167 = vsel %vm1164, %v1165, %v1166
        %v1168 = vrot.slane %v1070, 6
        %v1169 = vsel %vm1164, %v1166, %v1168
        %v1170 = vrot.slane %v1071, 6
        %v1171 = vrot.slane %v1072, 6
        %v1172 = vsel %vm1164, %v1170, %v1171
        %v1173 = vrot.slane %v1073, 6
        %v1174 = vsel %vm1164, %v1171, %v1173
        %v1175 = vrot.slane %v1074, 6
        %v1176 = vrot.slane %v1075, 6
        %v1177 = vsel %vm1164, %v1175, %v1176
        %v1178 = vrot.slane %v1076, 6
        %v1179 = vsel %vm1164, %v1176, %v1178
        %v1180 = vrot.slane %v1077, 6
        %v1181 = vrot.slane %v1078, 6
        %v1182 = vsel %vm1164, %v1180, %v1181
        %v1183 = vrot.slane %v1079, 6
        %v1184 = vsel %vm1164, %v1181, %v1183
        %v1185 = vrot.slane %v1080, 6
        %v1186 = vrot.slane %v1081, 6
        %v1187 = vsel %vm1164, %v1185, %v1186
        %v1188 = vrot.slane %v1082, 6
        %v1189 = vsel %vm1164, %v1186, %v1188
        %v1190 = vrot.slane %v1083, 6
        %v1191 = vrot.slane %v1084, 6
        %v1192 = vsel %vm1164, %v1190, %v1191
        %v1193 = vrot.slane %v1085, 6
        %v1194 = vsel %vm1164, %v1191, %v1193
        %v1195 = vrot.slane %v1086, 6
        %v1196 = vrot.slane %v1087, 6
        %v1197 = vsel %vm1164, %v1195, %v1196
        %v1198 = vrot.slane %v1088, 6
        %v1199 = vsel %vm1164, %v1196, %v1198
        %v1200 = vrot.slane %v1089, 6
        %v1201 = vrot.slane %v1090, 6
        %v1202 = vsel %vm1164, %v1200, %v1201
        %v1203 = vrot.slane %v1091, 6
        %v1204 = vsel %vm1164, %v1201, %v1203
        %v1205 = vrot.slane %v1092, 6
        %v1206 = vrot.slane %v1093, 6
        %v1207 = vsel %vm1164, %v1205, %v1206
        %v1208 = vrot.slane %v1094, 6
        %v1209 = vsel %vm1164, %v1206, %v1208
        %v1210 = vrot.slane %v1095, 6
        %v1211 = vrot.slane %v1096, 6
        %v1212 = vsel %vm1164, %v1210, %v1211
        %v1213 = vrot.slane %v1097, 6
        %v1214 = vsel %vm1164, %v1211, %v1213
        %v1215 = vrot.slane %v1098, 6
        %v1216 = vrot.slane %v1099, 6
        %v1217 = vsel %vm1164, %v1215, %v1216
        %v1218 = vrot.slane %v1100, 6
        %v1219 = vsel %vm1164, %v1216, %v1218
        %v1220 = vrot.slane %v1101, 6
        %v1221 = vrot.slane %v1102, 6
        %v1222 = vsel %vm1164, %v1220, %v1221
        %v1223 = vrot.slane %v1103, 6
        %v1224 = vsel %vm1164, %v1221, %v1223
        %v1225 = vrot.slane %v1104, 6
        %v1226 = vrot.slane %v1105, 6
        %v1227 = vsel %vm1164, %v1225, %v1226
        %v1228 = vrot.slane %v1106, 6
        %v1229 = vsel %vm1164, %v1226, %v1228
        %v1230 = vrot.slane %v1107, 6
        %v1231 = vrot.slane %v1108, 6
        %v1232 = vsel %vm1164, %v1230, %v1231
        %v1233 = vrot.slane %v1109, 6
        %v1234 = vsel %vm1164, %v1231, %v1233
        %v1235 = vrot.slane %v1110, 6
        %v1236 = vrot.slane %v1111, 6
        %v1237 = vsel %vm1164, %v1235, %v1236
        %v1238 = vrot.slane %v1112, 6
        %v1239 = vsel %vm1164, %v1236, %v1238
        %v1240 = vrot.slane %v1113, 6
        %v1241 = vrot.slane %v1114, 6
        %v1242 = vsel %vm1164, %v1240, %v1241
        %v1243 = vrot.slane %v1115, 6
        %v1244 = vsel %vm1164, %v1241, %v1243
        %v1293 = vadd.f32 %v922, %v1165
        %v1294 = vadd.f32 %v923, %v1167
        %v1295 = vadd.f32 %v924, %v1169
        %v1296 = vadd.f32 %v925, %v1170
        %v1297 = vadd.f32 %v926, %v1172
        %v1298 = vadd.f32 %v927, %v1174
        %v1299 = vadd.f32 %v928, %v1175
        %v1300 = vadd.f32 %v929, %v1177
        %v1301 = vadd.f32 %v930, %v1179
        %v1302 = vadd.f32 %v931, %v1180
        %v1303 = vadd.f32 %v932, %v1182
        %v1304 = vadd.f32 %v933, %v1184
        %v1305 = vadd.f32 %v934, %v1185
        %v1306 = vadd.f32 %v935, %v1187
        %v1307 = vadd.f32 %v936, %v1189
        %v1308 = vadd.f32 %v937, %v1190
        %v1309 = vadd.f32 %v938, %v1192
        %v1310 = vadd.f32 %v939, %v1194
        %v1311 = vadd.f32 %v940, %v1195
        %v1312 = vadd.f32 %v941, %v1197
        %v1313 = vadd.f32 %v942, %v1199
        %v1314 = vadd.f32 %v943, %v1200
        %v1315 = vadd.f32 %v944, %v1202
        %v1316 = vadd.f32 %v945, %v1204
        %v1317 = vadd.f32 %v946, %v1205
        %v1318 = vadd.f32 %v947, %v1207
        %v1319 = vadd.f32 %v948, %v1209
        %v1320 = vadd.f32 %v949, %v1210
        %v1321 = vadd.f32 %v950, %v1212
        %v1322 = vadd.f32 %v951, %v1214
        %v1323 = vadd.f32 %v952, %v1215
        %v1324 = vadd.f32 %v953, %v1217
        %v1325 = vadd.f32 %v954, %v1219
        %v1326 = vadd.f32 %v955, %v1220
        %v1327 = vadd.f32 %v956, %v1222
        %v1328 = vadd.f32 %v957, %v1224
        %v1329 = vadd.f32 %v958, %v1225
        %v1330 = vadd.f32 %v959, %v1227
        %v1331 = vadd.f32 %v960, %v1229
        %v1332 = vadd.f32 %v961, %v1230
        %v1333 = vadd.f32 %v962, %v1232
        %v1334 = vadd.f32 %v963, %v1234
        %v1335 = vadd.f32 %v964, %v1235
        %v1336 = vadd.f32 %v965, %v1237
        %v1337 = vadd.f32 %v966, %v1239
        %v1338 = vadd.f32 %v967, %v1240
        %v1339 = vadd.f32 %v968, %v1242
        %v1340 = vadd.f32 %v969, %v1244
        %v1341 = vld [vmem:[%s775 + $0x10] sm:$0xf]
        %v1342 = vld [vmem:[%s775 + $0x2c] sm:$0xf]
        %v1343 = vld [vmem:[%s775 + $0x48] sm:$0xf]
        %v1344 = vld [vmem:[%s775 + $0x64] sm:$0xf]
        %v1345 = vld [vmem:[%s775 + $0x80] sm:$0xf]
        %v1346 = vld [vmem:[%s775 + $0x9c] sm:$0xf]
        %v1347 = vld [vmem:[%s775 + $0xb8] sm:$0xf]
        %v1348 = vld [vmem:[%s775 + $0xd4] sm:$0xf]
        %v1349 = vld [vmem:[%s775 + $0xf0] sm:$0xf]
        %v1350 = vld [vmem:[%s775 + $0x10c] sm:$0xf]
        %v1351 = vld [vmem:[%s775 + $0x128] sm:$0xf]
        %v1352 = vld [vmem:[%s775 + $0x144] sm:$0xf]
        %v1353 = vld [vmem:[%s775 + $0x160] sm:$0xf]
        %v1354 = vld [vmem:[%s775 + $0x17c] sm:$0xf]
        %v1355 = vld [vmem:[%s775 + $0x198] sm:$0xf]
        %v1356 = vld [vmem:[%s775 + $0x1b4] sm:$0xf]
        %v1357 = vunpack.c.l.bf16 %v1341
        %v1358 = vunpack.c.l.bf16 %v1342
        %v1359 = vunpack.c.l.bf16 %v1343
        %v1360 = vunpack.c.l.bf16 %v1344
        %v1361 = vunpack.c.l.bf16 %v1345
        %v1362 = vunpack.c.l.bf16 %v1346
        %v1363 = vunpack.c.l.bf16 %v1347
        %v1364 = vunpack.c.l.bf16 %v1348
        %v1365 = vunpack.c.l.bf16 %v1349
        %v1366 = vunpack.c.l.bf16 %v1350
        %v1367 = vunpack.c.l.bf16 %v1351
        %v1368 = vunpack.c.l.bf16 %v1352
        %v1369 = vunpack.c.l.bf16 %v1353
        %v1370 = vunpack.c.l.bf16 %v1354
        %v1371 = vunpack.c.l.bf16 %v1355
        %v1372 = vunpack.c.l.bf16 %v1356
        %v1373 = vld [vmem:[%s3 + $0x2] sm:$0x1]
        %v1374 = vperm.slane %v1373, 0
        %v1375 = vmul.f32 %v1019, %v1374
        %v1376 = vmul.f32 %v1357, %v1374
        %v1377 = vmul.f32 %v1022, %v1374
        %v1378 = vmul.f32 %v1358, %v1374
        %v1379 = vmul.f32 %v1025, %v1374
        %v1380 = vmul.f32 %v1359, %v1374
        %v1381 = vmul.f32 %v1028, %v1374
        %v1382 = vmul.f32 %v1360, %v1374
        %v1383 = vmul.f32 %v1031, %v1374
        %v1384 = vmul.f32 %v1361, %v1374
        %v1385 = vmul.f32 %v1034, %v1374
        %v1386 = vmul.f32 %v1362, %v1374
        %v1387 = vmul.f32 %v1037, %v1374
        %v1388 = vmul.f32 %v1363, %v1374
        %v1389 = vmul.f32 %v1040, %v1374
        %v1390 = vmul.f32 %v1364, %v1374
        %v1391 = vmul.f32 %v1043, %v1374
        %v1392 = vmul.f32 %v1365, %v1374
        %v1393 = vmul.f32 %v1046, %v1374
        %v1394 = vmul.f32 %v1366, %v1374
        %v1395 = vmul.f32 %v1049, %v1374
        %v1396 = vmul.f32 %v1367, %v1374
        %v1397 = vmul.f32 %v1052, %v1374
        %v1398 = vmul.f32 %v1368, %v1374
        %v1399 = vmul.f32 %v1055, %v1374
        %v1400 = vmul.f32 %v1369, %v1374
        %v1401 = vmul.f32 %v1058, %v1374
        %v1402 = vmul.f32 %v1370, %v1374
        %v1403 = vmul.f32 %v1061, %v1374
        %v1404 = vmul.f32 %v1371, %v1374
        %v1405 = vmul.f32 %v1064, %v1374
        %v1406 = vmul.f32 %v1372, %v1374
        %vm1439 = vcmask 1043456
        %v1440 = vrot.slane %v1375, 4
        %v1441 = vrot.slane %v1376, 4
        %v1442 = vsel %vm1439, %v1440, %v1441
        %v1443 = vrot.slane %v1377, 4
        %v1444 = vrot.slane %v1378, 4
        %v1445 = vsel %vm1439, %v1443, %v1444
        %v1446 = vrot.slane %v1379, 4
        %v1447 = vrot.slane %v1380, 4
        %v1448 = vsel %vm1439, %v1446, %v1447
        %v1449 = vrot.slane %v1381, 4
        %v1450 = vrot.slane %v1382, 4
        %v1451 = vsel %vm1439, %v1449, %v1450
        %v1452 = vrot.slane %v1383, 4
        %v1453 = vrot.slane %v1384, 4
        %v1454 = vsel %vm1439, %v1452, %v1453
        %v1455 = vrot.slane %v1385, 4
        %v1456 = vrot.slane %v1386, 4
        %v1457 = vsel %vm1439, %v1455, %v1456
        %v1458 = vrot.slane %v1387, 4
        %v1459 = vrot.slane %v1388, 4
        %v1460 = vsel %vm1439, %v1458, %v1459
        %v1461 = vrot.slane %v1389, 4
        %v1462 = vrot.slane %v1390, 4
        %v1463 = vsel %vm1439, %v1461, %v1462
        %v1464 = vrot.slane %v1391, 4
        %v1465 = vrot.slane %v1392, 4
        %v1466 = vsel %vm1439, %v1464, %v1465
        %v1467 = vrot.slane %v1393, 4
        %v1468 = vrot.slane %v1394, 4
        %v1469 = vsel %vm1439, %v1467, %v1468
        %v1470 = vrot.slane %v1395, 4
        %v1471 = vrot.slane %v1396, 4
        %v1472 = vsel %vm1439, %v1470, %v1471
        %v1473 = vrot.slane %v1397, 4
        %v1474 = vrot.slane %v1398, 4
        %v1475 = vsel %vm1439, %v1473, %v1474
        %v1476 = vrot.slane %v1399, 4
        %v1477 = vrot.slane %v1400, 4
        %v1478 = vsel %vm1439, %v1476, %v1477
        %v1479 = vrot.slane %v1401, 4
        %v1480 = vrot.slane %v1402, 4
        %v1481 = vsel %vm1439, %v1479, %v1480
        %v1482 = vrot.slane %v1403, 4
        %v1483 = vrot.slane %v1404, 4
        %v1484 = vsel %vm1439, %v1482, %v1483
        %v1485 = vrot.slane %v1405, 4
        %v1486 = vrot.slane %v1406, 4
        %v1487 = vsel %vm1439, %v1485, %v1486
        %v1536 = vadd.f32 %v1293, %v1440
        %v1537 = vadd.f32 %v1294, %v1442
        %v1538 = vadd.f32 %v1295, %v1441
        %v1539 = vadd.f32 %v1296, %v1443
        %v1540 = vadd.f32 %v1297, %v1445
        %v1541 = vadd.f32 %v1298, %v1444
        %v1542 = vadd.f32 %v1299, %v1446
        %v1543 = vadd.f32 %v1300, %v1448
        %v1544 = vadd.f32 %v1301, %v1447
        %v1545 = vadd.f32 %v1302, %v1449
        %v1546 = vadd.f32 %v1303, %v1451
        %v1547 = vadd.f32 %v1304, %v1450
        %v1548 = vadd.f32 %v1305, %v1452
        %v1549 = vadd.f32 %v1306, %v1454
        %v1550 = vadd.f32 %v1307, %v1453
        %v1551 = vadd.f32 %v1308, %v1455
        %v1552 = vadd.f32 %v1309, %v1457
        %v1553 = vadd.f32 %v1310, %v1456
        %v1554 = vadd.f32 %v1311, %v1458
        %v1555 = vadd.f32 %v1312, %v1460
        %v1556 = vadd.f32 %v1313, %v1459
        %v1557 = vadd.f32 %v1314, %v1461
        %v1558 = vadd.f32 %v1315, %v1463
        %v1559 = vadd.f32 %v1316, %v1462
        %v1560 = vadd.f32 %v1317, %v1464
        %v1561 = vadd.f32 %v1318, %v1466
        %v1562 = vadd.f32 %v1319, %v1465
        %v1563 = vadd.f32 %v1320, %v1467
        %v1564 = vadd.f32 %v1321, %v1469
        %v1565 = vadd.f32 %v1322, %v1468
        %v1566 = vadd.f32 %v1323, %v1470
        %v1567 = vadd.f32 %v1324, %v1472
        %v1568 = vadd.f32 %v1325, %v1471
        %v1569 = vadd.f32 %v1326, %v1473
        %v1570 = vadd.f32 %v1327, %v1475
        %v1571 = vadd.f32 %v1328, %v1474
        %v1572 = vadd.f32 %v1329, %v1476
        %v1573 = vadd.f32 %v1330, %v1478
        %v1574 = vadd.f32 %v1331, %v1477
        %v1575 = vadd.f32 %v1332, %v1479
        %v1576 = vadd.f32 %v1333, %v1481
        %v1577 = vadd.f32 %v1334, %v1480
        %v1578 = vadd.f32 %v1335, %v1482
        %v1579 = vadd.f32 %v1336, %v1484
        %v1580 = vadd.f32 %v1337, %v1483
        %v1581 = vadd.f32 %v1338, %v1485
        %v1582 = vadd.f32 %v1339, %v1487
        %v1583 = vadd.f32 %v1340, %v1486
        %v1584 = vld [vmem:[%s345 + $0x4] sm:$0xc]
        %v1585 = vld [vmem:[%s345 + $0x8] sm:$0xf]
        %v1586 = vld [vmem:[%s345 + $0xc] sm:$0x3]
        %v1587 = vld [vmem:[%s345 + $0x20] sm:$0xc]
        %v1588 = vld [vmem:[%s345 + $0x24] sm:$0xf]
        %v1589 = vld [vmem:[%s345 + $0x28] sm:$0x3]
        %v1590 = vld [vmem:[%s345 + $0x3c] sm:$0xc]
        %v1591 = vld [vmem:[%s345 + $0x40] sm:$0xf]
        %v1592 = vld [vmem:[%s345 + $0x44] sm:$0x3]
        %v1593 = vld [vmem:[%s345 + $0x58] sm:$0xc]
        %v1594 = vld [vmem:[%s345 + $0x5c] sm:$0xf]
        %v1595 = vld [vmem:[%s345 + $0x60] sm:$0x3]
        %v1596 = vld [vmem:[%s345 + $0x74] sm:$0xc]
        %v1597 = vld [vmem:[%s345 + $0x78] sm:$0xf]
        %v1598 = vld [vmem:[%s345 + $0x7c] sm:$0x3]
        %v1599 = vld [vmem:[%s345 + $0x90] sm:$0xc]
        %v1600 = vld [vmem:[%s345 + $0x94] sm:$0xf]
        %v1601 = vld [vmem:[%s345 + $0x98] sm:$0x3]
        %v1602 = vld [vmem:[%s345 + $0xac] sm:$0xc]
        %v1603 = vld [vmem:[%s345 + $0xb0] sm:$0xf]
        %v1604 = vld [vmem:[%s345 + $0xb4] sm:$0x3]
        %v1605 = vld [vmem:[%s345 + $0xc8] sm:$0xc]
        %v1606 = vld [vmem:[%s345 + $0xcc] sm:$0xf]
        %v1607 = vld [vmem:[%s345 + $0xd0] sm:$0x3]
        %v1608 = vld [vmem:[%s345 + $0xe4] sm:$0xc]
        %v1609 = vld [vmem:[%s345 + $0xe8] sm:$0xf]
        %v1610 = vld [vmem:[%s345 + $0xec] sm:$0x3]
        %v1611 = vld [vmem:[%s345 + $0x100] sm:$0xc]
        %v1612 = vld [vmem:[%s345 + $0x104] sm:$0xf]
        %v1613 = vld [vmem:[%s345 + $0x108] sm:$0x3]
        %v1614 = vld [vmem:[%s345 + $0x11c] sm:$0xc]
        %v1615 = vld [vmem:[%s345 + $0x120] sm:$0xf]
        %v1616 = vld [vmem:[%s345 + $0x124] sm:$0x3]
        %v1617 = vld [vmem:[%s345 + $0x138] sm:$0xc]
        %v1618 = vld [vmem:[%s345 + $0x13c] sm:$0xf]
        %v1619 = vld [vmem:[%s345 + $0x140] sm:$0x3]
        %v1620 = vld [vmem:[%s345 + $0x154] sm:$0xc]
        %v1621 = vld [vmem:[%s345 + $0x158] sm:$0xf]
        %v1622 = vld [vmem:[%s345 + $0x15c] sm:$0x3]
        %v1623 = vld [vmem:[%s345 + $0x170] sm:$0xc]
        %v1624 = vld [vmem:[%s345 + $0x174] sm:$0xf]
        %v1625 = vld [vmem:[%s345 + $0x178] sm:$0x3]
        %v1626 = vld [vmem:[%s345 + $0x18c] sm:$0xc]
        %v1627 = vld [vmem:[%s345 + $0x190] sm:$0xf]
        %v1628 = vld [vmem:[%s345 + $0x194] sm:$0x3]
        %v1629 = vld [vmem:[%s345 + $0x1a8] sm:$0xc]
        %v1630 = vld [vmem:[%s345 + $0x1ac] sm:$0xf]
        %v1631 = vld [vmem:[%s345 + $0x1b0] sm:$0x3]
        %v1632 = vunpack.c.l.bf16 %v1584
        %v1633 = vunpack.c.l.bf16 %v1585
        %v1634 = vunpack.c.l.bf16 %v1586
        %v1635 = vunpack.c.l.bf16 %v1587
        %v1636 = vunpack.c.l.bf16 %v1588
        %v1637 = vunpack.c.l.bf16 %v1589
        %v1638 = vunpack.c.l.bf16 %v1590
        %v1639 = vunpack.c.l.bf16 %v1591
        %v1640 = vunpack.c.l.bf16 %v1592
        %v1641 = vunpack.c.l.bf16 %v1593
        %v1642 = vunpack.c.l.bf16 %v1594
        %v1643 = vunpack.c.l.bf16 %v1595
        %v1644 = vunpack.c.l.bf16 %v1596
        %v1645 = vunpack.c.l.bf16 %v1597
        %v1646 = vunpack.c.l.bf16 %v1598
        %v1647 = vunpack.c.l.bf16 %v1599
        %v1648 = vunpack.c.l.bf16 %v1600
        %v1649 = vunpack.c.l.bf16 %v1601
        %v1650 = vunpack.c.l.bf16 %v1602
        %v1651 = vunpack.c.l.bf16 %v1603
        %v1652 = vunpack.c.l.bf16 %v1604
        %v1653 = vunpack.c.l.bf16 %v1605
        %v1654 = vunpack.c.l.bf16 %v1606
        %v1655 = vunpack.c.l.bf16 %v1607
        %v1656 = vunpack.c.l.bf16 %v1608
        %v1657 = vunpack.c.l.bf16 %v1609
        %v1658 = vunpack.c.l.bf16 %v1610
        %v1659 = vunpack.c.l.bf16 %v1611
        %v1660 = vunpack.c.l.bf16 %v1612
        %v1661 = vunpack.c.l.bf16 %v1613
        %v1662 = vunpack.c.l.bf16 %v1614
        %v1663 = vunpack.c.l.bf16 %v1615
        %v1664 = vunpack.c.l.bf16 %v1616
        %v1665 = vunpack.c.l.bf16 %v1617
        %v1666 = vunpack.c.l.bf16 %v1618
        %v1667 = vunpack.c.l.bf16 %v1619
        %v1668 = vunpack.c.l.bf16 %v1620
        %v1669 = vunpack.c.l.bf16 %v1621
        %v1670 = vunpack.c.l.bf16 %v1622
        %v1671 = vunpack.c.l.bf16 %v1623
        %v1672 = vunpack.c.l.bf16 %v1624
        %v1673 = vunpack.c.l.bf16 %v1625
        %v1674 = vunpack.c.l.bf16 %v1626
        %v1675 = vunpack.c.l.bf16 %v1627
        %v1676 = vunpack.c.l.bf16 %v1628
        %v1677 = vunpack.c.l.bf16 %v1629
        %v1678 = vunpack.c.l.bf16 %v1630
        %v1679 = vunpack.c.l.bf16 %v1631
        %v1680 = vld [vmem:[%s3 + $0x3] sm:$0x1]
        %v1681 = vperm.slane %v1680, 0
        %v1682 = vmul.f32 %v1632, %v1681
        %v1683 = vmul.f32 %v1633, %v1681
        %v1684 = vmul.f32 %v1634, %v1681
        %v1685 = vmul.f32 %v1635, %v1681
        %v1686 = vmul.f32 %v1636, %v1681
        %v1687 = vmul.f32 %v1637, %v1681
        %v1688 = vmul.f32 %v1638, %v1681
        %v1689 = vmul.f32 %v1639, %v1681
        %v1690 = vmul.f32 %v1640, %v1681
        %v1691 = vmul.f32 %v1641, %v1681
        %v1692 = vmul.f32 %v1642, %v1681
        %v1693 = vmul.f32 %v1643, %v1681
        %v1694 = vmul.f32 %v1644, %v1681
        %v1695 = vmul.f32 %v1645, %v1681
        %v1696 = vmul.f32 %v1646, %v1681
        %v1697 = vmul.f32 %v1647, %v1681
        %v1698 = vmul.f32 %v1648, %v1681
        %v1699 = vmul.f32 %v1649, %v1681
        %v1700 = vmul.f32 %v1650, %v1681
        %v1701 = vmul.f32 %v1651, %v1681
        %v1702 = vmul.f32 %v1652, %v1681
        %v1703 = vmul.f32 %v1653, %v1681
        %v1704 = vmul.f32 %v1654, %v1681
        %v1705 = vmul.f32 %v1655, %v1681
        %v1706 = vmul.f32 %v1656, %v1681
        %v1707 = vmul.f32 %v1657, %v1681
        %v1708 = vmul.f32 %v1658, %v1681
        %v1709 = vmul.f32 %v1659, %v1681
        %v1710 = vmul.f32 %v1660, %v1681
        %v1711 = vmul.f32 %v1661, %v1681
        %v1712 = vmul.f32 %v1662, %v1681
        %v1713 = vmul.f32 %v1663, %v1681
        %v1714 = vmul.f32 %v1664, %v1681
        %v1715 = vmul.f32 %v1665, %v1681
        %v1716 = vmul.f32 %v1666, %v1681
        %v1717 = vmul.f32 %v1667, %v1681
        %v1718 = vmul.f32 %v1668, %v1681
        %v1719 = vmul.f32 %v1669, %v1681
        %v1720 = vmul.f32 %v1670, %v1681
        %v1721 = vmul.f32 %v1671, %v1681
        %v1722 = vmul.f32 %v1672, %v1681
        %v1723 = vmul.f32 %v1673, %v1681
        %v1724 = vmul.f32 %v1674, %v1681
        %v1725 = vmul.f32 %v1675, %v1681
        %v1726 = vmul.f32 %v1676, %v1681
        %v1727 = vmul.f32 %v1677, %v1681
        %v1728 = vmul.f32 %v1678, %v1681
        %v1729 = vmul.f32 %v1679, %v1681
        %v1730 = vadd.f32 %v1536, %v1682
        %v1731 = vadd.f32 %v1537, %v1683
        %v1732 = vadd.f32 %v1538, %v1684
        %v1733 = vadd.f32 %v1539, %v1685
        %v1734 = vadd.f32 %v1540, %v1686
        %v1735 = vadd.f32 %v1541, %v1687
        %v1736 = vadd.f32 %v1542, %v1688
        %v1737 = vadd.f32 %v1543, %v1689
        %v1738 = vadd.f32 %v1544, %v1690
        %v1739 = vadd.f32 %v1545, %v1691
        %v1740 = vadd.f32 %v1546, %v1692
        %v1741 = vadd.f32 %v1547, %v1693
        %v1742 = vadd.f32 %v1548, %v1694
        %v1743 = vadd.f32 %v1549, %v1695
        %v1744 = vadd.f32 %v1550, %v1696
        %v1745 = vadd.f32 %v1551, %v1697
        %v1746 = vadd.f32 %v1552, %v1698
        %v1747 = vadd.f32 %v1553, %v1699
        %v1748 = vadd.f32 %v1554, %v1700
        %v1749 = vadd.f32 %v1555, %v1701
        %v1750 = vadd.f32 %v1556, %v1702
        %v1751 = vadd.f32 %v1557, %v1703
        %v1752 = vadd.f32 %v1558, %v1704
        %v1753 = vadd.f32 %v1559, %v1705
        %v1754 = vadd.f32 %v1560, %v1706
        %v1755 = vadd.f32 %v1561, %v1707
        %v1756 = vadd.f32 %v1562, %v1708
        %v1757 = vadd.f32 %v1563, %v1709
        %v1758 = vadd.f32 %v1564, %v1710
        %v1759 = vadd.f32 %v1565, %v1711
        %v1760 = vadd.f32 %v1566, %v1712
        %v1761 = vadd.f32 %v1567, %v1713
        %v1762 = vadd.f32 %v1568, %v1714
        %v1763 = vadd.f32 %v1569, %v1715
        %v1764 = vadd.f32 %v1570, %v1716
        %v1765 = vadd.f32 %v1571, %v1717
        %v1766 = vadd.f32 %v1572, %v1718
        %v1767 = vadd.f32 %v1573, %v1719
        %v1768 = vadd.f32 %v1574, %v1720
        %v1769 = vadd.f32 %v1575, %v1721
        %v1770 = vadd.f32 %v1576, %v1722
        %v1771 = vadd.f32 %v1577, %v1723
        %v1772 = vadd.f32 %v1578, %v1724
        %v1773 = vadd.f32 %v1579, %v1725
        %v1774 = vadd.f32 %v1580, %v1726
        %v1775 = vadd.f32 %v1581, %v1727
        %v1776 = vadd.f32 %v1582, %v1728
        %v1777 = vadd.f32 %v1583, %v1729
        %v1778 = vld [vmem:[%s3 + $0x4] sm:$0x1]
        %v1779 = vperm.slane %v1778, 0
        %v1780 = vmul.f32 %v394, %v1779
        %v1781 = vmul.f32 %v395, %v1779
        %v1782 = vmul.f32 %v396, %v1779
        %v1783 = vmul.f32 %v397, %v1779
        %v1784 = vmul.f32 %v398, %v1779
        %v1785 = vmul.f32 %v399, %v1779
        %v1786 = vmul.f32 %v400, %v1779
        %v1787 = vmul.f32 %v401, %v1779
        %v1788 = vmul.f32 %v402, %v1779
        %v1789 = vmul.f32 %v403, %v1779
        %v1790 = vmul.f32 %v404, %v1779
        %v1791 = vmul.f32 %v405, %v1779
        %v1792 = vmul.f32 %v406, %v1779
        %v1793 = vmul.f32 %v407, %v1779
        %v1794 = vmul.f32 %v408, %v1779
        %v1795 = vmul.f32 %v409, %v1779
        %v1796 = vmul.f32 %v410, %v1779
        %v1797 = vmul.f32 %v411, %v1779
        %v1798 = vmul.f32 %v412, %v1779
        %v1799 = vmul.f32 %v413, %v1779
        %v1800 = vmul.f32 %v414, %v1779
        %v1801 = vmul.f32 %v415, %v1779
        %v1802 = vmul.f32 %v416, %v1779
        %v1803 = vmul.f32 %v417, %v1779
        %v1804 = vmul.f32 %v418, %v1779
        %v1805 = vmul.f32 %v419, %v1779
        %v1806 = vmul.f32 %v420, %v1779
        %v1807 = vmul.f32 %v421, %v1779
        %v1808 = vmul.f32 %v422, %v1779
        %v1809 = vmul.f32 %v423, %v1779
        %v1810 = vmul.f32 %v424, %v1779
        %v1811 = vmul.f32 %v425, %v1779
        %v1812 = vmul.f32 %v426, %v1779
        %v1813 = vmul.f32 %v427, %v1779
        %v1814 = vmul.f32 %v428, %v1779
        %v1815 = vmul.f32 %v429, %v1779
        %v1816 = vmul.f32 %v430, %v1779
        %v1817 = vmul.f32 %v431, %v1779
        %v1818 = vmul.f32 %v432, %v1779
        %v1819 = vmul.f32 %v433, %v1779
        %v1820 = vmul.f32 %v434, %v1779
        %v1821 = vmul.f32 %v435, %v1779
        %v1822 = vmul.f32 %v436, %v1779
        %v1823 = vmul.f32 %v437, %v1779
        %v1824 = vmul.f32 %v438, %v1779
        %v1825 = vmul.f32 %v439, %v1779
        %v1826 = vmul.f32 %v440, %v1779
        %v1827 = vmul.f32 %v441, %v1779
        %v1876 = vrot.slane %v1780, 6
        %v1877 = vrot.slane %v1781, 6
        %v1878 = vsel %vm1164, %v1876, %v1877
        %v1879 = vrot.slane %v1782, 6
        %v1880 = vsel %vm1164, %v1877, %v1879
        %v1881 = vrot.slane %v1783, 6
        %v1882 = vrot.slane %v1784, 6
        %v1883 = vsel %vm1164, %v1881, %v1882
        %v1884 = vrot.slane %v1785, 6
        %v1885 = vsel %vm1164, %v1882, %v1884
        %v1886 = vrot.slane %v1786, 6
        %v1887 = vrot.slane %v1787, 6
        %v1888 = vsel %vm1164, %v1886, %v1887
        %v1889 = vrot.slane %v1788, 6
        %v1890 = vsel %vm1164, %v1887, %v1889
        %v1891 = vrot.slane %v1789, 6
        %v1892 = vrot.slane %v1790, 6
        %v1893 = vsel %vm1164, %v1891, %v1892
        %v1894 = vrot.slane %v1791, 6
        %v1895 = vsel %vm1164, %v1892, %v1894
        %v1896 = vrot.slane %v1792, 6
        %v1897 = vrot.slane %v1793, 6
        %v1898 = vsel %vm1164, %v1896, %v1897
        %v1899 = vrot.slane %v1794, 6
        %v1900 = vsel %vm1164, %v1897, %v1899
        %v1901 = vrot.slane %v1795, 6
        %v1902 = vrot.slane %v1796, 6
        %v1903 = vsel %vm1164, %v1901, %v1902
        %v1904 = vrot.slane %v1797, 6
        %v1905 = vsel %vm1164, %v1902, %v1904
        %v1906 = vrot.slane %v1798, 6
        %v1907 = vrot.slane %v1799, 6
        %v1908 = vsel %vm1164, %v1906, %v1907
        %v1909 = vrot.slane %v1800, 6
        %v1910 = vsel %vm1164, %v1907, %v1909
        %v1911 = vrot.slane %v1801, 6
        %v1912 = vrot.slane %v1802, 6
        %v1913 = vsel %vm1164, %v1911, %v1912
        %v1914 = vrot.slane %v1803, 6
        %v1915 = vsel %vm1164, %v1912, %v1914
        %v1916 = vrot.slane %v1804, 6
        %v1917 = vrot.slane %v1805, 6
        %v1918 = vsel %vm1164, %v1916, %v1917
        %v1919 = vrot.slane %v1806, 6
        %v1920 = vsel %vm1164, %v1917, %v1919
        %v1921 = vrot.slane %v1807, 6
        %v1922 = vrot.slane %v1808, 6
        %v1923 = vsel %vm1164, %v1921, %v1922
        %v1924 = vrot.slane %v1809, 6
        %v1925 = vsel %vm1164, %v1922, %v1924
        %v1926 = vrot.slane %v1810, 6
        %v1927 = vrot.slane %v1811, 6
        %v1928 = vsel %vm1164, %v1926, %v1927
        %v1929 = vrot.slane %v1812, 6
        %v1930 = vsel %vm1164, %v1927, %v1929
        %v1931 = vrot.slane %v1813, 6
        %v1932 = vrot.slane %v1814, 6
        %v1933 = vsel %vm1164, %v1931, %v1932
        %v1934 = vrot.slane %v1815, 6
        %v1935 = vsel %vm1164, %v1932, %v1934
        %v1936 = vrot.slane %v1816, 6
        %v1937 = vrot.slane %v1817, 6
        %v1938 = vsel %vm1164, %v1936, %v1937
        %v1939 = vrot.slane %v1818, 6
        %v1940 = vsel %vm1164, %v1937, %v1939
        %v1941 = vrot.slane %v1819, 6
        %v1942 = vrot.slane %v1820, 6
        %v1943 = vsel %vm1164, %v1941, %v1942
        %v1944 = vrot.slane %v1821, 6
        %v1945 = vsel %vm1164, %v1942, %v1944
        %v1946 = vrot.slane %v1822, 6
        %v1947 = vrot.slane %v1823, 6
        %v1948 = vsel %vm1164, %v1946, %v1947
        %v1949 = vrot.slane %v1824, 6
        %v1950 = vsel %vm1164, %v1947, %v1949
        %v1951 = vrot.slane %v1825, 6
        %v1952 = vrot.slane %v1826, 6
        %v1953 = vsel %vm1164, %v1951, %v1952
        %v1954 = vrot.slane %v1827, 6
        %v1955 = vsel %vm1164, %v1952, %v1954
        %v2004 = vadd.f32 %v1730, %v1876
        %v2005 = vadd.f32 %v1731, %v1878
        %v2006 = vadd.f32 %v1732, %v1880
        %v2007 = vadd.f32 %v1733, %v1881
        %v2008 = vadd.f32 %v1734, %v1883
        %v2009 = vadd.f32 %v1735, %v1885
        %v2010 = vadd.f32 %v1736, %v1886
        %v2011 = vadd.f32 %v1737, %v1888
        %v2012 = vadd.f32 %v1738, %v1890
        %v2013 = vadd.f32 %v1739, %v1891
        %v2014 = vadd.f32 %v1740, %v1893
        %v2015 = vadd.f32 %v1741, %v1895
        %v2016 = vadd.f32 %v1742, %v1896
        %v2017 = vadd.f32 %v1743, %v1898
        %v2018 = vadd.f32 %v1744, %v1900
        %v2019 = vadd.f32 %v1745, %v1901
        %v2020 = vadd.f32 %v1746, %v1903
        %v2021 = vadd.f32 %v1747, %v1905
        %v2022 = vadd.f32 %v1748, %v1906
        %v2023 = vadd.f32 %v1749, %v1908
        %v2024 = vadd.f32 %v1750, %v1910
        %v2025 = vadd.f32 %v1751, %v1911
        %v2026 = vadd.f32 %v1752, %v1913
        %v2027 = vadd.f32 %v1753, %v1915
        %v2028 = vadd.f32 %v1754, %v1916
        %v2029 = vadd.f32 %v1755, %v1918
        %v2030 = vadd.f32 %v1756, %v1920
        %v2031 = vadd.f32 %v1757, %v1921
        %v2032 = vadd.f32 %v1758, %v1923
        %v2033 = vadd.f32 %v1759, %v1925
        %v2034 = vadd.f32 %v1760, %v1926
        %v2035 = vadd.f32 %v1761, %v1928
        %v2036 = vadd.f32 %v1762, %v1930
        %v2037 = vadd.f32 %v1763, %v1931
        %v2038 = vadd.f32 %v1764, %v1933
        %v2039 = vadd.f32 %v1765, %v1935
        %v2040 = vadd.f32 %v1766, %v1936
        %v2041 = vadd.f32 %v1767, %v1938
        %v2042 = vadd.f32 %v1768, %v1940
        %v2043 = vadd.f32 %v1769, %v1941
        %v2044 = vadd.f32 %v1770, %v1943
        %v2045 = vadd.f32 %v1771, %v1945
        %v2046 = vadd.f32 %v1772, %v1946
        %v2047 = vadd.f32 %v1773, %v1948
        %v2048 = vadd.f32 %v1774, %v1950
        %v2049 = vadd.f32 %v1775, %v1951
        %v2050 = vadd.f32 %v1776, %v1953
        %v2051 = vadd.f32 %v1777, %v1955
        %v2052 = vld [vmem:[%s345 + $0x10] sm:$0xf]
        %v2053 = vld [vmem:[%s345 + $0x2c] sm:$0xf]
        %v2054 = vld [vmem:[%s345 + $0x48] sm:$0xf]
        %v2055 = vld [vmem:[%s345 + $0x64] sm:$0xf]
        %v2056 = vld [vmem:[%s345 + $0x80] sm:$0xf]
        %v2057 = vld [vmem:[%s345 + $0x9c] sm:$0xf]
        %v2058 = vld [vmem:[%s345 + $0xb8] sm:$0xf]
        %v2059 = vld [vmem:[%s345 + $0xd4] sm:$0xf]
        %v2060 = vld [vmem:[%s345 + $0xf0] sm:$0xf]
        %v2061 = vld [vmem:[%s345 + $0x10c] sm:$0xf]
        %v2062 = vld [vmem:[%s345 + $0x128] sm:$0xf]
        %v2063 = vld [vmem:[%s345 + $0x144] sm:$0xf]
        %v2064 = vld [vmem:[%s345 + $0x160] sm:$0xf]
        %v2065 = vld [vmem:[%s345 + $0x17c] sm:$0xf]
        %v2066 = vld [vmem:[%s345 + $0x198] sm:$0xf]
        %v2067 = vld [vmem:[%s345 + $0x1b4] sm:$0xf]
        %v2068 = vunpack.c.l.bf16 %v2052
        %v2069 = vunpack.c.l.bf16 %v2053
        %v2070 = vunpack.c.l.bf16 %v2054
        %v2071 = vunpack.c.l.bf16 %v2055
        %v2072 = vunpack.c.l.bf16 %v2056
        %v2073 = vunpack.c.l.bf16 %v2057
        %v2074 = vunpack.c.l.bf16 %v2058
        %v2075 = vunpack.c.l.bf16 %v2059
        %v2076 = vunpack.c.l.bf16 %v2060
        %v2077 = vunpack.c.l.bf16 %v2061
        %v2078 = vunpack.c.l.bf16 %v2062
        %v2079 = vunpack.c.l.bf16 %v2063
        %v2080 = vunpack.c.l.bf16 %v2064
        %v2081 = vunpack.c.l.bf16 %v2065
        %v2082 = vunpack.c.l.bf16 %v2066
        %v2083 = vunpack.c.l.bf16 %v2067
        %v2084 = vld [vmem:[%s3 + $0x5] sm:$0x1]
        %v2085 = vperm.slane %v2084, 0
        %v2086 = vmul.f32 %v395, %v2085
        %v2087 = vmul.f32 %v2068, %v2085
        %v2088 = vmul.f32 %v398, %v2085
        %v2089 = vmul.f32 %v2069, %v2085
        %v2090 = vmul.f32 %v401, %v2085
        %v2091 = vmul.f32 %v2070, %v2085
        %v2092 = vmul.f32 %v404, %v2085
        %v2093 = vmul.f32 %v2071, %v2085
        %v2094 = vmul.f32 %v407, %v2085
        %v2095 = vmul.f32 %v2072, %v2085
        %v2096 = vmul.f32 %v410, %v2085
        %v2097 = vmul.f32 %v2073, %v2085
        %v2098 = vmul.f32 %v413, %v2085
        %v2099 = vmul.f32 %v2074, %v2085
        %v2100 = vmul.f32 %v416, %v2085
        %v2101 = vmul.f32 %v2075, %v2085
        %v2102 = vmul.f32 %v419, %v2085
        %v2103 = vmul.f32 %v2076, %v2085
        %v2104 = vmul.f32 %v422, %v2085
        %v2105 = vmul.f32 %v2077, %v2085
        %v2106 = vmul.f32 %v425, %v2085
        %v2107 = vmul.f32 %v2078, %v2085
        %v2108 = vmul.f32 %v428, %v2085
        %v2109 = vmul.f32 %v2079, %v2085
        %v2110 = vmul.f32 %v431, %v2085
        %v2111 = vmul.f32 %v2080, %v2085
        %v2112 = vmul.f32 %v434, %v2085
        %v2113 = vmul.f32 %v2081, %v2085
        %v2114 = vmul.f32 %v437, %v2085
        %v2115 = vmul.f32 %v2082, %v2085
        %v2116 = vmul.f32 %v440, %v2085
        %v2117 = vmul.f32 %v2083, %v2085
        %v2150 = vrot.slane %v2086, 4
        %v2151 = vrot.slane %v2087, 4
        %v2152 = vsel %vm1439, %v2150, %v2151
        %v2153 = vrot.slane %v2088, 4
        %v2154 = vrot.slane %v2089, 4
        %v2155 = vsel %vm1439, %v2153, %v2154
        %v2156 = vrot.slane %v2090, 4
        %v2157 = vrot.slane %v2091, 4
        %v2158 = vsel %vm1439, %v2156, %v2157
        %v2159 = vrot.slane %v2092, 4
        %v2160 = vrot.slane %v2093, 4
        %v2161 = vsel %vm1439, %v2159, %v2160
        %v2162 = vrot.slane %v2094, 4
        %v2163 = vrot.slane %v2095, 4
        %v2164 = vsel %vm1439, %v2162, %v2163
        %v2165 = vrot.slane %v2096, 4
        %v2166 = vrot.slane %v2097, 4
        %v2167 = vsel %vm1439, %v2165, %v2166
        %v2168 = vrot.slane %v2098, 4
        %v2169 = vrot.slane %v2099, 4
        %v2170 = vsel %vm1439, %v2168, %v2169
        %v2171 = vrot.slane %v2100, 4
        %v2172 = vrot.slane %v2101, 4
        %v2173 = vsel %vm1439, %v2171, %v2172
        %v2174 = vrot.slane %v2102, 4
        %v2175 = vrot.slane %v2103, 4
        %v2176 = vsel %vm1439, %v2174, %v2175
        %v2177 = vrot.slane %v2104, 4
        %v2178 = vrot.slane %v2105, 4
        %v2179 = vsel %vm1439, %v2177, %v2178
        %v2180 = vrot.slane %v2106, 4
        %v2181 = vrot.slane %v2107, 4
        %v2182 = vsel %vm1439, %v2180, %v2181
        %v2183 = vrot.slane %v2108, 4
        %v2184 = vrot.slane %v2109, 4
        %v2185 = vsel %vm1439, %v2183, %v2184
        %v2186 = vrot.slane %v2110, 4
        %v2187 = vrot.slane %v2111, 4
        %v2188 = vsel %vm1439, %v2186, %v2187
        %v2189 = vrot.slane %v2112, 4
        %v2190 = vrot.slane %v2113, 4
        %v2191 = vsel %vm1439, %v2189, %v2190
        %v2192 = vrot.slane %v2114, 4
        %v2193 = vrot.slane %v2115, 4
        %v2194 = vsel %vm1439, %v2192, %v2193
        %v2195 = vrot.slane %v2116, 4
        %v2196 = vrot.slane %v2117, 4
        %v2197 = vsel %vm1439, %v2195, %v2196
        %v2246 = vadd.f32 %v2004, %v2150
        %v2247 = vadd.f32 %v2005, %v2152
        %v2248 = vadd.f32 %v2006, %v2151
        %v2249 = vadd.f32 %v2007, %v2153
        %v2250 = vadd.f32 %v2008, %v2155
        %v2251 = vadd.f32 %v2009, %v2154
        %v2252 = vadd.f32 %v2010, %v2156
        %v2253 = vadd.f32 %v2011, %v2158
        %v2254 = vadd.f32 %v2012, %v2157
        %v2255 = vadd.f32 %v2013, %v2159
        %v2256 = vadd.f32 %v2014, %v2161
        %v2257 = vadd.f32 %v2015, %v2160
        %v2258 = vadd.f32 %v2016, %v2162
        %v2259 = vadd.f32 %v2017, %v2164
        %v2260 = vadd.f32 %v2018, %v2163
        %v2261 = vadd.f32 %v2019, %v2165
        %v2262 = vadd.f32 %v2020, %v2167
        %v2263 = vadd.f32 %v2021, %v2166
        %v2264 = vadd.f32 %v2022, %v2168
        %v2265 = vadd.f32 %v2023, %v2170
        %v2266 = vadd.f32 %v2024, %v2169
        %v2267 = vadd.f32 %v2025, %v2171
        %v2268 = vadd.f32 %v2026, %v2173
        %v2269 = vadd.f32 %v2027, %v2172
        %v2270 = vadd.f32 %v2028, %v2174
        %v2271 = vadd.f32 %v2029, %v2176
        %v2272 = vadd.f32 %v2030, %v2175
        %v2273 = vadd.f32 %v2031, %v2177
        %v2274 = vadd.f32 %v2032, %v2179
        %v2275 = vadd.f32 %v2033, %v2178
        %v2276 = vadd.f32 %v2034, %v2180
        %v2277 = vadd.f32 %v2035, %v2182
        %v2278 = vadd.f32 %v2036, %v2181
        %v2279 = vadd.f32 %v2037, %v2183
        %v2280 = vadd.f32 %v2038, %v2185
        %v2281 = vadd.f32 %v2039, %v2184
        %v2282 = vadd.f32 %v2040, %v2186
        %v2283 = vadd.f32 %v2041, %v2188
        %v2284 = vadd.f32 %v2042, %v2187
        %v2285 = vadd.f32 %v2043, %v2189
        %v2286 = vadd.f32 %v2044, %v2191
        %v2287 = vadd.f32 %v2045, %v2190
        %v2288 = vadd.f32 %v2046, %v2192
        %v2289 = vadd.f32 %v2047, %v2194
        %v2290 = vadd.f32 %v2048, %v2193
        %v2291 = vadd.f32 %v2049, %v2195
        %v2292 = vadd.f32 %v2050, %v2197
        %v2293 = vadd.f32 %v2051, %v2196
        %s2294 = scalar_lea.vmem %s341, 672
        %v2295 = vld [vmem:[%s2294 + $0x4] sm:$0xc]
        %v2296 = vld [vmem:[%s2294 + $0x8] sm:$0xf]
        %v2297 = vld [vmem:[%s2294 + $0xc] sm:$0x3]
        %v2298 = vld [vmem:[%s2294 + $0x20] sm:$0xc]
        %v2299 = vld [vmem:[%s2294 + $0x24] sm:$0xf]
        %v2300 = vld [vmem:[%s2294 + $0x28] sm:$0x3]
        %v2301 = vld [vmem:[%s2294 + $0x3c] sm:$0xc]
        %v2302 = vld [vmem:[%s2294 + $0x40] sm:$0xf]
        %v2303 = vld [vmem:[%s2294 + $0x44] sm:$0x3]
        %v2304 = vld [vmem:[%s2294 + $0x58] sm:$0xc]
        %v2305 = vld [vmem:[%s2294 + $0x5c] sm:$0xf]
        %v2306 = vld [vmem:[%s2294 + $0x60] sm:$0x3]
        %v2307 = vld [vmem:[%s2294 + $0x74] sm:$0xc]
        %v2308 = vld [vmem:[%s2294 + $0x78] sm:$0xf]
        %v2309 = vld [vmem:[%s2294 + $0x7c] sm:$0x3]
        %v2310 = vld [vmem:[%s2294 + $0x90] sm:$0xc]
        %v2311 = vld [vmem:[%s2294 + $0x94] sm:$0xf]
        %v2312 = vld [vmem:[%s2294 + $0x98] sm:$0x3]
        %v2313 = vld [vmem:[%s2294 + $0xac] sm:$0xc]
        %v2314 = vld [vmem:[%s2294 + $0xb0] sm:$0xf]
        %v2315 = vld [vmem:[%s2294 + $0xb4] sm:$0x3]
        %v2316 = vld [vmem:[%s2294 + $0xc8] sm:$0xc]
        %v2317 = vld [vmem:[%s2294 + $0xcc] sm:$0xf]
        %v2318 = vld [vmem:[%s2294 + $0xd0] sm:$0x3]
        %v2319 = vld [vmem:[%s2294 + $0xe4] sm:$0xc]
        %v2320 = vld [vmem:[%s2294 + $0xe8] sm:$0xf]
        %v2321 = vld [vmem:[%s2294 + $0xec] sm:$0x3]
        %v2322 = vld [vmem:[%s2294 + $0x100] sm:$0xc]
        %v2323 = vld [vmem:[%s2294 + $0x104] sm:$0xf]
        %v2324 = vld [vmem:[%s2294 + $0x108] sm:$0x3]
        %v2325 = vld [vmem:[%s2294 + $0x11c] sm:$0xc]
        %v2326 = vld [vmem:[%s2294 + $0x120] sm:$0xf]
        %v2327 = vld [vmem:[%s2294 + $0x124] sm:$0x3]
        %v2328 = vld [vmem:[%s2294 + $0x138] sm:$0xc]
        %v2329 = vld [vmem:[%s2294 + $0x13c] sm:$0xf]
        %v2330 = vld [vmem:[%s2294 + $0x140] sm:$0x3]
        %v2331 = vld [vmem:[%s2294 + $0x154] sm:$0xc]
        %v2332 = vld [vmem:[%s2294 + $0x158] sm:$0xf]
        %v2333 = vld [vmem:[%s2294 + $0x15c] sm:$0x3]
        %v2334 = vld [vmem:[%s2294 + $0x170] sm:$0xc]
        %v2335 = vld [vmem:[%s2294 + $0x174] sm:$0xf]
        %v2336 = vld [vmem:[%s2294 + $0x178] sm:$0x3]
        %v2337 = vld [vmem:[%s2294 + $0x18c] sm:$0xc]
        %v2338 = vld [vmem:[%s2294 + $0x190] sm:$0xf]
        %v2339 = vld [vmem:[%s2294 + $0x194] sm:$0x3]
        %v2340 = vld [vmem:[%s2294 + $0x1a8] sm:$0xc]
        %v2341 = vld [vmem:[%s2294 + $0x1ac] sm:$0xf]
        %v2342 = vld [vmem:[%s2294 + $0x1b0] sm:$0x3]
        %v2343 = vunpack.c.l.bf16 %v2295
        %v2344 = vunpack.c.l.bf16 %v2296
        %v2345 = vunpack.c.l.bf16 %v2297
        %v2346 = vunpack.c.l.bf16 %v2298
        %v2347 = vunpack.c.l.bf16 %v2299
        %v2348 = vunpack.c.l.bf16 %v2300
        %v2349 = vunpack.c.l.bf16 %v2301
        %v2350 = vunpack.c.l.bf16 %v2302
        %v2351 = vunpack.c.l.bf16 %v2303
        %v2352 = vunpack.c.l.bf16 %v2304
        %v2353 = vunpack.c.l.bf16 %v2305
        %v2354 = vunpack.c.l.bf16 %v2306
        %v2355 = vunpack.c.l.bf16 %v2307
        %v2356 = vunpack.c.l.bf16 %v2308
        %v2357 = vunpack.c.l.bf16 %v2309
        %v2358 = vunpack.c.l.bf16 %v2310
        %v2359 = vunpack.c.l.bf16 %v2311
        %v2360 = vunpack.c.l.bf16 %v2312
        %v2361 = vunpack.c.l.bf16 %v2313
        %v2362 = vunpack.c.l.bf16 %v2314
        %v2363 = vunpack.c.l.bf16 %v2315
        %v2364 = vunpack.c.l.bf16 %v2316
        %v2365 = vunpack.c.l.bf16 %v2317
        %v2366 = vunpack.c.l.bf16 %v2318
        %v2367 = vunpack.c.l.bf16 %v2319
        %v2368 = vunpack.c.l.bf16 %v2320
        %v2369 = vunpack.c.l.bf16 %v2321
        %v2370 = vunpack.c.l.bf16 %v2322
        %v2371 = vunpack.c.l.bf16 %v2323
        %v2372 = vunpack.c.l.bf16 %v2324
        %v2373 = vunpack.c.l.bf16 %v2325
        %v2374 = vunpack.c.l.bf16 %v2326
        %v2375 = vunpack.c.l.bf16 %v2327
        %v2376 = vunpack.c.l.bf16 %v2328
        %v2377 = vunpack.c.l.bf16 %v2329
        %v2378 = vunpack.c.l.bf16 %v2330
        %v2379 = vunpack.c.l.bf16 %v2331
        %v2380 = vunpack.c.l.bf16 %v2332
        %v2381 = vunpack.c.l.bf16 %v2333
        %v2382 = vunpack.c.l.bf16 %v2334
        %v2383 = vunpack.c.l.bf16 %v2335
        %v2384 = vunpack.c.l.bf16 %v2336
        %v2385 = vunpack.c.l.bf16 %v2337
        %v2386 = vunpack.c.l.bf16 %v2338
        %v2387 = vunpack.c.l.bf16 %v2339
        %v2388 = vunpack.c.l.bf16 %v2340
        %v2389 = vunpack.c.l.bf16 %v2341
        %v2390 = vunpack.c.l.bf16 %v2342
        %v2391 = vld [vmem:[%s3 + $0x6] sm:$0x1]
        %v2392 = vperm.slane %v2391, 0
        %v2393 = vmul.f32 %v2343, %v2392
        %v2394 = vmul.f32 %v2344, %v2392
        %v2395 = vmul.f32 %v2345, %v2392
        %v2396 = vmul.f32 %v2346, %v2392
        %v2397 = vmul.f32 %v2347, %v2392
        %v2398 = vmul.f32 %v2348, %v2392
        %v2399 = vmul.f32 %v2349, %v2392
        %v2400 = vmul.f32 %v2350, %v2392
        %v2401 = vmul.f32 %v2351, %v2392
        %v2402 = vmul.f32 %v2352, %v2392
        %v2403 = vmul.f32 %v2353, %v2392
        %v2404 = vmul.f32 %v2354, %v2392
        %v2405 = vmul.f32 %v2355, %v2392
        %v2406 = vmul.f32 %v2356, %v2392
        %v2407 = vmul.f32 %v2357, %v2392
        %v2408 = vmul.f32 %v2358, %v2392
        %v2409 = vmul.f32 %v2359, %v2392
        %v2410 = vmul.f32 %v2360, %v2392
        %v2411 = vmul.f32 %v2361, %v2392
        %v2412 = vmul.f32 %v2362, %v2392
        %v2413 = vmul.f32 %v2363, %v2392
        %v2414 = vmul.f32 %v2364, %v2392
        %v2415 = vmul.f32 %v2365, %v2392
        %v2416 = vmul.f32 %v2366, %v2392
        %v2417 = vmul.f32 %v2367, %v2392
        %v2418 = vmul.f32 %v2368, %v2392
        %v2419 = vmul.f32 %v2369, %v2392
        %v2420 = vmul.f32 %v2370, %v2392
        %v2421 = vmul.f32 %v2371, %v2392
        %v2422 = vmul.f32 %v2372, %v2392
        %v2423 = vmul.f32 %v2373, %v2392
        %v2424 = vmul.f32 %v2374, %v2392
        %v2425 = vmul.f32 %v2375, %v2392
        %v2426 = vmul.f32 %v2376, %v2392
        %v2427 = vmul.f32 %v2377, %v2392
        %v2428 = vmul.f32 %v2378, %v2392
        %v2429 = vmul.f32 %v2379, %v2392
        %v2430 = vmul.f32 %v2380, %v2392
        %v2431 = vmul.f32 %v2381, %v2392
        %v2432 = vmul.f32 %v2382, %v2392
        %v2433 = vmul.f32 %v2383, %v2392
        %v2434 = vmul.f32 %v2384, %v2392
        %v2435 = vmul.f32 %v2385, %v2392
        %v2436 = vmul.f32 %v2386, %v2392
        %v2437 = vmul.f32 %v2387, %v2392
        %v2438 = vmul.f32 %v2388, %v2392
        %v2439 = vmul.f32 %v2389, %v2392
        %v2440 = vmul.f32 %v2390, %v2392
        %v2441 = vadd.f32 %v2246, %v2393
        %v2442 = vadd.f32 %v2247, %v2394
        %v2443 = vadd.f32 %v2248, %v2395
        %v2444 = vadd.f32 %v2249, %v2396
        %v2445 = vadd.f32 %v2250, %v2397
        %v2446 = vadd.f32 %v2251, %v2398
        %v2447 = vadd.f32 %v2252, %v2399
        %v2448 = vadd.f32 %v2253, %v2400
        %v2449 = vadd.f32 %v2254, %v2401
        %v2450 = vadd.f32 %v2255, %v2402
        %v2451 = vadd.f32 %v2256, %v2403
        %v2452 = vadd.f32 %v2257, %v2404
        %v2453 = vadd.f32 %v2258, %v2405
        %v2454 = vadd.f32 %v2259, %v2406
        %v2455 = vadd.f32 %v2260, %v2407
        %v2456 = vadd.f32 %v2261, %v2408
        %v2457 = vadd.f32 %v2262, %v2409
        %v2458 = vadd.f32 %v2263, %v2410
        %v2459 = vadd.f32 %v2264, %v2411
        %v2460 = vadd.f32 %v2265, %v2412
        %v2461 = vadd.f32 %v2266, %v2413
        %v2462 = vadd.f32 %v2267, %v2414
        %v2463 = vadd.f32 %v2268, %v2415
        %v2464 = vadd.f32 %v2269, %v2416
        %v2465 = vadd.f32 %v2270, %v2417
        %v2466 = vadd.f32 %v2271, %v2418
        %v2467 = vadd.f32 %v2272, %v2419
        %v2468 = vadd.f32 %v2273, %v2420
        %v2469 = vadd.f32 %v2274, %v2421
        %v2470 = vadd.f32 %v2275, %v2422
        %v2471 = vadd.f32 %v2276, %v2423
        %v2472 = vadd.f32 %v2277, %v2424
        %v2473 = vadd.f32 %v2278, %v2425
        %v2474 = vadd.f32 %v2279, %v2426
        %v2475 = vadd.f32 %v2280, %v2427
        %v2476 = vadd.f32 %v2281, %v2428
        %v2477 = vadd.f32 %v2282, %v2429
        %v2478 = vadd.f32 %v2283, %v2430
        %v2479 = vadd.f32 %v2284, %v2431
        %v2480 = vadd.f32 %v2285, %v2432
        %v2481 = vadd.f32 %v2286, %v2433
        %v2482 = vadd.f32 %v2287, %v2434
        %v2483 = vadd.f32 %v2288, %v2435
        %v2484 = vadd.f32 %v2289, %v2436
        %v2485 = vadd.f32 %v2290, %v2437
        %v2486 = vadd.f32 %v2291, %v2438
        %v2487 = vadd.f32 %v2292, %v2439
        %v2488 = vadd.f32 %v2293, %v2440
        %v2489 = vld [vmem:[%s2294 + $0x8] sm:$0xe]
        %v2490 = vld [vmem:[%s2294 + $0xc] sm:$0xf]
        %v2491 = vld [vmem:[%s2294 + $0x10] sm:$0x1]
        %v2492 = vld [vmem:[%s2294 + $0x24] sm:$0xe]
        %v2493 = vld [vmem:[%s2294 + $0x28] sm:$0xf]
        %v2494 = vld [vmem:[%s2294 + $0x2c] sm:$0x1]
        %v2495 = vld [vmem:[%s2294 + $0x40] sm:$0xe]
        %v2496 = vld [vmem:[%s2294 + $0x44] sm:$0xf]
        %v2497 = vld [vmem:[%s2294 + $0x48] sm:$0x1]
        %v2498 = vld [vmem:[%s2294 + $0x5c] sm:$0xe]
        %v2499 = vld [vmem:[%s2294 + $0x60] sm:$0xf]
        %v2500 = vld [vmem:[%s2294 + $0x64] sm:$0x1]
        %v2501 = vld [vmem:[%s2294 + $0x78] sm:$0xe]
        %v2502 = vld [vmem:[%s2294 + $0x7c] sm:$0xf]
        %v2503 = vld [vmem:[%s2294 + $0x80] sm:$0x1]
        %v2504 = vld [vmem:[%s2294 + $0x94] sm:$0xe]
        %v2505 = vld [vmem:[%s2294 + $0x98] sm:$0xf]
        %v2506 = vld [vmem:[%s2294 + $0x9c] sm:$0x1]
        %v2507 = vld [vmem:[%s2294 + $0xb0] sm:$0xe]
        %v2508 = vld [vmem:[%s2294 + $0xb4] sm:$0xf]
        %v2509 = vld [vmem:[%s2294 + $0xb8] sm:$0x1]
        %v2510 = vld [vmem:[%s2294 + $0xcc] sm:$0xe]
        %v2511 = vld [vmem:[%s2294 + $0xd0] sm:$0xf]
        %v2512 = vld [vmem:[%s2294 + $0xd4] sm:$0x1]
        %v2513 = vld [vmem:[%s2294 + $0xe8] sm:$0xe]
        %v2514 = vld [vmem:[%s2294 + $0xec] sm:$0xf]
        %v2515 = vld [vmem:[%s2294 + $0xf0] sm:$0x1]
        %v2516 = vld [vmem:[%s2294 + $0x104] sm:$0xe]
        %v2517 = vld [vmem:[%s2294 + $0x108] sm:$0xf]
        %v2518 = vld [vmem:[%s2294 + $0x10c] sm:$0x1]
        %v2519 = vld [vmem:[%s2294 + $0x120] sm:$0xe]
        %v2520 = vld [vmem:[%s2294 + $0x124] sm:$0xf]
        %v2521 = vld [vmem:[%s2294 + $0x128] sm:$0x1]
        %v2522 = vld [vmem:[%s2294 + $0x13c] sm:$0xe]
        %v2523 = vld [vmem:[%s2294 + $0x140] sm:$0xf]
        %v2524 = vld [vmem:[%s2294 + $0x144] sm:$0x1]
        %v2525 = vld [vmem:[%s2294 + $0x158] sm:$0xe]
        %v2526 = vld [vmem:[%s2294 + $0x15c] sm:$0xf]
        %v2527 = vld [vmem:[%s2294 + $0x160] sm:$0x1]
        %v2528 = vld [vmem:[%s2294 + $0x174] sm:$0xe]
        %v2529 = vld [vmem:[%s2294 + $0x178] sm:$0xf]
        %v2530 = vld [vmem:[%s2294 + $0x17c] sm:$0x1]
        %v2531 = vld [vmem:[%s2294 + $0x190] sm:$0xe]
        %v2532 = vld [vmem:[%s2294 + $0x194] sm:$0xf]
        %v2533 = vld [vmem:[%s2294 + $0x198] sm:$0x1]
        %v2534 = vld [vmem:[%s2294 + $0x1ac] sm:$0xe]
        %v2535 = vld [vmem:[%s2294 + $0x1b0] sm:$0xf]
        %v2536 = vld [vmem:[%s2294 + $0x1b4] sm:$0x1]
        %v2537 = vunpack.c.l.bf16 %v2489
        %v2538 = vunpack.c.l.bf16 %v2490
        %v2539 = vunpack.c.l.bf16 %v2491
        %v2540 = vunpack.c.l.bf16 %v2492
        %v2541 = vunpack.c.l.bf16 %v2493
        %v2542 = vunpack.c.l.bf16 %v2494
        %v2543 = vunpack.c.l.bf16 %v2495
        %v2544 = vunpack.c.l.bf16 %v2496
        %v2545 = vunpack.c.l.bf16 %v2497
        %v2546 = vunpack.c.l.bf16 %v2498
        %v2547 = vunpack.c.l.bf16 %v2499
        %v2548 = vunpack.c.l.bf16 %v2500
        %v2549 = vunpack.c.l.bf16 %v2501
        %v2550 = vunpack.c.l.bf16 %v2502
        %v2551 = vunpack.c.l.bf16 %v2503
        %v2552 = vunpack.c.l.bf16 %v2504
        %v2553 = vunpack.c.l.bf16 %v2505
        %v2554 = vunpack.c.l.bf16 %v2506
        %v2555 = vunpack.c.l.bf16 %v2507
        %v2556 = vunpack.c.l.bf16 %v2508
        %v2557 = vunpack.c.l.bf16 %v2509
        %v2558 = vunpack.c.l.bf16 %v2510
        %v2559 = vunpack.c.l.bf16 %v2511
        %v2560 = vunpack.c.l.bf16 %v2512
        %v2561 = vunpack.c.l.bf16 %v2513
        %v2562 = vunpack.c.l.bf16 %v2514
        %v2563 = vunpack.c.l.bf16 %v2515
        %v2564 = vunpack.c.l.bf16 %v2516
        %v2565 = vunpack.c.l.bf16 %v2517
        %v2566 = vunpack.c.l.bf16 %v2518
        %v2567 = vunpack.c.l.bf16 %v2519
        %v2568 = vunpack.c.l.bf16 %v2520
        %v2569 = vunpack.c.l.bf16 %v2521
        %v2570 = vunpack.c.l.bf16 %v2522
        %v2571 = vunpack.c.l.bf16 %v2523
        %v2572 = vunpack.c.l.bf16 %v2524
        %v2573 = vunpack.c.l.bf16 %v2525
        %v2574 = vunpack.c.l.bf16 %v2526
        %v2575 = vunpack.c.l.bf16 %v2527
        %v2576 = vunpack.c.l.bf16 %v2528
        %v2577 = vunpack.c.l.bf16 %v2529
        %v2578 = vunpack.c.l.bf16 %v2530
        %v2579 = vunpack.c.l.bf16 %v2531
        %v2580 = vunpack.c.l.bf16 %v2532
        %v2581 = vunpack.c.l.bf16 %v2533
        %v2582 = vunpack.c.l.bf16 %v2534
        %v2583 = vunpack.c.l.bf16 %v2535
        %v2584 = vunpack.c.l.bf16 %v2536
        %v2585 = vld [vmem:[%s3 + $0x7] sm:$0x1]
        %v2586 = vperm.slane %v2585, 0
        %v2587 = vmul.f32 %v2537, %v2586
        %v2588 = vmul.f32 %v2538, %v2586
        %v2589 = vmul.f32 %v2539, %v2586
        %v2590 = vmul.f32 %v2540, %v2586
        %v2591 = vmul.f32 %v2541, %v2586
        %v2592 = vmul.f32 %v2542, %v2586
        %v2593 = vmul.f32 %v2543, %v2586
        %v2594 = vmul.f32 %v2544, %v2586
        %v2595 = vmul.f32 %v2545, %v2586
        %v2596 = vmul.f32 %v2546, %v2586
        %v2597 = vmul.f32 %v2547, %v2586
        %v2598 = vmul.f32 %v2548, %v2586
        %v2599 = vmul.f32 %v2549, %v2586
        %v2600 = vmul.f32 %v2550, %v2586
        %v2601 = vmul.f32 %v2551, %v2586
        %v2602 = vmul.f32 %v2552, %v2586
        %v2603 = vmul.f32 %v2553, %v2586
        %v2604 = vmul.f32 %v2554, %v2586
        %v2605 = vmul.f32 %v2555, %v2586
        %v2606 = vmul.f32 %v2556, %v2586
        %v2607 = vmul.f32 %v2557, %v2586
        %v2608 = vmul.f32 %v2558, %v2586
        %v2609 = vmul.f32 %v2559, %v2586
        %v2610 = vmul.f32 %v2560, %v2586
        %v2611 = vmul.f32 %v2561, %v2586
        %v2612 = vmul.f32 %v2562, %v2586
        %v2613 = vmul.f32 %v2563, %v2586
        %v2614 = vmul.f32 %v2564, %v2586
        %v2615 = vmul.f32 %v2565, %v2586
        %v2616 = vmul.f32 %v2566, %v2586
        %v2617 = vmul.f32 %v2567, %v2586
        %v2618 = vmul.f32 %v2568, %v2586
        %v2619 = vmul.f32 %v2569, %v2586
        %v2620 = vmul.f32 %v2570, %v2586
        %v2621 = vmul.f32 %v2571, %v2586
        %v2622 = vmul.f32 %v2572, %v2586
        %v2623 = vmul.f32 %v2573, %v2586
        %v2624 = vmul.f32 %v2574, %v2586
        %v2625 = vmul.f32 %v2575, %v2586
        %v2626 = vmul.f32 %v2576, %v2586
        %v2627 = vmul.f32 %v2577, %v2586
        %v2628 = vmul.f32 %v2578, %v2586
        %v2629 = vmul.f32 %v2579, %v2586
        %v2630 = vmul.f32 %v2580, %v2586
        %v2631 = vmul.f32 %v2581, %v2586
        %v2632 = vmul.f32 %v2582, %v2586
        %v2633 = vmul.f32 %v2583, %v2586
        %v2634 = vmul.f32 %v2584, %v2586
        %v2683 = vrot.slane %v2587, 6
        %v2684 = vrot.slane %v2588, 6
        %v2685 = vsel %vm1164, %v2683, %v2684
        %v2686 = vrot.slane %v2589, 6
        %v2687 = vsel %vm1164, %v2684, %v2686
        %v2688 = vrot.slane %v2590, 6
        %v2689 = vrot.slane %v2591, 6
        %v2690 = vsel %vm1164, %v2688, %v2689
        %v2691 = vrot.slane %v2592, 6
        %v2692 = vsel %vm1164, %v2689, %v2691
        %v2693 = vrot.slane %v2593, 6
        %v2694 = vrot.slane %v2594, 6
        %v2695 = vsel %vm1164, %v2693, %v2694
        %v2696 = vrot.slane %v2595, 6
        %v2697 = vsel %vm1164, %v2694, %v2696
        %v2698 = vrot.slane %v2596, 6
        %v2699 = vrot.slane %v2597, 6
        %v2700 = vsel %vm1164, %v2698, %v2699
        %v2701 = vrot.slane %v2598, 6
        %v2702 = vsel %vm1164, %v2699, %v2701
        %v2703 = vrot.slane %v2599, 6
        %v2704 = vrot.slane %v2600, 6
        %v2705 = vsel %vm1164, %v2703, %v2704
        %v2706 = vrot.slane %v2601, 6
        %v2707 = vsel %vm1164, %v2704, %v2706
        %v2708 = vrot.slane %v2602, 6
        %v2709 = vrot.slane %v2603, 6
        %v2710 = vsel %vm1164, %v2708, %v2709
        %v2711 = vrot.slane %v2604, 6
        %v2712 = vsel %vm1164, %v2709, %v2711
        %v2713 = vrot.slane %v2605, 6
        %v2714 = vrot.slane %v2606, 6
        %v2715 = vsel %vm1164, %v2713, %v2714
        %v2716 = vrot.slane %v2607, 6
        %v2717 = vsel %vm1164, %v2714, %v2716
        %v2718 = vrot.slane %v2608, 6
        %v2719 = vrot.slane %v2609, 6
        %v2720 = vsel %vm1164, %v2718, %v2719
        %v2721 = vrot.slane %v2610, 6
        %v2722 = vsel %vm1164, %v2719, %v2721
        %v2723 = vrot.slane %v2611, 6
        %v2724 = vrot.slane %v2612, 6
        %v2725 = vsel %vm1164, %v2723, %v2724
        %v2726 = vrot.slane %v2613, 6
        %v2727 = vsel %vm1164, %v2724, %v2726
        %v2728 = vrot.slane %v2614, 6
        %v2729 = vrot.slane %v2615, 6
        %v2730 = vsel %vm1164, %v2728, %v2729
        %v2731 = vrot.slane %v2616, 6
        %v2732 = vsel %vm1164, %v2729, %v2731
        %v2733 = vrot.slane %v2617, 6
        %v2734 = vrot.slane %v2618, 6
        %v2735 = vsel %vm1164, %v2733, %v2734
        %v2736 = vrot.slane %v2619, 6
        %v2737 = vsel %vm1164, %v2734, %v2736
        %v2738 = vrot.slane %v2620, 6
        %v2739 = vrot.slane %v2621, 6
        %v2740 = vsel %vm1164, %v2738, %v2739
        %v2741 = vrot.slane %v2622, 6
        %v2742 = vsel %vm1164, %v2739, %v2741
        %v2743 = vrot.slane %v2623, 6
        %v2744 = vrot.slane %v2624, 6
        %v2745 = vsel %vm1164, %v2743, %v2744
        %v2746 = vrot.slane %v2625, 6
        %v2747 = vsel %vm1164, %v2744, %v2746
        %v2748 = vrot.slane %v2626, 6
        %v2749 = vrot.slane %v2627, 6
        %v2750 = vsel %vm1164, %v2748, %v2749
        %v2751 = vrot.slane %v2628, 6
        %v2752 = vsel %vm1164, %v2749, %v2751
        %v2753 = vrot.slane %v2629, 6
        %v2754 = vrot.slane %v2630, 6
        %v2755 = vsel %vm1164, %v2753, %v2754
        %v2756 = vrot.slane %v2631, 6
        %v2757 = vsel %vm1164, %v2754, %v2756
        %v2758 = vrot.slane %v2632, 6
        %v2759 = vrot.slane %v2633, 6
        %v2760 = vsel %vm1164, %v2758, %v2759
        %v2761 = vrot.slane %v2634, 6
        %v2762 = vsel %vm1164, %v2759, %v2761
        %v2811 = vadd.f32 %v2441, %v2683
        %v2812 = vadd.f32 %v2442, %v2685
        %v2813 = vadd.f32 %v2443, %v2687
        %v2814 = vadd.f32 %v2444, %v2688
        %v2815 = vadd.f32 %v2445, %v2690
        %v2816 = vadd.f32 %v2446, %v2692
        %v2817 = vadd.f32 %v2447, %v2693
        %v2818 = vadd.f32 %v2448, %v2695
        %v2819 = vadd.f32 %v2449, %v2697
        %v2820 = vadd.f32 %v2450, %v2698
        %v2821 = vadd.f32 %v2451, %v2700
        %v2822 = vadd.f32 %v2452, %v2702
        %v2823 = vadd.f32 %v2453, %v2703
        %v2824 = vadd.f32 %v2454, %v2705
        %v2825 = vadd.f32 %v2455, %v2707
        %v2826 = vadd.f32 %v2456, %v2708
        %v2827 = vadd.f32 %v2457, %v2710
        %v2828 = vadd.f32 %v2458, %v2712
        %v2829 = vadd.f32 %v2459, %v2713
        %v2830 = vadd.f32 %v2460, %v2715
        %v2831 = vadd.f32 %v2461, %v2717
        %v2832 = vadd.f32 %v2462, %v2718
        %v2833 = vadd.f32 %v2463, %v2720
        %v2834 = vadd.f32 %v2464, %v2722
        %v2835 = vadd.f32 %v2465, %v2723
        %v2836 = vadd.f32 %v2466, %v2725
        %v2837 = vadd.f32 %v2467, %v2727
        %v2838 = vadd.f32 %v2468, %v2728
        %v2839 = vadd.f32 %v2469, %v2730
        %v2840 = vadd.f32 %v2470, %v2732
        %v2841 = vadd.f32 %v2471, %v2733
        %v2842 = vadd.f32 %v2472, %v2735
        %v2843 = vadd.f32 %v2473, %v2737
        %v2844 = vadd.f32 %v2474, %v2738
        %v2845 = vadd.f32 %v2475, %v2740
        %v2846 = vadd.f32 %v2476, %v2742
        %v2847 = vadd.f32 %v2477, %v2743
        %v2848 = vadd.f32 %v2478, %v2745
        %v2849 = vadd.f32 %v2479, %v2747
        %v2850 = vadd.f32 %v2480, %v2748
        %v2851 = vadd.f32 %v2481, %v2750
        %v2852 = vadd.f32 %v2482, %v2752
        %v2853 = vadd.f32 %v2483, %v2753
        %v2854 = vadd.f32 %v2484, %v2755
        %v2855 = vadd.f32 %v2485, %v2757
        %v2856 = vadd.f32 %v2486, %v2758
        %v2857 = vadd.f32 %v2487, %v2760
        %v2858 = vadd.f32 %v2488, %v2762
        %v2859 = vld [vmem:[%s2294 + $0x10] sm:$0xf]
        %v2860 = vld [vmem:[%s2294 + $0x2c] sm:$0xf]
        %v2861 = vld [vmem:[%s2294 + $0x48] sm:$0xf]
        %v2862 = vld [vmem:[%s2294 + $0x64] sm:$0xf]
        %v2863 = vld [vmem:[%s2294 + $0x80] sm:$0xf]
        %v2864 = vld [vmem:[%s2294 + $0x9c] sm:$0xf]
        %v2865 = vld [vmem:[%s2294 + $0xb8] sm:$0xf]
        %v2866 = vld [vmem:[%s2294 + $0xd4] sm:$0xf]
        %v2867 = vld [vmem:[%s2294 + $0xf0] sm:$0xf]
        %v2868 = vld [vmem:[%s2294 + $0x10c] sm:$0xf]
        %v2869 = vld [vmem:[%s2294 + $0x128] sm:$0xf]
        %v2870 = vld [vmem:[%s2294 + $0x144] sm:$0xf]
        %v2871 = vld [vmem:[%s2294 + $0x160] sm:$0xf]
        %v2872 = vld [vmem:[%s2294 + $0x17c] sm:$0xf]
        %v2873 = vld [vmem:[%s2294 + $0x198] sm:$0xf]
        %v2874 = vld [vmem:[%s2294 + $0x1b4] sm:$0xf]
        %v2875 = vunpack.c.l.bf16 %v2859
        %v2876 = vunpack.c.l.bf16 %v2860
        %v2877 = vunpack.c.l.bf16 %v2861
        %v2878 = vunpack.c.l.bf16 %v2862
        %v2879 = vunpack.c.l.bf16 %v2863
        %v2880 = vunpack.c.l.bf16 %v2864
        %v2881 = vunpack.c.l.bf16 %v2865
        %v2882 = vunpack.c.l.bf16 %v2866
        %v2883 = vunpack.c.l.bf16 %v2867
        %v2884 = vunpack.c.l.bf16 %v2868
        %v2885 = vunpack.c.l.bf16 %v2869
        %v2886 = vunpack.c.l.bf16 %v2870
        %v2887 = vunpack.c.l.bf16 %v2871
        %v2888 = vunpack.c.l.bf16 %v2872
        %v2889 = vunpack.c.l.bf16 %v2873
        %v2890 = vunpack.c.l.bf16 %v2874
        %v2891 = vld [vmem:[%s3 + $0x8] sm:$0x1]
        %v2892 = vperm.slane %v2891, 0
        %v2893 = vmul.f32 %v2538, %v2892
        %v2894 = vmul.f32 %v2875, %v2892
        %v2895 = vmul.f32 %v2541, %v2892
        %v2896 = vmul.f32 %v2876, %v2892
        %v2897 = vmul.f32 %v2544, %v2892
        %v2898 = vmul.f32 %v2877, %v2892
        %v2899 = vmul.f32 %v2547, %v2892
        %v2900 = vmul.f32 %v2878, %v2892
        %v2901 = vmul.f32 %v2550, %v2892
        %v2902 = vmul.f32 %v2879, %v2892
        %v2903 = vmul.f32 %v2553, %v2892
        %v2904 = vmul.f32 %v2880, %v2892
        %v2905 = vmul.f32 %v2556, %v2892
        %v2906 = vmul.f32 %v2881, %v2892
        %v2907 = vmul.f32 %v2559, %v2892
        %v2908 = vmul.f32 %v2882, %v2892
        %v2909 = vmul.f32 %v2562, %v2892
        %v2910 = vmul.f32 %v2883, %v2892
        %v2911 = vmul.f32 %v2565, %v2892
        %v2912 = vmul.f32 %v2884, %v2892
        %v2913 = vmul.f32 %v2568, %v2892
        %v2914 = vmul.f32 %v2885, %v2892
        %v2915 = vmul.f32 %v2571, %v2892
        %v2916 = vmul.f32 %v2886, %v2892
        %v2917 = vmul.f32 %v2574, %v2892
        %v2918 = vmul.f32 %v2887, %v2892
        %v2919 = vmul.f32 %v2577, %v2892
        %v2920 = vmul.f32 %v2888, %v2892
        %v2921 = vmul.f32 %v2580, %v2892
        %v2922 = vmul.f32 %v2889, %v2892
        %v2923 = vmul.f32 %v2583, %v2892
        %v2924 = vmul.f32 %v2890, %v2892
        %v2957 = vrot.slane %v2893, 4
        %v2958 = vrot.slane %v2894, 4
        %v2959 = vsel %vm1439, %v2957, %v2958
        %v2960 = vrot.slane %v2895, 4
        %v2961 = vrot.slane %v2896, 4
        %v2962 = vsel %vm1439, %v2960, %v2961
        %v2963 = vrot.slane %v2897, 4
        %v2964 = vrot.slane %v2898, 4
        %v2965 = vsel %vm1439, %v2963, %v2964
        %v2966 = vrot.slane %v2899, 4
        %v2967 = vrot.slane %v2900, 4
        %v2968 = vsel %vm1439, %v2966, %v2967
        %v2969 = vrot.slane %v2901, 4
        %v2970 = vrot.slane %v2902, 4
        %v2971 = vsel %vm1439, %v2969, %v2970
        %v2972 = vrot.slane %v2903, 4
        %v2973 = vrot.slane %v2904, 4
        %v2974 = vsel %vm1439, %v2972, %v2973
        %v2975 = vrot.slane %v2905, 4
        %v2976 = vrot.slane %v2906, 4
        %v2977 = vsel %vm1439, %v2975, %v2976
        %v2978 = vrot.slane %v2907, 4
        %v2979 = vrot.slane %v2908, 4
        %v2980 = vsel %vm1439, %v2978, %v2979
        %v2981 = vrot.slane %v2909, 4
        %v2982 = vrot.slane %v2910, 4
        %v2983 = vsel %vm1439, %v2981, %v2982
        %v2984 = vrot.slane %v2911, 4
        %v2985 = vrot.slane %v2912, 4
        %v2986 = vsel %vm1439, %v2984, %v2985
        %v2987 = vrot.slane %v2913, 4
        %v2988 = vrot.slane %v2914, 4
        %v2989 = vsel %vm1439, %v2987, %v2988
        %v2990 = vrot.slane %v2915, 4
        %v2991 = vrot.slane %v2916, 4
        %v2992 = vsel %vm1439, %v2990, %v2991
        %v2993 = vrot.slane %v2917, 4
        %v2994 = vrot.slane %v2918, 4
        %v2995 = vsel %vm1439, %v2993, %v2994
        %v2996 = vrot.slane %v2919, 4
        %v2997 = vrot.slane %v2920, 4
        %v2998 = vsel %vm1439, %v2996, %v2997
        %v2999 = vrot.slane %v2921, 4
        %v3000 = vrot.slane %v2922, 4
        %v3001 = vsel %vm1439, %v2999, %v3000
        %v3002 = vrot.slane %v2923, 4
        %v3003 = vrot.slane %v2924, 4
        %v3004 = vsel %vm1439, %v3002, %v3003
        %v3053 = vadd.f32 %v2811, %v2957
        %v3054 = vadd.f32 %v2812, %v2959
        %v3055 = vadd.f32 %v2813, %v2958
        %v3056 = vadd.f32 %v2814, %v2960
        %v3057 = vadd.f32 %v2815, %v2962
        %v3058 = vadd.f32 %v2816, %v2961
        %v3059 = vadd.f32 %v2817, %v2963
        %v3060 = vadd.f32 %v2818, %v2965
        %v3061 = vadd.f32 %v2819, %v2964
        %v3062 = vadd.f32 %v2820, %v2966
        %v3063 = vadd.f32 %v2821, %v2968
        %v3064 = vadd.f32 %v2822, %v2967
        %v3065 = vadd.f32 %v2823, %v2969
        %v3066 = vadd.f32 %v2824, %v2971
        %v3067 = vadd.f32 %v2825, %v2970
        %v3068 = vadd.f32 %v2826, %v2972
        %v3069 = vadd.f32 %v2827, %v2974
        %v3070 = vadd.f32 %v2828, %v2973
        %v3071 = vadd.f32 %v2829, %v2975
        %v3072 = vadd.f32 %v2830, %v2977
        %v3073 = vadd.f32 %v2831, %v2976
        %v3074 = vadd.f32 %v2832, %v2978
        %v3075 = vadd.f32 %v2833, %v2980
        %v3076 = vadd.f32 %v2834, %v2979
        %v3077 = vadd.f32 %v2835, %v2981
        %v3078 = vadd.f32 %v2836, %v2983
        %v3079 = vadd.f32 %v2837, %v2982
        %v3080 = vadd.f32 %v2838, %v2984
        %v3081 = vadd.f32 %v2839, %v2986
        %v3082 = vadd.f32 %v2840, %v2985
        %v3083 = vadd.f32 %v2841, %v2987
        %v3084 = vadd.f32 %v2842, %v2989
        %v3085 = vadd.f32 %v2843, %v2988
        %v3086 = vadd.f32 %v2844, %v2990
        %v3087 = vadd.f32 %v2845, %v2992
        %v3088 = vadd.f32 %v2846, %v2991
        %v3089 = vadd.f32 %v2847, %v2993
        %v3090 = vadd.f32 %v2848, %v2995
        %v3091 = vadd.f32 %v2849, %v2994
        %v3092 = vadd.f32 %v2850, %v2996
        %v3093 = vadd.f32 %v2851, %v2998
        %v3094 = vadd.f32 %v2852, %v2997
        %v3095 = vadd.f32 %v2853, %v2999
        %v3096 = vadd.f32 %v2854, %v3001
        %v3097 = vadd.f32 %v2855, %v3000
        %v3098 = vadd.f32 %v2856, %v3002
        %v3099 = vadd.f32 %v2857, %v3004
        %v3100 = vadd.f32 %v2858, %v3003
        %v3101 = vld [vmem:[%s4] sm:$0x1]
        %v3102 = vperm.slane %v3101, 0
        %v3103 = vadd.f32 %v3053, %v3102
        %v3104 = vadd.f32 %v3054, %v3102
        %v3105 = vadd.f32 %v3055, %v3102
        %v3106 = vadd.f32 %v3056, %v3102
        %v3107 = vadd.f32 %v3057, %v3102
        %v3108 = vadd.f32 %v3058, %v3102
        %v3109 = vadd.f32 %v3059, %v3102
        %v3110 = vadd.f32 %v3060, %v3102
        %v3111 = vadd.f32 %v3061, %v3102
        %v3112 = vadd.f32 %v3062, %v3102
        %v3113 = vadd.f32 %v3063, %v3102
        %v3114 = vadd.f32 %v3064, %v3102
        %v3115 = vadd.f32 %v3065, %v3102
        %v3116 = vadd.f32 %v3066, %v3102
        %v3117 = vadd.f32 %v3067, %v3102
        %v3118 = vadd.f32 %v3068, %v3102
        %v3119 = vadd.f32 %v3069, %v3102
        %v3120 = vadd.f32 %v3070, %v3102
        %v3121 = vadd.f32 %v3071, %v3102
        %v3122 = vadd.f32 %v3072, %v3102
        %v3123 = vadd.f32 %v3073, %v3102
        %v3124 = vadd.f32 %v3074, %v3102
        %v3125 = vadd.f32 %v3075, %v3102
        %v3126 = vadd.f32 %v3076, %v3102
        %v3127 = vadd.f32 %v3077, %v3102
        %v3128 = vadd.f32 %v3078, %v3102
        %v3129 = vadd.f32 %v3079, %v3102
        %v3130 = vadd.f32 %v3080, %v3102
        %v3131 = vadd.f32 %v3081, %v3102
        %v3132 = vadd.f32 %v3082, %v3102
        %v3133 = vadd.f32 %v3083, %v3102
        %v3134 = vadd.f32 %v3084, %v3102
        %v3135 = vadd.f32 %v3085, %v3102
        %v3136 = vadd.f32 %v3086, %v3102
        %v3137 = vadd.f32 %v3087, %v3102
        %v3138 = vadd.f32 %v3088, %v3102
        %v3139 = vadd.f32 %v3089, %v3102
        %v3140 = vadd.f32 %v3090, %v3102
        %v3141 = vadd.f32 %v3091, %v3102
        %v3142 = vadd.f32 %v3092, %v3102
        %v3143 = vadd.f32 %v3093, %v3102
        %v3144 = vadd.f32 %v3094, %v3102
        %v3145 = vadd.f32 %v3095, %v3102
        %v3146 = vadd.f32 %v3096, %v3102
        %v3147 = vadd.f32 %v3097, %v3102
        %v3148 = vadd.f32 %v3098, %v3102
        %v3149 = vadd.f32 %v3099, %v3102
        %v3150 = vadd.f32 %v3100, %v3102
        %v3151 = vmax.f32 %v3103, 0.0
        %v3152 = vmax.f32 %v3104, 0.0
        %v3153 = vmax.f32 %v3105, 0.0
        %v3154 = vmax.f32 %v3106, 0.0
        %v3155 = vmax.f32 %v3107, 0.0
        %v3156 = vmax.f32 %v3108, 0.0
        %v3157 = vmax.f32 %v3109, 0.0
        %v3158 = vmax.f32 %v3110, 0.0
        %v3159 = vmax.f32 %v3111, 0.0
        %v3160 = vmax.f32 %v3112, 0.0
        %v3161 = vmax.f32 %v3113, 0.0
        %v3162 = vmax.f32 %v3114, 0.0
        %v3163 = vmax.f32 %v3115, 0.0
        %v3164 = vmax.f32 %v3116, 0.0
        %v3165 = vmax.f32 %v3117, 0.0
        %v3166 = vmax.f32 %v3118, 0.0
        %v3167 = vmax.f32 %v3119, 0.0
        %v3168 = vmax.f32 %v3120, 0.0
        %v3169 = vmax.f32 %v3121, 0.0
        %v3170 = vmax.f32 %v3122, 0.0
        %v3171 = vmax.f32 %v3123, 0.0
        %v3172 = vmax.f32 %v3124, 0.0
        %v3173 = vmax.f32 %v3125, 0.0
        %v3174 = vmax.f32 %v3126, 0.0
        %v3175 = vmax.f32 %v3127, 0.0
        %v3176 = vmax.f32 %v3128, 0.0
        %v3177 = vmax.f32 %v3129, 0.0
        %v3178 = vmax.f32 %v3130, 0.0
        %v3179 = vmax.f32 %v3131, 0.0
        %v3180 = vmax.f32 %v3132, 0.0
        %v3181 = vmax.f32 %v3133, 0.0
        %v3182 = vmax.f32 %v3134, 0.0
        %v3183 = vmax.f32 %v3135, 0.0
        %v3184 = vmax.f32 %v3136, 0.0
        %v3185 = vmax.f32 %v3137, 0.0
        %v3186 = vmax.f32 %v3138, 0.0
        %v3187 = vmax.f32 %v3139, 0.0
        %v3188 = vmax.f32 %v3140, 0.0
        %v3189 = vmax.f32 %v3141, 0.0
        %v3190 = vmax.f32 %v3142, 0.0
        %v3191 = vmax.f32 %v3143, 0.0
        %v3192 = vmax.f32 %v3144, 0.0
        %v3193 = vmax.f32 %v3145, 0.0
        %v3194 = vmax.f32 %v3146, 0.0
        %v3195 = vmax.f32 %v3147, 0.0
        %v3196 = vmax.f32 %v3148, 0.0
        %v3197 = vmax.f32 %v3149, 0.0
        %v3198 = vmax.f32 %v3150, 0.0
        %v3199 = vmin.f32 %v3151, 6.0
        %v3200 = vmin.f32 %v3152, 6.0
        %v3201 = vmin.f32 %v3153, 6.0
        %v3202 = vmin.f32 %v3154, 6.0
        %v3203 = vmin.f32 %v3155, 6.0
        %v3204 = vmin.f32 %v3156, 6.0
        %v3205 = vmin.f32 %v3157, 6.0
        %v3206 = vmin.f32 %v3158, 6.0
        %v3207 = vmin.f32 %v3159, 6.0
        %v3208 = vmin.f32 %v3160, 6.0
        %v3209 = vmin.f32 %v3161, 6.0
        %v3210 = vmin.f32 %v3162, 6.0
        %v3211 = vmin.f32 %v3163, 6.0
        %v3212 = vmin.f32 %v3164, 6.0
        %v3213 = vmin.f32 %v3165, 6.0
        %v3214 = vmin.f32 %v3166, 6.0
        %v3215 = vmin.f32 %v3167, 6.0
        %v3216 = vmin.f32 %v3168, 6.0
        %v3217 = vmin.f32 %v3169, 6.0
        %v3218 = vmin.f32 %v3170, 6.0
        %v3219 = vmin.f32 %v3171, 6.0
        %v3220 = vmin.f32 %v3172, 6.0
        %v3221 = vmin.f32 %v3173, 6.0
        %v3222 = vmin.f32 %v3174, 6.0
        %v3223 = vmin.f32 %v3175, 6.0
        %v3224 = vmin.f32 %v3176, 6.0
        %v3225 = vmin.f32 %v3177, 6.0
        %v3226 = vmin.f32 %v3178, 6.0
        %v3227 = vmin.f32 %v3179, 6.0
        %v3228 = vmin.f32 %v3180, 6.0
        %v3229 = vmin.f32 %v3181, 6.0
        %v3230 = vmin.f32 %v3182, 6.0
        %v3231 = vmin.f32 %v3183, 6.0
        %v3232 = vmin.f32 %v3184, 6.0
        %v3233 = vmin.f32 %v3185, 6.0
        %v3234 = vmin.f32 %v3186, 6.0
        %v3235 = vmin.f32 %v3187, 6.0
        %v3236 = vmin.f32 %v3188, 6.0
        %v3237 = vmin.f32 %v3189, 6.0
        %v3238 = vmin.f32 %v3190, 6.0
        %v3239 = vmin.f32 %v3191, 6.0
        %v3240 = vmin.f32 %v3192, 6.0
        %v3241 = vmin.f32 %v3193, 6.0
        %v3242 = vmin.f32 %v3194, 6.0
        %v3243 = vmin.f32 %v3195, 6.0
        %v3244 = vmin.f32 %v3196, 6.0
        %v3245 = vmin.f32 %v3197, 6.0
        %v3246 = vmin.f32 %v3198, 6.0
        %v3295 = vrot.slane %v3199, 4
        %v3296 = vrot.slane %v3200, 4
        %v3297 = vsel %vm1439, %v3295, %v3296
        %v3298 = vrot.slane %v3201, 4
        %v3299 = vsel %vm1439, %v3296, %v3298
        %v3300 = vrot.slane %v3202, 4
        %v3301 = vrot.slane %v3203, 4
        %v3302 = vsel %vm1439, %v3300, %v3301
        %v3303 = vrot.slane %v3204, 4
        %v3304 = vsel %vm1439, %v3301, %v3303
        %v3305 = vrot.slane %v3205, 4
        %v3306 = vrot.slane %v3206, 4
        %v3307 = vsel %vm1439, %v3305, %v3306
        %v3308 = vrot.slane %v3207, 4
        %v3309 = vsel %vm1439, %v3306, %v3308
        %v3310 = vrot.slane %v3208, 4
        %v3311 = vrot.slane %v3209, 4
        %v3312 = vsel %vm1439, %v3310, %v3311
        %v3313 = vrot.slane %v3210, 4
        %v3314 = vsel %vm1439, %v3311, %v3313
        %v3315 = vrot.slane %v3211, 4
        %v3316 = vrot.slane %v3212, 4
        %v3317 = vsel %vm1439, %v3315, %v3316
        %v3318 = vrot.slane %v3213, 4
        %v3319 = vsel %vm1439, %v3316, %v3318
        %v3320 = vrot.slane %v3214, 4
        %v3321 = vrot.slane %v3215, 4
        %v3322 = vsel %vm1439, %v3320, %v3321
        %v3323 = vrot.slane %v3216, 4
        %v3324 = vsel %vm1439, %v3321, %v3323
        %v3325 = vrot.slane %v3217, 4
        %v3326 = vrot.slane %v3218, 4
        %v3327 = vsel %vm1439, %v3325, %v3326
        %v3328 = vrot.slane %v3219, 4
        %v3329 = vsel %vm1439, %v3326, %v3328
        %v3330 = vrot.slane %v3220, 4
        %v3331 = vrot.slane %v3221, 4
        %v3332 = vsel %vm1439, %v3330, %v3331
        %v3333 = vrot.slane %v3222, 4
        %v3334 = vsel %vm1439, %v3331, %v3333
        %v3335 = vrot.slane %v3223, 4
        %v3336 = vrot.slane %v3224, 4
        %v3337 = vsel %vm1439, %v3335, %v3336
        %v3338 = vrot.slane %v3225, 4
        %v3339 = vsel %vm1439, %v3336, %v3338
        %v3340 = vrot.slane %v3226, 4
        %v3341 = vrot.slane %v3227, 4
        %v3342 = vsel %vm1439, %v3340, %v3341
        %v3343 = vrot.slane %v3228, 4
        %v3344 = vsel %vm1439, %v3341, %v3343
        %v3345 = vrot.slane %v3229, 4
        %v3346 = vrot.slane %v3230, 4
        %v3347 = vsel %vm1439, %v3345, %v3346
        %v3348 = vrot.slane %v3231, 4
        %v3349 = vsel %vm1439, %v3346, %v3348
        %v3350 = vrot.slane %v3232, 4
        %v3351 = vrot.slane %v3233, 4
        %v3352 = vsel %vm1439, %v3350, %v3351
        %v3353 = vrot.slane %v3234, 4
        %v3354 = vsel %vm1439, %v3351, %v3353
        %v3355 = vrot.slane %v3235, 4
        %v3356 = vrot.slane %v3236, 4
        %v3357 = vsel %vm1439, %v3355, %v3356
        %v3358 = vrot.slane %v3237, 4
        %v3359 = vsel %vm1439, %v3356, %v3358
        %v3360 = vrot.slane %v3238, 4
        %v3361 = vrot.slane %v3239, 4
        %v3362 = vsel %vm1439, %v3360, %v3361
        %v3363 = vrot.slane %v3240, 4
        %v3364 = vsel %vm1439, %v3361, %v3363
        %v3365 = vrot.slane %v3241, 4
        %v3366 = vrot.slane %v3242, 4
        %v3367 = vsel %vm1439, %v3365, %v3366
        %v3368 = vrot.slane %v3243, 4
        %v3369 = vsel %vm1439, %v3366, %v3368
        %v3370 = vrot.slane %v3244, 4
        %v3371 = vrot.slane %v3245, 4
        %v3372 = vsel %vm1439, %v3370, %v3371
        %v3373 = vrot.slane %v3246, 4
        %v3374 = vsel %vm1439, %v3371, %v3373
        %v3375 = vld [vmem:[%s5 + $0x20] sm:$0xff]
        %v3376 = vld [vmem:[%s5 + $0x28] sm:$0xff]
        %v3377 = vld [vmem:[%s5 + $0x30] sm:$0xff]
        %v3378 = vld [vmem:[%s5 + $0x38] sm:$0xff]
        %vm3379 = vcmask 261120
        %v3380 = vsel %vm3379, %v3297, 0
        %v3382 = vsel %vm3379, %v3299, 0
        %v3384 = vsel %vm3379, %v3302, 0
        %v3386 = vsel %vm3379, %v3304, 0
        %v3388 = vsel %vm3379, %v3307, 0
        %v3390 = vsel %vm3379, %v3309, 0
        %v3392 = vsel %vm3379, %v3312, 0
        %v3394 = vsel %vm3379, %v3314, 0
        %v3396 = vsel %vm3379, %v3317, 0
        %v3398 = vsel %vm3379, %v3319, 0
        %v3400 = vsel %vm3379, %v3322, 0
        %v3402 = vsel %vm3379, %v3324, 0
        %v3404 = vsel %vm3379, %v3327, 0
        %v3406 = vsel %vm3379, %v3329, 0
        %v3408 = vsel %vm3379, %v3332, 0
        %v3410 = vsel %vm3379, %v3334, 0
        %v3412 = vsel %vm3379, %v3337, 0
        %v3414 = vsel %vm3379, %v3339, 0
        %v3416 = vsel %vm3379, %v3342, 0
        %v3418 = vsel %vm3379, %v3344, 0
        %v3420 = vsel %vm3379, %v3347, 0
        %v3422 = vsel %vm3379, %v3349, 0
        %v3424 = vsel %vm3379, %v3352, 0
        %v3426 = vsel %vm3379, %v3354, 0
        %v3428 = vsel %vm3379, %v3357, 0
        %v3430 = vsel %vm3379, %v3359, 0
        %v3432 = vsel %vm3379, %v3362, 0
        %v3434 = vsel %vm3379, %v3364, 0
        %v3436 = vsel %vm3379, %v3367, 0
        %v3438 = vsel %vm3379, %v3369, 0
        %v3440 = vsel %vm3379, %v3372, 0
        %v3442 = vsel %vm3379, %v3374, 0
        %3444 = vmatpush.msra.mxu0 0.0
        %3445 = vmatpush.msra.mxu0 0.0
        %3446 = vmatpush.msra.mxu0 0.0
        %3447 = vmatpush.msra.mxu0 0.0
        %3448 = vmatpush.msra.mxu0 0.0
        %3449 = vmatpush.msra.mxu0 0.0
        %3450 = vmatpush.msra.mxu0 0.0
        %3451 = vmatpush.msra.mxu0 0.0
        %3452 = vmatpush.msra.mxu0 0.0
        %3453 = vmatpush.msra.mxu0 0.0
        %3454 = vmatpush.msra.mxu0 0.0
        %3455 = vmatpush.msra.mxu0 0.0
        %3456 = vmatpush.msra.mxu0 %v3378
        %3457 = vmatpush.msra.mxu0 %v3377
        %3458 = vmatpush.msra.mxu0 %v3376
        %3459 = vmatpush.msra.mxu0 %v3375
        %3460 = vmatmul.f32.gmra.mxu0 %v3380
        %v3461 = vpop.f32.mrf.mxu0
        %v3462 = vadd.f32 0.0, %v3461
        %3463 = vmatmul.f32.gmra.mxu0 %v3382
        %v3464 = vpop.f32.mrf.mxu0
        %v3465 = vadd.f32 0.0, %v3464
        %3466 = vmatmul.f32.gmra.mxu0 %v3384
        %v3467 = vpop.f32.mrf.mxu0
        %v3468 = vadd.f32 0.0, %v3467
        %3469 = vmatmul.f32.gmra.mxu0 %v3386
        %v3470 = vpop.f32.mrf.mxu0
        %v3471 = vadd.f32 0.0, %v3470
        %3472 = vmatmul.f32.gmra.mxu0 %v3388
        %v3473 = vpop.f32.mrf.mxu0
        %v3474 = vadd.f32 0.0, %v3473
        %3475 = vmatmul.f32.gmra.mxu0 %v3390
        %v3476 = vpop.f32.mrf.mxu0
        %v3477 = vadd.f32 0.0, %v3476
        %3478 = vmatmul.f32.gmra.mxu0 %v3392
        %v3479 = vpop.f32.mrf.mxu0
        %v3480 = vadd.f32 0.0, %v3479
        %3481 = vmatmul.f32.gmra.mxu0 %v3394
        %v3482 = vpop.f32.mrf.mxu0
        %v3483 = vadd.f32 0.0, %v3482
        %3484 = vmatmul.f32.gmra.mxu0 %v3396
        %v3485 = vpop.f32.mrf.mxu0
        %v3486 = vadd.f32 0.0, %v3485
        %3487 = vmatmul.f32.gmra.mxu0 %v3398
        %v3488 = vpop.f32.mrf.mxu0
        %v3489 = vadd.f32 0.0, %v3488
        %3490 = vmatmul.f32.gmra.mxu0 %v3400
        %v3491 = vpop.f32.mrf.mxu0
        %v3492 = vadd.f32 0.0, %v3491
        %3493 = vmatmul.f32.gmra.mxu0 %v3402
        %v3494 = vpop.f32.mrf.mxu0
        %v3495 = vadd.f32 0.0, %v3494
        %3496 = vmatmul.f32.gmra.mxu0 %v3404
        %v3497 = vpop.f32.mrf.mxu0
        %v3498 = vadd.f32 0.0, %v3497
        %3499 = vmatmul.f32.gmra.mxu0 %v3406
        %v3500 = vpop.f32.mrf.mxu0
        %v3501 = vadd.f32 0.0, %v3500
        %3502 = vmatmul.f32.gmra.mxu0 %v3408
        %v3503 = vpop.f32.mrf.mxu0
        %v3504 = vadd.f32 0.0, %v3503
        %3505 = vmatmul.f32.gmra.mxu0 %v3410
        %v3506 = vpop.f32.mrf.mxu0
        %v3507 = vadd.f32 0.0, %v3506
        %3508 = vmatmul.f32.gmra.mxu0 %v3412
        %v3509 = vpop.f32.mrf.mxu0
        %v3510 = vadd.f32 0.0, %v3509
        %3511 = vmatmul.f32.gmra.mxu0 %v3414
        %v3512 = vpop.f32.mrf.mxu0
        %v3513 = vadd.f32 0.0, %v3512
        %3514 = vmatmul.f32.gmra.mxu0 %v3416
        %v3515 = vpop.f32.mrf.mxu0
        %v3516 = vadd.f32 0.0, %v3515
        %3517 = vmatmul.f32.gmra.mxu0 %v3418
        %v3518 = vpop.f32.mrf.mxu0
        %v3519 = vadd.f32 0.0, %v3518
        %3520 = vmatmul.f32.gmra.mxu0 %v3420
        %v3521 = vpop.f32.mrf.mxu0
        %v3522 = vadd.f32 0.0, %v3521
        %3523 = vmatmul.f32.gmra.mxu0 %v3422
        %v3524 = vpop.f32.mrf.mxu0
        %v3525 = vadd.f32 0.0, %v3524
        %3526 = vmatmul.f32.gmra.mxu0 %v3424
        %v3527 = vpop.f32.mrf.mxu0
        %v3528 = vadd.f32 0.0, %v3527
        %3529 = vmatmul.f32.gmra.mxu0 %v3426
        %v3530 = vpop.f32.mrf.mxu0
        %v3531 = vadd.f32 0.0, %v3530
        %3532 = vmatmul.f32.gmra.mxu0 %v3428
        %v3533 = vpop.f32.mrf.mxu0
        %v3534 = vadd.f32 0.0, %v3533
        %3535 = vmatmul.f32.gmra.mxu0 %v3430
        %v3536 = vpop.f32.mrf.mxu0
        %v3537 = vadd.f32 0.0, %v3536
        %3538 = vmatmul.f32.gmra.mxu0 %v3432
        %v3539 = vpop.f32.mrf.mxu0
        %v3540 = vadd.f32 0.0, %v3539
        %3541 = vmatmul.f32.gmra.mxu0 %v3434
        %v3542 = vpop.f32.mrf.mxu0
        %v3543 = vadd.f32 0.0, %v3542
        %3544 = vmatmul.f32.gmra.mxu0 %v3436
        %v3545 = vpop.f32.mrf.mxu0
        %v3546 = vadd.f32 0.0, %v3545
        %3547 = vmatmul.f32.gmra.mxu0 %v3438
        %v3548 = vpop.f32.mrf.mxu0
        %v3549 = vadd.f32 0.0, %v3548
        %3550 = vmatmul.f32.gmra.mxu0 %v3440
        %v3551 = vpop.f32.mrf.mxu0
        %v3552 = vadd.f32 0.0, %v3551
        %3553 = vmatmul.f32.gmra.mxu0 %v3442
        %v3554 = vpop.f32.mrf.mxu0
        %v3555 = vadd.f32 0.0, %v3554
        %3556 = vdwg.mxu0
        %v3557 = vsel %vm3379, %v693, 0
        %v3559 = vsel %vm3379, %v695, 0
        %v3561 = vsel %vm3379, %v698, 0
        %v3563 = vsel %vm3379, %v700, 0
        %v3565 = vsel %vm3379, %v703, 0
        %v3567 = vsel %vm3379, %v705, 0
        %v3569 = vsel %vm3379, %v708, 0
        %v3571 = vsel %vm3379, %v710, 0
        %v3573 = vsel %vm3379, %v713, 0
        %v3575 = vsel %vm3379, %v715, 0
        %v3577 = vsel %vm3379, %v718, 0
        %v3579 = vsel %vm3379, %v720, 0
        %v3581 = vsel %vm3379, %v723, 0
        %v3583 = vsel %vm3379, %v725, 0
        %v3585 = vsel %vm3379, %v728, 0
        %v3587 = vsel %vm3379, %v730, 0
        %v3589 = vsel %vm3379, %v733, 0
        %v3591 = vsel %vm3379, %v735, 0
        %v3593 = vsel %vm3379, %v738, 0
        %v3595 = vsel %vm3379, %v740, 0
        %v3597 = vsel %vm3379, %v743, 0
        %v3599 = vsel %vm3379, %v745, 0
        %v3601 = vsel %vm3379, %v748, 0
        %v3603 = vsel %vm3379, %v750, 0
        %v3605 = vsel %vm3379, %v753, 0
        %v3607 = vsel %vm3379, %v755, 0
        %v3609 = vsel %vm3379, %v758, 0
        %v3611 = vsel %vm3379, %v760, 0
        %v3613 = vsel %vm3379, %v763, 0
        %v3615 = vsel %vm3379, %v765, 0
        %v3617 = vsel %vm3379, %v768, 0
        %v3619 = vsel %vm3379, %v770, 0
        %3621 = vmatpush.msra.mxu0 0.0
        %3622 = vmatpush.msra.mxu0 0.0
        %3623 = vmatpush.msra.mxu0 0.0
        %3624 = vmatpush.msra.mxu0 0.0
        %3625 = vmatpush.msra.mxu0 0.0
        %3626 = vmatpush.msra.mxu0 0.0
        %3627 = vmatpush.msra.mxu0 0.0
        %3628 = vmatpush.msra.mxu0 0.0
        %3629 = vmatpush.msra.mxu0 0.0
        %3630 = vmatpush.msra.mxu0 0.0
        %3631 = vmatpush.msra.mxu0 0.0
        %3632 = vmatpush.msra.mxu0 0.0
        %3633 = vmatpush.msra.mxu0 %v774
        %3634 = vmatpush.msra.mxu0 %v773
        %3635 = vmatpush.msra.mxu0 %v772
        %3636 = vmatpush.msra.mxu0 %v771
        %3637 = vmatmul.f32.gmra.mxu0 %v3557
        %v3638 = vpop.f32.mrf.mxu0
        %v3639 = vadd.f32 %v3462, %v3638
        %3640 = vmatmul.f32.gmra.mxu0 %v3559
        %v3641 = vpop.f32.mrf.mxu0
        %v3642 = vadd.f32 %v3465, %v3641
        %3643 = vmatmul.f32.gmra.mxu0 %v3561
        %v3644 = vpop.f32.mrf.mxu0
        %v3645 = vadd.f32 %v3468, %v3644
        %3646 = vmatmul.f32.gmra.mxu0 %v3563
        %v3647 = vpop.f32.mrf.mxu0
        %v3648 = vadd.f32 %v3471, %v3647
        %3649 = vmatmul.f32.gmra.mxu0 %v3565
        %v3650 = vpop.f32.mrf.mxu0
        %v3651 = vadd.f32 %v3474, %v3650
        %3652 = vmatmul.f32.gmra.mxu0 %v3567
        %v3653 = vpop.f32.mrf.mxu0
        %v3654 = vadd.f32 %v3477, %v3653
        %3655 = vmatmul.f32.gmra.mxu0 %v3569
        %v3656 = vpop.f32.mrf.mxu0
        %v3657 = vadd.f32 %v3480, %v3656
        %3658 = vmatmul.f32.gmra.mxu0 %v3571
        %v3659 = vpop.f32.mrf.mxu0
        %v3660 = vadd.f32 %v3483, %v3659
        %3661 = vmatmul.f32.gmra.mxu0 %v3573
        %v3662 = vpop.f32.mrf.mxu0
        %v3663 = vadd.f32 %v3486, %v3662
        %3664 = vmatmul.f32.gmra.mxu0 %v3575
        %v3665 = vpop.f32.mrf.mxu0
        %v3666 = vadd.f32 %v3489, %v3665
        %3667 = vmatmul.f32.gmra.mxu0 %v3577
        %v3668 = vpop.f32.mrf.mxu0
        %v3669 = vadd.f32 %v3492, %v3668
        %3670 = vmatmul.f32.gmra.mxu0 %v3579
        %v3671 = vpop.f32.mrf.mxu0
        %v3672 = vadd.f32 %v3495, %v3671
        %3673 = vmatmul.f32.gmra.mxu0 %v3581
        %v3674 = vpop.f32.mrf.mxu0
        %v3675 = vadd.f32 %v3498, %v3674
        %3676 = vmatmul.f32.gmra.mxu0 %v3583
        %v3677 = vpop.f32.mrf.mxu0
        %v3678 = vadd.f32 %v3501, %v3677
        %3679 = vmatmul.f32.gmra.mxu0 %v3585
        %v3680 = vpop.f32.mrf.mxu0
        %v3681 = vadd.f32 %v3504, %v3680
        %3682 = vmatmul.f32.gmra.mxu0 %v3587
        %v3683 = vpop.f32.mrf.mxu0
        %v3684 = vadd.f32 %v3507, %v3683
        %3685 = vmatmul.f32.gmra.mxu0 %v3589
        %v3686 = vpop.f32.mrf.mxu0
        %v3687 = vadd.f32 %v3510, %v3686
        %3688 = vmatmul.f32.gmra.mxu0 %v3591
        %v3689 = vpop.f32.mrf.mxu0
        %v3690 = vadd.f32 %v3513, %v3689
        %3691 = vmatmul.f32.gmra.mxu0 %v3593
        %v3692 = vpop.f32.mrf.mxu0
        %v3693 = vadd.f32 %v3516, %v3692
        %3694 = vmatmul.f32.gmra.mxu0 %v3595
        %v3695 = vpop.f32.mrf.mxu0
        %v3696 = vadd.f32 %v3519, %v3695
        %3697 = vmatmul.f32.gmra.mxu0 %v3597
        %v3698 = vpop.f32.mrf.mxu0
        %v3699 = vadd.f32 %v3522, %v3698
        %3700 = vmatmul.f32.gmra.mxu0 %v3599
        %v3701 = vpop.f32.mrf.mxu0
        %v3702 = vadd.f32 %v3525, %v3701
        %3703 = vmatmul.f32.gmra.mxu0 %v3601
        %v3704 = vpop.f32.mrf.mxu0
        %v3705 = vadd.f32 %v3528, %v3704
        %3706 = vmatmul.f32.gmra.mxu0 %v3603
        %v3707 = vpop.f32.mrf.mxu0
        %v3708 = vadd.f32 %v3531, %v3707
        %3709 = vmatmul.f32.gmra.mxu0 %v3605
        %v3710 = vpop.f32.mrf.mxu0
        %v3711 = vadd.f32 %v3534, %v3710
        %3712 = vmatmul.f32.gmra.mxu0 %v3607
        %v3713 = vpop.f32.mrf.mxu0
        %v3714 = vadd.f32 %v3537, %v3713
        %3715 = vmatmul.f32.gmra.mxu0 %v3609
        %v3716 = vpop.f32.mrf.mxu0
        %v3717 = vadd.f32 %v3540, %v3716
        %3718 = vmatmul.f32.gmra.mxu0 %v3611
        %v3719 = vpop.f32.mrf.mxu0
        %v3720 = vadd.f32 %v3543, %v3719
        %3721 = vmatmul.f32.gmra.mxu0 %v3613
        %v3722 = vpop.f32.mrf.mxu0
        %v3723 = vadd.f32 %v3546, %v3722
        %3724 = vmatmul.f32.gmra.mxu0 %v3615
        %v3725 = vpop.f32.mrf.mxu0
        %v3726 = vadd.f32 %v3549, %v3725
        %3727 = vmatmul.f32.gmra.mxu0 %v3617
        %v3728 = vpop.f32.mrf.mxu0
        %v3729 = vadd.f32 %v3552, %v3728
        %3730 = vmatmul.f32.gmra.mxu0 %v3619
        %v3731 = vpop.f32.mrf.mxu0
        %v3732 = vadd.f32 %v3555, %v3731
        %3733 = vdwg.mxu0
        %s3734 = scalar_lea.vmem %s341, 168
        %v3735 = vld [vmem:[%s3734] sm:$0x8]
        %v3736 = vld [vmem:[%s3734 + $0x4] sm:$0xf]
        %v3737 = vld [vmem:[%s3734 + $0x8] sm:$0x7]
        %v3738 = vld [vmem:[%s3734 + $0x1c] sm:$0x8]
        %v3739 = vld [vmem:[%s3734 + $0x20] sm:$0xf]
        %v3740 = vld [vmem:[%s3734 + $0x24] sm:$0x7]
        %v3741 = vld [vmem:[%s3734 + $0x38] sm:$0x8]
        %v3742 = vld [vmem:[%s3734 + $0x3c] sm:$0xf]
        %v3743 = vld [vmem:[%s3734 + $0x40] sm:$0x7]
        %v3744 = vld [vmem:[%s3734 + $0x54] sm:$0x8]
        %v3745 = vld [vmem:[%s3734 + $0x58] sm:$0xf]
        %v3746 = vld [vmem:[%s3734 + $0x5c] sm:$0x7]
        %v3747 = vld [vmem:[%s3734 + $0x70] sm:$0x8]
        %v3748 = vld [vmem:[%s3734 + $0x74] sm:$0xf]
        %v3749 = vld [vmem:[%s3734 + $0x78] sm:$0x7]
        %v3750 = vld [vmem:[%s3734 + $0x8c] sm:$0x8]
        %v3751 = vld [vmem:[%s3734 + $0x90] sm:$0xf]
        %v3752 = vld [vmem:[%s3734 + $0x94] sm:$0x7]
        %v3753 = vld [vmem:[%s3734 + $0xa8] sm:$0x8]
        %v3754 = vld [vmem:[%s3734 + $0xac] sm:$0xf]
        %v3755 = vld [vmem:[%s3734 + $0xb0] sm:$0x7]
        %v3756 = vld [vmem:[%s3734 + $0xc4] sm:$0x8]
        %v3757 = vld [vmem:[%s3734 + $0xc8] sm:$0xf]
        %v3758 = vld [vmem:[%s3734 + $0xcc] sm:$0x7]
        %v3759 = vld [vmem:[%s3734 + $0xe0] sm:$0x8]
        %v3760 = vld [vmem:[%s3734 + $0xe4] sm:$0xf]
        %v3761 = vld [vmem:[%s3734 + $0xe8] sm:$0x7]
        %v3762 = vld [vmem:[%s3734 + $0xfc] sm:$0x8]
        %v3763 = vld [vmem:[%s3734 + $0x100] sm:$0xf]
        %v3764 = vld [vmem:[%s3734 + $0x104] sm:$0x7]
        %v3765 = vld [vmem:[%s3734 + $0x118] sm:$0x8]
        %v3766 = vld [vmem:[%s3734 + $0x11c] sm:$0xf]
        %v3767 = vld [vmem:[%s3734 + $0x120] sm:$0x7]
        %v3768 = vld [vmem:[%s3734 + $0x134] sm:$0x8]
        %v3769 = vld [vmem:[%s3734 + $0x138] sm:$0xf]
        %v3770 = vld [vmem:[%s3734 + $0x13c] sm:$0x7]
        %v3771 = vld [vmem:[%s3734 + $0x150] sm:$0x8]
        %v3772 = vld [vmem:[%s3734 + $0x154] sm:$0xf]
        %v3773 = vld [vmem:[%s3734 + $0x158] sm:$0x7]
        %v3774 = vld [vmem:[%s3734 + $0x16c] sm:$0x8]
        %v3775 = vld [vmem:[%s3734 + $0x170] sm:$0xf]
        %v3776 = vld [vmem:[%s3734 + $0x174] sm:$0x7]
        %v3777 = vld [vmem:[%s3734 + $0x188] sm:$0x8]
        %v3778 = vld [vmem:[%s3734 + $0x18c] sm:$0xf]
        %v3779 = vld [vmem:[%s3734 + $0x190] sm:$0x7]
        %v3780 = vld [vmem:[%s3734 + $0x1a4] sm:$0x8]
        %v3781 = vld [vmem:[%s3734 + $0x1a8] sm:$0xf]
        %v3782 = vld [vmem:[%s3734 + $0x1ac] sm:$0x7]
        %v3783 = vunpack.c.l.bf16 %v3735
        %v3784 = vunpack.c.l.bf16 %v3736
        %v3785 = vunpack.c.l.bf16 %v3737
        %v3786 = vunpack.c.l.bf16 %v3738
        %v3787 = vunpack.c.l.bf16 %v3739
        %v3788 = vunpack.c.l.bf16 %v3740
        %v3789 = vunpack.c.l.bf16 %v3741
        %v3790 = vunpack.c.l.bf16 %v3742
        %v3791 = vunpack.c.l.bf16 %v3743
        %v3792 = vunpack.c.l.bf16 %v3744
        %v3793 = vunpack.c.l.bf16 %v3745
        %v3794 = vunpack.c.l.bf16 %v3746
        %v3795 = vunpack.c.l.bf16 %v3747
        %v3796 = vunpack.c.l.bf16 %v3748
        %v3797 = vunpack.c.l.bf16 %v3749
        %v3798 = vunpack.c.l.bf16 %v3750
        %v3799 = vunpack.c.l.bf16 %v3751
        %v3800 = vunpack.c.l.bf16 %v3752
        %v3801 = vunpack.c.l.bf16 %v3753
        %v3802 = vunpack.c.l.bf16 %v3754
        %v3803 = vunpack.c.l.bf16 %v3755
        %v3804 = vunpack.c.l.bf16 %v3756
        %v3805 = vunpack.c.l.bf16 %v3757
        %v3806 = vunpack.c.l.bf16 %v3758
        %v3807 = vunpack.c.l.bf16 %v3759
        %v3808 = vunpack.c.l.bf16 %v3760
        %v3809 = vunpack.c.l.bf16 %v3761
        %v3810 = vunpack.c.l.bf16 %v3762
        %v3811 = vunpack.c.l.bf16 %v3763
        %v3812 = vunpack.c.l.bf16 %v3764
        %v3813 = vunpack.c.l.bf16 %v3765
        %v3814 = vunpack.c.l.bf16 %v3766
        %v3815 = vunpack.c.l.bf16 %v3767
        %v3816 = vunpack.c.l.bf16 %v3768
        %v3817 = vunpack.c.l.bf16 %v3769
        %v3818 = vunpack.c.l.bf16 %v3770
        %v3819 = vunpack.c.l.bf16 %v3771
        %v3820 = vunpack.c.l.bf16 %v3772
        %v3821 = vunpack.c.l.bf16 %v3773
        %v3822 = vunpack.c.l.bf16 %v3774
        %v3823 = vunpack.c.l.bf16 %v3775
        %v3824 = vunpack.c.l.bf16 %v3776
        %v3825 = vunpack.c.l.bf16 %v3777
        %v3826 = vunpack.c.l.bf16 %v3778
        %v3827 = vunpack.c.l.bf16 %v3779
        %v3828 = vunpack.c.l.bf16 %v3780
        %v3829 = vunpack.c.l.bf16 %v3781
        %v3830 = vunpack.c.l.bf16 %v3782
        %s3831 = scalar_lea.vmem %s3, 16
        %v3832 = vld [vmem:[%s3831] sm:$0x1]
        %v3833 = vperm.slane %v3832, 0
        %v3834 = vmul.f32 %v3783, %v3833
        %v3835 = vmul.f32 %v3784, %v3833
        %v3836 = vmul.f32 %v3785, %v3833
        %v3837 = vmul.f32 %v3786, %v3833
        %v3838 = vmul.f32 %v3787, %v3833
        %v3839 = vmul.f32 %v3788, %v3833
        %v3840 = vmul.f32 %v3789, %v3833
        %v3841 = vmul.f32 %v3790, %v3833
        %v3842 = vmul.f32 %v3791, %v3833
        %v3843 = vmul.f32 %v3792, %v3833
        %v3844 = vmul.f32 %v3793, %v3833
        %v3845 = vmul.f32 %v3794, %v3833
        %v3846 = vmul.f32 %v3795, %v3833
        %v3847 = vmul.f32 %v3796, %v3833
        %v3848 = vmul.f32 %v3797, %v3833
        %v3849 = vmul.f32 %v3798, %v3833
        %v3850 = vmul.f32 %v3799, %v3833
        %v3851 = vmul.f32 %v3800, %v3833
        %v3852 = vmul.f32 %v3801, %v3833
        %v3853 = vmul.f32 %v3802, %v3833
        %v3854 = vmul.f32 %v3803, %v3833
        %v3855 = vmul.f32 %v3804, %v3833
        %v3856 = vmul.f32 %v3805, %v3833
        %v3857 = vmul.f32 %v3806, %v3833
        %v3858 = vmul.f32 %v3807, %v3833
        %v3859 = vmul.f32 %v3808, %v3833
        %v3860 = vmul.f32 %v3809, %v3833
        %v3861 = vmul.f32 %v3810, %v3833
        %v3862 = vmul.f32 %v3811, %v3833
        %v3863 = vmul.f32 %v3812, %v3833
        %v3864 = vmul.f32 %v3813, %v3833
        %v3865 = vmul.f32 %v3814, %v3833
        %v3866 = vmul.f32 %v3815, %v3833
        %v3867 = vmul.f32 %v3816, %v3833
        %v3868 = vmul.f32 %v3817, %v3833
        %v3869 = vmul.f32 %v3818, %v3833
        %v3870 = vmul.f32 %v3819, %v3833
        %v3871 = vmul.f32 %v3820, %v3833
        %v3872 = vmul.f32 %v3821, %v3833
        %v3873 = vmul.f32 %v3822, %v3833
        %v3874 = vmul.f32 %v3823, %v3833
        %v3875 = vmul.f32 %v3824, %v3833
        %v3876 = vmul.f32 %v3825, %v3833
        %v3877 = vmul.f32 %v3826, %v3833
        %v3878 = vmul.f32 %v3827, %v3833
        %v3879 = vmul.f32 %v3828, %v3833
        %v3880 = vmul.f32 %v3829, %v3833
        %v3881 = vmul.f32 %v3830, %v3833
        %v3882 = vadd.f32 %v3834, 0.0
        %v3883 = vadd.f32 %v3835, 0.0
        %v3884 = vadd.f32 %v3836, 0.0
        %v3885 = vadd.f32 %v3837, 0.0
        %v3886 = vadd.f32 %v3838, 0.0
        %v3887 = vadd.f32 %v3839, 0.0
        %v3888 = vadd.f32 %v3840, 0.0
        %v3889 = vadd.f32 %v3841, 0.0
        %v3890 = vadd.f32 %v3842, 0.0
        %v3891 = vadd.f32 %v3843, 0.0
        %v3892 = vadd.f32 %v3844, 0.0
        %v3893 = vadd.f32 %v3845, 0.0
        %v3894 = vadd.f32 %v3846, 0.0
        %v3895 = vadd.f32 %v3847, 0.0
        %v3896 = vadd.f32 %v3848, 0.0
        %v3897 = vadd.f32 %v3849, 0.0
        %v3898 = vadd.f32 %v3850, 0.0
        %v3899 = vadd.f32 %v3851, 0.0
        %v3900 = vadd.f32 %v3852, 0.0
        %v3901 = vadd.f32 %v3853, 0.0
        %v3902 = vadd.f32 %v3854, 0.0
        %v3903 = vadd.f32 %v3855, 0.0
        %v3904 = vadd.f32 %v3856, 0.0
        %v3905 = vadd.f32 %v3857, 0.0
        %v3906 = vadd.f32 %v3858, 0.0
        %v3907 = vadd.f32 %v3859, 0.0
        %v3908 = vadd.f32 %v3860, 0.0
        %v3909 = vadd.f32 %v3861, 0.0
        %v3910 = vadd.f32 %v3862, 0.0
        %v3911 = vadd.f32 %v3863, 0.0
        %v3912 = vadd.f32 %v3864, 0.0
        %v3913 = vadd.f32 %v3865, 0.0
        %v3914 = vadd.f32 %v3866, 0.0
        %v3915 = vadd.f32 %v3867, 0.0
        %v3916 = vadd.f32 %v3868, 0.0
        %v3917 = vadd.f32 %v3869, 0.0
        %v3918 = vadd.f32 %v3870, 0.0
        %v3919 = vadd.f32 %v3871, 0.0
        %v3920 = vadd.f32 %v3872, 0.0
        %v3921 = vadd.f32 %v3873, 0.0
        %v3922 = vadd.f32 %v3874, 0.0
        %v3923 = vadd.f32 %v3875, 0.0
        %v3924 = vadd.f32 %v3876, 0.0
        %v3925 = vadd.f32 %v3877, 0.0
        %v3926 = vadd.f32 %v3878, 0.0
        %v3927 = vadd.f32 %v3879, 0.0
        %v3928 = vadd.f32 %v3880, 0.0
        %v3929 = vadd.f32 %v3881, 0.0
        %v3930 = vld [vmem:[%s3734 + $0x8] sm:$0xe]
        %v3931 = vld [vmem:[%s3734 + $0xc] sm:$0xf]
        %v3932 = vld [vmem:[%s3734 + $0x10] sm:$0x1]
        %v3933 = vld [vmem:[%s3734 + $0x24] sm:$0xe]
        %v3934 = vld [vmem:[%s3734 + $0x28] sm:$0xf]
        %v3935 = vld [vmem:[%s3734 + $0x2c] sm:$0x1]
        %v3936 = vld [vmem:[%s3734 + $0x40] sm:$0xe]
        %v3937 = vld [vmem:[%s3734 + $0x44] sm:$0xf]
        %v3938 = vld [vmem:[%s3734 + $0x48] sm:$0x1]
        %v3939 = vld [vmem:[%s3734 + $0x5c] sm:$0xe]
        %v3940 = vld [vmem:[%s3734 + $0x60] sm:$0xf]
        %v3941 = vld [vmem:[%s3734 + $0x64] sm:$0x1]
        %v3942 = vld [vmem:[%s3734 + $0x78] sm:$0xe]
        %v3943 = vld [vmem:[%s3734 + $0x7c] sm:$0xf]
        %v3944 = vld [vmem:[%s3734 + $0x80] sm:$0x1]
        %v3945 = vld [vmem:[%s3734 + $0x94] sm:$0xe]
        %v3946 = vld [vmem:[%s3734 + $0x98] sm:$0xf]
        %v3947 = vld [vmem:[%s3734 + $0x9c] sm:$0x1]
        %v3948 = vld [vmem:[%s3734 + $0xb0] sm:$0xe]
        %v3949 = vld [vmem:[%s3734 + $0xb4] sm:$0xf]
        %v3950 = vld [vmem:[%s3734 + $0xb8] sm:$0x1]
        %v3951 = vld [vmem:[%s3734 + $0xcc] sm:$0xe]
        %v3952 = vld [vmem:[%s3734 + $0xd0] sm:$0xf]
        %v3953 = vld [vmem:[%s3734 + $0xd4] sm:$0x1]
        %v3954 = vld [vmem:[%s3734 + $0xe8] sm:$0xe]
        %v3955 = vld [vmem:[%s3734 + $0xec] sm:$0xf]
        %v3956 = vld [vmem:[%s3734 + $0xf0] sm:$0x1]
        %v3957 = vld [vmem:[%s3734 + $0x104] sm:$0xe]
        %v3958 = vld [vmem:[%s3734 + $0x108] sm:$0xf]
        %v3959 = vld [vmem:[%s3734 + $0x10c] sm:$0x1]
        %v3960 = vld [vmem:[%s3734 + $0x120] sm:$0xe]
        %v3961 = vld [vmem:[%s3734 + $0x124] sm:$0xf]
        %v3962 = vld [vmem:[%s3734 + $0x128] sm:$0x1]
        %v3963 = vld [vmem:[%s3734 + $0x13c] sm:$0xe]
        %v3964 = vld [vmem:[%s3734 + $0x140] sm:$0xf]
        %v3965 = vld [vmem:[%s3734 + $0x144] sm:$0x1]
        %v3966 = vld [vmem:[%s3734 + $0x158] sm:$0xe]
        %v3967 = vld [vmem:[%s3734 + $0x15c] sm:$0xf]
        %v3968 = vld [vmem:[%s3734 + $0x160] sm:$0x1]
        %v3969 = vld [vmem:[%s3734 + $0x174] sm:$0xe]
        %v3970 = vld [vmem:[%s3734 + $0x178] sm:$0xf]
        %v3971 = vld [vmem:[%s3734 + $0x17c] sm:$0x1]
        %v3972 = vld [vmem:[%s3734 + $0x190] sm:$0xe]
        %v3973 = vld [vmem:[%s3734 + $0x194] sm:$0xf]
        %v3974 = vld [vmem:[%s3734 + $0x198] sm:$0x1]
        %v3975 = vld [vmem:[%s3734 + $0x1ac] sm:$0xe]
        %v3976 = vld [vmem:[%s3734 + $0x1b0] sm:$0xf]
        %v3977 = vld [vmem:[%s3734 + $0x1b4] sm:$0x1]
        %v3978 = vunpack.c.l.bf16 %v3930
        %v3979 = vunpack.c.l.bf16 %v3931
        %v3980 = vunpack.c.l.bf16 %v3932
        %v3981 = vunpack.c.l.bf16 %v3933
        %v3982 = vunpack.c.l.bf16 %v3934
        %v3983 = vunpack.c.l.bf16 %v3935
        %v3984 = vunpack.c.l.bf16 %v3936
        %v3985 = vunpack.c.l.bf16 %v3937
        %v3986 = vunpack.c.l.bf16 %v3938
        %v3987 = vunpack.c.l.bf16 %v3939
        %v3988 = vunpack.c.l.bf16 %v3940
        %v3989 = vunpack.c.l.bf16 %v3941
        %v3990 = vunpack.c.l.bf16 %v3942
        %v3991 = vunpack.c.l.bf16 %v3943
        %v3992 = vunpack.c.l.bf16 %v3944
        %v3993 = vunpack.c.l.bf16 %v3945
        %v3994 = vunpack.c.l.bf16 %v3946
        %v3995 = vunpack.c.l.bf16 %v3947
        %v3996 = vunpack.c.l.bf16 %v3948
        %v3997 = vunpack.c.l.bf16 %v3949
        %v3998 = vunpack.c.l.bf16 %v3950
        %v3999 = vunpack.c.l.bf16 %v3951
        %v4000 = vunpack.c.l.bf16 %v3952
        %v4001 = vunpack.c.l.bf16 %v3953
        %v4002 = vunpack.c.l.bf16 %v3954
        %v4003 = vunpack.c.l.bf16 %v3955
        %v4004 = vunpack.c.l.bf16 %v3956
        %v4005 = vunpack.c.l.bf16 %v3957
        %v4006 = vunpack.c.l.bf16 %v3958
        %v4007 = vunpack.c.l.bf16 %v3959
        %v4008 = vunpack.c.l.bf16 %v3960
        %v4009 = vunpack.c.l.bf16 %v3961
        %v4010 = vunpack.c.l.bf16 %v3962
        %v4011 = vunpack.c.l.bf16 %v3963
        %v4012 = vunpack.c.l.bf16 %v3964
        %v4013 = vunpack.c.l.bf16 %v3965
        %v4014 = vunpack.c.l.bf16 %v3966
        %v4015 = vunpack.c.l.bf16 %v3967
        %v4016 = vunpack.c.l.bf16 %v3968
        %v4017 = vunpack.c.l.bf16 %v3969
        %v4018 = vunpack.c.l.bf16 %v3970
        %v4019 = vunpack.c.l.bf16 %v3971
        %v4020 = vunpack.c.l.bf16 %v3972
        %v4021 = vunpack.c.l.bf16 %v3973
        %v4022 = vunpack.c.l.bf16 %v3974
        %v4023 = vunpack.c.l.bf16 %v3975
        %v4024 = vunpack.c.l.bf16 %v3976
        %v4025 = vunpack.c.l.bf16 %v3977
        %v4026 = vld [vmem:[%s3831 + $0x1] sm:$0x1]
        %v4027 = vperm.slane %v4026, 0
        %v4028 = vmul.f32 %v3978, %v4027
        %v4029 = vmul.f32 %v3979, %v4027
        %v4030 = vmul.f32 %v3980, %v4027
        %v4031 = vmul.f32 %v3981, %v4027
        %v4032 = vmul.f32 %v3982, %v4027
        %v4033 = vmul.f32 %v3983, %v4027
        %v4034 = vmul.f32 %v3984, %v4027
        %v4035 = vmul.f32 %v3985, %v4027
        %v4036 = vmul.f32 %v3986, %v4027
        %v4037 = vmul.f32 %v3987, %v4027
        %v4038 = vmul.f32 %v3988, %v4027
        %v4039 = vmul.f32 %v3989, %v4027
        %v4040 = vmul.f32 %v3990, %v4027
        %v4041 = vmul.f32 %v3991, %v4027
        %v4042 = vmul.f32 %v3992, %v4027
        %v4043 = vmul.f32 %v3993, %v4027
        %v4044 = vmul.f32 %v3994, %v4027
        %v4045 = vmul.f32 %v3995, %v4027
        %v4046 = vmul.f32 %v3996, %v4027
        %v4047 = vmul.f32 %v3997, %v4027
        %v4048 = vmul.f32 %v3998, %v4027
        %v4049 = vmul.f32 %v3999, %v4027
        %v4050 = vmul.f32 %v4000, %v4027
        %v4051 = vmul.f32 %v4001, %v4027
        %v4052 = vmul.f32 %v4002, %v4027
        %v4053 = vmul.f32 %v4003, %v4027
        %v4054 = vmul.f32 %v4004, %v4027
        %v4055 = vmul.f32 %v4005, %v4027
        %v4056 = vmul.f32 %v4006, %v4027
        %v4057 = vmul.f32 %v4007, %v4027
        %v4058 = vmul.f32 %v4008, %v4027
        %v4059 = vmul.f32 %v4009, %v4027
        %v4060 = vmul.f32 %v4010, %v4027
        %v4061 = vmul.f32 %v4011, %v4027
        %v4062 = vmul.f32 %v4012, %v4027
        %v4063 = vmul.f32 %v4013, %v4027
        %v4064 = vmul.f32 %v4014, %v4027
        %v4065 = vmul.f32 %v4015, %v4027
        %v4066 = vmul.f32 %v4016, %v4027
        %v4067 = vmul.f32 %v4017, %v4027
        %v4068 = vmul.f32 %v4018, %v4027
        %v4069 = vmul.f32 %v4019, %v4027
        %v4070 = vmul.f32 %v4020, %v4027
        %v4071 = vmul.f32 %v4021, %v4027
        %v4072 = vmul.f32 %v4022, %v4027
        %v4073 = vmul.f32 %v4023, %v4027
        %v4074 = vmul.f32 %v4024, %v4027
        %v4075 = vmul.f32 %v4025, %v4027
        %v4124 = vrot.slane %v4028, 4
        %v4125 = vrot.slane %v4029, 4
        %v4126 = vsel %vm1439, %v4124, %v4125
        %v4127 = vrot.slane %v4030, 4
        %v4128 = vsel %vm1439, %v4125, %v4127
        %v4129 = vrot.slane %v4031, 4
        %v4130 = vrot.slane %v4032, 4
        %v4131 = vsel %vm1439, %v4129, %v4130
        %v4132 = vrot.slane %v4033, 4
        %v4133 = vsel %vm1439, %v4130, %v4132
        %v4134 = vrot.slane %v4034, 4
        %v4135 = vrot.slane %v4035, 4
        %v4136 = vsel %vm1439, %v4134, %v4135
        %v4137 = vrot.slane %v4036, 4
        %v4138 = vsel %vm1439, %v4135, %v4137
        %v4139 = vrot.slane %v4037, 4
        %v4140 = vrot.slane %v4038, 4
        %v4141 = vsel %vm1439, %v4139, %v4140
        %v4142 = vrot.slane %v4039, 4
        %v4143 = vsel %vm1439, %v4140, %v4142
        %v4144 = vrot.slane %v4040, 4
        %v4145 = vrot.slane %v4041, 4
        %v4146 = vsel %vm1439, %v4144, %v4145
        %v4147 = vrot.slane %v4042, 4
        %v4148 = vsel %vm1439, %v4145, %v4147
        %v4149 = vrot.slane %v4043, 4
        %v4150 = vrot.slane %v4044, 4
        %v4151 = vsel %vm1439, %v4149, %v4150
        %v4152 = vrot.slane %v4045, 4
        %v4153 = vsel %vm1439, %v4150, %v4152
        %v4154 = vrot.slane %v4046, 4
        %v4155 = vrot.slane %v4047, 4
        %v4156 = vsel %vm1439, %v4154, %v4155
        %v4157 = vrot.slane %v4048, 4
        %v4158 = vsel %vm1439, %v4155, %v4157
        %v4159 = vrot.slane %v4049, 4
        %v4160 = vrot.slane %v4050, 4
        %v4161 = vsel %vm1439, %v4159, %v4160
        %v4162 = vrot.slane %v4051, 4
        %v4163 = vsel %vm1439, %v4160, %v4162
        %v4164 = vrot.slane %v4052, 4
        %v4165 = vrot.slane %v4053, 4
        %v4166 = vsel %vm1439, %v4164, %v4165
        %v4167 = vrot.slane %v4054, 4
        %v4168 = vsel %vm1439, %v4165, %v4167
        %v4169 = vrot.slane %v4055, 4
        %v4170 = vrot.slane %v4056, 4
        %v4171 = vsel %vm1439, %v4169, %v4170
        %v4172 = vrot.slane %v4057, 4
        %v4173 = vsel %vm1439, %v4170, %v4172
        %v4174 = vrot.slane %v4058, 4
        %v4175 = vrot.slane %v4059, 4
        %v4176 = vsel %vm1439, %v4174, %v4175
        %v4177 = vrot.slane %v4060, 4
        %v4178 = vsel %vm1439, %v4175, %v4177
        %v4179 = vrot.slane %v4061, 4
        %v4180 = vrot.slane %v4062, 4
        %v4181 = vsel %vm1439, %v4179, %v4180
        %v4182 = vrot.slane %v4063, 4
        %v4183 = vsel %vm1439, %v4180, %v4182
        %v4184 = vrot.slane %v4064, 4
        %v4185 = vrot.slane %v4065, 4
        %v4186 = vsel %vm1439, %v4184, %v4185
        %v4187 = vrot.slane %v4066, 4
        %v4188 = vsel %vm1439, %v4185, %v4187
        %v4189 = vrot.slane %v4067, 4
        %v4190 = vrot.slane %v4068, 4
        %v4191 = vsel %vm1439, %v4189, %v4190
        %v4192 = vrot.slane %v4069, 4
        %v4193 = vsel %vm1439, %v4190, %v4192
        %v4194 = vrot.slane %v4070, 4
        %v4195 = vrot.slane %v4071, 4
        %v4196 = vsel %vm1439, %v4194, %v4195
        %v4197 = vrot.slane %v4072, 4
        %v4198 = vsel %vm1439, %v4195, %v4197
        %v4199 = vrot.slane %v4073, 4
        %v4200 = vrot.slane %v4074, 4
        %v4201 = vsel %vm1439, %v4199, %v4200
        %v4202 = vrot.slane %v4075, 4
        %v4203 = vsel %vm1439, %v4200, %v4202
        %v4252 = vadd.f32 %v3882, %v4124
        %v4253 = vadd.f32 %v3883, %v4126
        %v4254 = vadd.f32 %v3884, %v4128
        %v4255 = vadd.f32 %v3885, %v4129
        %v4256 = vadd.f32 %v3886, %v4131
        %v4257 = vadd.f32 %v3887, %v4133
        %v4258 = vadd.f32 %v3888, %v4134
        %v4259 = vadd.f32 %v3889, %v4136
        %v4260 = vadd.f32 %v3890, %v4138
        %v4261 = vadd.f32 %v3891, %v4139
        %v4262 = vadd.f32 %v3892, %v4141
        %v4263 = vadd.f32 %v3893, %v4143
        %v4264 = vadd.f32 %v3894, %v4144
        %v4265 = vadd.f32 %v3895, %v4146
        %v4266 = vadd.f32 %v3896, %v4148
        %v4267 = vadd.f32 %v3897, %v4149
        %v4268 = vadd.f32 %v3898, %v4151
        %v4269 = vadd.f32 %v3899, %v4153
        %v4270 = vadd.f32 %v3900, %v4154
        %v4271 = vadd.f32 %v3901, %v4156
        %v4272 = vadd.f32 %v3902, %v4158
        %v4273 = vadd.f32 %v3903, %v4159
        %v4274 = vadd.f32 %v3904, %v4161
        %v4275 = vadd.f32 %v3905, %v4163
        %v4276 = vadd.f32 %v3906, %v4164
        %v4277 = vadd.f32 %v3907, %v4166
        %v4278 = vadd.f32 %v3908, %v4168
        %v4279 = vadd.f32 %v3909, %v4169
        %v4280 = vadd.f32 %v3910, %v4171
        %v4281 = vadd.f32 %v3911, %v4173
        %v4282 = vadd.f32 %v3912, %v4174
        %v4283 = vadd.f32 %v3913, %v4176
        %v4284 = vadd.f32 %v3914, %v4178
        %v4285 = vadd.f32 %v3915, %v4179
        %v4286 = vadd.f32 %v3916, %v4181
        %v4287 = vadd.f32 %v3917, %v4183
        %v4288 = vadd.f32 %v3918, %v4184
        %v4289 = vadd.f32 %v3919, %v4186
        %v4290 = vadd.f32 %v3920, %v4188
        %v4291 = vadd.f32 %v3921, %v4189
        %v4292 = vadd.f32 %v3922, %v4191
        %v4293 = vadd.f32 %v3923, %v4193
        %v4294 = vadd.f32 %v3924, %v4194
        %v4295 = vadd.f32 %v3925, %v4196
        %v4296 = vadd.f32 %v3926, %v4198
        %v4297 = vadd.f32 %v3927, %v4199
        %v4298 = vadd.f32 %v3928, %v4201
        %v4299 = vadd.f32 %v3929, %v4203
        %v4300 = vld [vmem:[%s3734 + $0xc] sm:$0x8]
        %v4301 = vld [vmem:[%s3734 + $0x10] sm:$0xf]
        %v4302 = vld [vmem:[%s3734 + $0x14] sm:$0x7]
        %v4303 = vld [vmem:[%s3734 + $0x28] sm:$0x8]
        %v4304 = vld [vmem:[%s3734 + $0x2c] sm:$0xf]
        %v4305 = vld [vmem:[%s3734 + $0x30] sm:$0x7]
        %v4306 = vld [vmem:[%s3734 + $0x44] sm:$0x8]
        %v4307 = vld [vmem:[%s3734 + $0x48] sm:$0xf]
        %v4308 = vld [vmem:[%s3734 + $0x4c] sm:$0x7]
        %v4309 = vld [vmem:[%s3734 + $0x60] sm:$0x8]
        %v4310 = vld [vmem:[%s3734 + $0x64] sm:$0xf]
        %v4311 = vld [vmem:[%s3734 + $0x68] sm:$0x7]
        %v4312 = vld [vmem:[%s3734 + $0x7c] sm:$0x8]
        %v4313 = vld [vmem:[%s3734 + $0x80] sm:$0xf]
        %v4314 = vld [vmem:[%s3734 + $0x84] sm:$0x7]
        %v4315 = vld [vmem:[%s3734 + $0x98] sm:$0x8]
        %v4316 = vld [vmem:[%s3734 + $0x9c] sm:$0xf]
        %v4317 = vld [vmem:[%s3734 + $0xa0] sm:$0x7]
        %v4318 = vld [vmem:[%s3734 + $0xb4] sm:$0x8]
        %v4319 = vld [vmem:[%s3734 + $0xb8] sm:$0xf]
        %v4320 = vld [vmem:[%s3734 + $0xbc] sm:$0x7]
        %v4321 = vld [vmem:[%s3734 + $0xd0] sm:$0x8]
        %v4322 = vld [vmem:[%s3734 + $0xd4] sm:$0xf]
        %v4323 = vld [vmem:[%s3734 + $0xd8] sm:$0x7]
        %v4324 = vld [vmem:[%s3734 + $0xec] sm:$0x8]
        %v4325 = vld [vmem:[%s3734 + $0xf0] sm:$0xf]
        %v4326 = vld [vmem:[%s3734 + $0xf4] sm:$0x7]
        %v4327 = vld [vmem:[%s3734 + $0x108] sm:$0x8]
        %v4328 = vld [vmem:[%s3734 + $0x10c] sm:$0xf]
        %v4329 = vld [vmem:[%s3734 + $0x110] sm:$0x7]
        %v4330 = vld [vmem:[%s3734 + $0x124] sm:$0x8]
        %v4331 = vld [vmem:[%s3734 + $0x128] sm:$0xf]
        %v4332 = vld [vmem:[%s3734 + $0x12c] sm:$0x7]
        %v4333 = vld [vmem:[%s3734 + $0x140] sm:$0x8]
        %v4334 = vld [vmem:[%s3734 + $0x144] sm:$0xf]
        %v4335 = vld [vmem:[%s3734 + $0x148] sm:$0x7]
        %v4336 = vld [vmem:[%s3734 + $0x15c] sm:$0x8]
        %v4337 = vld [vmem:[%s3734 + $0x160] sm:$0xf]
        %v4338 = vld [vmem:[%s3734 + $0x164] sm:$0x7]
        %v4339 = vld [vmem:[%s3734 + $0x178] sm:$0x8]
        %v4340 = vld [vmem:[%s3734 + $0x17c] sm:$0xf]
        %v4341 = vld [vmem:[%s3734 + $0x180] sm:$0x7]
        %v4342 = vld [vmem:[%s3734 + $0x194] sm:$0x8]
        %v4343 = vld [vmem:[%s3734 + $0x198] sm:$0xf]
        %v4344 = vld [vmem:[%s3734 + $0x19c] sm:$0x7]
        %v4345 = vld [vmem:[%s3734 + $0x1b0] sm:$0x8]
        %v4346 = vld [vmem:[%s3734 + $0x1b4] sm:$0xf]
        %v4347 = vld [vmem:[%s3734 + $0x1b8] sm:$0x7]
        %v4348 = vunpack.c.l.bf16 %v4300
        %v4349 = vunpack.c.l.bf16 %v4301
        %v4350 = vunpack.c.l.bf16 %v4302
        %v4351 = vunpack.c.l.bf16 %v4303
        %v4352 = vunpack.c.l.bf16 %v4304
        %v4353 = vunpack.c.l.bf16 %v4305
        %v4354 = vunpack.c.l.bf16 %v4306
        %v4355 = vunpack.c.l.bf16 %v4307
        %v4356 = vunpack.c.l.bf16 %v4308
        %v4357 = vunpack.c.l.bf16 %v4309
        %v4358 = vunpack.c.l.bf16 %v4310
        %v4359 = vunpack.c.l.bf16 %v4311
        %v4360 = vunpack.c.l.bf16 %v4312
        %v4361 = vunpack.c.l.bf16 %v4313
        %v4362 = vunpack.c.l.bf16 %v4314
        %v4363 = vunpack.c.l.bf16 %v4315
        %v4364 = vunpack.c.l.bf16 %v4316
        %v4365 = vunpack.c.l.bf16 %v4317
        %v4366 = vunpack.c.l.bf16 %v4318
        %v4367 = vunpack.c.l.bf16 %v4319
        %v4368 = vunpack.c.l.bf16 %v4320
        %v4369 = vunpack.c.l.bf16 %v4321
        %v4370 = vunpack.c.l.bf16 %v4322
        %v4371 = vunpack.c.l.bf16 %v4323
        %v4372 = vunpack.c.l.bf16 %v4324
        %v4373 = vunpack.c.l.bf16 %v4325
        %v4374 = vunpack.c.l.bf16 %v4326
        %v4375 = vunpack.c.l.bf16 %v4327
        %v4376 = vunpack.c.l.bf16 %v4328
        %v4377 = vunpack.c.l.bf16 %v4329
        %v4378 = vunpack.c.l.bf16 %v4330
        %v4379 = vunpack.c.l.bf16 %v4331
        %v4380 = vunpack.c.l.bf16 %v4332
        %v4381 = vunpack.c.l.bf16 %v4333
        %v4382 = vunpack.c.l.bf16 %v4334
        %v4383 = vunpack.c.l.bf16 %v4335
        %v4384 = vunpack.c.l.bf16 %v4336
        %v4385 = vunpack.c.l.bf16 %v4337
        %v4386 = vunpack.c.l.bf16 %v4338
        %v4387 = vunpack.c.l.bf16 %v4339
        %v4388 = vunpack.c.l.bf16 %v4340
        %v4389 = vunpack.c.l.bf16 %v4341
        %v4390 = vunpack.c.l.bf16 %v4342
        %v4391 = vunpack.c.l.bf16 %v4343
        %v4392 = vunpack.c.l.bf16 %v4344
        %v4393 = vunpack.c.l.bf16 %v4345
        %v4394 = vunpack.c.l.bf16 %v4346
        %v4395 = vunpack.c.l.bf16 %v4347
        %v4396 = vld [vmem:[%s3831 + $0x2] sm:$0x1]
        %v4397 = vperm.slane %v4396, 0
        %v4398 = vmul.f32 %v4348, %v4397
        %v4399 = vmul.f32 %v4349, %v4397
        %v4400 = vmul.f32 %v4350, %v4397
        %v4401 = vmul.f32 %v4351, %v4397
        %v4402 = vmul.f32 %v4352, %v4397
        %v4403 = vmul.f32 %v4353, %v4397
        %v4404 = vmul.f32 %v4354, %v4397
        %v4405 = vmul.f32 %v4355, %v4397
        %v4406 = vmul.f32 %v4356, %v4397
        %v4407 = vmul.f32 %v4357, %v4397
        %v4408 = vmul.f32 %v4358, %v4397
        %v4409 = vmul.f32 %v4359, %v4397
        %v4410 = vmul.f32 %v4360, %v4397
        %v4411 = vmul.f32 %v4361, %v4397
        %v4412 = vmul.f32 %v4362, %v4397
        %v4413 = vmul.f32 %v4363, %v4397
        %v4414 = vmul.f32 %v4364, %v4397
        %v4415 = vmul.f32 %v4365, %v4397
        %v4416 = vmul.f32 %v4366, %v4397
        %v4417 = vmul.f32 %v4367, %v4397
        %v4418 = vmul.f32 %v4368, %v4397
        %v4419 = vmul.f32 %v4369, %v4397
        %v4420 = vmul.f32 %v4370, %v4397
        %v4421 = vmul.f32 %v4371, %v4397
        %v4422 = vmul.f32 %v4372, %v4397
        %v4423 = vmul.f32 %v4373, %v4397
        %v4424 = vmul.f32 %v4374, %v4397
        %v4425 = vmul.f32 %v4375, %v4397
        %v4426 = vmul.f32 %v4376, %v4397
        %v4427 = vmul.f32 %v4377, %v4397
        %v4428 = vmul.f32 %v4378, %v4397
        %v4429 = vmul.f32 %v4379, %v4397
        %v4430 = vmul.f32 %v4380, %v4397
        %v4431 = vmul.f32 %v4381, %v4397
        %v4432 = vmul.f32 %v4382, %v4397
        %v4433 = vmul.f32 %v4383, %v4397
        %v4434 = vmul.f32 %v4384, %v4397
        %v4435 = vmul.f32 %v4385, %v4397
        %v4436 = vmul.f32 %v4386, %v4397
        %v4437 = vmul.f32 %v4387, %v4397
        %v4438 = vmul.f32 %v4388, %v4397
        %v4439 = vmul.f32 %v4389, %v4397
        %v4440 = vmul.f32 %v4390, %v4397
        %v4441 = vmul.f32 %v4391, %v4397
        %v4442 = vmul.f32 %v4392, %v4397
        %v4443 = vmul.f32 %v4393, %v4397
        %v4444 = vmul.f32 %v4394, %v4397
        %v4445 = vmul.f32 %v4395, %v4397
        %v4446 = vadd.f32 %v4252, %v4398
        %v4447 = vadd.f32 %v4253, %v4399
        %v4448 = vadd.f32 %v4254, %v4400
        %v4449 = vadd.f32 %v4255, %v4401
        %v4450 = vadd.f32 %v4256, %v4402
        %v4451 = vadd.f32 %v4257, %v4403
        %v4452 = vadd.f32 %v4258, %v4404
        %v4453 = vadd.f32 %v4259, %v4405
        %v4454 = vadd.f32 %v4260, %v4406
        %v4455 = vadd.f32 %v4261, %v4407
        %v4456 = vadd.f32 %v4262, %v4408
        %v4457 = vadd.f32 %v4263, %v4409
        %v4458 = vadd.f32 %v4264, %v4410
        %v4459 = vadd.f32 %v4265, %v4411
        %v4460 = vadd.f32 %v4266, %v4412
        %v4461 = vadd.f32 %v4267, %v4413
        %v4462 = vadd.f32 %v4268, %v4414
        %v4463 = vadd.f32 %v4269, %v4415
        %v4464 = vadd.f32 %v4270, %v4416
        %v4465 = vadd.f32 %v4271, %v4417
        %v4466 = vadd.f32 %v4272, %v4418
        %v4467 = vadd.f32 %v4273, %v4419
        %v4468 = vadd.f32 %v4274, %v4420
        %v4469 = vadd.f32 %v4275, %v4421
        %v4470 = vadd.f32 %v4276, %v4422
        %v4471 = vadd.f32 %v4277, %v4423
        %v4472 = vadd.f32 %v4278, %v4424
        %v4473 = vadd.f32 %v4279, %v4425
        %v4474 = vadd.f32 %v4280, %v4426
        %v4475 = vadd.f32 %v4281, %v4427
        %v4476 = vadd.f32 %v4282, %v4428
        %v4477 = vadd.f32 %v4283, %v4429
        %v4478 = vadd.f32 %v4284, %v4430
        %v4479 = vadd.f32 %v4285, %v4431
        %v4480 = vadd.f32 %v4286, %v4432
        %v4481 = vadd.f32 %v4287, %v4433
        %v4482 = vadd.f32 %v4288, %v4434
        %v4483 = vadd.f32 %v4289, %v4435
        %v4484 = vadd.f32 %v4290, %v4436
        %v4485 = vadd.f32 %v4291, %v4437
        %v4486 = vadd.f32 %v4292, %v4438
        %v4487 = vadd.f32 %v4293, %v4439
        %v4488 = vadd.f32 %v4294, %v4440
        %v4489 = vadd.f32 %v4295, %v4441
        %v4490 = vadd.f32 %v4296, %v4442
        %v4491 = vadd.f32 %v4297, %v4443
        %v4492 = vadd.f32 %v4298, %v4444
        %v4493 = vadd.f32 %v4299, %v4445
        %v4494 = vld [vmem:[%s345] sm:$0x8]
        %v4495 = vld [vmem:[%s345 + $0x4] sm:$0xf]
        %v4496 = vld [vmem:[%s345 + $0x8] sm:$0x7]
        %v4497 = vld [vmem:[%s345 + $0x1c] sm:$0x8]
        %v4498 = vld [vmem:[%s345 + $0x20] sm:$0xf]
        %v4499 = vld [vmem:[%s345 + $0x24] sm:$0x7]
        %v4500 = vld [vmem:[%s345 + $0x38] sm:$0x8]
        %v4501 = vld [vmem:[%s345 + $0x3c] sm:$0xf]
        %v4502 = vld [vmem:[%s345 + $0x40] sm:$0x7]
        %v4503 = vld [vmem:[%s345 + $0x54] sm:$0x8]
        %v4504 = vld [vmem:[%s345 + $0x58] sm:$0xf]
        %v4505 = vld [vmem:[%s345 + $0x5c] sm:$0x7]
        %v4506 = vld [vmem:[%s345 + $0x70] sm:$0x8]
        %v4507 = vld [vmem:[%s345 + $0x74] sm:$0xf]
        %v4508 = vld [vmem:[%s345 + $0x78] sm:$0x7]
        %v4509 = vld [vmem:[%s345 + $0x8c] sm:$0x8]
        %v4510 = vld [vmem:[%s345 + $0x90] sm:$0xf]
        %v4511 = vld [vmem:[%s345 + $0x94] sm:$0x7]
        %v4512 = vld [vmem:[%s345 + $0xa8] sm:$0x8]
        %v4513 = vld [vmem:[%s345 + $0xac] sm:$0xf]
        %v4514 = vld [vmem:[%s345 + $0xb0] sm:$0x7]
        %v4515 = vld [vmem:[%s345 + $0xc4] sm:$0x8]
        %v4516 = vld [vmem:[%s345 + $0xc8] sm:$0xf]
        %v4517 = vld [vmem:[%s345 + $0xcc] sm:$0x7]
        %v4518 = vld [vmem:[%s345 + $0xe0] sm:$0x8]
        %v4519 = vld [vmem:[%s345 + $0xe4] sm:$0xf]
        %v4520 = vld [vmem:[%s345 + $0xe8] sm:$0x7]
        %v4521 = vld [vmem:[%s345 + $0xfc] sm:$0x8]
        %v4522 = vld [vmem:[%s345 + $0x100] sm:$0xf]
        %v4523 = vld [vmem:[%s345 + $0x104] sm:$0x7]
        %v4524 = vld [vmem:[%s345 + $0x118] sm:$0x8]
        %v4525 = vld [vmem:[%s345 + $0x11c] sm:$0xf]
        %v4526 = vld [vmem:[%s345 + $0x120] sm:$0x7]
        %v4527 = vld [vmem:[%s345 + $0x134] sm:$0x8]
        %v4528 = vld [vmem:[%s345 + $0x138] sm:$0xf]
        %v4529 = vld [vmem:[%s345 + $0x13c] sm:$0x7]
        %v4530 = vld [vmem:[%s345 + $0x150] sm:$0x8]
        %v4531 = vld [vmem:[%s345 + $0x154] sm:$0xf]
        %v4532 = vld [vmem:[%s345 + $0x158] sm:$0x7]
        %v4533 = vld [vmem:[%s345 + $0x16c] sm:$0x8]
        %v4534 = vld [vmem:[%s345 + $0x170] sm:$0xf]
        %v4535 = vld [vmem:[%s345 + $0x174] sm:$0x7]
        %v4536 = vld [vmem:[%s345 + $0x188] sm:$0x8]
        %v4537 = vld [vmem:[%s345 + $0x18c] sm:$0xf]
        %v4538 = vld [vmem:[%s345 + $0x190] sm:$0x7]
        %v4539 = vld [vmem:[%s345 + $0x1a4] sm:$0x8]
        %v4540 = vld [vmem:[%s345 + $0x1a8] sm:$0xf]
        %v4541 = vld [vmem:[%s345 + $0x1ac] sm:$0x7]
        %v4542 = vunpack.c.l.bf16 %v4494
        %v4543 = vunpack.c.l.bf16 %v4495
        %v4544 = vunpack.c.l.bf16 %v4496
        %v4545 = vunpack.c.l.bf16 %v4497
        %v4546 = vunpack.c.l.bf16 %v4498
        %v4547 = vunpack.c.l.bf16 %v4499
        %v4548 = vunpack.c.l.bf16 %v4500
        %v4549 = vunpack.c.l.bf16 %v4501
        %v4550 = vunpack.c.l.bf16 %v4502
        %v4551 = vunpack.c.l.bf16 %v4503
        %v4552 = vunpack.c.l.bf16 %v4504
        %v4553 = vunpack.c.l.bf16 %v4505
        %v4554 = vunpack.c.l.bf16 %v4506
        %v4555 = vunpack.c.l.bf16 %v4507
        %v4556 = vunpack.c.l.bf16 %v4508
        %v4557 = vunpack.c.l.bf16 %v4509
        %v4558 = vunpack.c.l.bf16 %v4510
        %v4559 = vunpack.c.l.bf16 %v4511
        %v4560 = vunpack.c.l.bf16 %v4512
        %v4561 = vunpack.c.l.bf16 %v4513
        %v4562 = vunpack.c.l.bf16 %v4514
        %v4563 = vunpack.c.l.bf16 %v4515
        %v4564 = vunpack.c.l.bf16 %v4516
        %v4565 = vunpack.c.l.bf16 %v4517
        %v4566 = vunpack.c.l.bf16 %v4518
        %v4567 = vunpack.c.l.bf16 %v4519
        %v4568 = vunpack.c.l.bf16 %v4520
        %v4569 = vunpack.c.l.bf16 %v4521
        %v4570 = vunpack.c.l.bf16 %v4522
        %v4571 = vunpack.c.l.bf16 %v4523
        %v4572 = vunpack.c.l.bf16 %v4524
        %v4573 = vunpack.c.l.bf16 %v4525
        %v4574 = vunpack.c.l.bf16 %v4526
        %v4575 = vunpack.c.l.bf16 %v4527
        %v4576 = vunpack.c.l.bf16 %v4528
        %v4577 = vunpack.c.l.bf16 %v4529
        %v4578 = vunpack.c.l.bf16 %v4530
        %v4579 = vunpack.c.l.bf16 %v4531
        %v4580 = vunpack.c.l.bf16 %v4532
        %v4581 = vunpack.c.l.bf16 %v4533
        %v4582 = vunpack.c.l.bf16 %v4534
        %v4583 = vunpack.c.l.bf16 %v4535
        %v4584 = vunpack.c.l.bf16 %v4536
        %v4585 = vunpack.c.l.bf16 %v4537
        %v4586 = vunpack.c.l.bf16 %v4538
        %v4587 = vunpack.c.l.bf16 %v4539
        %v4588 = vunpack.c.l.bf16 %v4540
        %v4589 = vunpack.c.l.bf16 %v4541
        %v4590 = vld [vmem:[%s3831 + $0x3] sm:$0x1]
        %v4591 = vperm.slane %v4590, 0
        %v4592 = vmul.f32 %v4542, %v4591
        %v4593 = vmul.f32 %v4543, %v4591
        %v4594 = vmul.f32 %v4544, %v4591
        %v4595 = vmul.f32 %v4545, %v4591
        %v4596 = vmul.f32 %v4546, %v4591
        %v4597 = vmul.f32 %v4547, %v4591
        %v4598 = vmul.f32 %v4548, %v4591
        %v4599 = vmul.f32 %v4549, %v4591
        %v4600 = vmul.f32 %v4550, %v4591
        %v4601 = vmul.f32 %v4551, %v4591
        %v4602 = vmul.f32 %v4552, %v4591
        %v4603 = vmul.f32 %v4553, %v4591
        %v4604 = vmul.f32 %v4554, %v4591
        %v4605 = vmul.f32 %v4555, %v4591
        %v4606 = vmul.f32 %v4556, %v4591
        %v4607 = vmul.f32 %v4557, %v4591
        %v4608 = vmul.f32 %v4558, %v4591
        %v4609 = vmul.f32 %v4559, %v4591
        %v4610 = vmul.f32 %v4560, %v4591
        %v4611 = vmul.f32 %v4561, %v4591
        %v4612 = vmul.f32 %v4562, %v4591
        %v4613 = vmul.f32 %v4563, %v4591
        %v4614 = vmul.f32 %v4564, %v4591
        %v4615 = vmul.f32 %v4565, %v4591
        %v4616 = vmul.f32 %v4566, %v4591
        %v4617 = vmul.f32 %v4567, %v4591
        %v4618 = vmul.f32 %v4568, %v4591
        %v4619 = vmul.f32 %v4569, %v4591
        %v4620 = vmul.f32 %v4570, %v4591
        %v4621 = vmul.f32 %v4571, %v4591
        %v4622 = vmul.f32 %v4572, %v4591
        %v4623 = vmul.f32 %v4573, %v4591
        %v4624 = vmul.f32 %v4574, %v4591
        %v4625 = vmul.f32 %v4575, %v4591
        %v4626 = vmul.f32 %v4576, %v4591
        %v4627 = vmul.f32 %v4577, %v4591
        %v4628 = vmul.f32 %v4578, %v4591
        %v4629 = vmul.f32 %v4579, %v4591
        %v4630 = vmul.f32 %v4580, %v4591
        %v4631 = vmul.f32 %v4581, %v4591
        %v4632 = vmul.f32 %v4582, %v4591
        %v4633 = vmul.f32 %v4583, %v4591
        %v4634 = vmul.f32 %v4584, %v4591
        %v4635 = vmul.f32 %v4585, %v4591
        %v4636 = vmul.f32 %v4586, %v4591
        %v4637 = vmul.f32 %v4587, %v4591
        %v4638 = vmul.f32 %v4588, %v4591
        %v4639 = vmul.f32 %v4589, %v4591
        %v4640 = vadd.f32 %v4446, %v4592
        %v4641 = vadd.f32 %v4447, %v4593
        %v4642 = vadd.f32 %v4448, %v4594
        %v4643 = vadd.f32 %v4449, %v4595
        %v4644 = vadd.f32 %v4450, %v4596
        %v4645 = vadd.f32 %v4451, %v4597
        %v4646 = vadd.f32 %v4452, %v4598
        %v4647 = vadd.f32 %v4453, %v4599
        %v4648 = vadd.f32 %v4454, %v4600
        %v4649 = vadd.f32 %v4455, %v4601
        %v4650 = vadd.f32 %v4456, %v4602
        %v4651 = vadd.f32 %v4457, %v4603
        %v4652 = vadd.f32 %v4458, %v4604
        %v4653 = vadd.f32 %v4459, %v4605
        %v4654 = vadd.f32 %v4460, %v4606
        %v4655 = vadd.f32 %v4461, %v4607
        %v4656 = vadd.f32 %v4462, %v4608
        %v4657 = vadd.f32 %v4463, %v4609
        %v4658 = vadd.f32 %v4464, %v4610
        %v4659 = vadd.f32 %v4465, %v4611
        %v4660 = vadd.f32 %v4466, %v4612
        %v4661 = vadd.f32 %v4467, %v4613
        %v4662 = vadd.f32 %v4468, %v4614
        %v4663 = vadd.f32 %v4469, %v4615
        %v4664 = vadd.f32 %v4470, %v4616
        %v4665 = vadd.f32 %v4471, %v4617
        %v4666 = vadd.f32 %v4472, %v4618
        %v4667 = vadd.f32 %v4473, %v4619
        %v4668 = vadd.f32 %v4474, %v4620
        %v4669 = vadd.f32 %v4475, %v4621
        %v4670 = vadd.f32 %v4476, %v4622
        %v4671 = vadd.f32 %v4477, %v4623
        %v4672 = vadd.f32 %v4478, %v4624
        %v4673 = vadd.f32 %v4479, %v4625
        %v4674 = vadd.f32 %v4480, %v4626
        %v4675 = vadd.f32 %v4481, %v4627
        %v4676 = vadd.f32 %v4482, %v4628
        %v4677 = vadd.f32 %v4483, %v4629
        %v4678 = vadd.f32 %v4484, %v4630
        %v4679 = vadd.f32 %v4485, %v4631
        %v4680 = vadd.f32 %v4486, %v4632
        %v4681 = vadd.f32 %v4487, %v4633
        %v4682 = vadd.f32 %v4488, %v4634
        %v4683 = vadd.f32 %v4489, %v4635
        %v4684 = vadd.f32 %v4490, %v4636
        %v4685 = vadd.f32 %v4491, %v4637
        %v4686 = vadd.f32 %v4492, %v4638
        %v4687 = vadd.f32 %v4493, %v4639
        %v4688 = vld [vmem:[%s3831 + $0x4] sm:$0x1]
        %v4689 = vperm.slane %v4688, 0
        %v4690 = vmul.f32 %v394, %v4689
        %v4691 = vmul.f32 %v395, %v4689
        %v4692 = vmul.f32 %v396, %v4689
        %v4693 = vmul.f32 %v397, %v4689
        %v4694 = vmul.f32 %v398, %v4689
        %v4695 = vmul.f32 %v399, %v4689
        %v4696 = vmul.f32 %v400, %v4689
        %v4697 = vmul.f32 %v401, %v4689
        %v4698 = vmul.f32 %v402, %v4689
        %v4699 = vmul.f32 %v403, %v4689
        %v4700 = vmul.f32 %v404, %v4689
        %v4701 = vmul.f32 %v405, %v4689
        %v4702 = vmul.f32 %v406, %v4689
        %v4703 = vmul.f32 %v407, %v4689
        %v4704 = vmul.f32 %v408, %v4689
        %v4705 = vmul.f32 %v409, %v4689
        %v4706 = vmul.f32 %v410, %v4689
        %v4707 = vmul.f32 %v411, %v4689
        %v4708 = vmul.f32 %v412, %v4689
        %v4709 = vmul.f32 %v413, %v4689
        %v4710 = vmul.f32 %v414, %v4689
        %v4711 = vmul.f32 %v415, %v4689
        %v4712 = vmul.f32 %v416, %v4689
        %v4713 = vmul.f32 %v417, %v4689
        %v4714 = vmul.f32 %v418, %v4689
        %v4715 = vmul.f32 %v419, %v4689
        %v4716 = vmul.f32 %v420, %v4689
        %v4717 = vmul.f32 %v421, %v4689
        %v4718 = vmul.f32 %v422, %v4689
        %v4719 = vmul.f32 %v423, %v4689
        %v4720 = vmul.f32 %v424, %v4689
        %v4721 = vmul.f32 %v425, %v4689
        %v4722 = vmul.f32 %v426, %v4689
        %v4723 = vmul.f32 %v427, %v4689
        %v4724 = vmul.f32 %v428, %v4689
        %v4725 = vmul.f32 %v429, %v4689
        %v4726 = vmul.f32 %v430, %v4689
        %v4727 = vmul.f32 %v431, %v4689
        %v4728 = vmul.f32 %v432, %v4689
        %v4729 = vmul.f32 %v433, %v4689
        %v4730 = vmul.f32 %v434, %v4689
        %v4731 = vmul.f32 %v435, %v4689
        %v4732 = vmul.f32 %v436, %v4689
        %v4733 = vmul.f32 %v437, %v4689
        %v4734 = vmul.f32 %v438, %v4689
        %v4735 = vmul.f32 %v439, %v4689
        %v4736 = vmul.f32 %v440, %v4689
        %v4737 = vmul.f32 %v441, %v4689
        %v4786 = vrot.slane %v4690, 4
        %v4787 = vrot.slane %v4691, 4
        %v4788 = vsel %vm1439, %v4786, %v4787
        %v4789 = vrot.slane %v4692, 4
        %v4790 = vsel %vm1439, %v4787, %v4789
        %v4791 = vrot.slane %v4693, 4
        %v4792 = vrot.slane %v4694, 4
        %v4793 = vsel %vm1439, %v4791, %v4792
        %v4794 = vrot.slane %v4695, 4
        %v4795 = vsel %vm1439, %v4792, %v4794
        %v4796 = vrot.slane %v4696, 4
        %v4797 = vrot.slane %v4697, 4
        %v4798 = vsel %vm1439, %v4796, %v4797
        %v4799 = vrot.slane %v4698, 4
        %v4800 = vsel %vm1439, %v4797, %v4799
        %v4801 = vrot.slane %v4699, 4
        %v4802 = vrot.slane %v4700, 4
        %v4803 = vsel %vm1439, %v4801, %v4802
        %v4804 = vrot.slane %v4701, 4
        %v4805 = vsel %vm1439, %v4802, %v4804
        %v4806 = vrot.slane %v4702, 4
        %v4807 = vrot.slane %v4703, 4
        %v4808 = vsel %vm1439, %v4806, %v4807
        %v4809 = vrot.slane %v4704, 4
        %v4810 = vsel %vm1439, %v4807, %v4809
        %v4811 = vrot.slane %v4705, 4
        %v4812 = vrot.slane %v4706, 4
        %v4813 = vsel %vm1439, %v4811, %v4812
        %v4814 = vrot.slane %v4707, 4
        %v4815 = vsel %vm1439, %v4812, %v4814
        %v4816 = vrot.slane %v4708, 4
        %v4817 = vrot.slane %v4709, 4
        %v4818 = vsel %vm1439, %v4816, %v4817
        %v4819 = vrot.slane %v4710, 4
        %v4820 = vsel %vm1439, %v4817, %v4819
        %v4821 = vrot.slane %v4711, 4
        %v4822 = vrot.slane %v4712, 4
        %v4823 = vsel %vm1439, %v4821, %v4822
        %v4824 = vrot.slane %v4713, 4
        %v4825 = vsel %vm1439, %v4822, %v4824
        %v4826 = vrot.slane %v4714, 4
        %v4827 = vrot.slane %v4715, 4
        %v4828 = vsel %vm1439, %v4826, %v4827
        %v4829 = vrot.slane %v4716, 4
        %v4830 = vsel %vm1439, %v4827, %v4829
        %v4831 = vrot.slane %v4717, 4
        %v4832 = vrot.slane %v4718, 4
        %v4833 = vsel %vm1439, %v4831, %v4832
        %v4834 = vrot.slane %v4719, 4
        %v4835 = vsel %vm1439, %v4832, %v4834
        %v4836 = vrot.slane %v4720, 4
        %v4837 = vrot.slane %v4721, 4
        %v4838 = vsel %vm1439, %v4836, %v4837
        %v4839 = vrot.slane %v4722, 4
        %v4840 = vsel %vm1439, %v4837, %v4839
        %v4841 = vrot.slane %v4723, 4
        %v4842 = vrot.slane %v4724, 4
        %v4843 = vsel %vm1439, %v4841, %v4842
        %v4844 = vrot.slane %v4725, 4
        %v4845 = vsel %vm1439, %v4842, %v4844
        %v4846 = vrot.slane %v4726, 4
        %v4847 = vrot.slane %v4727, 4
        %v4848 = vsel %vm1439, %v4846, %v4847
        %v4849 = vrot.slane %v4728, 4
        %v4850 = vsel %vm1439, %v4847, %v4849
        %v4851 = vrot.slane %v4729, 4
        %v4852 = vrot.slane %v4730, 4
        %v4853 = vsel %vm1439, %v4851, %v4852
        %v4854 = vrot.slane %v4731, 4
        %v4855 = vsel %vm1439, %v4852, %v4854
        %v4856 = vrot.slane %v4732, 4
        %v4857 = vrot.slane %v4733, 4
        %v4858 = vsel %vm1439, %v4856, %v4857
        %v4859 = vrot.slane %v4734, 4
        %v4860 = vsel %vm1439, %v4857, %v4859
        %v4861 = vrot.slane %v4735, 4
        %v4862 = vrot.slane %v4736, 4
        %v4863 = vsel %vm1439, %v4861, %v4862
        %v4864 = vrot.slane %v4737, 4
        %v4865 = vsel %vm1439, %v4862, %v4864
        %v4914 = vadd.f32 %v4640, %v4786
        %v4915 = vadd.f32 %v4641, %v4788
        %v4916 = vadd.f32 %v4642, %v4790
        %v4917 = vadd.f32 %v4643, %v4791
        %v4918 = vadd.f32 %v4644, %v4793
        %v4919 = vadd.f32 %v4645, %v4795
        %v4920 = vadd.f32 %v4646, %v4796
        %v4921 = vadd.f32 %v4647, %v4798
        %v4922 = vadd.f32 %v4648, %v4800
        %v4923 = vadd.f32 %v4649, %v4801
        %v4924 = vadd.f32 %v4650, %v4803
        %v4925 = vadd.f32 %v4651, %v4805
        %v4926 = vadd.f32 %v4652, %v4806
        %v4927 = vadd.f32 %v4653, %v4808
        %v4928 = vadd.f32 %v4654, %v4810
        %v4929 = vadd.f32 %v4655, %v4811
        %v4930 = vadd.f32 %v4656, %v4813
        %v4931 = vadd.f32 %v4657, %v4815
        %v4932 = vadd.f32 %v4658, %v4816
        %v4933 = vadd.f32 %v4659, %v4818
        %v4934 = vadd.f32 %v4660, %v4820
        %v4935 = vadd.f32 %v4661, %v4821
        %v4936 = vadd.f32 %v4662, %v4823
        %v4937 = vadd.f32 %v4663, %v4825
        %v4938 = vadd.f32 %v4664, %v4826
        %v4939 = vadd.f32 %v4665, %v4828
        %v4940 = vadd.f32 %v4666, %v4830
        %v4941 = vadd.f32 %v4667, %v4831
        %v4942 = vadd.f32 %v4668, %v4833
        %v4943 = vadd.f32 %v4669, %v4835
        %v4944 = vadd.f32 %v4670, %v4836
        %v4945 = vadd.f32 %v4671, %v4838
        %v4946 = vadd.f32 %v4672, %v4840
        %v4947 = vadd.f32 %v4673, %v4841
        %v4948 = vadd.f32 %v4674, %v4843
        %v4949 = vadd.f32 %v4675, %v4845
        %v4950 = vadd.f32 %v4676, %v4846
        %v4951 = vadd.f32 %v4677, %v4848
        %v4952 = vadd.f32 %v4678, %v4850
        %v4953 = vadd.f32 %v4679, %v4851
        %v4954 = vadd.f32 %v4680, %v4853
        %v4955 = vadd.f32 %v4681, %v4855
        %v4956 = vadd.f32 %v4682, %v4856
        %v4957 = vadd.f32 %v4683, %v4858
        %v4958 = vadd.f32 %v4684, %v4860
        %v4959 = vadd.f32 %v4685, %v4861
        %v4960 = vadd.f32 %v4686, %v4863
        %v4961 = vadd.f32 %v4687, %v4865
        %v4962 = vld [vmem:[%s345 + $0xc] sm:$0x8]
        %v4963 = vld [vmem:[%s345 + $0x10] sm:$0xf]
        %v4964 = vld [vmem:[%s345 + $0x14] sm:$0x7]
        %v4965 = vld [vmem:[%s345 + $0x28] sm:$0x8]
        %v4966 = vld [vmem:[%s345 + $0x2c] sm:$0xf]
        %v4967 = vld [vmem:[%s345 + $0x30] sm:$0x7]
        %v4968 = vld [vmem:[%s345 + $0x44] sm:$0x8]
        %v4969 = vld [vmem:[%s345 + $0x48] sm:$0xf]
        %v4970 = vld [vmem:[%s345 + $0x4c] sm:$0x7]
        %v4971 = vld [vmem:[%s345 + $0x60] sm:$0x8]
        %v4972 = vld [vmem:[%s345 + $0x64] sm:$0xf]
        %v4973 = vld [vmem:[%s345 + $0x68] sm:$0x7]
        %v4974 = vld [vmem:[%s345 + $0x7c] sm:$0x8]
        %v4975 = vld [vmem:[%s345 + $0x80] sm:$0xf]
        %v4976 = vld [vmem:[%s345 + $0x84] sm:$0x7]
        %v4977 = vld [vmem:[%s345 + $0x98] sm:$0x8]
        %v4978 = vld [vmem:[%s345 + $0x9c] sm:$0xf]
        %v4979 = vld [vmem:[%s345 + $0xa0] sm:$0x7]
        %v4980 = vld [vmem:[%s345 + $0xb4] sm:$0x8]
        %v4981 = vld [vmem:[%s345 + $0xb8] sm:$0xf]
        %v4982 = vld [vmem:[%s345 + $0xbc] sm:$0x7]
        %v4983 = vld [vmem:[%s345 + $0xd0] sm:$0x8]
        %v4984 = vld [vmem:[%s345 + $0xd4] sm:$0xf]
        %v4985 = vld [vmem:[%s345 + $0xd8] sm:$0x7]
        %v4986 = vld [vmem:[%s345 + $0xec] sm:$0x8]
        %v4987 = vld [vmem:[%s345 + $0xf0] sm:$0xf]
        %v4988 = vld [vmem:[%s345 + $0xf4] sm:$0x7]
        %v4989 = vld [vmem:[%s345 + $0x108] sm:$0x8]
        %v4990 = vld [vmem:[%s345 + $0x10c] sm:$0xf]
        %v4991 = vld [vmem:[%s345 + $0x110] sm:$0x7]
        %v4992 = vld [vmem:[%s345 + $0x124] sm:$0x8]
        %v4993 = vld [vmem:[%s345 + $0x128] sm:$0xf]
        %v4994 = vld [vmem:[%s345 + $0x12c] sm:$0x7]
        %v4995 = vld [vmem:[%s345 + $0x140] sm:$0x8]
        %v4996 = vld [vmem:[%s345 + $0x144] sm:$0xf]
        %v4997 = vld [vmem:[%s345 + $0x148] sm:$0x7]
        %v4998 = vld [vmem:[%s345 + $0x15c] sm:$0x8]
        %v4999 = vld [vmem:[%s345 + $0x160] sm:$0xf]
        %v5000 = vld [vmem:[%s345 + $0x164] sm:$0x7]
        %v5001 = vld [vmem:[%s345 + $0x178] sm:$0x8]
        %v5002 = vld [vmem:[%s345 + $0x17c] sm:$0xf]
        %v5003 = vld [vmem:[%s345 + $0x180] sm:$0x7]
        %v5004 = vld [vmem:[%s345 + $0x194] sm:$0x8]
        %v5005 = vld [vmem:[%s345 + $0x198] sm:$0xf]
        %v5006 = vld [vmem:[%s345 + $0x19c] sm:$0x7]
        %v5007 = vld [vmem:[%s345 + $0x1b0] sm:$0x8]
        %v5008 = vld [vmem:[%s345 + $0x1b4] sm:$0xf]
        %v5009 = vld [vmem:[%s345 + $0x1b8] sm:$0x7]
        %v5010 = vunpack.c.l.bf16 %v4962
        %v5011 = vunpack.c.l.bf16 %v4963
        %v5012 = vunpack.c.l.bf16 %v4964
        %v5013 = vunpack.c.l.bf16 %v4965
        %v5014 = vunpack.c.l.bf16 %v4966
        %v5015 = vunpack.c.l.bf16 %v4967
        %v5016 = vunpack.c.l.bf16 %v4968
        %v5017 = vunpack.c.l.bf16 %v4969
        %v5018 = vunpack.c.l.bf16 %v4970
        %v5019 = vunpack.c.l.bf16 %v4971
        %v5020 = vunpack.c.l.bf16 %v4972
        %v5021 = vunpack.c.l.bf16 %v4973
        %v5022 = vunpack.c.l.bf16 %v4974
        %v5023 = vunpack.c.l.bf16 %v4975
        %v5024 = vunpack.c.l.bf16 %v4976
        %v5025 = vunpack.c.l.bf16 %v4977
        %v5026 = vunpack.c.l.bf16 %v4978
        %v5027 = vunpack.c.l.bf16 %v4979
        %v5028 = vunpack.c.l.bf16 %v4980
        %v5029 = vunpack.c.l.bf16 %v4981
        %v5030 = vunpack.c.l.bf16 %v4982
        %v5031 = vunpack.c.l.bf16 %v4983
        %v5032 = vunpack.c.l.bf16 %v4984
        %v5033 = vunpack.c.l.bf16 %v4985
        %v5034 = vunpack.c.l.bf16 %v4986
        %v5035 = vunpack.c.l.bf16 %v4987
        %v5036 = vunpack.c.l.bf16 %v4988
        %v5037 = vunpack.c.l.bf16 %v4989
        %v5038 = vunpack.c.l.bf16 %v4990
        %v5039 = vunpack.c.l.bf16 %v4991
        %v5040 = vunpack.c.l.bf16 %v4992
        %v5041 = vunpack.c.l.bf16 %v4993
        %v5042 = vunpack.c.l.bf16 %v4994
        %v5043 = vunpack.c.l.bf16 %v4995
        %v5044 = vunpack.c.l.bf16 %v4996
        %v5045 = vunpack.c.l.bf16 %v4997
        %v5046 = vunpack.c.l.bf16 %v4998
        %v5047 = vunpack.c.l.bf16 %v4999
        %v5048 = vunpack.c.l.bf16 %v5000
        %v5049 = vunpack.c.l.bf16 %v5001
        %v5050 = vunpack.c.l.bf16 %v5002
        %v5051 = vunpack.c.l.bf16 %v5003
        %v5052 = vunpack.c.l.bf16 %v5004
        %v5053 = vunpack.c.l.bf16 %v5005
        %v5054 = vunpack.c.l.bf16 %v5006
        %v5055 = vunpack.c.l.bf16 %v5007
        %v5056 = vunpack.c.l.bf16 %v5008
        %v5057 = vunpack.c.l.bf16 %v5009
        %v5058 = vld [vmem:[%s3831 + $0x5] sm:$0x1]
        %v5059 = vperm.slane %v5058, 0
        %v5060 = vmul.f32 %v5010, %v5059
        %v5061 = vmul.f32 %v5011, %v5059
        %v5062 = vmul.f32 %v5012, %v5059
        %v5063 = vmul.f32 %v5013, %v5059
        %v5064 = vmul.f32 %v5014, %v5059
        %v5065 = vmul.f32 %v5015, %v5059
        %v5066 = vmul.f32 %v5016, %v5059
        %v5067 = vmul.f32 %v5017, %v5059
        %v5068 = vmul.f32 %v5018, %v5059
        %v5069 = vmul.f32 %v5019, %v5059
        %v5070 = vmul.f32 %v5020, %v5059
        %v5071 = vmul.f32 %v5021, %v5059
        %v5072 = vmul.f32 %v5022, %v5059
        %v5073 = vmul.f32 %v5023, %v5059
        %v5074 = vmul.f32 %v5024, %v5059
        %v5075 = vmul.f32 %v5025, %v5059
        %v5076 = vmul.f32 %v5026, %v5059
        %v5077 = vmul.f32 %v5027, %v5059
        %v5078 = vmul.f32 %v5028, %v5059
        %v5079 = vmul.f32 %v5029, %v5059
        %v5080 = vmul.f32 %v5030, %v5059
        %v5081 = vmul.f32 %v5031, %v5059
        %v5082 = vmul.f32 %v5032, %v5059
        %v5083 = vmul.f32 %v5033, %v5059
        %v5084 = vmul.f32 %v5034, %v5059
        %v5085 = vmul.f32 %v5035, %v5059
        %v5086 = vmul.f32 %v5036, %v5059
        %v5087 = vmul.f32 %v5037, %v5059
        %v5088 = vmul.f32 %v5038, %v5059
        %v5089 = vmul.f32 %v5039, %v5059
        %v5090 = vmul.f32 %v5040, %v5059
        %v5091 = vmul.f32 %v5041, %v5059
        %v5092 = vmul.f32 %v5042, %v5059
        %v5093 = vmul.f32 %v5043, %v5059
        %v5094 = vmul.f32 %v5044, %v5059
        %v5095 = vmul.f32 %v5045, %v5059
        %v5096 = vmul.f32 %v5046, %v5059
        %v5097 = vmul.f32 %v5047, %v5059
        %v5098 = vmul.f32 %v5048, %v5059
        %v5099 = vmul.f32 %v5049, %v5059
        %v5100 = vmul.f32 %v5050, %v5059
        %v5101 = vmul.f32 %v5051, %v5059
        %v5102 = vmul.f32 %v5052, %v5059
        %v5103 = vmul.f32 %v5053, %v5059
        %v5104 = vmul.f32 %v5054, %v5059
        %v5105 = vmul.f32 %v5055, %v5059
        %v5106 = vmul.f32 %v5056, %v5059
        %v5107 = vmul.f32 %v5057, %v5059
        %v5108 = vadd.f32 %v4914, %v5060
        %v5109 = vadd.f32 %v4915, %v5061
        %v5110 = vadd.f32 %v4916, %v5062
        %v5111 = vadd.f32 %v4917, %v5063
        %v5112 = vadd.f32 %v4918, %v5064
        %v5113 = vadd.f32 %v4919, %v5065
        %v5114 = vadd.f32 %v4920, %v5066
        %v5115 = vadd.f32 %v4921, %v5067
        %v5116 = vadd.f32 %v4922, %v5068
        %v5117 = vadd.f32 %v4923, %v5069
        %v5118 = vadd.f32 %v4924, %v5070
        %v5119 = vadd.f32 %v4925, %v5071
        %v5120 = vadd.f32 %v4926, %v5072
        %v5121 = vadd.f32 %v4927, %v5073
        %v5122 = vadd.f32 %v4928, %v5074
        %v5123 = vadd.f32 %v4929, %v5075
        %v5124 = vadd.f32 %v4930, %v5076
        %v5125 = vadd.f32 %v4931, %v5077
        %v5126 = vadd.f32 %v4932, %v5078
        %v5127 = vadd.f32 %v4933, %v5079
        %v5128 = vadd.f32 %v4934, %v5080
        %v5129 = vadd.f32 %v4935, %v5081
        %v5130 = vadd.f32 %v4936, %v5082
        %v5131 = vadd.f32 %v4937, %v5083
        %v5132 = vadd.f32 %v4938, %v5084
        %v5133 = vadd.f32 %v4939, %v5085
        %v5134 = vadd.f32 %v4940, %v5086
        %v5135 = vadd.f32 %v4941, %v5087
        %v5136 = vadd.f32 %v4942, %v5088
        %v5137 = vadd.f32 %v4943, %v5089
        %v5138 = vadd.f32 %v4944, %v5090
        %v5139 = vadd.f32 %v4945, %v5091
        %v5140 = vadd.f32 %v4946, %v5092
        %v5141 = vadd.f32 %v4947, %v5093
        %v5142 = vadd.f32 %v4948, %v5094
        %v5143 = vadd.f32 %v4949, %v5095
        %v5144 = vadd.f32 %v4950, %v5096
        %v5145 = vadd.f32 %v4951, %v5097
        %v5146 = vadd.f32 %v4952, %v5098
        %v5147 = vadd.f32 %v4953, %v5099
        %v5148 = vadd.f32 %v4954, %v5100
        %v5149 = vadd.f32 %v4955, %v5101
        %v5150 = vadd.f32 %v4956, %v5102
        %v5151 = vadd.f32 %v4957, %v5103
        %v5152 = vadd.f32 %v4958, %v5104
        %v5153 = vadd.f32 %v4959, %v5105
        %v5154 = vadd.f32 %v4960, %v5106
        %v5155 = vadd.f32 %v4961, %v5107
        %s5156 = scalar_lea.vmem %s341, 840
        %v5157 = vld [vmem:[%s5156] sm:$0x8]
        %v5158 = vld [vmem:[%s5156 + $0x4] sm:$0xf]
        %v5159 = vld [vmem:[%s5156 + $0x8] sm:$0x7]
        %v5160 = vld [vmem:[%s5156 + $0x1c] sm:$0x8]
        %v5161 = vld [vmem:[%s5156 + $0x20] sm:$0xf]
        %v5162 = vld [vmem:[%s5156 + $0x24] sm:$0x7]
        %v5163 = vld [vmem:[%s5156 + $0x38] sm:$0x8]
        %v5164 = vld [vmem:[%s5156 + $0x3c] sm:$0xf]
        %v5165 = vld [vmem:[%s5156 + $0x40] sm:$0x7]
        %v5166 = vld [vmem:[%s5156 + $0x54] sm:$0x8]
        %v5167 = vld [vmem:[%s5156 + $0x58] sm:$0xf]
        %v5168 = vld [vmem:[%s5156 + $0x5c] sm:$0x7]
        %v5169 = vld [vmem:[%s5156 + $0x70] sm:$0x8]
        %v5170 = vld [vmem:[%s5156 + $0x74] sm:$0xf]
        %v5171 = vld [vmem:[%s5156 + $0x78] sm:$0x7]
        %v5172 = vld [vmem:[%s5156 + $0x8c] sm:$0x8]
        %v5173 = vld [vmem:[%s5156 + $0x90] sm:$0xf]
        %v5174 = vld [vmem:[%s5156 + $0x94] sm:$0x7]
        %v5175 = vld [vmem:[%s5156 + $0xa8] sm:$0x8]
        %v5176 = vld [vmem:[%s5156 + $0xac] sm:$0xf]
        %v5177 = vld [vmem:[%s5156 + $0xb0] sm:$0x7]
        %v5178 = vld [vmem:[%s5156 + $0xc4] sm:$0x8]
        %v5179 = vld [vmem:[%s5156 + $0xc8] sm:$0xf]
        %v5180 = vld [vmem:[%s5156 + $0xcc] sm:$0x7]
        %v5181 = vld [vmem:[%s5156 + $0xe0] sm:$0x8]
        %v5182 = vld [vmem:[%s5156 + $0xe4] sm:$0xf]
        %v5183 = vld [vmem:[%s5156 + $0xe8] sm:$0x7]
        %v5184 = vld [vmem:[%s5156 + $0xfc] sm:$0x8]
        %v5185 = vld [vmem:[%s5156 + $0x100] sm:$0xf]
        %v5186 = vld [vmem:[%s5156 + $0x104] sm:$0x7]
        %v5187 = vld [vmem:[%s5156 + $0x118] sm:$0x8]
        %v5188 = vld [vmem:[%s5156 + $0x11c] sm:$0xf]
        %v5189 = vld [vmem:[%s5156 + $0x120] sm:$0x7]
        %v5190 = vld [vmem:[%s5156 + $0x134] sm:$0x8]
        %v5191 = vld [vmem:[%s5156 + $0x138] sm:$0xf]
        %v5192 = vld [vmem:[%s5156 + $0x13c] sm:$0x7]
        %v5193 = vld [vmem:[%s5156 + $0x150] sm:$0x8]
        %v5194 = vld [vmem:[%s5156 + $0x154] sm:$0xf]
        %v5195 = vld [vmem:[%s5156 + $0x158] sm:$0x7]
        %v5196 = vld [vmem:[%s5156 + $0x16c] sm:$0x8]
        %v5197 = vld [vmem:[%s5156 + $0x170] sm:$0xf]
        %v5198 = vld [vmem:[%s5156 + $0x174] sm:$0x7]
        %v5199 = vld [vmem:[%s5156 + $0x188] sm:$0x8]
        %v5200 = vld [vmem:[%s5156 + $0x18c] sm:$0xf]
        %v5201 = vld [vmem:[%s5156 + $0x190] sm:$0x7]
        %v5202 = vld [vmem:[%s5156 + $0x1a4] sm:$0x8]
        %v5203 = vld [vmem:[%s5156 + $0x1a8] sm:$0xf]
        %v5204 = vld [vmem:[%s5156 + $0x1ac] sm:$0x7]
        %v5205 = vunpack.c.l.bf16 %v5157
        %v5206 = vunpack.c.l.bf16 %v5158
        %v5207 = vunpack.c.l.bf16 %v5159
        %v5208 = vunpack.c.l.bf16 %v5160
        %v5209 = vunpack.c.l.bf16 %v5161
        %v5210 = vunpack.c.l.bf16 %v5162
        %v5211 = vunpack.c.l.bf16 %v5163
        %v5212 = vunpack.c.l.bf16 %v5164
        %v5213 = vunpack.c.l.bf16 %v5165
        %v5214 = vunpack.c.l.bf16 %v5166
        %v5215 = vunpack.c.l.bf16 %v5167
        %v5216 = vunpack.c.l.bf16 %v5168
        %v5217 = vunpack.c.l.bf16 %v5169
        %v5218 = vunpack.c.l.bf16 %v5170
        %v5219 = vunpack.c.l.bf16 %v5171
        %v5220 = vunpack.c.l.bf16 %v5172
        %v5221 = vunpack.c.l.bf16 %v5173
        %v5222 = vunpack.c.l.bf16 %v5174
        %v5223 = vunpack.c.l.bf16 %v5175
        %v5224 = vunpack.c.l.bf16 %v5176
        %v5225 = vunpack.c.l.bf16 %v5177
        %v5226 = vunpack.c.l.bf16 %v5178
        %v5227 = vunpack.c.l.bf16 %v5179
        %v5228 = vunpack.c.l.bf16 %v5180
        %v5229 = vunpack.c.l.bf16 %v5181
        %v5230 = vunpack.c.l.bf16 %v5182
        %v5231 = vunpack.c.l.bf16 %v5183
        %v5232 = vunpack.c.l.bf16 %v5184
        %v5233 = vunpack.c.l.bf16 %v5185
        %v5234 = vunpack.c.l.bf16 %v5186
        %v5235 = vunpack.c.l.bf16 %v5187
        %v5236 = vunpack.c.l.bf16 %v5188
        %v5237 = vunpack.c.l.bf16 %v5189
        %v5238 = vunpack.c.l.bf16 %v5190
        %v5239 = vunpack.c.l.bf16 %v5191
        %v5240 = vunpack.c.l.bf16 %v5192
        %v5241 = vunpack.c.l.bf16 %v5193
        %v5242 = vunpack.c.l.bf16 %v5194
        %v5243 = vunpack.c.l.bf16 %v5195
        %v5244 = vunpack.c.l.bf16 %v5196
        %v5245 = vunpack.c.l.bf16 %v5197
        %v5246 = vunpack.c.l.bf16 %v5198
        %v5247 = vunpack.c.l.bf16 %v5199
        %v5248 = vunpack.c.l.bf16 %v5200
        %v5249 = vunpack.c.l.bf16 %v5201
        %v5250 = vunpack.c.l.bf16 %v5202
        %v5251 = vunpack.c.l.bf16 %v5203
        %v5252 = vunpack.c.l.bf16 %v5204
        %v5253 = vld [vmem:[%s3831 + $0x6] sm:$0x1]
        %v5254 = vperm.slane %v5253, 0
        %v5255 = vmul.f32 %v5205, %v5254
        %v5256 = vmul.f32 %v5206, %v5254
        %v5257 = vmul.f32 %v5207, %v5254
        %v5258 = vmul.f32 %v5208, %v5254
        %v5259 = vmul.f32 %v5209, %v5254
        %v5260 = vmul.f32 %v5210, %v5254
        %v5261 = vmul.f32 %v5211, %v5254
        %v5262 = vmul.f32 %v5212, %v5254
        %v5263 = vmul.f32 %v5213, %v5254
        %v5264 = vmul.f32 %v5214, %v5254
        %v5265 = vmul.f32 %v5215, %v5254
        %v5266 = vmul.f32 %v5216, %v5254
        %v5267 = vmul.f32 %v5217, %v5254
        %v5268 = vmul.f32 %v5218, %v5254
        %v5269 = vmul.f32 %v5219, %v5254
        %v5270 = vmul.f32 %v5220, %v5254
        %v5271 = vmul.f32 %v5221, %v5254
        %v5272 = vmul.f32 %v5222, %v5254
        %v5273 = vmul.f32 %v5223, %v5254
        %v5274 = vmul.f32 %v5224, %v5254
        %v5275 = vmul.f32 %v5225, %v5254
        %v5276 = vmul.f32 %v5226, %v5254
        %v5277 = vmul.f32 %v5227, %v5254
        %v5278 = vmul.f32 %v5228, %v5254
        %v5279 = vmul.f32 %v5229, %v5254
        %v5280 = vmul.f32 %v5230, %v5254
        %v5281 = vmul.f32 %v5231, %v5254
        %v5282 = vmul.f32 %v5232, %v5254
        %v5283 = vmul.f32 %v5233, %v5254
        %v5284 = vmul.f32 %v5234, %v5254
        %v5285 = vmul.f32 %v5235, %v5254
        %v5286 = vmul.f32 %v5236, %v5254
        %v5287 = vmul.f32 %v5237, %v5254
        %v5288 = vmul.f32 %v5238, %v5254
        %v5289 = vmul.f32 %v5239, %v5254
        %v5290 = vmul.f32 %v5240, %v5254
        %v5291 = vmul.f32 %v5241, %v5254
        %v5292 = vmul.f32 %v5242, %v5254
        %v5293 = vmul.f32 %v5243, %v5254
        %v5294 = vmul.f32 %v5244, %v5254
        %v5295 = vmul.f32 %v5245, %v5254
        %v5296 = vmul.f32 %v5246, %v5254
        %v5297 = vmul.f32 %v5247, %v5254
        %v5298 = vmul.f32 %v5248, %v5254
        %v5299 = vmul.f32 %v5249, %v5254
        %v5300 = vmul.f32 %v5250, %v5254
        %v5301 = vmul.f32 %v5251, %v5254
        %v5302 = vmul.f32 %v5252, %v5254
        %v5303 = vadd.f32 %v5108, %v5255
        %v5304 = vadd.f32 %v5109, %v5256
        %v5305 = vadd.f32 %v5110, %v5257
        %v5306 = vadd.f32 %v5111, %v5258
        %v5307 = vadd.f32 %v5112, %v5259
        %v5308 = vadd.f32 %v5113, %v5260
        %v5309 = vadd.f32 %v5114, %v5261
        %v5310 = vadd.f32 %v5115, %v5262
        %v5311 = vadd.f32 %v5116, %v5263
        %v5312 = vadd.f32 %v5117, %v5264
        %v5313 = vadd.f32 %v5118, %v5265
        %v5314 = vadd.f32 %v5119, %v5266
        %v5315 = vadd.f32 %v5120, %v5267
        %v5316 = vadd.f32 %v5121, %v5268
        %v5317 = vadd.f32 %v5122, %v5269
        %v5318 = vadd.f32 %v5123, %v5270
        %v5319 = vadd.f32 %v5124, %v5271
        %v5320 = vadd.f32 %v5125, %v5272
        %v5321 = vadd.f32 %v5126, %v5273
        %v5322 = vadd.f32 %v5127, %v5274
        %v5323 = vadd.f32 %v5128, %v5275
        %v5324 = vadd.f32 %v5129, %v5276
        %v5325 = vadd.f32 %v5130, %v5277
        %v5326 = vadd.f32 %v5131, %v5278
        %v5327 = vadd.f32 %v5132, %v5279
        %v5328 = vadd.f32 %v5133, %v5280
        %v5329 = vadd.f32 %v5134, %v5281
        %v5330 = vadd.f32 %v5135, %v5282
        %v5331 = vadd.f32 %v5136, %v5283
        %v5332 = vadd.f32 %v5137, %v5284
        %v5333 = vadd.f32 %v5138, %v5285
        %v5334 = vadd.f32 %v5139, %v5286
        %v5335 = vadd.f32 %v5140, %v5287
        %v5336 = vadd.f32 %v5141, %v5288
        %v5337 = vadd.f32 %v5142, %v5289
        %v5338 = vadd.f32 %v5143, %v5290
        %v5339 = vadd.f32 %v5144, %v5291
        %v5340 = vadd.f32 %v5145, %v5292
        %v5341 = vadd.f32 %v5146, %v5293
        %v5342 = vadd.f32 %v5147, %v5294
        %v5343 = vadd.f32 %v5148, %v5295
        %v5344 = vadd.f32 %v5149, %v5296
        %v5345 = vadd.f32 %v5150, %v5297
        %v5346 = vadd.f32 %v5151, %v5298
        %v5347 = vadd.f32 %v5152, %v5299
        %v5348 = vadd.f32 %v5153, %v5300
        %v5349 = vadd.f32 %v5154, %v5301
        %v5350 = vadd.f32 %v5155, %v5302
        %v5351 = vld [vmem:[%s5156 + $0x8] sm:$0xe]
        %v5352 = vld [vmem:[%s5156 + $0xc] sm:$0xf]
        %v5353 = vld [vmem:[%s5156 + $0x10] sm:$0x1]
        %v5354 = vld [vmem:[%s5156 + $0x24] sm:$0xe]
        %v5355 = vld [vmem:[%s5156 + $0x28] sm:$0xf]
        %v5356 = vld [vmem:[%s5156 + $0x2c] sm:$0x1]
        %v5357 = vld [vmem:[%s5156 + $0x40] sm:$0xe]
        %v5358 = vld [vmem:[%s5156 + $0x44] sm:$0xf]
        %v5359 = vld [vmem:[%s5156 + $0x48] sm:$0x1]
        %v5360 = vld [vmem:[%s5156 + $0x5c] sm:$0xe]
        %v5361 = vld [vmem:[%s5156 + $0x60] sm:$0xf]
        %v5362 = vld [vmem:[%s5156 + $0x64] sm:$0x1]
        %v5363 = vld [vmem:[%s5156 + $0x78] sm:$0xe]
        %v5364 = vld [vmem:[%s5156 + $0x7c] sm:$0xf]
        %v5365 = vld [vmem:[%s5156 + $0x80] sm:$0x1]
        %v5366 = vld [vmem:[%s5156 + $0x94] sm:$0xe]
        %v5367 = vld [vmem:[%s5156 + $0x98] sm:$0xf]
        %v5368 = vld [vmem:[%s5156 + $0x9c] sm:$0x1]
        %v5369 = vld [vmem:[%s5156 + $0xb0] sm:$0xe]
        %v5370 = vld [vmem:[%s5156 + $0xb4] sm:$0xf]
        %v5371 = vld [vmem:[%s5156 + $0xb8] sm:$0x1]
        %v5372 = vld [vmem:[%s5156 + $0xcc] sm:$0xe]
        %v5373 = vld [vmem:[%s5156 + $0xd0] sm:$0xf]
        %v5374 = vld [vmem:[%s5156 + $0xd4] sm:$0x1]
        %v5375 = vld [vmem:[%s5156 + $0xe8] sm:$0xe]
        %v5376 = vld [vmem:[%s5156 + $0xec] sm:$0xf]
        %v5377 = vld [vmem:[%s5156 + $0xf0] sm:$0x1]
        %v5378 = vld [vmem:[%s5156 + $0x104] sm:$0xe]
        %v5379 = vld [vmem:[%s5156 + $0x108] sm:$0xf]
        %v5380 = vld [vmem:[%s5156 + $0x10c] sm:$0x1]
        %v5381 = vld [vmem:[%s5156 + $0x120] sm:$0xe]
        %v5382 = vld [vmem:[%s5156 + $0x124] sm:$0xf]
        %v5383 = vld [vmem:[%s5156 + $0x128] sm:$0x1]
        %v5384 = vld [vmem:[%s5156 + $0x13c] sm:$0xe]
        %v5385 = vld [vmem:[%s5156 + $0x140] sm:$0xf]
        %v5386 = vld [vmem:[%s5156 + $0x144] sm:$0x1]
        %v5387 = vld [vmem:[%s5156 + $0x158] sm:$0xe]
        %v5388 = vld [vmem:[%s5156 + $0x15c] sm:$0xf]
        %v5389 = vld [vmem:[%s5156 + $0x160] sm:$0x1]
        %v5390 = vld [vmem:[%s5156 + $0x174] sm:$0xe]
        %v5391 = vld [vmem:[%s5156 + $0x178] sm:$0xf]
        %v5392 = vld [vmem:[%s5156 + $0x17c] sm:$0x1]
        %v5393 = vld [vmem:[%s5156 + $0x190] sm:$0xe]
        %v5394 = vld [vmem:[%s5156 + $0x194] sm:$0xf]
        %v5395 = vld [vmem:[%s5156 + $0x198] sm:$0x1]
        %v5396 = vld [vmem:[%s5156 + $0x1ac] sm:$0xe]
        %v5397 = vld [vmem:[%s5156 + $0x1b0] sm:$0xf]
        %v5398 = vld [vmem:[%s5156 + $0x1b4] sm:$0x1]
        %v5399 = vunpack.c.l.bf16 %v5351
        %v5400 = vunpack.c.l.bf16 %v5352
        %v5401 = vunpack.c.l.bf16 %v5353
        %v5402 = vunpack.c.l.bf16 %v5354
        %v5403 = vunpack.c.l.bf16 %v5355
        %v5404 = vunpack.c.l.bf16 %v5356
        %v5405 = vunpack.c.l.bf16 %v5357
        %v5406 = vunpack.c.l.bf16 %v5358
        %v5407 = vunpack.c.l.bf16 %v5359
        %v5408 = vunpack.c.l.bf16 %v5360
        %v5409 = vunpack.c.l.bf16 %v5361
        %v5410 = vunpack.c.l.bf16 %v5362
        %v5411 = vunpack.c.l.bf16 %v5363
        %v5412 = vunpack.c.l.bf16 %v5364
        %v5413 = vunpack.c.l.bf16 %v5365
        %v5414 = vunpack.c.l.bf16 %v5366
        %v5415 = vunpack.c.l.bf16 %v5367
        %v5416 = vunpack.c.l.bf16 %v5368
        %v5417 = vunpack.c.l.bf16 %v5369
        %v5418 = vunpack.c.l.bf16 %v5370
        %v5419 = vunpack.c.l.bf16 %v5371
        %v5420 = vunpack.c.l.bf16 %v5372
        %v5421 = vunpack.c.l.bf16 %v5373
        %v5422 = vunpack.c.l.bf16 %v5374
        %v5423 = vunpack.c.l.bf16 %v5375
        %v5424 = vunpack.c.l.bf16 %v5376
        %v5425 = vunpack.c.l.bf16 %v5377
        %v5426 = vunpack.c.l.bf16 %v5378
        %v5427 = vunpack.c.l.bf16 %v5379
        %v5428 = vunpack.c.l.bf16 %v5380
        %v5429 = vunpack.c.l.bf16 %v5381
        %v5430 = vunpack.c.l.bf16 %v5382
        %v5431 = vunpack.c.l.bf16 %v5383
        %v5432 = vunpack.c.l.bf16 %v5384
        %v5433 = vunpack.c.l.bf16 %v5385
        %v5434 = vunpack.c.l.bf16 %v5386
        %v5435 = vunpack.c.l.bf16 %v5387
        %v5436 = vunpack.c.l.bf16 %v5388
        %v5437 = vunpack.c.l.bf16 %v5389
        %v5438 = vunpack.c.l.bf16 %v5390
        %v5439 = vunpack.c.l.bf16 %v5391
        %v5440 = vunpack.c.l.bf16 %v5392
        %v5441 = vunpack.c.l.bf16 %v5393
        %v5442 = vunpack.c.l.bf16 %v5394
        %v5443 = vunpack.c.l.bf16 %v5395
        %v5444 = vunpack.c.l.bf16 %v5396
        %v5445 = vunpack.c.l.bf16 %v5397
        %v5446 = vunpack.c.l.bf16 %v5398
        %v5447 = vld [vmem:[%s3831 + $0x7] sm:$0x1]
        %v5448 = vperm.slane %v5447, 0
        %v5449 = vmul.f32 %v5399, %v5448
        %v5450 = vmul.f32 %v5400, %v5448
        %v5451 = vmul.f32 %v5401, %v5448
        %v5452 = vmul.f32 %v5402, %v5448
        %v5453 = vmul.f32 %v5403, %v5448
        %v5454 = vmul.f32 %v5404, %v5448
        %v5455 = vmul.f32 %v5405, %v5448
        %v5456 = vmul.f32 %v5406, %v5448
        %v5457 = vmul.f32 %v5407, %v5448
        %v5458 = vmul.f32 %v5408, %v5448
        %v5459 = vmul.f32 %v5409, %v5448
        %v5460 = vmul.f32 %v5410, %v5448
        %v5461 = vmul.f32 %v5411, %v5448
        %v5462 = vmul.f32 %v5412, %v5448
        %v5463 = vmul.f32 %v5413, %v5448
        %v5464 = vmul.f32 %v5414, %v5448
        %v5465 = vmul.f32 %v5415, %v5448
        %v5466 = vmul.f32 %v5416, %v5448
        %v5467 = vmul.f32 %v5417, %v5448
        %v5468 = vmul.f32 %v5418, %v5448
        %v5469 = vmul.f32 %v5419, %v5448
        %v5470 = vmul.f32 %v5420, %v5448
        %v5471 = vmul.f32 %v5421, %v5448
        %v5472 = vmul.f32 %v5422, %v5448
        %v5473 = vmul.f32 %v5423, %v5448
        %v5474 = vmul.f32 %v5424, %v5448
        %v5475 = vmul.f32 %v5425, %v5448
        %v5476 = vmul.f32 %v5426, %v5448
        %v5477 = vmul.f32 %v5427, %v5448
        %v5478 = vmul.f32 %v5428, %v5448
        %v5479 = vmul.f32 %v5429, %v5448
        %v5480 = vmul.f32 %v5430, %v5448
        %v5481 = vmul.f32 %v5431, %v5448
        %v5482 = vmul.f32 %v5432, %v5448
        %v5483 = vmul.f32 %v5433, %v5448
        %v5484 = vmul.f32 %v5434, %v5448
        %v5485 = vmul.f32 %v5435, %v5448
        %v5486 = vmul.f32 %v5436, %v5448
        %v5487 = vmul.f32 %v5437, %v5448
        %v5488 = vmul.f32 %v5438, %v5448
        %v5489 = vmul.f32 %v5439, %v5448
        %v5490 = vmul.f32 %v5440, %v5448
        %v5491 = vmul.f32 %v5441, %v5448
        %v5492 = vmul.f32 %v5442, %v5448
        %v5493 = vmul.f32 %v5443, %v5448
        %v5494 = vmul.f32 %v5444, %v5448
        %v5495 = vmul.f32 %v5445, %v5448
        %v5496 = vmul.f32 %v5446, %v5448
        %v5545 = vrot.slane %v5449, 4
        %v5546 = vrot.slane %v5450, 4
        %v5547 = vsel %vm1439, %v5545, %v5546
        %v5548 = vrot.slane %v5451, 4
        %v5549 = vsel %vm1439, %v5546, %v5548
        %v5550 = vrot.slane %v5452, 4
        %v5551 = vrot.slane %v5453, 4
        %v5552 = vsel %vm1439, %v5550, %v5551
        %v5553 = vrot.slane %v5454, 4
        %v5554 = vsel %vm1439, %v5551, %v5553
        %v5555 = vrot.slane %v5455, 4
        %v5556 = vrot.slane %v5456, 4
        %v5557 = vsel %vm1439, %v5555, %v5556
        %v5558 = vrot.slane %v5457, 4
        %v5559 = vsel %vm1439, %v5556, %v5558
        %v5560 = vrot.slane %v5458, 4
        %v5561 = vrot.slane %v5459, 4
        %v5562 = vsel %vm1439, %v5560, %v5561
        %v5563 = vrot.slane %v5460, 4
        %v5564 = vsel %vm1439, %v5561, %v5563
        %v5565 = vrot.slane %v5461, 4
        %v5566 = vrot.slane %v5462, 4
        %v5567 = vsel %vm1439, %v5565, %v5566
        %v5568 = vrot.slane %v5463, 4
        %v5569 = vsel %vm1439, %v5566, %v5568
        %v5570 = vrot.slane %v5464, 4
        %v5571 = vrot.slane %v5465, 4
        %v5572 = vsel %vm1439, %v5570, %v5571
        %v5573 = vrot.slane %v5466, 4
        %v5574 = vsel %vm1439, %v5571, %v5573
        %v5575 = vrot.slane %v5467, 4
        %v5576 = vrot.slane %v5468, 4
        %v5577 = vsel %vm1439, %v5575, %v5576
        %v5578 = vrot.slane %v5469, 4
        %v5579 = vsel %vm1439, %v5576, %v5578
        %v5580 = vrot.slane %v5470, 4
        %v5581 = vrot.slane %v5471, 4
        %v5582 = vsel %vm1439, %v5580, %v5581
        %v5583 = vrot.slane %v5472, 4
        %v5584 = vsel %vm1439, %v5581, %v5583
        %v5585 = vrot.slane %v5473, 4
        %v5586 = vrot.slane %v5474, 4
        %v5587 = vsel %vm1439, %v5585, %v5586
        %v5588 = vrot.slane %v5475, 4
        %v5589 = vsel %vm1439, %v5586, %v5588
        %v5590 = vrot.slane %v5476, 4
        %v5591 = vrot.slane %v5477, 4
        %v5592 = vsel %vm1439, %v5590, %v5591
        %v5593 = vrot.slane %v5478, 4
        %v5594 = vsel %vm1439, %v5591, %v5593
        %v5595 = vrot.slane %v5479, 4
        %v5596 = vrot.slane %v5480, 4
        %v5597 = vsel %vm1439, %v5595, %v5596
        %v5598 = vrot.slane %v5481, 4
        %v5599 = vsel %vm1439, %v5596, %v5598
        %v5600 = vrot.slane %v5482, 4
        %v5601 = vrot.slane %v5483, 4
        %v5602 = vsel %vm1439, %v5600, %v5601
        %v5603 = vrot.slane %v5484, 4
        %v5604 = vsel %vm1439, %v5601, %v5603
        %v5605 = vrot.slane %v5485, 4
        %v5606 = vrot.slane %v5486, 4
        %v5607 = vsel %vm1439, %v5605, %v5606
        %v5608 = vrot.slane %v5487, 4
        %v5609 = vsel %vm1439, %v5606, %v5608
        %v5610 = vrot.slane %v5488, 4
        %v5611 = vrot.slane %v5489, 4
        %v5612 = vsel %vm1439, %v5610, %v5611
        %v5613 = vrot.slane %v5490, 4
        %v5614 = vsel %vm1439, %v5611, %v5613
        %v5615 = vrot.slane %v5491, 4
        %v5616 = vrot.slane %v5492, 4
        %v5617 = vsel %vm1439, %v5615, %v5616
        %v5618 = vrot.slane %v5493, 4
        %v5619 = vsel %vm1439, %v5616, %v5618
        %v5620 = vrot.slane %v5494, 4
        %v5621 = vrot.slane %v5495, 4
        %v5622 = vsel %vm1439, %v5620, %v5621
        %v5623 = vrot.slane %v5496, 4
        %v5624 = vsel %vm1439, %v5621, %v5623
        %v5673 = vadd.f32 %v5303, %v5545
        %v5674 = vadd.f32 %v5304, %v5547
        %v5675 = vadd.f32 %v5305, %v5549
        %v5676 = vadd.f32 %v5306, %v5550
        %v5677 = vadd.f32 %v5307, %v5552
        %v5678 = vadd.f32 %v5308, %v5554
        %v5679 = vadd.f32 %v5309, %v5555
        %v5680 = vadd.f32 %v5310, %v5557
        %v5681 = vadd.f32 %v5311, %v5559
        %v5682 = vadd.f32 %v5312, %v5560
        %v5683 = vadd.f32 %v5313, %v5562
        %v5684 = vadd.f32 %v5314, %v5564
        %v5685 = vadd.f32 %v5315, %v5565
        %v5686 = vadd.f32 %v5316, %v5567
        %v5687 = vadd.f32 %v5317, %v5569
        %v5688 = vadd.f32 %v5318, %v5570
        %v5689 = vadd.f32 %v5319, %v5572
        %v5690 = vadd.f32 %v5320, %v5574
        %v5691 = vadd.f32 %v5321, %v5575
        %v5692 = vadd.f32 %v5322, %v5577
        %v5693 = vadd.f32 %v5323, %v5579
        %v5694 = vadd.f32 %v5324, %v5580
        %v5695 = vadd.f32 %v5325, %v5582
        %v5696 = vadd.f32 %v5326, %v5584
        %v5697 = vadd.f32 %v5327, %v5585
        %v5698 = vadd.f32 %v5328, %v5587
        %v5699 = vadd.f32 %v5329, %v5589
        %v5700 = vadd.f32 %v5330, %v5590
        %v5701 = vadd.f32 %v5331, %v5592
        %v5702 = vadd.f32 %v5332, %v5594
        %v5703 = vadd.f32 %v5333, %v5595
        %v5704 = vadd.f32 %v5334, %v5597
        %v5705 = vadd.f32 %v5335, %v5599
        %v5706 = vadd.f32 %v5336, %v5600
        %v5707 = vadd.f32 %v5337, %v5602
        %v5708 = vadd.f32 %v5338, %v5604
        %v5709 = vadd.f32 %v5339, %v5605
        %v5710 = vadd.f32 %v5340, %v5607
        %v5711 = vadd.f32 %v5341, %v5609
        %v5712 = vadd.f32 %v5342, %v5610
        %v5713 = vadd.f32 %v5343, %v5612
        %v5714 = vadd.f32 %v5344, %v5614
        %v5715 = vadd.f32 %v5345, %v5615
        %v5716 = vadd.f32 %v5346, %v5617
        %v5717 = vadd.f32 %v5347, %v5619
        %v5718 = vadd.f32 %v5348, %v5620
        %v5719 = vadd.f32 %v5349, %v5622
        %v5720 = vadd.f32 %v5350, %v5624
        %v5721 = vld [vmem:[%s5156 + $0xc] sm:$0x8]
        %v5722 = vld [vmem:[%s5156 + $0x10] sm:$0xf]
        %v5723 = vld [vmem:[%s5156 + $0x14] sm:$0x7]
        %v5724 = vld [vmem:[%s5156 + $0x28] sm:$0x8]
        %v5725 = vld [vmem:[%s5156 + $0x2c] sm:$0xf]
        %v5726 = vld [vmem:[%s5156 + $0x30] sm:$0x7]
        %v5727 = vld [vmem:[%s5156 + $0x44] sm:$0x8]
        %v5728 = vld [vmem:[%s5156 + $0x48] sm:$0xf]
        %v5729 = vld [vmem:[%s5156 + $0x4c] sm:$0x7]
        %v5730 = vld [vmem:[%s5156 + $0x60] sm:$0x8]
        %v5731 = vld [vmem:[%s5156 + $0x64] sm:$0xf]
        %v5732 = vld [vmem:[%s5156 + $0x68] sm:$0x7]
        %v5733 = vld [vmem:[%s5156 + $0x7c] sm:$0x8]
        %v5734 = vld [vmem:[%s5156 + $0x80] sm:$0xf]
        %v5735 = vld [vmem:[%s5156 + $0x84] sm:$0x7]
        %v5736 = vld [vmem:[%s5156 + $0x98] sm:$0x8]
        %v5737 = vld [vmem:[%s5156 + $0x9c] sm:$0xf]
        %v5738 = vld [vmem:[%s5156 + $0xa0] sm:$0x7]
        %v5739 = vld [vmem:[%s5156 + $0xb4] sm:$0x8]
        %v5740 = vld [vmem:[%s5156 + $0xb8] sm:$0xf]
        %v5741 = vld [vmem:[%s5156 + $0xbc] sm:$0x7]
        %v5742 = vld [vmem:[%s5156 + $0xd0] sm:$0x8]
        %v5743 = vld [vmem:[%s5156 + $0xd4] sm:$0xf]
        %v5744 = vld [vmem:[%s5156 + $0xd8] sm:$0x7]
        %v5745 = vld [vmem:[%s5156 + $0xec] sm:$0x8]
        %v5746 = vld [vmem:[%s5156 + $0xf0] sm:$0xf]
        %v5747 = vld [vmem:[%s5156 + $0xf4] sm:$0x7]
        %v5748 = vld [vmem:[%s5156 + $0x108] sm:$0x8]
        %v5749 = vld [vmem:[%s5156 + $0x10c] sm:$0xf]
        %v5750 = vld [vmem:[%s5156 + $0x110] sm:$0x7]
        %v5751 = vld [vmem:[%s5156 + $0x124] sm:$0x8]
        %v5752 = vld [vmem:[%s5156 + $0x128] sm:$0xf]
        %v5753 = vld [vmem:[%s5156 + $0x12c] sm:$0x7]
        %v5754 = vld [vmem:[%s5156 + $0x140] sm:$0x8]
        %v5755 = vld [vmem:[%s5156 + $0x144] sm:$0xf]
        %v5756 = vld [vmem:[%s5156 + $0x148] sm:$0x7]
        %v5757 = vld [vmem:[%s5156 + $0x15c] sm:$0x8]
        %v5758 = vld [vmem:[%s5156 + $0x160] sm:$0xf]
        %v5759 = vld [vmem:[%s5156 + $0x164] sm:$0x7]
        %v5760 = vld [vmem:[%s5156 + $0x178] sm:$0x8]
        %v5761 = vld [vmem:[%s5156 + $0x17c] sm:$0xf]
        %v5762 = vld [vmem:[%s5156 + $0x180] sm:$0x7]
        %v5763 = vld [vmem:[%s5156 + $0x194] sm:$0x8]
        %v5764 = vld [vmem:[%s5156 + $0x198] sm:$0xf]
        %v5765 = vld [vmem:[%s5156 + $0x19c] sm:$0x7]
        %v5766 = vld [vmem:[%s5156 + $0x1b0] sm:$0x8]
        %v5767 = vld [vmem:[%s5156 + $0x1b4] sm:$0xf]
        %v5768 = vld [vmem:[%s5156 + $0x1b8] sm:$0x7]
        %v5769 = vunpack.c.l.bf16 %v5721
        %v5770 = vunpack.c.l.bf16 %v5722
        %v5771 = vunpack.c.l.bf16 %v5723
        %v5772 = vunpack.c.l.bf16 %v5724
        %v5773 = vunpack.c.l.bf16 %v5725
        %v5774 = vunpack.c.l.bf16 %v5726
        %v5775 = vunpack.c.l.bf16 %v5727
        %v5776 = vunpack.c.l.bf16 %v5728
        %v5777 = vunpack.c.l.bf16 %v5729
        %v5778 = vunpack.c.l.bf16 %v5730
        %v5779 = vunpack.c.l.bf16 %v5731
        %v5780 = vunpack.c.l.bf16 %v5732
        %v5781 = vunpack.c.l.bf16 %v5733
        %v5782 = vunpack.c.l.bf16 %v5734
        %v5783 = vunpack.c.l.bf16 %v5735
        %v5784 = vunpack.c.l.bf16 %v5736
        %v5785 = vunpack.c.l.bf16 %v5737
        %v5786 = vunpack.c.l.bf16 %v5738
        %v5787 = vunpack.c.l.bf16 %v5739
        %v5788 = vunpack.c.l.bf16 %v5740
        %v5789 = vunpack.c.l.bf16 %v5741
        %v5790 = vunpack.c.l.bf16 %v5742
        %v5791 = vunpack.c.l.bf16 %v5743
        %v5792 = vunpack.c.l.bf16 %v5744
        %v5793 = vunpack.c.l.bf16 %v5745
        %v5794 = vunpack.c.l.bf16 %v5746
        %v5795 = vunpack.c.l.bf16 %v5747
        %v5796 = vunpack.c.l.bf16 %v5748
        %v5797 = vunpack.c.l.bf16 %v5749
        %v5798 = vunpack.c.l.bf16 %v5750
        %v5799 = vunpack.c.l.bf16 %v5751
        %v5800 = vunpack.c.l.bf16 %v5752
        %v5801 = vunpack.c.l.bf16 %v5753
        %v5802 = vunpack.c.l.bf16 %v5754
        %v5803 = vunpack.c.l.bf16 %v5755
        %v5804 = vunpack.c.l.bf16 %v5756
        %v5805 = vunpack.c.l.bf16 %v5757
        %v5806 = vunpack.c.l.bf16 %v5758
        %v5807 = vunpack.c.l.bf16 %v5759
        %v5808 = vunpack.c.l.bf16 %v5760
        %v5809 = vunpack.c.l.bf16 %v5761
        %v5810 = vunpack.c.l.bf16 %v5762
        %v5811 = vunpack.c.l.bf16 %v5763
        %v5812 = vunpack.c.l.bf16 %v5764
        %v5813 = vunpack.c.l.bf16 %v5765
        %v5814 = vunpack.c.l.bf16 %v5766
        %v5815 = vunpack.c.l.bf16 %v5767
        %v5816 = vunpack.c.l.bf16 %v5768
        %v5817 = vld [vmem:[%s3831 + $0x8] sm:$0x1]
        %v5818 = vperm.slane %v5817, 0
        %v5819 = vmul.f32 %v5769, %v5818
        %v5820 = vmul.f32 %v5770, %v5818
        %v5821 = vmul.f32 %v5771, %v5818
        %v5822 = vmul.f32 %v5772, %v5818
        %v5823 = vmul.f32 %v5773, %v5818
        %v5824 = vmul.f32 %v5774, %v5818
        %v5825 = vmul.f32 %v5775, %v5818
        %v5826 = vmul.f32 %v5776, %v5818
        %v5827 = vmul.f32 %v5777, %v5818
        %v5828 = vmul.f32 %v5778, %v5818
        %v5829 = vmul.f32 %v5779, %v5818
        %v5830 = vmul.f32 %v5780, %v5818
        %v5831 = vmul.f32 %v5781, %v5818
        %v5832 = vmul.f32 %v5782, %v5818
        %v5833 = vmul.f32 %v5783, %v5818
        %v5834 = vmul.f32 %v5784, %v5818
        %v5835 = vmul.f32 %v5785, %v5818
        %v5836 = vmul.f32 %v5786, %v5818
        %v5837 = vmul.f32 %v5787, %v5818
        %v5838 = vmul.f32 %v5788, %v5818
        %v5839 = vmul.f32 %v5789, %v5818
        %v5840 = vmul.f32 %v5790, %v5818
        %v5841 = vmul.f32 %v5791, %v5818
        %v5842 = vmul.f32 %v5792, %v5818
        %v5843 = vmul.f32 %v5793, %v5818
        %v5844 = vmul.f32 %v5794, %v5818
        %v5845 = vmul.f32 %v5795, %v5818
        %v5846 = vmul.f32 %v5796, %v5818
        %v5847 = vmul.f32 %v5797, %v5818
        %v5848 = vmul.f32 %v5798, %v5818
        %v5849 = vmul.f32 %v5799, %v5818
        %v5850 = vmul.f32 %v5800, %v5818
        %v5851 = vmul.f32 %v5801, %v5818
        %v5852 = vmul.f32 %v5802, %v5818
        %v5853 = vmul.f32 %v5803, %v5818
        %v5854 = vmul.f32 %v5804, %v5818
        %v5855 = vmul.f32 %v5805, %v5818
        %v5856 = vmul.f32 %v5806, %v5818
        %v5857 = vmul.f32 %v5807, %v5818
        %v5858 = vmul.f32 %v5808, %v5818
        %v5859 = vmul.f32 %v5809, %v5818
        %v5860 = vmul.f32 %v5810, %v5818
        %v5861 = vmul.f32 %v5811, %v5818
        %v5862 = vmul.f32 %v5812, %v5818
        %v5863 = vmul.f32 %v5813, %v5818
        %v5864 = vmul.f32 %v5814, %v5818
        %v5865 = vmul.f32 %v5815, %v5818
        %v5866 = vmul.f32 %v5816, %v5818
        %v5867 = vadd.f32 %v5673, %v5819
        %v5868 = vadd.f32 %v5674, %v5820
        %v5869 = vadd.f32 %v5675, %v5821
        %v5870 = vadd.f32 %v5676, %v5822
        %v5871 = vadd.f32 %v5677, %v5823
        %v5872 = vadd.f32 %v5678, %v5824
        %v5873 = vadd.f32 %v5679, %v5825
        %v5874 = vadd.f32 %v5680, %v5826
        %v5875 = vadd.f32 %v5681, %v5827
        %v5876 = vadd.f32 %v5682, %v5828
        %v5877 = vadd.f32 %v5683, %v5829
        %v5878 = vadd.f32 %v5684, %v5830
        %v5879 = vadd.f32 %v5685, %v5831
        %v5880 = vadd.f32 %v5686, %v5832
        %v5881 = vadd.f32 %v5687, %v5833
        %v5882 = vadd.f32 %v5688, %v5834
        %v5883 = vadd.f32 %v5689, %v5835
        %v5884 = vadd.f32 %v5690, %v5836
        %v5885 = vadd.f32 %v5691, %v5837
        %v5886 = vadd.f32 %v5692, %v5838
        %v5887 = vadd.f32 %v5693, %v5839
        %v5888 = vadd.f32 %v5694, %v5840
        %v5889 = vadd.f32 %v5695, %v5841
        %v5890 = vadd.f32 %v5696, %v5842
        %v5891 = vadd.f32 %v5697, %v5843
        %v5892 = vadd.f32 %v5698, %v5844
        %v5893 = vadd.f32 %v5699, %v5845
        %v5894 = vadd.f32 %v5700, %v5846
        %v5895 = vadd.f32 %v5701, %v5847
        %v5896 = vadd.f32 %v5702, %v5848
        %v5897 = vadd.f32 %v5703, %v5849
        %v5898 = vadd.f32 %v5704, %v5850
        %v5899 = vadd.f32 %v5705, %v5851
        %v5900 = vadd.f32 %v5706, %v5852
        %v5901 = vadd.f32 %v5707, %v5853
        %v5902 = vadd.f32 %v5708, %v5854
        %v5903 = vadd.f32 %v5709, %v5855
        %v5904 = vadd.f32 %v5710, %v5856
        %v5905 = vadd.f32 %v5711, %v5857
        %v5906 = vadd.f32 %v5712, %v5858
        %v5907 = vadd.f32 %v5713, %v5859
        %v5908 = vadd.f32 %v5714, %v5860
        %v5909 = vadd.f32 %v5715, %v5861
        %v5910 = vadd.f32 %v5716, %v5862
        %v5911 = vadd.f32 %v5717, %v5863
        %v5912 = vadd.f32 %v5718, %v5864
        %v5913 = vadd.f32 %v5719, %v5865
        %v5914 = vadd.f32 %v5720, %v5866
        %v5915 = vld [vmem:[%s4 + $0x1] sm:$0x1]
        %v5916 = vperm.slane %v5915, 0
        %v5917 = vadd.f32 %v5867, %v5916
        %v5918 = vadd.f32 %v5868, %v5916
        %v5919 = vadd.f32 %v5869, %v5916
        %v5920 = vadd.f32 %v5870, %v5916
        %v5921 = vadd.f32 %v5871, %v5916
        %v5922 = vadd.f32 %v5872, %v5916
        %v5923 = vadd.f32 %v5873, %v5916
        %v5924 = vadd.f32 %v5874, %v5916
        %v5925 = vadd.f32 %v5875, %v5916
        %v5926 = vadd.f32 %v5876, %v5916
        %v5927 = vadd.f32 %v5877, %v5916
        %v5928 = vadd.f32 %v5878, %v5916
        %v5929 = vadd.f32 %v5879, %v5916
        %v5930 = vadd.f32 %v5880, %v5916
        %v5931 = vadd.f32 %v5881, %v5916
        %v5932 = vadd.f32 %v5882, %v5916
        %v5933 = vadd.f32 %v5883, %v5916
        %v5934 = vadd.f32 %v5884, %v5916
        %v5935 = vadd.f32 %v5885, %v5916
        %v5936 = vadd.f32 %v5886, %v5916
        %v5937 = vadd.f32 %v5887, %v5916
        %v5938 = vadd.f32 %v5888, %v5916
        %v5939 = vadd.f32 %v5889, %v5916
        %v5940 = vadd.f32 %v5890, %v5916
        %v5941 = vadd.f32 %v5891, %v5916
        %v5942 = vadd.f32 %v5892, %v5916
        %v5943 = vadd.f32 %v5893, %v5916
        %v5944 = vadd.f32 %v5894, %v5916
        %v5945 = vadd.f32 %v5895, %v5916
        %v5946 = vadd.f32 %v5896, %v5916
        %v5947 = vadd.f32 %v5897, %v5916
        %v5948 = vadd.f32 %v5898, %v5916
        %v5949 = vadd.f32 %v5899, %v5916
        %v5950 = vadd.f32 %v5900, %v5916
        %v5951 = vadd.f32 %v5901, %v5916
        %v5952 = vadd.f32 %v5902, %v5916
        %v5953 = vadd.f32 %v5903, %v5916
        %v5954 = vadd.f32 %v5904, %v5916
        %v5955 = vadd.f32 %v5905, %v5916
        %v5956 = vadd.f32 %v5906, %v5916
        %v5957 = vadd.f32 %v5907, %v5916
        %v5958 = vadd.f32 %v5908, %v5916
        %v5959 = vadd.f32 %v5909, %v5916
        %v5960 = vadd.f32 %v5910, %v5916
        %v5961 = vadd.f32 %v5911, %v5916
        %v5962 = vadd.f32 %v5912, %v5916
        %v5963 = vadd.f32 %v5913, %v5916
        %v5964 = vadd.f32 %v5914, %v5916
        %v5965 = vmax.f32 %v5917, 0.0
        %v5966 = vmax.f32 %v5918, 0.0
        %v5967 = vmax.f32 %v5919, 0.0
        %v5968 = vmax.f32 %v5920, 0.0
        %v5969 = vmax.f32 %v5921, 0.0
        %v5970 = vmax.f32 %v5922, 0.0
        %v5971 = vmax.f32 %v5923, 0.0
        %v5972 = vmax.f32 %v5924, 0.0
        %v5973 = vmax.f32 %v5925, 0.0
        %v5974 = vmax.f32 %v5926, 0.0
        %v5975 = vmax.f32 %v5927, 0.0
        %v5976 = vmax.f32 %v5928, 0.0
        %v5977 = vmax.f32 %v5929, 0.0
        %v5978 = vmax.f32 %v5930, 0.0
        %v5979 = vmax.f32 %v5931, 0.0
        %v5980 = vmax.f32 %v5932, 0.0
        %v5981 = vmax.f32 %v5933, 0.0
        %v5982 = vmax.f32 %v5934, 0.0
        %v5983 = vmax.f32 %v5935, 0.0
        %v5984 = vmax.f32 %v5936, 0.0
        %v5985 = vmax.f32 %v5937, 0.0
        %v5986 = vmax.f32 %v5938, 0.0
        %v5987 = vmax.f32 %v5939, 0.0
        %v5988 = vmax.f32 %v5940, 0.0
        %v5989 = vmax.f32 %v5941, 0.0
        %v5990 = vmax.f32 %v5942, 0.0
        %v5991 = vmax.f32 %v5943, 0.0
        %v5992 = vmax.f32 %v5944, 0.0
        %v5993 = vmax.f32 %v5945, 0.0
        %v5994 = vmax.f32 %v5946, 0.0
        %v5995 = vmax.f32 %v5947, 0.0
        %v5996 = vmax.f32 %v5948, 0.0
        %v5997 = vmax.f32 %v5949, 0.0
        %v5998 = vmax.f32 %v5950, 0.0
        %v5999 = vmax.f32 %v5951, 0.0
        %v6000 = vmax.f32 %v5952, 0.0
        %v6001 = vmax.f32 %v5953, 0.0
        %v6002 = vmax.f32 %v5954, 0.0
        %v6003 = vmax.f32 %v5955, 0.0
        %v6004 = vmax.f32 %v5956, 0.0
        %v6005 = vmax.f32 %v5957, 0.0
        %v6006 = vmax.f32 %v5958, 0.0
        %v6007 = vmax.f32 %v5959, 0.0
        %v6008 = vmax.f32 %v5960, 0.0
        %v6009 = vmax.f32 %v5961, 0.0
        %v6010 = vmax.f32 %v5962, 0.0
        %v6011 = vmax.f32 %v5963, 0.0
        %v6012 = vmax.f32 %v5964, 0.0
        %v6013 = vmin.f32 %v5965, 6.0
        %v6014 = vmin.f32 %v5966, 6.0
        %v6015 = vmin.f32 %v5967, 6.0
        %v6016 = vmin.f32 %v5968, 6.0
        %v6017 = vmin.f32 %v5969, 6.0
        %v6018 = vmin.f32 %v5970, 6.0
        %v6019 = vmin.f32 %v5971, 6.0
        %v6020 = vmin.f32 %v5972, 6.0
        %v6021 = vmin.f32 %v5973, 6.0
        %v6022 = vmin.f32 %v5974, 6.0
        %v6023 = vmin.f32 %v5975, 6.0
        %v6024 = vmin.f32 %v5976, 6.0
        %v6025 = vmin.f32 %v5977, 6.0
        %v6026 = vmin.f32 %v5978, 6.0
        %v6027 = vmin.f32 %v5979, 6.0
        %v6028 = vmin.f32 %v5980, 6.0
        %v6029 = vmin.f32 %v5981, 6.0
        %v6030 = vmin.f32 %v5982, 6.0
        %v6031 = vmin.f32 %v5983, 6.0
        %v6032 = vmin.f32 %v5984, 6.0
        %v6033 = vmin.f32 %v5985, 6.0
        %v6034 = vmin.f32 %v5986, 6.0
        %v6035 = vmin.f32 %v5987, 6.0
        %v6036 = vmin.f32 %v5988, 6.0
        %v6037 = vmin.f32 %v5989, 6.0
        %v6038 = vmin.f32 %v5990, 6.0
        %v6039 = vmin.f32 %v5991, 6.0
        %v6040 = vmin.f32 %v5992, 6.0
        %v6041 = vmin.f32 %v5993, 6.0
        %v6042 = vmin.f32 %v5994, 6.0
        %v6043 = vmin.f32 %v5995, 6.0
        %v6044 = vmin.f32 %v5996, 6.0
        %v6045 = vmin.f32 %v5997, 6.0
        %v6046 = vmin.f32 %v5998, 6.0
        %v6047 = vmin.f32 %v5999, 6.0
        %v6048 = vmin.f32 %v6000, 6.0
        %v6049 = vmin.f32 %v6001, 6.0
        %v6050 = vmin.f32 %v6002, 6.0
        %v6051 = vmin.f32 %v6003, 6.0
        %v6052 = vmin.f32 %v6004, 6.0
        %v6053 = vmin.f32 %v6005, 6.0
        %v6054 = vmin.f32 %v6006, 6.0
        %v6055 = vmin.f32 %v6007, 6.0
        %v6056 = vmin.f32 %v6008, 6.0
        %v6057 = vmin.f32 %v6009, 6.0
        %v6058 = vmin.f32 %v6010, 6.0
        %v6059 = vmin.f32 %v6011, 6.0
        %v6060 = vmin.f32 %v6012, 6.0
        %v6109 = vrot.slane %v6013, 6
        %v6110 = vrot.slane %v6014, 6
        %v6111 = vsel %vm1164, %v6109, %v6110
        %v6112 = vrot.slane %v6015, 6
        %v6113 = vsel %vm1164, %v6110, %v6112
        %v6114 = vrot.slane %v6016, 6
        %v6115 = vrot.slane %v6017, 6
        %v6116 = vsel %vm1164, %v6114, %v6115
        %v6117 = vrot.slane %v6018, 6
        %v6118 = vsel %vm1164, %v6115, %v6117
        %v6119 = vrot.slane %v6019, 6
        %v6120 = vrot.slane %v6020, 6
        %v6121 = vsel %vm1164, %v6119, %v6120
        %v6122 = vrot.slane %v6021, 6
        %v6123 = vsel %vm1164, %v6120, %v6122
        %v6124 = vrot.slane %v6022, 6
        %v6125 = vrot.slane %v6023, 6
        %v6126 = vsel %vm1164, %v6124, %v6125
        %v6127 = vrot.slane %v6024, 6
        %v6128 = vsel %vm1164, %v6125, %v6127
        %v6129 = vrot.slane %v6025, 6
        %v6130 = vrot.slane %v6026, 6
        %v6131 = vsel %vm1164, %v6129, %v6130
        %v6132 = vrot.slane %v6027, 6
        %v6133 = vsel %vm1164, %v6130, %v6132
        %v6134 = vrot.slane %v6028, 6
        %v6135 = vrot.slane %v6029, 6
        %v6136 = vsel %vm1164, %v6134, %v6135
        %v6137 = vrot.slane %v6030, 6
        %v6138 = vsel %vm1164, %v6135, %v6137
        %v6139 = vrot.slane %v6031, 6
        %v6140 = vrot.slane %v6032, 6
        %v6141 = vsel %vm1164, %v6139, %v6140
        %v6142 = vrot.slane %v6033, 6
        %v6143 = vsel %vm1164, %v6140, %v6142
        %v6144 = vrot.slane %v6034, 6
        %v6145 = vrot.slane %v6035, 6
        %v6146 = vsel %vm1164, %v6144, %v6145
        %v6147 = vrot.slane %v6036, 6
        %v6148 = vsel %vm1164, %v6145, %v6147
        %v6149 = vrot.slane %v6037, 6
        %v6150 = vrot.slane %v6038, 6
        %v6151 = vsel %vm1164, %v6149, %v6150
        %v6152 = vrot.slane %v6039, 6
        %v6153 = vsel %vm1164, %v6150, %v6152
        %v6154 = vrot.slane %v6040, 6
        %v6155 = vrot.slane %v6041, 6
        %v6156 = vsel %vm1164, %v6154, %v6155
        %v6157 = vrot.slane %v6042, 6
        %v6158 = vsel %vm1164, %v6155, %v6157
        %v6159 = vrot.slane %v6043, 6
        %v6160 = vrot.slane %v6044, 6
        %v6161 = vsel %vm1164, %v6159, %v6160
        %v6162 = vrot.slane %v6045, 6
        %v6163 = vsel %vm1164, %v6160, %v6162
        %v6164 = vrot.slane %v6046, 6
        %v6165 = vrot.slane %v6047, 6
        %v6166 = vsel %vm1164, %v6164, %v6165
        %v6167 = vrot.slane %v6048, 6
        %v6168 = vsel %vm1164, %v6165, %v6167
        %v6169 = vrot.slane %v6049, 6
        %v6170 = vrot.slane %v6050, 6
        %v6171 = vsel %vm1164, %v6169, %v6170
        %v6172 = vrot.slane %v6051, 6
        %v6173 = vsel %vm1164, %v6170, %v6172
        %v6174 = vrot.slane %v6052, 6
        %v6175 = vrot.slane %v6053, 6
        %v6176 = vsel %vm1164, %v6174, %v6175
        %v6177 = vrot.slane %v6054, 6
        %v6178 = vsel %vm1164, %v6175, %v6177
        %v6179 = vrot.slane %v6055, 6
        %v6180 = vrot.slane %v6056, 6
        %v6181 = vsel %vm1164, %v6179, %v6180
        %v6182 = vrot.slane %v6057, 6
        %v6183 = vsel %vm1164, %v6180, %v6182
        %v6184 = vrot.slane %v6058, 6
        %v6185 = vrot.slane %v6059, 6
        %v6186 = vsel %vm1164, %v6184, %v6185
        %v6187 = vrot.slane %v6060, 6
        %v6188 = vsel %vm1164, %v6185, %v6187
        %v6189 = vld [vmem:[%s5 + $0x40] sm:$0xff]
        %v6190 = vld [vmem:[%s5 + $0x48] sm:$0xff]
        %v6191 = vld [vmem:[%s5 + $0x50] sm:$0xff]
        %v6192 = vld [vmem:[%s5 + $0x58] sm:$0xff]
        %v6193 = vsel %vm3379, %v6111, 0
        %v6195 = vsel %vm3379, %v6113, 0
        %v6197 = vsel %vm3379, %v6116, 0
        %v6199 = vsel %vm3379, %v6118, 0
        %v6201 = vsel %vm3379, %v6121, 0
        %v6203 = vsel %vm3379, %v6123, 0
        %v6205 = vsel %vm3379, %v6126, 0
        %v6207 = vsel %vm3379, %v6128, 0
        %v6209 = vsel %vm3379, %v6131, 0
        %v6211 = vsel %vm3379, %v6133, 0
        %v6213 = vsel %vm3379, %v6136, 0
        %v6215 = vsel %vm3379, %v6138, 0
        %v6217 = vsel %vm3379, %v6141, 0
        %v6219 = vsel %vm3379, %v6143, 0
        %v6221 = vsel %vm3379, %v6146, 0
        %v6223 = vsel %vm3379, %v6148, 0
        %v6225 = vsel %vm3379, %v6151, 0
        %v6227 = vsel %vm3379, %v6153, 0
        %v6229 = vsel %vm3379, %v6156, 0
        %v6231 = vsel %vm3379, %v6158, 0
        %v6233 = vsel %vm3379, %v6161, 0
        %v6235 = vsel %vm3379, %v6163, 0
        %v6237 = vsel %vm3379, %v6166, 0
        %v6239 = vsel %vm3379, %v6168, 0
        %v6241 = vsel %vm3379, %v6171, 0
        %v6243 = vsel %vm3379, %v6173, 0
        %v6245 = vsel %vm3379, %v6176, 0
        %v6247 = vsel %vm3379, %v6178, 0
        %v6249 = vsel %vm3379, %v6181, 0
        %v6251 = vsel %vm3379, %v6183, 0
        %v6253 = vsel %vm3379, %v6186, 0
        %v6255 = vsel %vm3379, %v6188, 0
        %6257 = vmatpush.msra.mxu0 0.0
        %6258 = vmatpush.msra.mxu0 0.0
        %6259 = vmatpush.msra.mxu0 0.0
        %6260 = vmatpush.msra.mxu0 0.0
        %6261 = vmatpush.msra.mxu0 0.0
        %6262 = vmatpush.msra.mxu0 0.0
        %6263 = vmatpush.msra.mxu0 0.0
        %6264 = vmatpush.msra.mxu0 0.0
        %6265 = vmatpush.msra.mxu0 0.0
        %6266 = vmatpush.msra.mxu0 0.0
        %6267 = vmatpush.msra.mxu0 0.0
        %6268 = vmatpush.msra.mxu0 0.0
        %6269 = vmatpush.msra.mxu0 %v6192
        %6270 = vmatpush.msra.mxu0 %v6191
        %6271 = vmatpush.msra.mxu0 %v6190
        %6272 = vmatpush.msra.mxu0 %v6189
        %6273 = vmatmul.f32.gmra.mxu0 %v6193
        %v6274 = vpop.f32.mrf.mxu0
        %v6275 = vadd.f32 0.0, %v6274
        %6276 = vmatmul.f32.gmra.mxu0 %v6195
        %v6277 = vpop.f32.mrf.mxu0
        %v6278 = vadd.f32 0.0, %v6277
        %6279 = vmatmul.f32.gmra.mxu0 %v6197
        %v6280 = vpop.f32.mrf.mxu0
        %v6281 = vadd.f32 0.0, %v6280
        %6282 = vmatmul.f32.gmra.mxu0 %v6199
        %v6283 = vpop.f32.mrf.mxu0
        %v6284 = vadd.f32 0.0, %v6283
        %6285 = vmatmul.f32.gmra.mxu0 %v6201
        %v6286 = vpop.f32.mrf.mxu0
        %v6287 = vadd.f32 0.0, %v6286
        %6288 = vmatmul.f32.gmra.mxu0 %v6203
        %v6289 = vpop.f32.mrf.mxu0
        %v6290 = vadd.f32 0.0, %v6289
        %6291 = vmatmul.f32.gmra.mxu0 %v6205
        %v6292 = vpop.f32.mrf.mxu0
        %v6293 = vadd.f32 0.0, %v6292
        %6294 = vmatmul.f32.gmra.mxu0 %v6207
        %v6295 = vpop.f32.mrf.mxu0
        %v6296 = vadd.f32 0.0, %v6295
        %6297 = vmatmul.f32.gmra.mxu0 %v6209
        %v6298 = vpop.f32.mrf.mxu0
        %v6299 = vadd.f32 0.0, %v6298
        %6300 = vmatmul.f32.gmra.mxu0 %v6211
        %v6301 = vpop.f32.mrf.mxu0
        %v6302 = vadd.f32 0.0, %v6301
        %6303 = vmatmul.f32.gmra.mxu0 %v6213
        %v6304 = vpop.f32.mrf.mxu0
        %v6305 = vadd.f32 0.0, %v6304
        %6306 = vmatmul.f32.gmra.mxu0 %v6215
        %v6307 = vpop.f32.mrf.mxu0
        %v6308 = vadd.f32 0.0, %v6307
        %6309 = vmatmul.f32.gmra.mxu0 %v6217
        %v6310 = vpop.f32.mrf.mxu0
        %v6311 = vadd.f32 0.0, %v6310
        %6312 = vmatmul.f32.gmra.mxu0 %v6219
        %v6313 = vpop.f32.mrf.mxu0
        %v6314 = vadd.f32 0.0, %v6313
        %6315 = vmatmul.f32.gmra.mxu0 %v6221
        %v6316 = vpop.f32.mrf.mxu0
        %v6317 = vadd.f32 0.0, %v6316
        %6318 = vmatmul.f32.gmra.mxu0 %v6223
        %v6319 = vpop.f32.mrf.mxu0
        %v6320 = vadd.f32 0.0, %v6319
        %6321 = vmatmul.f32.gmra.mxu0 %v6225
        %v6322 = vpop.f32.mrf.mxu0
        %v6323 = vadd.f32 0.0, %v6322
        %6324 = vmatmul.f32.gmra.mxu0 %v6227
        %v6325 = vpop.f32.mrf.mxu0
        %v6326 = vadd.f32 0.0, %v6325
        %6327 = vmatmul.f32.gmra.mxu0 %v6229
        %v6328 = vpop.f32.mrf.mxu0
        %v6329 = vadd.f32 0.0, %v6328
        %6330 = vmatmul.f32.gmra.mxu0 %v6231
        %v6331 = vpop.f32.mrf.mxu0
        %v6332 = vadd.f32 0.0, %v6331
        %6333 = vmatmul.f32.gmra.mxu0 %v6233
        %v6334 = vpop.f32.mrf.mxu0
        %v6335 = vadd.f32 0.0, %v6334
        %6336 = vmatmul.f32.gmra.mxu0 %v6235
        %v6337 = vpop.f32.mrf.mxu0
        %v6338 = vadd.f32 0.0, %v6337
        %6339 = vmatmul.f32.gmra.mxu0 %v6237
        %v6340 = vpop.f32.mrf.mxu0
        %v6341 = vadd.f32 0.0, %v6340
        %6342 = vmatmul.f32.gmra.mxu0 %v6239
        %v6343 = vpop.f32.mrf.mxu0
        %v6344 = vadd.f32 0.0, %v6343
        %6345 = vmatmul.f32.gmra.mxu0 %v6241
        %v6346 = vpop.f32.mrf.mxu0
        %v6347 = vadd.f32 0.0, %v6346
        %6348 = vmatmul.f32.gmra.mxu0 %v6243
        %v6349 = vpop.f32.mrf.mxu0
        %v6350 = vadd.f32 0.0, %v6349
        %6351 = vmatmul.f32.gmra.mxu0 %v6245
        %v6352 = vpop.f32.mrf.mxu0
        %v6353 = vadd.f32 0.0, %v6352
        %6354 = vmatmul.f32.gmra.mxu0 %v6247
        %v6355 = vpop.f32.mrf.mxu0
        %v6356 = vadd.f32 0.0, %v6355
        %6357 = vmatmul.f32.gmra.mxu0 %v6249
        %v6358 = vpop.f32.mrf.mxu0
        %v6359 = vadd.f32 0.0, %v6358
        %6360 = vmatmul.f32.gmra.mxu0 %v6251
        %v6361 = vpop.f32.mrf.mxu0
        %v6362 = vadd.f32 0.0, %v6361
        %6363 = vmatmul.f32.gmra.mxu0 %v6253
        %v6364 = vpop.f32.mrf.mxu0
        %v6365 = vadd.f32 0.0, %v6364
        %6366 = vmatmul.f32.gmra.mxu0 %v6255
        %v6367 = vpop.f32.mrf.mxu0
        %v6368 = vadd.f32 0.0, %v6367
        %6369 = vdwg.mxu0
        %v6370 = vadd.f32 %v3639, %v6275
        %v6371 = vadd.f32 %v3642, %v6278
        %v6372 = vadd.f32 %v3645, %v6281
        %v6373 = vadd.f32 %v3648, %v6284
        %v6374 = vadd.f32 %v3651, %v6287
        %v6375 = vadd.f32 %v3654, %v6290
        %v6376 = vadd.f32 %v3657, %v6293
        %v6377 = vadd.f32 %v3660, %v6296
        %v6378 = vadd.f32 %v3663, %v6299
        %v6379 = vadd.f32 %v3666, %v6302
        %v6380 = vadd.f32 %v3669, %v6305
        %v6381 = vadd.f32 %v3672, %v6308
        %v6382 = vadd.f32 %v3675, %v6311
        %v6383 = vadd.f32 %v3678, %v6314
        %v6384 = vadd.f32 %v3681, %v6317
        %v6385 = vadd.f32 %v3684, %v6320
        %v6386 = vadd.f32 %v3687, %v6323
        %v6387 = vadd.f32 %v3690, %v6326
        %v6388 = vadd.f32 %v3693, %v6329
        %v6389 = vadd.f32 %v3696, %v6332
        %v6390 = vadd.f32 %v3699, %v6335
        %v6391 = vadd.f32 %v3702, %v6338
        %v6392 = vadd.f32 %v3705, %v6341
        %v6393 = vadd.f32 %v3708, %v6344
        %v6394 = vadd.f32 %v3711, %v6347
        %v6395 = vadd.f32 %v3714, %v6350
        %v6396 = vadd.f32 %v3717, %v6353
        %v6397 = vadd.f32 %v3720, %v6356
        %v6398 = vadd.f32 %v3723, %v6359
        %v6399 = vadd.f32 %v3726, %v6362
        %v6400 = vadd.f32 %v3729, %v6365
        %v6401 = vadd.f32 %v3732, %v6368
        %v6402 = vld [vmem:[%s341] sm:$0xf]
        %v6403 = vld [vmem:[%s341 + $0x4] sm:$0xf]
        %v6404 = vld [vmem:[%s341 + $0x1c] sm:$0xf]
        %v6405 = vld [vmem:[%s341 + $0x20] sm:$0xf]
        %v6406 = vld [vmem:[%s341 + $0x38] sm:$0xf]
        %v6407 = vld [vmem:[%s341 + $0x3c] sm:$0xf]
        %v6408 = vld [vmem:[%s341 + $0x54] sm:$0xf]
        %v6409 = vld [vmem:[%s341 + $0x58] sm:$0xf]
        %v6410 = vld [vmem:[%s341 + $0x70] sm:$0xf]
        %v6411 = vld [vmem:[%s341 + $0x74] sm:$0xf]
        %v6412 = vld [vmem:[%s341 + $0x8c] sm:$0xf]
        %v6413 = vld [vmem:[%s341 + $0x90] sm:$0xf]
        %v6414 = vld [vmem:[%s341 + $0xa8] sm:$0xf]
        %v6415 = vld [vmem:[%s341 + $0xac] sm:$0xf]
        %v6416 = vld [vmem:[%s341 + $0xc4] sm:$0xf]
        %v6417 = vld [vmem:[%s341 + $0xc8] sm:$0xf]
        %v6418 = vld [vmem:[%s341 + $0xe0] sm:$0xf]
        %v6419 = vld [vmem:[%s341 + $0xe4] sm:$0xf]
        %v6420 = vld [vmem:[%s341 + $0xfc] sm:$0xf]
        %v6421 = vld [vmem:[%s341 + $0x100] sm:$0xf]
        %v6422 = vld [vmem:[%s341 + $0x118] sm:$0xf]
        %v6423 = vld [vmem:[%s341 + $0x11c] sm:$0xf]
        %v6424 = vld [vmem:[%s341 + $0x134] sm:$0xf]
        %v6425 = vld [vmem:[%s341 + $0x138] sm:$0xf]
        %v6426 = vld [vmem:[%s341 + $0x150] sm:$0xf]
        %v6427 = vld [vmem:[%s341 + $0x154] sm:$0xf]
        %v6428 = vld [vmem:[%s341 + $0x16c] sm:$0xf]
        %v6429 = vld [vmem:[%s341 + $0x170] sm:$0xf]
        %v6430 = vld [vmem:[%s341 + $0x188] sm:$0xf]
        %v6431 = vld [vmem:[%s341 + $0x18c] sm:$0xf]
        %v6432 = vld [vmem:[%s341 + $0x1a4] sm:$0xf]
        %v6433 = vld [vmem:[%s341 + $0x1a8] sm:$0xf]
        %v6434 = vunpack.c.l.bf16 %v6402
        %v6435 = vunpack.c.l.bf16 %v6403
        %v6436 = vunpack.c.l.bf16 %v6404
        %v6437 = vunpack.c.l.bf16 %v6405
        %v6438 = vunpack.c.l.bf16 %v6406
        %v6439 = vunpack.c.l.bf16 %v6407
        %v6440 = vunpack.c.l.bf16 %v6408
        %v6441 = vunpack.c.l.bf16 %v6409
        %v6442 = vunpack.c.l.bf16 %v6410
        %v6443 = vunpack.c.l.bf16 %v6411
        %v6444 = vunpack.c.l.bf16 %v6412
        %v6445 = vunpack.c.l.bf16 %v6413
        %v6446 = vunpack.c.l.bf16 %v6414
        %v6447 = vunpack.c.l.bf16 %v6415
        %v6448 = vunpack.c.l.bf16 %v6416
        %v6449 = vunpack.c.l.bf16 %v6417
        %v6450 = vunpack.c.l.bf16 %v6418
        %v6451 = vunpack.c.l.bf16 %v6419
        %v6452 = vunpack.c.l.bf16 %v6420
        %v6453 = vunpack.c.l.bf16 %v6421
        %v6454 = vunpack.c.l.bf16 %v6422
        %v6455 = vunpack.c.l.bf16 %v6423
        %v6456 = vunpack.c.l.bf16 %v6424
        %v6457 = vunpack.c.l.bf16 %v6425
        %v6458 = vunpack.c.l.bf16 %v6426
        %v6459 = vunpack.c.l.bf16 %v6427
        %v6460 = vunpack.c.l.bf16 %v6428
        %v6461 = vunpack.c.l.bf16 %v6429
        %v6462 = vunpack.c.l.bf16 %v6430
        %v6463 = vunpack.c.l.bf16 %v6431
        %v6464 = vunpack.c.l.bf16 %v6432
        %v6465 = vunpack.c.l.bf16 %v6433
        %s6466 = scalar_lea.vmem %s3, 32
        %v6467 = vld [vmem:[%s6466] sm:$0x1]
        %v6468 = vperm.slane %v6467, 0
        %v6469 = vmul.f32 %v6434, %v6468
        %v6470 = vmul.f32 %v6435, %v6468
        %v6471 = vmul.f32 %v6436, %v6468
        %v6472 = vmul.f32 %v6437, %v6468
        %v6473 = vmul.f32 %v6438, %v6468
        %v6474 = vmul.f32 %v6439, %v6468
        %v6475 = vmul.f32 %v6440, %v6468
        %v6476 = vmul.f32 %v6441, %v6468
        %v6477 = vmul.f32 %v6442, %v6468
        %v6478 = vmul.f32 %v6443, %v6468
        %v6479 = vmul.f32 %v6444, %v6468
        %v6480 = vmul.f32 %v6445, %v6468
        %v6481 = vmul.f32 %v6446, %v6468
        %v6482 = vmul.f32 %v6447, %v6468
        %v6483 = vmul.f32 %v6448, %v6468
        %v6484 = vmul.f32 %v6449, %v6468
        %v6485 = vmul.f32 %v6450, %v6468
        %v6486 = vmul.f32 %v6451, %v6468
        %v6487 = vmul.f32 %v6452, %v6468
        %v6488 = vmul.f32 %v6453, %v6468
        %v6489 = vmul.f32 %v6454, %v6468
        %v6490 = vmul.f32 %v6455, %v6468
        %v6491 = vmul.f32 %v6456, %v6468
        %v6492 = vmul.f32 %v6457, %v6468
        %v6493 = vmul.f32 %v6458, %v6468
        %v6494 = vmul.f32 %v6459, %v6468
        %v6495 = vmul.f32 %v6460, %v6468
        %v6496 = vmul.f32 %v6461, %v6468
        %v6497 = vmul.f32 %v6462, %v6468
        %v6498 = vmul.f32 %v6463, %v6468
        %v6499 = vmul.f32 %v6464, %v6468
        %v6500 = vmul.f32 %v6465, %v6468
        %v6501 = vadd.f32 %v6469, 0.0
        %v6502 = vadd.f32 %v6470, 0.0
        %v6503 = vadd.f32 %v6471, 0.0
        %v6504 = vadd.f32 %v6472, 0.0
        %v6505 = vadd.f32 %v6473, 0.0
        %v6506 = vadd.f32 %v6474, 0.0
        %v6507 = vadd.f32 %v6475, 0.0
        %v6508 = vadd.f32 %v6476, 0.0
        %v6509 = vadd.f32 %v6477, 0.0
        %v6510 = vadd.f32 %v6478, 0.0
        %v6511 = vadd.f32 %v6479, 0.0
        %v6512 = vadd.f32 %v6480, 0.0
        %v6513 = vadd.f32 %v6481, 0.0
        %v6514 = vadd.f32 %v6482, 0.0
        %v6515 = vadd.f32 %v6483, 0.0
        %v6516 = vadd.f32 %v6484, 0.0
        %v6517 = vadd.f32 %v6485, 0.0
        %v6518 = vadd.f32 %v6486, 0.0
        %v6519 = vadd.f32 %v6487, 0.0
        %v6520 = vadd.f32 %v6488, 0.0
        %v6521 = vadd.f32 %v6489, 0.0
        %v6522 = vadd.f32 %v6490, 0.0
        %v6523 = vadd.f32 %v6491, 0.0
        %v6524 = vadd.f32 %v6492, 0.0
        %v6525 = vadd.f32 %v6493, 0.0
        %v6526 = vadd.f32 %v6494, 0.0
        %v6527 = vadd.f32 %v6495, 0.0
        %v6528 = vadd.f32 %v6496, 0.0
        %v6529 = vadd.f32 %v6497, 0.0
        %v6530 = vadd.f32 %v6498, 0.0
        %v6531 = vadd.f32 %v6499, 0.0
        %v6532 = vadd.f32 %v6500, 0.0
        %v6533 = vld [vmem:[%s341 + $0x8] sm:$0xe]
        %v6534 = vld [vmem:[%s341 + $0xc] sm:$0xf]
        %v6535 = vld [vmem:[%s341 + $0x10] sm:$0x1]
        %v6536 = vld [vmem:[%s341 + $0x24] sm:$0xe]
        %v6537 = vld [vmem:[%s341 + $0x28] sm:$0xf]
        %v6538 = vld [vmem:[%s341 + $0x2c] sm:$0x1]
        %v6539 = vld [vmem:[%s341 + $0x40] sm:$0xe]
        %v6540 = vld [vmem:[%s341 + $0x44] sm:$0xf]
        %v6541 = vld [vmem:[%s341 + $0x48] sm:$0x1]
        %v6542 = vld [vmem:[%s341 + $0x5c] sm:$0xe]
        %v6543 = vld [vmem:[%s341 + $0x60] sm:$0xf]
        %v6544 = vld [vmem:[%s341 + $0x64] sm:$0x1]
        %v6545 = vld [vmem:[%s341 + $0x78] sm:$0xe]
        %v6546 = vld [vmem:[%s341 + $0x7c] sm:$0xf]
        %v6547 = vld [vmem:[%s341 + $0x80] sm:$0x1]
        %v6548 = vld [vmem:[%s341 + $0x94] sm:$0xe]
        %v6549 = vld [vmem:[%s341 + $0x98] sm:$0xf]
        %v6550 = vld [vmem:[%s341 + $0x9c] sm:$0x1]
        %v6551 = vld [vmem:[%s341 + $0xb0] sm:$0xe]
        %v6552 = vld [vmem:[%s341 + $0xb4] sm:$0xf]
        %v6553 = vld [vmem:[%s341 + $0xb8] sm:$0x1]
        %v6554 = vld [vmem:[%s341 + $0xcc] sm:$0xe]
        %v6555 = vld [vmem:[%s341 + $0xd0] sm:$0xf]
        %v6556 = vld [vmem:[%s341 + $0xd4] sm:$0x1]
        %v6557 = vld [vmem:[%s341 + $0xe8] sm:$0xe]
        %v6558 = vld [vmem:[%s341 + $0xec] sm:$0xf]
        %v6559 = vld [vmem:[%s341 + $0xf0] sm:$0x1]
        %v6560 = vld [vmem:[%s341 + $0x104] sm:$0xe]
        %v6561 = vld [vmem:[%s341 + $0x108] sm:$0xf]
        %v6562 = vld [vmem:[%s341 + $0x10c] sm:$0x1]
        %v6563 = vld [vmem:[%s341 + $0x120] sm:$0xe]
        %v6564 = vld [vmem:[%s341 + $0x124] sm:$0xf]
        %v6565 = vld [vmem:[%s341 + $0x128] sm:$0x1]
        %v6566 = vld [vmem:[%s341 + $0x13c] sm:$0xe]
        %v6567 = vld [vmem:[%s341 + $0x140] sm:$0xf]
        %v6568 = vld [vmem:[%s341 + $0x144] sm:$0x1]
        %v6569 = vld [vmem:[%s341 + $0x158] sm:$0xe]
        %v6570 = vld [vmem:[%s341 + $0x15c] sm:$0xf]
        %v6571 = vld [vmem:[%s341 + $0x160] sm:$0x1]
        %v6572 = vld [vmem:[%s341 + $0x174] sm:$0xe]
        %v6573 = vld [vmem:[%s341 + $0x178] sm:$0xf]
        %v6574 = vld [vmem:[%s341 + $0x17c] sm:$0x1]
        %v6575 = vld [vmem:[%s341 + $0x190] sm:$0xe]
        %v6576 = vld [vmem:[%s341 + $0x194] sm:$0xf]
        %v6577 = vld [vmem:[%s341 + $0x198] sm:$0x1]
        %v6578 = vld [vmem:[%s341 + $0x1ac] sm:$0xe]
        %v6579 = vld [vmem:[%s341 + $0x1b0] sm:$0xf]
        %v6580 = vld [vmem:[%s341 + $0x1b4] sm:$0x1]
        %v6581 = vunpack.c.l.bf16 %v6533
        %v6582 = vunpack.c.l.bf16 %v6534
        %v6583 = vunpack.c.l.bf16 %v6535
        %v6584 = vunpack.c.l.bf16 %v6536
        %v6585 = vunpack.c.l.bf16 %v6537
        %v6586 = vunpack.c.l.bf16 %v6538
        %v6587 = vunpack.c.l.bf16 %v6539
        %v6588 = vunpack.c.l.bf16 %v6540
        %v6589 = vunpack.c.l.bf16 %v6541
        %v6590 = vunpack.c.l.bf16 %v6542
        %v6591 = vunpack.c.l.bf16 %v6543
        %v6592 = vunpack.c.l.bf16 %v6544
        %v6593 = vunpack.c.l.bf16 %v6545
        %v6594 = vunpack.c.l.bf16 %v6546
        %v6595 = vunpack.c.l.bf16 %v6547
        %v6596 = vunpack.c.l.bf16 %v6548
        %v6597 = vunpack.c.l.bf16 %v6549
        %v6598 = vunpack.c.l.bf16 %v6550
        %v6599 = vunpack.c.l.bf16 %v6551
        %v6600 = vunpack.c.l.bf16 %v6552
        %v6601 = vunpack.c.l.bf16 %v6553
        %v6602 = vunpack.c.l.bf16 %v6554
        %v6603 = vunpack.c.l.bf16 %v6555
        %v6604 = vunpack.c.l.bf16 %v6556
        %v6605 = vunpack.c.l.bf16 %v6557
        %v6606 = vunpack.c.l.bf16 %v6558
        %v6607 = vunpack.c.l.bf16 %v6559
        %v6608 = vunpack.c.l.bf16 %v6560
        %v6609 = vunpack.c.l.bf16 %v6561
        %v6610 = vunpack.c.l.bf16 %v6562
        %v6611 = vunpack.c.l.bf16 %v6563
        %v6612 = vunpack.c.l.bf16 %v6564
        %v6613 = vunpack.c.l.bf16 %v6565
        %v6614 = vunpack.c.l.bf16 %v6566
        %v6615 = vunpack.c.l.bf16 %v6567
        %v6616 = vunpack.c.l.bf16 %v6568
        %v6617 = vunpack.c.l.bf16 %v6569
        %v6618 = vunpack.c.l.bf16 %v6570
        %v6619 = vunpack.c.l.bf16 %v6571
        %v6620 = vunpack.c.l.bf16 %v6572
        %v6621 = vunpack.c.l.bf16 %v6573
        %v6622 = vunpack.c.l.bf16 %v6574
        %v6623 = vunpack.c.l.bf16 %v6575
        %v6624 = vunpack.c.l.bf16 %v6576
        %v6625 = vunpack.c.l.bf16 %v6577
        %v6626 = vunpack.c.l.bf16 %v6578
        %v6627 = vunpack.c.l.bf16 %v6579
        %v6628 = vunpack.c.l.bf16 %v6580
        %v6629 = vld [vmem:[%s6466 + $0x1] sm:$0x1]
        %v6630 = vperm.slane %v6629, 0
        %v6631 = vmul.f32 %v6581, %v6630
        %v6632 = vmul.f32 %v6582, %v6630
        %v6633 = vmul.f32 %v6583, %v6630
        %v6634 = vmul.f32 %v6584, %v6630
        %v6635 = vmul.f32 %v6585, %v6630
        %v6636 = vmul.f32 %v6586, %v6630
        %v6637 = vmul.f32 %v6587, %v6630
        %v6638 = vmul.f32 %v6588, %v6630
        %v6639 = vmul.f32 %v6589, %v6630
        %v6640 = vmul.f32 %v6590, %v6630
        %v6641 = vmul.f32 %v6591, %v6630
        %v6642 = vmul.f32 %v6592, %v6630
        %v6643 = vmul.f32 %v6593, %v6630
        %v6644 = vmul.f32 %v6594, %v6630
        %v6645 = vmul.f32 %v6595, %v6630
        %v6646 = vmul.f32 %v6596, %v6630
        %v6647 = vmul.f32 %v6597, %v6630
        %v6648 = vmul.f32 %v6598, %v6630
        %v6649 = vmul.f32 %v6599, %v6630
        %v6650 = vmul.f32 %v6600, %v6630
        %v6651 = vmul.f32 %v6601, %v6630
        %v6652 = vmul.f32 %v6602, %v6630
        %v6653 = vmul.f32 %v6603, %v6630
        %v6654 = vmul.f32 %v6604, %v6630
        %v6655 = vmul.f32 %v6605, %v6630
        %v6656 = vmul.f32 %v6606, %v6630
        %v6657 = vmul.f32 %v6607, %v6630
        %v6658 = vmul.f32 %v6608, %v6630
        %v6659 = vmul.f32 %v6609, %v6630
        %v6660 = vmul.f32 %v6610, %v6630
        %v6661 = vmul.f32 %v6611, %v6630
        %v6662 = vmul.f32 %v6612, %v6630
        %v6663 = vmul.f32 %v6613, %v6630
        %v6664 = vmul.f32 %v6614, %v6630
        %v6665 = vmul.f32 %v6615, %v6630
        %v6666 = vmul.f32 %v6616, %v6630
        %v6667 = vmul.f32 %v6617, %v6630
        %v6668 = vmul.f32 %v6618, %v6630
        %v6669 = vmul.f32 %v6619, %v6630
        %v6670 = vmul.f32 %v6620, %v6630
        %v6671 = vmul.f32 %v6621, %v6630
        %v6672 = vmul.f32 %v6622, %v6630
        %v6673 = vmul.f32 %v6623, %v6630
        %v6674 = vmul.f32 %v6624, %v6630
        %v6675 = vmul.f32 %v6625, %v6630
        %v6676 = vmul.f32 %v6626, %v6630
        %v6677 = vmul.f32 %v6627, %v6630
        %v6678 = vmul.f32 %v6628, %v6630
        %v6727 = vrot.slane %v6631, 2
        %v6728 = vrot.slane %v6632, 2
        %v6729 = vsel %vm690, %v6727, %v6728
        %v6730 = vrot.slane %v6633, 2
        %v6731 = vsel %vm690, %v6728, %v6730
        %v6732 = vrot.slane %v6634, 2
        %v6733 = vrot.slane %v6635, 2
        %v6734 = vsel %vm690, %v6732, %v6733
        %v6735 = vrot.slane %v6636, 2
        %v6736 = vsel %vm690, %v6733, %v6735
        %v6737 = vrot.slane %v6637, 2
        %v6738 = vrot.slane %v6638, 2
        %v6739 = vsel %vm690, %v6737, %v6738
        %v6740 = vrot.slane %v6639, 2
        %v6741 = vsel %vm690, %v6738, %v6740
        %v6742 = vrot.slane %v6640, 2
        %v6743 = vrot.slane %v6641, 2
        %v6744 = vsel %vm690, %v6742, %v6743
        %v6745 = vrot.slane %v6642, 2
        %v6746 = vsel %vm690, %v6743, %v6745
        %v6747 = vrot.slane %v6643, 2
        %v6748 = vrot.slane %v6644, 2
        %v6749 = vsel %vm690, %v6747, %v6748
        %v6750 = vrot.slane %v6645, 2
        %v6751 = vsel %vm690, %v6748, %v6750
        %v6752 = vrot.slane %v6646, 2
        %v6753 = vrot.slane %v6647, 2
        %v6754 = vsel %vm690, %v6752, %v6753
        %v6755 = vrot.slane %v6648, 2
        %v6756 = vsel %vm690, %v6753, %v6755
        %v6757 = vrot.slane %v6649, 2
        %v6758 = vrot.slane %v6650, 2
        %v6759 = vsel %vm690, %v6757, %v6758
        %v6760 = vrot.slane %v6651, 2
        %v6761 = vsel %vm690, %v6758, %v6760
        %v6762 = vrot.slane %v6652, 2
        %v6763 = vrot.slane %v6653, 2
        %v6764 = vsel %vm690, %v6762, %v6763
        %v6765 = vrot.slane %v6654, 2
        %v6766 = vsel %vm690, %v6763, %v6765
        %v6767 = vrot.slane %v6655, 2
        %v6768 = vrot.slane %v6656, 2
        %v6769 = vsel %vm690, %v6767, %v6768
        %v6770 = vrot.slane %v6657, 2
        %v6771 = vsel %vm690, %v6768, %v6770
        %v6772 = vrot.slane %v6658, 2
        %v6773 = vrot.slane %v6659, 2
        %v6774 = vsel %vm690, %v6772, %v6773
        %v6775 = vrot.slane %v6660, 2
        %v6776 = vsel %vm690, %v6773, %v6775
        %v6777 = vrot.slane %v6661, 2
        %v6778 = vrot.slane %v6662, 2
        %v6779 = vsel %vm690, %v6777, %v6778
        %v6780 = vrot.slane %v6663, 2
        %v6781 = vsel %vm690, %v6778, %v6780
        %v6782 = vrot.slane %v6664, 2
        %v6783 = vrot.slane %v6665, 2
        %v6784 = vsel %vm690, %v6782, %v6783
        %v6785 = vrot.slane %v6666, 2
        %v6786 = vsel %vm690, %v6783, %v6785
        %v6787 = vrot.slane %v6667, 2
        %v6788 = vrot.slane %v6668, 2
        %v6789 = vsel %vm690, %v6787, %v6788
        %v6790 = vrot.slane %v6669, 2
        %v6791 = vsel %vm690, %v6788, %v6790
        %v6792 = vrot.slane %v6670, 2
        %v6793 = vrot.slane %v6671, 2
        %v6794 = vsel %vm690, %v6792, %v6793
        %v6795 = vrot.slane %v6672, 2
        %v6796 = vsel %vm690, %v6793, %v6795
        %v6797 = vrot.slane %v6673, 2
        %v6798 = vrot.slane %v6674, 2
        %v6799 = vsel %vm690, %v6797, %v6798
        %v6800 = vrot.slane %v6675, 2
        %v6801 = vsel %vm690, %v6798, %v6800
        %v6802 = vrot.slane %v6676, 2
        %v6803 = vrot.slane %v6677, 2
        %v6804 = vsel %vm690, %v6802, %v6803
        %v6805 = vrot.slane %v6678, 2
        %v6806 = vsel %vm690, %v6803, %v6805
        %v6839 = vadd.f32 %v6501, %v6729
        %v6840 = vadd.f32 %v6502, %v6731
        %v6841 = vadd.f32 %v6503, %v6734
        %v6842 = vadd.f32 %v6504, %v6736
        %v6843 = vadd.f32 %v6505, %v6739
        %v6844 = vadd.f32 %v6506, %v6741
        %v6845 = vadd.f32 %v6507, %v6744
        %v6846 = vadd.f32 %v6508, %v6746
        %v6847 = vadd.f32 %v6509, %v6749
        %v6848 = vadd.f32 %v6510, %v6751
        %v6849 = vadd.f32 %v6511, %v6754
        %v6850 = vadd.f32 %v6512, %v6756
        %v6851 = vadd.f32 %v6513, %v6759
        %v6852 = vadd.f32 %v6514, %v6761
        %v6853 = vadd.f32 %v6515, %v6764
        %v6854 = vadd.f32 %v6516, %v6766
        %v6855 = vadd.f32 %v6517, %v6769
        %v6856 = vadd.f32 %v6518, %v6771
        %v6857 = vadd.f32 %v6519, %v6774
        %v6858 = vadd.f32 %v6520, %v6776
        %v6859 = vadd.f32 %v6521, %v6779
        %v6860 = vadd.f32 %v6522, %v6781
        %v6861 = vadd.f32 %v6523, %v6784
        %v6862 = vadd.f32 %v6524, %v6786
        %v6863 = vadd.f32 %v6525, %v6789
        %v6864 = vadd.f32 %v6526, %v6791
        %v6865 = vadd.f32 %v6527, %v6794
        %v6866 = vadd.f32 %v6528, %v6796
        %v6867 = vadd.f32 %v6529, %v6799
        %v6868 = vadd.f32 %v6530, %v6801
        %v6869 = vadd.f32 %v6531, %v6804
        %v6870 = vadd.f32 %v6532, %v6806
        %v6871 = vld [vmem:[%s341 + $0x10] sm:$0xc]
        %v6872 = vld [vmem:[%s341 + $0x14] sm:$0xf]
        %v6873 = vld [vmem:[%s341 + $0x18] sm:$0x3]
        %v6874 = vld [vmem:[%s341 + $0x2c] sm:$0xc]
        %v6875 = vld [vmem:[%s341 + $0x30] sm:$0xf]
        %v6876 = vld [vmem:[%s341 + $0x34] sm:$0x3]
        %v6877 = vld [vmem:[%s341 + $0x48] sm:$0xc]
        %v6878 = vld [vmem:[%s341 + $0x4c] sm:$0xf]
        %v6879 = vld [vmem:[%s341 + $0x50] sm:$0x3]
        %v6880 = vld [vmem:[%s341 + $0x64] sm:$0xc]
        %v6881 = vld [vmem:[%s341 + $0x68] sm:$0xf]
        %v6882 = vld [vmem:[%s341 + $0x6c] sm:$0x3]
        %v6883 = vld [vmem:[%s341 + $0x80] sm:$0xc]
        %v6884 = vld [vmem:[%s341 + $0x84] sm:$0xf]
        %v6885 = vld [vmem:[%s341 + $0x88] sm:$0x3]
        %v6886 = vld [vmem:[%s341 + $0x9c] sm:$0xc]
        %v6887 = vld [vmem:[%s341 + $0xa0] sm:$0xf]
        %v6888 = vld [vmem:[%s341 + $0xa4] sm:$0x3]
        %v6889 = vld [vmem:[%s341 + $0xb8] sm:$0xc]
        %v6890 = vld [vmem:[%s341 + $0xbc] sm:$0xf]
        %v6891 = vld [vmem:[%s341 + $0xc0] sm:$0x3]
        %v6892 = vld [vmem:[%s341 + $0xd4] sm:$0xc]
        %v6893 = vld [vmem:[%s341 + $0xd8] sm:$0xf]
        %v6894 = vld [vmem:[%s341 + $0xdc] sm:$0x3]
        %v6895 = vld [vmem:[%s341 + $0xf0] sm:$0xc]
        %v6896 = vld [vmem:[%s341 + $0xf4] sm:$0xf]
        %v6897 = vld [vmem:[%s341 + $0xf8] sm:$0x3]
        %v6898 = vld [vmem:[%s341 + $0x10c] sm:$0xc]
        %v6899 = vld [vmem:[%s341 + $0x110] sm:$0xf]
        %v6900 = vld [vmem:[%s341 + $0x114] sm:$0x3]
        %v6901 = vld [vmem:[%s341 + $0x128] sm:$0xc]
        %v6902 = vld [vmem:[%s341 + $0x12c] sm:$0xf]
        %v6903 = vld [vmem:[%s341 + $0x130] sm:$0x3]
        %v6904 = vld [vmem:[%s341 + $0x144] sm:$0xc]
        %v6905 = vld [vmem:[%s341 + $0x148] sm:$0xf]
        %v6906 = vld [vmem:[%s341 + $0x14c] sm:$0x3]
        %v6907 = vld [vmem:[%s341 + $0x160] sm:$0xc]
        %v6908 = vld [vmem:[%s341 + $0x164] sm:$0xf]
        %v6909 = vld [vmem:[%s341 + $0x168] sm:$0x3]
        %v6910 = vld [vmem:[%s341 + $0x17c] sm:$0xc]
        %v6911 = vld [vmem:[%s341 + $0x180] sm:$0xf]
        %v6912 = vld [vmem:[%s341 + $0x184] sm:$0x3]
        %v6913 = vld [vmem:[%s341 + $0x198] sm:$0xc]
        %v6914 = vld [vmem:[%s341 + $0x19c] sm:$0xf]
        %v6915 = vld [vmem:[%s341 + $0x1a0] sm:$0x3]
        %v6916 = vld [vmem:[%s341 + $0x1b4] sm:$0xc]
        %v6917 = vld [vmem:[%s341 + $0x1b8] sm:$0xf]
        %v6918 = vld [vmem:[%s341 + $0x1bc] sm:$0x3]
        %v6919 = vunpack.c.l.bf16 %v6871
        %v6920 = vunpack.c.l.bf16 %v6872
        %v6921 = vunpack.c.l.bf16 %v6873
        %v6922 = vunpack.c.l.bf16 %v6874
        %v6923 = vunpack.c.l.bf16 %v6875
        %v6924 = vunpack.c.l.bf16 %v6876
        %v6925 = vunpack.c.l.bf16 %v6877
        %v6926 = vunpack.c.l.bf16 %v6878
        %v6927 = vunpack.c.l.bf16 %v6879
        %v6928 = vunpack.c.l.bf16 %v6880
        %v6929 = vunpack.c.l.bf16 %v6881
        %v6930 = vunpack.c.l.bf16 %v6882
        %v6931 = vunpack.c.l.bf16 %v6883
        %v6932 = vunpack.c.l.bf16 %v6884
        %v6933 = vunpack.c.l.bf16 %v6885
        %v6934 = vunpack.c.l.bf16 %v6886
        %v6935 = vunpack.c.l.bf16 %v6887
        %v6936 = vunpack.c.l.bf16 %v6888
        %v6937 = vunpack.c.l.bf16 %v6889
        %v6938 = vunpack.c.l.bf16 %v6890
        %v6939 = vunpack.c.l.bf16 %v6891
        %v6940 = vunpack.c.l.bf16 %v6892
        %v6941 = vunpack.c.l.bf16 %v6893
        %v6942 = vunpack.c.l.bf16 %v6894
        %v6943 = vunpack.c.l.bf16 %v6895
        %v6944 = vunpack.c.l.bf16 %v6896
        %v6945 = vunpack.c.l.bf16 %v6897
        %v6946 = vunpack.c.l.bf16 %v6898
        %v6947 = vunpack.c.l.bf16 %v6899
        %v6948 = vunpack.c.l.bf16 %v6900
        %v6949 = vunpack.c.l.bf16 %v6901
        %v6950 = vunpack.c.l.bf16 %v6902
        %v6951 = vunpack.c.l.bf16 %v6903
        %v6952 = vunpack.c.l.bf16 %v6904
        %v6953 = vunpack.c.l.bf16 %v6905
        %v6954 = vunpack.c.l.bf16 %v6906
        %v6955 = vunpack.c.l.bf16 %v6907
        %v6956 = vunpack.c.l.bf16 %v6908
        %v6957 = vunpack.c.l.bf16 %v6909
        %v6958 = vunpack.c.l.bf16 %v6910
        %v6959 = vunpack.c.l.bf16 %v6911
        %v6960 = vunpack.c.l.bf16 %v6912
        %v6961 = vunpack.c.l.bf16 %v6913
        %v6962 = vunpack.c.l.bf16 %v6914
        %v6963 = vunpack.c.l.bf16 %v6915
        %v6964 = vunpack.c.l.bf16 %v6916
        %v6965 = vunpack.c.l.bf16 %v6917
        %v6966 = vunpack.c.l.bf16 %v6918
        %v6967 = vld [vmem:[%s6466 + $0x2] sm:$0x1]
        %v6968 = vperm.slane %v6967, 0
        %v6969 = vmul.f32 %v6919, %v6968
        %v6970 = vmul.f32 %v6920, %v6968
        %v6971 = vmul.f32 %v6921, %v6968
        %v6972 = vmul.f32 %v6922, %v6968
        %v6973 = vmul.f32 %v6923, %v6968
        %v6974 = vmul.f32 %v6924, %v6968
        %v6975 = vmul.f32 %v6925, %v6968
        %v6976 = vmul.f32 %v6926, %v6968
        %v6977 = vmul.f32 %v6927, %v6968
        %v6978 = vmul.f32 %v6928, %v6968
        %v6979 = vmul.f32 %v6929, %v6968
        %v6980 = vmul.f32 %v6930, %v6968
        %v6981 = vmul.f32 %v6931, %v6968
        %v6982 = vmul.f32 %v6932, %v6968
        %v6983 = vmul.f32 %v6933, %v6968
        %v6984 = vmul.f32 %v6934, %v6968
        %v6985 = vmul.f32 %v6935, %v6968
        %v6986 = vmul.f32 %v6936, %v6968
        %v6987 = vmul.f32 %v6937, %v6968
        %v6988 = vmul.f32 %v6938, %v6968
        %v6989 = vmul.f32 %v6939, %v6968
        %v6990 = vmul.f32 %v6940, %v6968
        %v6991 = vmul.f32 %v6941, %v6968
        %v6992 = vmul.f32 %v6942, %v6968
        %v6993 = vmul.f32 %v6943, %v6968
        %v6994 = vmul.f32 %v6944, %v6968
        %v6995 = vmul.f32 %v6945, %v6968
        %v6996 = vmul.f32 %v6946, %v6968
        %v6997 = vmul.f32 %v6947, %v6968
        %v6998 = vmul.f32 %v6948, %v6968
        %v6999 = vmul.f32 %v6949, %v6968
        %v7000 = vmul.f32 %v6950, %v6968
        %v7001 = vmul.f32 %v6951, %v6968
        %v7002 = vmul.f32 %v6952, %v6968
        %v7003 = vmul.f32 %v6953, %v6968
        %v7004 = vmul.f32 %v6954, %v6968
        %v7005 = vmul.f32 %v6955, %v6968
        %v7006 = vmul.f32 %v6956, %v6968
        %v7007 = vmul.f32 %v6957, %v6968
        %v7008 = vmul.f32 %v6958, %v6968
        %v7009 = vmul.f32 %v6959, %v6968
        %v7010 = vmul.f32 %v6960, %v6968
        %v7011 = vmul.f32 %v6961, %v6968
        %v7012 = vmul.f32 %v6962, %v6968
        %v7013 = vmul.f32 %v6963, %v6968
        %v7014 = vmul.f32 %v6964, %v6968
        %v7015 = vmul.f32 %v6965, %v6968
        %v7016 = vmul.f32 %v6966, %v6968
        %v7065 = vrot.slane %v6969, 4
        %v7066 = vrot.slane %v6970, 4
        %v7067 = vsel %vm1439, %v7065, %v7066
        %v7068 = vrot.slane %v6971, 4
        %v7069 = vsel %vm1439, %v7066, %v7068
        %v7070 = vrot.slane %v6972, 4
        %v7071 = vrot.slane %v6973, 4
        %v7072 = vsel %vm1439, %v7070, %v7071
        %v7073 = vrot.slane %v6974, 4
        %v7074 = vsel %vm1439, %v7071, %v7073
        %v7075 = vrot.slane %v6975, 4
        %v7076 = vrot.slane %v6976, 4
        %v7077 = vsel %vm1439, %v7075, %v7076
        %v7078 = vrot.slane %v6977, 4
        %v7079 = vsel %vm1439, %v7076, %v7078
        %v7080 = vrot.slane %v6978, 4
        %v7081 = vrot.slane %v6979, 4
        %v7082 = vsel %vm1439, %v7080, %v7081
        %v7083 = vrot.slane %v6980, 4
        %v7084 = vsel %vm1439, %v7081, %v7083
        %v7085 = vrot.slane %v6981, 4
        %v7086 = vrot.slane %v6982, 4
        %v7087 = vsel %vm1439, %v7085, %v7086
        %v7088 = vrot.slane %v6983, 4
        %v7089 = vsel %vm1439, %v7086, %v7088
        %v7090 = vrot.slane %v6984, 4
        %v7091 = vrot.slane %v6985, 4
        %v7092 = vsel %vm1439, %v7090, %v7091
        %v7093 = vrot.slane %v6986, 4
        %v7094 = vsel %vm1439, %v7091, %v7093
        %v7095 = vrot.slane %v6987, 4
        %v7096 = vrot.slane %v6988, 4
        %v7097 = vsel %vm1439, %v7095, %v7096
        %v7098 = vrot.slane %v6989, 4
        %v7099 = vsel %vm1439, %v7096, %v7098
        %v7100 = vrot.slane %v6990, 4
        %v7101 = vrot.slane %v6991, 4
        %v7102 = vsel %vm1439, %v7100, %v7101
        %v7103 = vrot.slane %v6992, 4
        %v7104 = vsel %vm1439, %v7101, %v7103
        %v7105 = vrot.slane %v6993, 4
        %v7106 = vrot.slane %v6994, 4
        %v7107 = vsel %vm1439, %v7105, %v7106
        %v7108 = vrot.slane %v6995, 4
        %v7109 = vsel %vm1439, %v7106, %v7108
        %v7110 = vrot.slane %v6996, 4
        %v7111 = vrot.slane %v6997, 4
        %v7112 = vsel %vm1439, %v7110, %v7111
        %v7113 = vrot.slane %v6998, 4
        %v7114 = vsel %vm1439, %v7111, %v7113
        %v7115 = vrot.slane %v6999, 4
        %v7116 = vrot.slane %v7000, 4
        %v7117 = vsel %vm1439, %v7115, %v7116
        %v7118 = vrot.slane %v7001, 4
        %v7119 = vsel %vm1439, %v7116, %v7118
        %v7120 = vrot.slane %v7002, 4
        %v7121 = vrot.slane %v7003, 4
        %v7122 = vsel %vm1439, %v7120, %v7121
        %v7123 = vrot.slane %v7004, 4
        %v7124 = vsel %vm1439, %v7121, %v7123
        %v7125 = vrot.slane %v7005, 4
        %v7126 = vrot.slane %v7006, 4
        %v7127 = vsel %vm1439, %v7125, %v7126
        %v7128 = vrot.slane %v7007, 4
        %v7129 = vsel %vm1439, %v7126, %v7128
        %v7130 = vrot.slane %v7008, 4
        %v7131 = vrot.slane %v7009, 4
        %v7132 = vsel %vm1439, %v7130, %v7131
        %v7133 = vrot.slane %v7010, 4
        %v7134 = vsel %vm1439, %v7131, %v7133
        %v7135 = vrot.slane %v7011, 4
        %v7136 = vrot.slane %v7012, 4
        %v7137 = vsel %vm1439, %v7135, %v7136
        %v7138 = vrot.slane %v7013, 4
        %v7139 = vsel %vm1439, %v7136, %v7138
        %v7140 = vrot.slane %v7014, 4
        %v7141 = vrot.slane %v7015, 4
        %v7142 = vsel %vm1439, %v7140, %v7141
        %v7143 = vrot.slane %v7016, 4
        %v7144 = vsel %vm1439, %v7141, %v7143
        %v7177 = vadd.f32 %v6839, %v7067
        %v7178 = vadd.f32 %v6840, %v7069
        %v7179 = vadd.f32 %v6841, %v7072
        %v7180 = vadd.f32 %v6842, %v7074
        %v7181 = vadd.f32 %v6843, %v7077
        %v7182 = vadd.f32 %v6844, %v7079
        %v7183 = vadd.f32 %v6845, %v7082
        %v7184 = vadd.f32 %v6846, %v7084
        %v7185 = vadd.f32 %v6847, %v7087
        %v7186 = vadd.f32 %v6848, %v7089
        %v7187 = vadd.f32 %v6849, %v7092
        %v7188 = vadd.f32 %v6850, %v7094
        %v7189 = vadd.f32 %v6851, %v7097
        %v7190 = vadd.f32 %v6852, %v7099
        %v7191 = vadd.f32 %v6853, %v7102
        %v7192 = vadd.f32 %v6854, %v7104
        %v7193 = vadd.f32 %v6855, %v7107
        %v7194 = vadd.f32 %v6856, %v7109
        %v7195 = vadd.f32 %v6857, %v7112
        %v7196 = vadd.f32 %v6858, %v7114
        %v7197 = vadd.f32 %v6859, %v7117
        %v7198 = vadd.f32 %v6860, %v7119
        %v7199 = vadd.f32 %v6861, %v7122
        %v7200 = vadd.f32 %v6862, %v7124
        %v7201 = vadd.f32 %v6863, %v7127
        %v7202 = vadd.f32 %v6864, %v7129
        %v7203 = vadd.f32 %v6865, %v7132
        %v7204 = vadd.f32 %v6866, %v7134
        %v7205 = vadd.f32 %v6867, %v7137
        %v7206 = vadd.f32 %v6868, %v7139
        %v7207 = vadd.f32 %v6869, %v7142
        %v7208 = vadd.f32 %v6870, %v7144
        %v7209 = vld [vmem:[%s345] sm:$0xf]
        %v7210 = vld [vmem:[%s345 + $0x4] sm:$0xf]
        %v7211 = vld [vmem:[%s345 + $0x1c] sm:$0xf]
        %v7212 = vld [vmem:[%s345 + $0x20] sm:$0xf]
        %v7213 = vld [vmem:[%s345 + $0x38] sm:$0xf]
        %v7214 = vld [vmem:[%s345 + $0x3c] sm:$0xf]
        %v7215 = vld [vmem:[%s345 + $0x54] sm:$0xf]
        %v7216 = vld [vmem:[%s345 + $0x58] sm:$0xf]
        %v7217 = vld [vmem:[%s345 + $0x70] sm:$0xf]
        %v7218 = vld [vmem:[%s345 + $0x74] sm:$0xf]
        %v7219 = vld [vmem:[%s345 + $0x8c] sm:$0xf]
        %v7220 = vld [vmem:[%s345 + $0x90] sm:$0xf]
        %v7221 = vld [vmem:[%s345 + $0xa8] sm:$0xf]
        %v7222 = vld [vmem:[%s345 + $0xac] sm:$0xf]
        %v7223 = vld [vmem:[%s345 + $0xc4] sm:$0xf]
        %v7224 = vld [vmem:[%s345 + $0xc8] sm:$0xf]
        %v7225 = vld [vmem:[%s345 + $0xe0] sm:$0xf]
        %v7226 = vld [vmem:[%s345 + $0xe4] sm:$0xf]
        %v7227 = vld [vmem:[%s345 + $0xfc] sm:$0xf]
        %v7228 = vld [vmem:[%s345 + $0x100] sm:$0xf]
        %v7229 = vld [vmem:[%s345 + $0x118] sm:$0xf]
        %v7230 = vld [vmem:[%s345 + $0x11c] sm:$0xf]
        %v7231 = vld [vmem:[%s345 + $0x134] sm:$0xf]
        %v7232 = vld [vmem:[%s345 + $0x138] sm:$0xf]
        %v7233 = vld [vmem:[%s345 + $0x150] sm:$0xf]
        %v7234 = vld [vmem:[%s345 + $0x154] sm:$0xf]
        %v7235 = vld [vmem:[%s345 + $0x16c] sm:$0xf]
        %v7236 = vld [vmem:[%s345 + $0x170] sm:$0xf]
        %v7237 = vld [vmem:[%s345 + $0x188] sm:$0xf]
        %v7238 = vld [vmem:[%s345 + $0x18c] sm:$0xf]
        %v7239 = vld [vmem:[%s345 + $0x1a4] sm:$0xf]
        %v7240 = vld [vmem:[%s345 + $0x1a8] sm:$0xf]
        %v7241 = vunpack.c.l.bf16 %v7209
        %v7242 = vunpack.c.l.bf16 %v7210
        %v7243 = vunpack.c.l.bf16 %v7211
        %v7244 = vunpack.c.l.bf16 %v7212
        %v7245 = vunpack.c.l.bf16 %v7213
        %v7246 = vunpack.c.l.bf16 %v7214
        %v7247 = vunpack.c.l.bf16 %v7215
        %v7248 = vunpack.c.l.bf16 %v7216
        %v7249 = vunpack.c.l.bf16 %v7217
        %v7250 = vunpack.c.l.bf16 %v7218
        %v7251 = vunpack.c.l.bf16 %v7219
        %v7252 = vunpack.c.l.bf16 %v7220
        %v7253 = vunpack.c.l.bf16 %v7221
        %v7254 = vunpack.c.l.bf16 %v7222
        %v7255 = vunpack.c.l.bf16 %v7223
        %v7256 = vunpack.c.l.bf16 %v7224
        %v7257 = vunpack.c.l.bf16 %v7225
        %v7258 = vunpack.c.l.bf16 %v7226
        %v7259 = vunpack.c.l.bf16 %v7227
        %v7260 = vunpack.c.l.bf16 %v7228
        %v7261 = vunpack.c.l.bf16 %v7229
        %v7262 = vunpack.c.l.bf16 %v7230
        %v7263 = vunpack.c.l.bf16 %v7231
        %v7264 = vunpack.c.l.bf16 %v7232
        %v7265 = vunpack.c.l.bf16 %v7233
        %v7266 = vunpack.c.l.bf16 %v7234
        %v7267 = vunpack.c.l.bf16 %v7235
        %v7268 = vunpack.c.l.bf16 %v7236
        %v7269 = vunpack.c.l.bf16 %v7237
        %v7270 = vunpack.c.l.bf16 %v7238
        %v7271 = vunpack.c.l.bf16 %v7239
        %v7272 = vunpack.c.l.bf16 %v7240
        %v7273 = vld [vmem:[%s6466 + $0x3] sm:$0x1]
        %v7274 = vperm.slane %v7273, 0
        %v7275 = vmul.f32 %v7241, %v7274
        %v7276 = vmul.f32 %v7242, %v7274
        %v7277 = vmul.f32 %v7243, %v7274
        %v7278 = vmul.f32 %v7244, %v7274
        %v7279 = vmul.f32 %v7245, %v7274
        %v7280 = vmul.f32 %v7246, %v7274
        %v7281 = vmul.f32 %v7247, %v7274
        %v7282 = vmul.f32 %v7248, %v7274
        %v7283 = vmul.f32 %v7249, %v7274
        %v7284 = vmul.f32 %v7250, %v7274
        %v7285 = vmul.f32 %v7251, %v7274
        %v7286 = vmul.f32 %v7252, %v7274
        %v7287 = vmul.f32 %v7253, %v7274
        %v7288 = vmul.f32 %v7254, %v7274
        %v7289 = vmul.f32 %v7255, %v7274
        %v7290 = vmul.f32 %v7256, %v7274
        %v7291 = vmul.f32 %v7257, %v7274
        %v7292 = vmul.f32 %v7258, %v7274
        %v7293 = vmul.f32 %v7259, %v7274
        %v7294 = vmul.f32 %v7260, %v7274
        %v7295 = vmul.f32 %v7261, %v7274
        %v7296 = vmul.f32 %v7262, %v7274
        %v7297 = vmul.f32 %v7263, %v7274
        %v7298 = vmul.f32 %v7264, %v7274
        %v7299 = vmul.f32 %v7265, %v7274
        %v7300 = vmul.f32 %v7266, %v7274
        %v7301 = vmul.f32 %v7267, %v7274
        %v7302 = vmul.f32 %v7268, %v7274
        %v7303 = vmul.f32 %v7269, %v7274
        %v7304 = vmul.f32 %v7270, %v7274
        %v7305 = vmul.f32 %v7271, %v7274
        %v7306 = vmul.f32 %v7272, %v7274
        %v7307 = vadd.f32 %v7177, %v7275
        %v7308 = vadd.f32 %v7178, %v7276
        %v7309 = vadd.f32 %v7179, %v7277
        %v7310 = vadd.f32 %v7180, %v7278
        %v7311 = vadd.f32 %v7181, %v7279
        %v7312 = vadd.f32 %v7182, %v7280
        %v7313 = vadd.f32 %v7183, %v7281
        %v7314 = vadd.f32 %v7184, %v7282
        %v7315 = vadd.f32 %v7185, %v7283
        %v7316 = vadd.f32 %v7186, %v7284
        %v7317 = vadd.f32 %v7187, %v7285
        %v7318 = vadd.f32 %v7188, %v7286
        %v7319 = vadd.f32 %v7189, %v7287
        %v7320 = vadd.f32 %v7190, %v7288
        %v7321 = vadd.f32 %v7191, %v7289
        %v7322 = vadd.f32 %v7192, %v7290
        %v7323 = vadd.f32 %v7193, %v7291
        %v7324 = vadd.f32 %v7194, %v7292
        %v7325 = vadd.f32 %v7195, %v7293
        %v7326 = vadd.f32 %v7196, %v7294
        %v7327 = vadd.f32 %v7197, %v7295
        %v7328 = vadd.f32 %v7198, %v7296
        %v7329 = vadd.f32 %v7199, %v7297
        %v7330 = vadd.f32 %v7200, %v7298
        %v7331 = vadd.f32 %v7201, %v7299
        %v7332 = vadd.f32 %v7202, %v7300
        %v7333 = vadd.f32 %v7203, %v7301
        %v7334 = vadd.f32 %v7204, %v7302
        %v7335 = vadd.f32 %v7205, %v7303
        %v7336 = vadd.f32 %v7206, %v7304
        %v7337 = vadd.f32 %v7207, %v7305
        %v7338 = vadd.f32 %v7208, %v7306
        %v7339 = vld [vmem:[%s6466 + $0x4] sm:$0x1]
        %v7340 = vperm.slane %v7339, 0
        %v7341 = vmul.f32 %v394, %v7340
        %v7342 = vmul.f32 %v395, %v7340
        %v7343 = vmul.f32 %v396, %v7340
        %v7344 = vmul.f32 %v397, %v7340
        %v7345 = vmul.f32 %v398, %v7340
        %v7346 = vmul.f32 %v399, %v7340
        %v7347 = vmul.f32 %v400, %v7340
        %v7348 = vmul.f32 %v401, %v7340
        %v7349 = vmul.f32 %v402, %v7340
        %v7350 = vmul.f32 %v403, %v7340
        %v7351 = vmul.f32 %v404, %v7340
        %v7352 = vmul.f32 %v405, %v7340
        %v7353 = vmul.f32 %v406, %v7340
        %v7354 = vmul.f32 %v407, %v7340
        %v7355 = vmul.f32 %v408, %v7340
        %v7356 = vmul.f32 %v409, %v7340
        %v7357 = vmul.f32 %v410, %v7340
        %v7358 = vmul.f32 %v411, %v7340
        %v7359 = vmul.f32 %v412, %v7340
        %v7360 = vmul.f32 %v413, %v7340
        %v7361 = vmul.f32 %v414, %v7340
        %v7362 = vmul.f32 %v415, %v7340
        %v7363 = vmul.f32 %v416, %v7340
        %v7364 = vmul.f32 %v417, %v7340
        %v7365 = vmul.f32 %v418, %v7340
        %v7366 = vmul.f32 %v419, %v7340
        %v7367 = vmul.f32 %v420, %v7340
        %v7368 = vmul.f32 %v421, %v7340
        %v7369 = vmul.f32 %v422, %v7340
        %v7370 = vmul.f32 %v423, %v7340
        %v7371 = vmul.f32 %v424, %v7340
        %v7372 = vmul.f32 %v425, %v7340
        %v7373 = vmul.f32 %v426, %v7340
        %v7374 = vmul.f32 %v427, %v7340
        %v7375 = vmul.f32 %v428, %v7340
        %v7376 = vmul.f32 %v429, %v7340
        %v7377 = vmul.f32 %v430, %v7340
        %v7378 = vmul.f32 %v431, %v7340
        %v7379 = vmul.f32 %v432, %v7340
        %v7380 = vmul.f32 %v433, %v7340
        %v7381 = vmul.f32 %v434, %v7340
        %v7382 = vmul.f32 %v435, %v7340
        %v7383 = vmul.f32 %v436, %v7340
        %v7384 = vmul.f32 %v437, %v7340
        %v7385 = vmul.f32 %v438, %v7340
        %v7386 = vmul.f32 %v439, %v7340
        %v7387 = vmul.f32 %v440, %v7340
        %v7388 = vmul.f32 %v441, %v7340
        %v7437 = vrot.slane %v7341, 2
        %v7438 = vrot.slane %v7342, 2
        %v7439 = vsel %vm690, %v7437, %v7438
        %v7440 = vrot.slane %v7343, 2
        %v7441 = vsel %vm690, %v7438, %v7440
        %v7442 = vrot.slane %v7344, 2
        %v7443 = vrot.slane %v7345, 2
        %v7444 = vsel %vm690, %v7442, %v7443
        %v7445 = vrot.slane %v7346, 2
        %v7446 = vsel %vm690, %v7443, %v7445
        %v7447 = vrot.slane %v7347, 2
        %v7448 = vrot.slane %v7348, 2
        %v7449 = vsel %vm690, %v7447, %v7448
        %v7450 = vrot.slane %v7349, 2
        %v7451 = vsel %vm690, %v7448, %v7450
        %v7452 = vrot.slane %v7350, 2
        %v7453 = vrot.slane %v7351, 2
        %v7454 = vsel %vm690, %v7452, %v7453
        %v7455 = vrot.slane %v7352, 2
        %v7456 = vsel %vm690, %v7453, %v7455
        %v7457 = vrot.slane %v7353, 2
        %v7458 = vrot.slane %v7354, 2
        %v7459 = vsel %vm690, %v7457, %v7458
        %v7460 = vrot.slane %v7355, 2
        %v7461 = vsel %vm690, %v7458, %v7460
        %v7462 = vrot.slane %v7356, 2
        %v7463 = vrot.slane %v7357, 2
        %v7464 = vsel %vm690, %v7462, %v7463
        %v7465 = vrot.slane %v7358, 2
        %v7466 = vsel %vm690, %v7463, %v7465
        %v7467 = vrot.slane %v7359, 2
        %v7468 = vrot.slane %v7360, 2
        %v7469 = vsel %vm690, %v7467, %v7468
        %v7470 = vrot.slane %v7361, 2
        %v7471 = vsel %vm690, %v7468, %v7470
        %v7472 = vrot.slane %v7362, 2
        %v7473 = vrot.slane %v7363, 2
        %v7474 = vsel %vm690, %v7472, %v7473
        %v7475 = vrot.slane %v7364, 2
        %v7476 = vsel %vm690, %v7473, %v7475
        %v7477 = vrot.slane %v7365, 2
        %v7478 = vrot.slane %v7366, 2
        %v7479 = vsel %vm690, %v7477, %v7478
        %v7480 = vrot.slane %v7367, 2
        %v7481 = vsel %vm690, %v7478, %v7480
        %v7482 = vrot.slane %v7368, 2
        %v7483 = vrot.slane %v7369, 2
        %v7484 = vsel %vm690, %v7482, %v7483
        %v7485 = vrot.slane %v7370, 2
        %v7486 = vsel %vm690, %v7483, %v7485
        %v7487 = vrot.slane %v7371, 2
        %v7488 = vrot.slane %v7372, 2
        %v7489 = vsel %vm690, %v7487, %v7488
        %v7490 = vrot.slane %v7373, 2
        %v7491 = vsel %vm690, %v7488, %v7490
        %v7492 = vrot.slane %v7374, 2
        %v7493 = vrot.slane %v7375, 2
        %v7494 = vsel %vm690, %v7492, %v7493
        %v7495 = vrot.slane %v7376, 2
        %v7496 = vsel %vm690, %v7493, %v7495
        %v7497 = vrot.slane %v7377, 2
        %v7498 = vrot.slane %v7378, 2
        %v7499 = vsel %vm690, %v7497, %v7498
        %v7500 = vrot.slane %v7379, 2
        %v7501 = vsel %vm690, %v7498, %v7500
        %v7502 = vrot.slane %v7380, 2
        %v7503 = vrot.slane %v7381, 2
        %v7504 = vsel %vm690, %v7502, %v7503
        %v7505 = vrot.slane %v7382, 2
        %v7506 = vsel %vm690, %v7503, %v7505
        %v7507 = vrot.slane %v7383, 2
        %v7508 = vrot.slane %v7384, 2
        %v7509 = vsel %vm690, %v7507, %v7508
        %v7510 = vrot.slane %v7385, 2
        %v7511 = vsel %vm690, %v7508, %v7510
        %v7512 = vrot.slane %v7386, 2
        %v7513 = vrot.slane %v7387, 2
        %v7514 = vsel %vm690, %v7512, %v7513
        %v7515 = vrot.slane %v7388, 2
        %v7516 = vsel %vm690, %v7513, %v7515
        %v7549 = vadd.f32 %v7307, %v7439
        %v7550 = vadd.f32 %v7308, %v7441
        %v7551 = vadd.f32 %v7309, %v7444
        %v7552 = vadd.f32 %v7310, %v7446
        %v7553 = vadd.f32 %v7311, %v7449
        %v7554 = vadd.f32 %v7312, %v7451
        %v7555 = vadd.f32 %v7313, %v7454
        %v7556 = vadd.f32 %v7314, %v7456
        %v7557 = vadd.f32 %v7315, %v7459
        %v7558 = vadd.f32 %v7316, %v7461
        %v7559 = vadd.f32 %v7317, %v7464
        %v7560 = vadd.f32 %v7318, %v7466
        %v7561 = vadd.f32 %v7319, %v7469
        %v7562 = vadd.f32 %v7320, %v7471
        %v7563 = vadd.f32 %v7321, %v7474
        %v7564 = vadd.f32 %v7322, %v7476
        %v7565 = vadd.f32 %v7323, %v7479
        %v7566 = vadd.f32 %v7324, %v7481
        %v7567 = vadd.f32 %v7325, %v7484
        %v7568 = vadd.f32 %v7326, %v7486
        %v7569 = vadd.f32 %v7327, %v7489
        %v7570 = vadd.f32 %v7328, %v7491
        %v7571 = vadd.f32 %v7329, %v7494
        %v7572 = vadd.f32 %v7330, %v7496
        %v7573 = vadd.f32 %v7331, %v7499
        %v7574 = vadd.f32 %v7332, %v7501
        %v7575 = vadd.f32 %v7333, %v7504
        %v7576 = vadd.f32 %v7334, %v7506
        %v7577 = vadd.f32 %v7335, %v7509
        %v7578 = vadd.f32 %v7336, %v7511
        %v7579 = vadd.f32 %v7337, %v7514
        %v7580 = vadd.f32 %v7338, %v7516
        %v7581 = vld [vmem:[%s345 + $0x10] sm:$0xc]
        %v7582 = vld [vmem:[%s345 + $0x14] sm:$0xf]
        %v7583 = vld [vmem:[%s345 + $0x18] sm:$0x3]
        %v7584 = vld [vmem:[%s345 + $0x2c] sm:$0xc]
        %v7585 = vld [vmem:[%s345 + $0x30] sm:$0xf]
        %v7586 = vld [vmem:[%s345 + $0x34] sm:$0x3]
        %v7587 = vld [vmem:[%s345 + $0x48] sm:$0xc]
        %v7588 = vld [vmem:[%s345 + $0x4c] sm:$0xf]
        %v7589 = vld [vmem:[%s345 + $0x50] sm:$0x3]
        %v7590 = vld [vmem:[%s345 + $0x64] sm:$0xc]
        %v7591 = vld [vmem:[%s345 + $0x68] sm:$0xf]
        %v7592 = vld [vmem:[%s345 + $0x6c] sm:$0x3]
        %v7593 = vld [vmem:[%s345 + $0x80] sm:$0xc]
        %v7594 = vld [vmem:[%s345 + $0x84] sm:$0xf]
        %v7595 = vld [vmem:[%s345 + $0x88] sm:$0x3]
        %v7596 = vld [vmem:[%s345 + $0x9c] sm:$0xc]
        %v7597 = vld [vmem:[%s345 + $0xa0] sm:$0xf]
        %v7598 = vld [vmem:[%s345 + $0xa4] sm:$0x3]
        %v7599 = vld [vmem:[%s345 + $0xb8] sm:$0xc]
        %v7600 = vld [vmem:[%s345 + $0xbc] sm:$0xf]
        %v7601 = vld [vmem:[%s345 + $0xc0] sm:$0x3]
        %v7602 = vld [vmem:[%s345 + $0xd4] sm:$0xc]
        %v7603 = vld [vmem:[%s345 + $0xd8] sm:$0xf]
        %v7604 = vld [vmem:[%s345 + $0xdc] sm:$0x3]
        %v7605 = vld [vmem:[%s345 + $0xf0] sm:$0xc]
        %v7606 = vld [vmem:[%s345 + $0xf4] sm:$0xf]
        %v7607 = vld [vmem:[%s345 + $0xf8] sm:$0x3]
        %v7608 = vld [vmem:[%s345 + $0x10c] sm:$0xc]
        %v7609 = vld [vmem:[%s345 + $0x110] sm:$0xf]
        %v7610 = vld [vmem:[%s345 + $0x114] sm:$0x3]
        %v7611 = vld [vmem:[%s345 + $0x128] sm:$0xc]
        %v7612 = vld [vmem:[%s345 + $0x12c] sm:$0xf]
        %v7613 = vld [vmem:[%s345 + $0x130] sm:$0x3]
        %v7614 = vld [vmem:[%s345 + $0x144] sm:$0xc]
        %v7615 = vld [vmem:[%s345 + $0x148] sm:$0xf]
        %v7616 = vld [vmem:[%s345 + $0x14c] sm:$0x3]
        %v7617 = vld [vmem:[%s345 + $0x160] sm:$0xc]
        %v7618 = vld [vmem:[%s345 + $0x164] sm:$0xf]
        %v7619 = vld [vmem:[%s345 + $0x168] sm:$0x3]
        %v7620 = vld [vmem:[%s345 + $0x17c] sm:$0xc]
        %v7621 = vld [vmem:[%s345 + $0x180] sm:$0xf]
        %v7622 = vld [vmem:[%s345 + $0x184] sm:$0x3]
        %v7623 = vld [vmem:[%s345 + $0x198] sm:$0xc]
        %v7624 = vld [vmem:[%s345 + $0x19c] sm:$0xf]
        %v7625 = vld [vmem:[%s345 + $0x1a0] sm:$0x3]
        %v7626 = vld [vmem:[%s345 + $0x1b4] sm:$0xc]
        %v7627 = vld [vmem:[%s345 + $0x1b8] sm:$0xf]
        %v7628 = vld [vmem:[%s345 + $0x1bc] sm:$0x3]
        %v7629 = vunpack.c.l.bf16 %v7581
        %v7630 = vunpack.c.l.bf16 %v7582
        %v7631 = vunpack.c.l.bf16 %v7583
        %v7632 = vunpack.c.l.bf16 %v7584
        %v7633 = vunpack.c.l.bf16 %v7585
        %v7634 = vunpack.c.l.bf16 %v7586
        %v7635 = vunpack.c.l.bf16 %v7587
        %v7636 = vunpack.c.l.bf16 %v7588
        %v7637 = vunpack.c.l.bf16 %v7589
        %v7638 = vunpack.c.l.bf16 %v7590
        %v7639 = vunpack.c.l.bf16 %v7591
        %v7640 = vunpack.c.l.bf16 %v7592
        %v7641 = vunpack.c.l.bf16 %v7593
        %v7642 = vunpack.c.l.bf16 %v7594
        %v7643 = vunpack.c.l.bf16 %v7595
        %v7644 = vunpack.c.l.bf16 %v7596
        %v7645 = vunpack.c.l.bf16 %v7597
        %v7646 = vunpack.c.l.bf16 %v7598
        %v7647 = vunpack.c.l.bf16 %v7599
        %v7648 = vunpack.c.l.bf16 %v7600
        %v7649 = vunpack.c.l.bf16 %v7601
        %v7650 = vunpack.c.l.bf16 %v7602
        %v7651 = vunpack.c.l.bf16 %v7603
        %v7652 = vunpack.c.l.bf16 %v7604
        %v7653 = vunpack.c.l.bf16 %v7605
        %v7654 = vunpack.c.l.bf16 %v7606
        %v7655 = vunpack.c.l.bf16 %v7607
        %v7656 = vunpack.c.l.bf16 %v7608
        %v7657 = vunpack.c.l.bf16 %v7609
        %v7658 = vunpack.c.l.bf16 %v7610
        %v7659 = vunpack.c.l.bf16 %v7611
        %v7660 = vunpack.c.l.bf16 %v7612
        %v7661 = vunpack.c.l.bf16 %v7613
        %v7662 = vunpack.c.l.bf16 %v7614
        %v7663 = vunpack.c.l.bf16 %v7615
        %v7664 = vunpack.c.l.bf16 %v7616
        %v7665 = vunpack.c.l.bf16 %v7617
        %v7666 = vunpack.c.l.bf16 %v7618
        %v7667 = vunpack.c.l.bf16 %v7619
        %v7668 = vunpack.c.l.bf16 %v7620
        %v7669 = vunpack.c.l.bf16 %v7621
        %v7670 = vunpack.c.l.bf16 %v7622
        %v7671 = vunpack.c.l.bf16 %v7623
        %v7672 = vunpack.c.l.bf16 %v7624
        %v7673 = vunpack.c.l.bf16 %v7625
        %v7674 = vunpack.c.l.bf16 %v7626
        %v7675 = vunpack.c.l.bf16 %v7627
        %v7676 = vunpack.c.l.bf16 %v7628
        %v7677 = vld [vmem:[%s6466 + $0x5] sm:$0x1]
        %v7678 = vperm.slane %v7677, 0
        %v7679 = vmul.f32 %v7629, %v7678
        %v7680 = vmul.f32 %v7630, %v7678
        %v7681 = vmul.f32 %v7631, %v7678
        %v7682 = vmul.f32 %v7632, %v7678
        %v7683 = vmul.f32 %v7633, %v7678
        %v7684 = vmul.f32 %v7634, %v7678
        %v7685 = vmul.f32 %v7635, %v7678
        %v7686 = vmul.f32 %v7636, %v7678
        %v7687 = vmul.f32 %v7637, %v7678
        %v7688 = vmul.f32 %v7638, %v7678
        %v7689 = vmul.f32 %v7639, %v7678
        %v7690 = vmul.f32 %v7640, %v7678
        %v7691 = vmul.f32 %v7641, %v7678
        %v7692 = vmul.f32 %v7642, %v7678
        %v7693 = vmul.f32 %v7643, %v7678
        %v7694 = vmul.f32 %v7644, %v7678
        %v7695 = vmul.f32 %v7645, %v7678
        %v7696 = vmul.f32 %v7646, %v7678
        %v7697 = vmul.f32 %v7647, %v7678
        %v7698 = vmul.f32 %v7648, %v7678
        %v7699 = vmul.f32 %v7649, %v7678
        %v7700 = vmul.f32 %v7650, %v7678
        %v7701 = vmul.f32 %v7651, %v7678
        %v7702 = vmul.f32 %v7652, %v7678
        %v7703 = vmul.f32 %v7653, %v7678
        %v7704 = vmul.f32 %v7654, %v7678
        %v7705 = vmul.f32 %v7655, %v7678
        %v7706 = vmul.f32 %v7656, %v7678
        %v7707 = vmul.f32 %v7657, %v7678
        %v7708 = vmul.f32 %v7658, %v7678
        %v7709 = vmul.f32 %v7659, %v7678
        %v7710 = vmul.f32 %v7660, %v7678
        %v7711 = vmul.f32 %v7661, %v7678
        %v7712 = vmul.f32 %v7662, %v7678
        %v7713 = vmul.f32 %v7663, %v7678
        %v7714 = vmul.f32 %v7664, %v7678
        %v7715 = vmul.f32 %v7665, %v7678
        %v7716 = vmul.f32 %v7666, %v7678
        %v7717 = vmul.f32 %v7667, %v7678
        %v7718 = vmul.f32 %v7668, %v7678
        %v7719 = vmul.f32 %v7669, %v7678
        %v7720 = vmul.f32 %v7670, %v7678
        %v7721 = vmul.f32 %v7671, %v7678
        %v7722 = vmul.f32 %v7672, %v7678
        %v7723 = vmul.f32 %v7673, %v7678
        %v7724 = vmul.f32 %v7674, %v7678
        %v7725 = vmul.f32 %v7675, %v7678
        %v7726 = vmul.f32 %v7676, %v7678
        %v7775 = vrot.slane %v7679, 4
        %v7776 = vrot.slane %v7680, 4
        %v7777 = vsel %vm1439, %v7775, %v7776
        %v7778 = vrot.slane %v7681, 4
        %v7779 = vsel %vm1439, %v7776, %v7778
        %v7780 = vrot.slane %v7682, 4
        %v7781 = vrot.slane %v7683, 4
        %v7782 = vsel %vm1439, %v7780, %v7781
        %v7783 = vrot.slane %v7684, 4
        %v7784 = vsel %vm1439, %v7781, %v7783
        %v7785 = vrot.slane %v7685, 4
        %v7786 = vrot.slane %v7686, 4
        %v7787 = vsel %vm1439, %v7785, %v7786
        %v7788 = vrot.slane %v7687, 4
        %v7789 = vsel %vm1439, %v7786, %v7788
        %v7790 = vrot.slane %v7688, 4
        %v7791 = vrot.slane %v7689, 4
        %v7792 = vsel %vm1439, %v7790, %v7791
        %v7793 = vrot.slane %v7690, 4
        %v7794 = vsel %vm1439, %v7791, %v7793
        %v7795 = vrot.slane %v7691, 4
        %v7796 = vrot.slane %v7692, 4
        %v7797 = vsel %vm1439, %v7795, %v7796
        %v7798 = vrot.slane %v7693, 4
        %v7799 = vsel %vm1439, %v7796, %v7798
        %v7800 = vrot.slane %v7694, 4
        %v7801 = vrot.slane %v7695, 4
        %v7802 = vsel %vm1439, %v7800, %v7801
        %v7803 = vrot.slane %v7696, 4
        %v7804 = vsel %vm1439, %v7801, %v7803
        %v7805 = vrot.slane %v7697, 4
        %v7806 = vrot.slane %v7698, 4
        %v7807 = vsel %vm1439, %v7805, %v7806
        %v7808 = vrot.slane %v7699, 4
        %v7809 = vsel %vm1439, %v7806, %v7808
        %v7810 = vrot.slane %v7700, 4
        %v7811 = vrot.slane %v7701, 4
        %v7812 = vsel %vm1439, %v7810, %v7811
        %v7813 = vrot.slane %v7702, 4
        %v7814 = vsel %vm1439, %v7811, %v7813
        %v7815 = vrot.slane %v7703, 4
        %v7816 = vrot.slane %v7704, 4
        %v7817 = vsel %vm1439, %v7815, %v7816
        %v7818 = vrot.slane %v7705, 4
        %v7819 = vsel %vm1439, %v7816, %v7818
        %v7820 = vrot.slane %v7706, 4
        %v7821 = vrot.slane %v7707, 4
        %v7822 = vsel %vm1439, %v7820, %v7821
        %v7823 = vrot.slane %v7708, 4
        %v7824 = vsel %vm1439, %v7821, %v7823
        %v7825 = vrot.slane %v7709, 4
        %v7826 = vrot.slane %v7710, 4
        %v7827 = vsel %vm1439, %v7825, %v7826
        %v7828 = vrot.slane %v7711, 4
        %v7829 = vsel %vm1439, %v7826, %v7828
        %v7830 = vrot.slane %v7712, 4
        %v7831 = vrot.slane %v7713, 4
        %v7832 = vsel %vm1439, %v7830, %v7831
        %v7833 = vrot.slane %v7714, 4
        %v7834 = vsel %vm1439, %v7831, %v7833
        %v7835 = vrot.slane %v7715, 4
        %v7836 = vrot.slane %v7716, 4
        %v7837 = vsel %vm1439, %v7835, %v7836
        %v7838 = vrot.slane %v7717, 4
        %v7839 = vsel %vm1439, %v7836, %v7838
        %v7840 = vrot.slane %v7718, 4
        %v7841 = vrot.slane %v7719, 4
        %v7842 = vsel %vm1439, %v7840, %v7841
        %v7843 = vrot.slane %v7720, 4
        %v7844 = vsel %vm1439, %v7841, %v7843
        %v7845 = vrot.slane %v7721, 4
        %v7846 = vrot.slane %v7722, 4
        %v7847 = vsel %vm1439, %v7845, %v7846
        %v7848 = vrot.slane %v7723, 4
        %v7849 = vsel %vm1439, %v7846, %v7848
        %v7850 = vrot.slane %v7724, 4
        %v7851 = vrot.slane %v7725, 4
        %v7852 = vsel %vm1439, %v7850, %v7851
        %v7853 = vrot.slane %v7726, 4
        %v7854 = vsel %vm1439, %v7851, %v7853
        %v7887 = vadd.f32 %v7549, %v7777
        %v7888 = vadd.f32 %v7550, %v7779
        %v7889 = vadd.f32 %v7551, %v7782
        %v7890 = vadd.f32 %v7552, %v7784
        %v7891 = vadd.f32 %v7553, %v7787
        %v7892 = vadd.f32 %v7554, %v7789
        %v7893 = vadd.f32 %v7555, %v7792
        %v7894 = vadd.f32 %v7556, %v7794
        %v7895 = vadd.f32 %v7557, %v7797
        %v7896 = vadd.f32 %v7558, %v7799
        %v7897 = vadd.f32 %v7559, %v7802
        %v7898 = vadd.f32 %v7560, %v7804
        %v7899 = vadd.f32 %v7561, %v7807
        %v7900 = vadd.f32 %v7562, %v7809
        %v7901 = vadd.f32 %v7563, %v7812
        %v7902 = vadd.f32 %v7564, %v7814
        %v7903 = vadd.f32 %v7565, %v7817
        %v7904 = vadd.f32 %v7566, %v7819
        %v7905 = vadd.f32 %v7567, %v7822
        %v7906 = vadd.f32 %v7568, %v7824
        %v7907 = vadd.f32 %v7569, %v7827
        %v7908 = vadd.f32 %v7570, %v7829
        %v7909 = vadd.f32 %v7571, %v7832
        %v7910 = vadd.f32 %v7572, %v7834
        %v7911 = vadd.f32 %v7573, %v7837
        %v7912 = vadd.f32 %v7574, %v7839
        %v7913 = vadd.f32 %v7575, %v7842
        %v7914 = vadd.f32 %v7576, %v7844
        %v7915 = vadd.f32 %v7577, %v7847
        %v7916 = vadd.f32 %v7578, %v7849
        %v7917 = vadd.f32 %v7579, %v7852
        %v7918 = vadd.f32 %v7580, %v7854
        %s7919 = scalar_lea.vmem %s341, 1008
        %v7920 = vld [vmem:[%s7919] sm:$0xf]
        %v7921 = vld [vmem:[%s7919 + $0x4] sm:$0xf]
        %v7922 = vld [vmem:[%s7919 + $0x1c] sm:$0xf]
        %v7923 = vld [vmem:[%s7919 + $0x20] sm:$0xf]
        %v7924 = vld [vmem:[%s7919 + $0x38] sm:$0xf]
        %v7925 = vld [vmem:[%s7919 + $0x3c] sm:$0xf]
        %v7926 = vld [vmem:[%s7919 + $0x54] sm:$0xf]
        %v7927 = vld [vmem:[%s7919 + $0x58] sm:$0xf]
        %v7928 = vld [vmem:[%s7919 + $0x70] sm:$0xf]
        %v7929 = vld [vmem:[%s7919 + $0x74] sm:$0xf]
        %v7930 = vld [vmem:[%s7919 + $0x8c] sm:$0xf]
        %v7931 = vld [vmem:[%s7919 + $0x90] sm:$0xf]
        %v7932 = vld [vmem:[%s7919 + $0xa8] sm:$0xf]
        %v7933 = vld [vmem:[%s7919 + $0xac] sm:$0xf]
        %v7934 = vld [vmem:[%s7919 + $0xc4] sm:$0xf]
        %v7935 = vld [vmem:[%s7919 + $0xc8] sm:$0xf]
        %v7936 = vld [vmem:[%s7919 + $0xe0] sm:$0xf]
        %v7937 = vld [vmem:[%s7919 + $0xe4] sm:$0xf]
        %v7938 = vld [vmem:[%s7919 + $0xfc] sm:$0xf]
        %v7939 = vld [vmem:[%s7919 + $0x100] sm:$0xf]
        %v7940 = vld [vmem:[%s7919 + $0x118] sm:$0xf]
        %v7941 = vld [vmem:[%s7919 + $0x11c] sm:$0xf]
        %v7942 = vld [vmem:[%s7919 + $0x134] sm:$0xf]
        %v7943 = vld [vmem:[%s7919 + $0x138] sm:$0xf]
        %v7944 = vld [vmem:[%s7919 + $0x150] sm:$0xf]
        %v7945 = vld [vmem:[%s7919 + $0x154] sm:$0xf]
        %v7946 = vld [vmem:[%s7919 + $0x16c] sm:$0xf]
        %v7947 = vld [vmem:[%s7919 + $0x170] sm:$0xf]
        %v7948 = vld [vmem:[%s7919 + $0x188] sm:$0xf]
        %v7949 = vld [vmem:[%s7919 + $0x18c] sm:$0xf]
        %v7950 = vld [vmem:[%s7919 + $0x1a4] sm:$0xf]
        %v7951 = vld [vmem:[%s7919 + $0x1a8] sm:$0xf]
        %v7952 = vunpack.c.l.bf16 %v7920
        %v7953 = vunpack.c.l.bf16 %v7921
        %v7954 = vunpack.c.l.bf16 %v7922
        %v7955 = vunpack.c.l.bf16 %v7923
        %v7956 = vunpack.c.l.bf16 %v7924
        %v7957 = vunpack.c.l.bf16 %v7925
        %v7958 = vunpack.c.l.bf16 %v7926
        %v7959 = vunpack.c.l.bf16 %v7927
        %v7960 = vunpack.c.l.bf16 %v7928
        %v7961 = vunpack.c.l.bf16 %v7929
        %v7962 = vunpack.c.l.bf16 %v7930
        %v7963 = vunpack.c.l.bf16 %v7931
        %v7964 = vunpack.c.l.bf16 %v7932
        %v7965 = vunpack.c.l.bf16 %v7933
        %v7966 = vunpack.c.l.bf16 %v7934
        %v7967 = vunpack.c.l.bf16 %v7935
        %v7968 = vunpack.c.l.bf16 %v7936
        %v7969 = vunpack.c.l.bf16 %v7937
        %v7970 = vunpack.c.l.bf16 %v7938
        %v7971 = vunpack.c.l.bf16 %v7939
        %v7972 = vunpack.c.l.bf16 %v7940
        %v7973 = vunpack.c.l.bf16 %v7941
        %v7974 = vunpack.c.l.bf16 %v7942
        %v7975 = vunpack.c.l.bf16 %v7943
        %v7976 = vunpack.c.l.bf16 %v7944
        %v7977 = vunpack.c.l.bf16 %v7945
        %v7978 = vunpack.c.l.bf16 %v7946
        %v7979 = vunpack.c.l.bf16 %v7947
        %v7980 = vunpack.c.l.bf16 %v7948
        %v7981 = vunpack.c.l.bf16 %v7949
        %v7982 = vunpack.c.l.bf16 %v7950
        %v7983 = vunpack.c.l.bf16 %v7951
        %v7984 = vld [vmem:[%s6466 + $0x6] sm:$0x1]
        %v7985 = vperm.slane %v7984, 0
        %v7986 = vmul.f32 %v7952, %v7985
        %v7987 = vmul.f32 %v7953, %v7985
        %v7988 = vmul.f32 %v7954, %v7985
        %v7989 = vmul.f32 %v7955, %v7985
        %v7990 = vmul.f32 %v7956, %v7985
        %v7991 = vmul.f32 %v7957, %v7985
        %v7992 = vmul.f32 %v7958, %v7985
        %v7993 = vmul.f32 %v7959, %v7985
        %v7994 = vmul.f32 %v7960, %v7985
        %v7995 = vmul.f32 %v7961, %v7985
        %v7996 = vmul.f32 %v7962, %v7985
        %v7997 = vmul.f32 %v7963, %v7985
        %v7998 = vmul.f32 %v7964, %v7985
        %v7999 = vmul.f32 %v7965, %v7985
        %v8000 = vmul.f32 %v7966, %v7985
        %v8001 = vmul.f32 %v7967, %v7985
        %v8002 = vmul.f32 %v7968, %v7985
        %v8003 = vmul.f32 %v7969, %v7985
        %v8004 = vmul.f32 %v7970, %v7985
        %v8005 = vmul.f32 %v7971, %v7985
        %v8006 = vmul.f32 %v7972, %v7985
        %v8007 = vmul.f32 %v7973, %v7985
        %v8008 = vmul.f32 %v7974, %v7985
        %v8009 = vmul.f32 %v7975, %v7985
        %v8010 = vmul.f32 %v7976, %v7985
        %v8011 = vmul.f32 %v7977, %v7985
        %v8012 = vmul.f32 %v7978, %v7985
        %v8013 = vmul.f32 %v7979, %v7985
        %v8014 = vmul.f32 %v7980, %v7985
        %v8015 = vmul.f32 %v7981, %v7985
        %v8016 = vmul.f32 %v7982, %v7985
        %v8017 = vmul.f32 %v7983, %v7985
        %v8018 = vadd.f32 %v7887, %v7986
        %v8019 = vadd.f32 %v7888, %v7987
        %v8020 = vadd.f32 %v7889, %v7988
        %v8021 = vadd.f32 %v7890, %v7989
        %v8022 = vadd.f32 %v7891, %v7990
        %v8023 = vadd.f32 %v7892, %v7991
        %v8024 = vadd.f32 %v7893, %v7992
        %v8025 = vadd.f32 %v7894, %v7993
        %v8026 = vadd.f32 %v7895, %v7994
        %v8027 = vadd.f32 %v7896, %v7995
        %v8028 = vadd.f32 %v7897, %v7996
        %v8029 = vadd.f32 %v7898, %v7997
        %v8030 = vadd.f32 %v7899, %v7998
        %v8031 = vadd.f32 %v7900, %v7999
        %v8032 = vadd.f32 %v7901, %v8000
        %v8033 = vadd.f32 %v7902, %v8001
        %v8034 = vadd.f32 %v7903, %v8002
        %v8035 = vadd.f32 %v7904, %v8003
        %v8036 = vadd.f32 %v7905, %v8004
        %v8037 = vadd.f32 %v7906, %v8005
        %v8038 = vadd.f32 %v7907, %v8006
        %v8039 = vadd.f32 %v7908, %v8007
        %v8040 = vadd.f32 %v7909, %v8008
        %v8041 = vadd.f32 %v7910, %v8009
        %v8042 = vadd.f32 %v7911, %v8010
        %v8043 = vadd.f32 %v7912, %v8011
        %v8044 = vadd.f32 %v7913, %v8012
        %v8045 = vadd.f32 %v7914, %v8013
        %v8046 = vadd.f32 %v7915, %v8014
        %v8047 = vadd.f32 %v7916, %v8015
        %v8048 = vadd.f32 %v7917, %v8016
        %v8049 = vadd.f32 %v7918, %v8017
        %v8050 = vld [vmem:[%s7919 + $0x8] sm:$0xe]
        %v8051 = vld [vmem:[%s7919 + $0xc] sm:$0xf]
        %v8052 = vld [vmem:[%s7919 + $0x10] sm:$0x1]
        %v8053 = vld [vmem:[%s7919 + $0x24] sm:$0xe]
        %v8054 = vld [vmem:[%s7919 + $0x28] sm:$0xf]
        %v8055 = vld [vmem:[%s7919 + $0x2c] sm:$0x1]
        %v8056 = vld [vmem:[%s7919 + $0x40] sm:$0xe]
        %v8057 = vld [vmem:[%s7919 + $0x44] sm:$0xf]
        %v8058 = vld [vmem:[%s7919 + $0x48] sm:$0x1]
        %v8059 = vld [vmem:[%s7919 + $0x5c] sm:$0xe]
        %v8060 = vld [vmem:[%s7919 + $0x60] sm:$0xf]
        %v8061 = vld [vmem:[%s7919 + $0x64] sm:$0x1]
        %v8062 = vld [vmem:[%s7919 + $0x78] sm:$0xe]
        %v8063 = vld [vmem:[%s7919 + $0x7c] sm:$0xf]
        %v8064 = vld [vmem:[%s7919 + $0x80] sm:$0x1]
        %v8065 = vld [vmem:[%s7919 + $0x94] sm:$0xe]
        %v8066 = vld [vmem:[%s7919 + $0x98] sm:$0xf]
        %v8067 = vld [vmem:[%s7919 + $0x9c] sm:$0x1]
        %v8068 = vld [vmem:[%s7919 + $0xb0] sm:$0xe]
        %v8069 = vld [vmem:[%s7919 + $0xb4] sm:$0xf]
        %v8070 = vld [vmem:[%s7919 + $0xb8] sm:$0x1]
        %v8071 = vld [vmem:[%s7919 + $0xcc] sm:$0xe]
        %v8072 = vld [vmem:[%s7919 + $0xd0] sm:$0xf]
        %v8073 = vld [vmem:[%s7919 + $0xd4] sm:$0x1]
        %v8074 = vld [vmem:[%s7919 + $0xe8] sm:$0xe]
        %v8075 = vld [vmem:[%s7919 + $0xec] sm:$0xf]
        %v8076 = vld [vmem:[%s7919 + $0xf0] sm:$0x1]
        %v8077 = vld [vmem:[%s7919 + $0x104] sm:$0xe]
        %v8078 = vld [vmem:[%s7919 + $0x108] sm:$0xf]
        %v8079 = vld [vmem:[%s7919 + $0x10c] sm:$0x1]
        %v8080 = vld [vmem:[%s7919 + $0x120] sm:$0xe]
        %v8081 = vld [vmem:[%s7919 + $0x124] sm:$0xf]
        %v8082 = vld [vmem:[%s7919 + $0x128] sm:$0x1]
        %v8083 = vld [vmem:[%s7919 + $0x13c] sm:$0xe]
        %v8084 = vld [vmem:[%s7919 + $0x140] sm:$0xf]
        %v8085 = vld [vmem:[%s7919 + $0x144] sm:$0x1]
        %v8086 = vld [vmem:[%s7919 + $0x158] sm:$0xe]
        %v8087 = vld [vmem:[%s7919 + $0x15c] sm:$0xf]
        %v8088 = vld [vmem:[%s7919 + $0x160] sm:$0x1]
        %v8089 = vld [vmem:[%s7919 + $0x174] sm:$0xe]
        %v8090 = vld [vmem:[%s7919 + $0x178] sm:$0xf]
        %v8091 = vld [vmem:[%s7919 + $0x17c] sm:$0x1]
        %v8092 = vld [vmem:[%s7919 + $0x190] sm:$0xe]
        %v8093 = vld [vmem:[%s7919 + $0x194] sm:$0xf]
        %v8094 = vld [vmem:[%s7919 + $0x198] sm:$0x1]
        %v8095 = vld [vmem:[%s7919 + $0x1ac] sm:$0xe]
        %v8096 = vld [vmem:[%s7919 + $0x1b0] sm:$0xf]
        %v8097 = vld [vmem:[%s7919 + $0x1b4] sm:$0x1]
        %v8098 = vunpack.c.l.bf16 %v8050
        %v8099 = vunpack.c.l.bf16 %v8051
        %v8100 = vunpack.c.l.bf16 %v8052
        %v8101 = vunpack.c.l.bf16 %v8053
        %v8102 = vunpack.c.l.bf16 %v8054
        %v8103 = vunpack.c.l.bf16 %v8055
        %v8104 = vunpack.c.l.bf16 %v8056
        %v8105 = vunpack.c.l.bf16 %v8057
        %v8106 = vunpack.c.l.bf16 %v8058
        %v8107 = vunpack.c.l.bf16 %v8059
        %v8108 = vunpack.c.l.bf16 %v8060
        %v8109 = vunpack.c.l.bf16 %v8061
        %v8110 = vunpack.c.l.bf16 %v8062
        %v8111 = vunpack.c.l.bf16 %v8063
        %v8112 = vunpack.c.l.bf16 %v8064
        %v8113 = vunpack.c.l.bf16 %v8065
        %v8114 = vunpack.c.l.bf16 %v8066
        %v8115 = vunpack.c.l.bf16 %v8067
        %v8116 = vunpack.c.l.bf16 %v8068
        %v8117 = vunpack.c.l.bf16 %v8069
        %v8118 = vunpack.c.l.bf16 %v8070
        %v8119 = vunpack.c.l.bf16 %v8071
        %v8120 = vunpack.c.l.bf16 %v8072
        %v8121 = vunpack.c.l.bf16 %v8073
        %v8122 = vunpack.c.l.bf16 %v8074
        %v8123 = vunpack.c.l.bf16 %v8075
        %v8124 = vunpack.c.l.bf16 %v8076
        %v8125 = vunpack.c.l.bf16 %v8077
        %v8126 = vunpack.c.l.bf16 %v8078
        %v8127 = vunpack.c.l.bf16 %v8079
        %v8128 = vunpack.c.l.bf16 %v8080
        %v8129 = vunpack.c.l.bf16 %v8081
        %v8130 = vunpack.c.l.bf16 %v8082
        %v8131 = vunpack.c.l.bf16 %v8083
        %v8132 = vunpack.c.l.bf16 %v8084
        %v8133 = vunpack.c.l.bf16 %v8085
        %v8134 = vunpack.c.l.bf16 %v8086
        %v8135 = vunpack.c.l.bf16 %v8087
        %v8136 = vunpack.c.l.bf16 %v8088
        %v8137 = vunpack.c.l.bf16 %v8089
        %v8138 = vunpack.c.l.bf16 %v8090
        %v8139 = vunpack.c.l.bf16 %v8091
        %v8140 = vunpack.c.l.bf16 %v8092
        %v8141 = vunpack.c.l.bf16 %v8093
        %v8142 = vunpack.c.l.bf16 %v8094
        %v8143 = vunpack.c.l.bf16 %v8095
        %v8144 = vunpack.c.l.bf16 %v8096
        %v8145 = vunpack.c.l.bf16 %v8097
        %v8146 = vld [vmem:[%s6466 + $0x7] sm:$0x1]
        %v8147 = vperm.slane %v8146, 0
        %v8148 = vmul.f32 %v8098, %v8147
        %v8149 = vmul.f32 %v8099, %v8147
        %v8150 = vmul.f32 %v8100, %v8147
        %v8151 = vmul.f32 %v8101, %v8147
        %v8152 = vmul.f32 %v8102, %v8147
        %v8153 = vmul.f32 %v8103, %v8147
        %v8154 = vmul.f32 %v8104, %v8147
        %v8155 = vmul.f32 %v8105, %v8147
        %v8156 = vmul.f32 %v8106, %v8147
        %v8157 = vmul.f32 %v8107, %v8147
        %v8158 = vmul.f32 %v8108, %v8147
        %v8159 = vmul.f32 %v8109, %v8147
        %v8160 = vmul.f32 %v8110, %v8147
        %v8161 = vmul.f32 %v8111, %v8147
        %v8162 = vmul.f32 %v8112, %v8147
        %v8163 = vmul.f32 %v8113, %v8147
        %v8164 = vmul.f32 %v8114, %v8147
        %v8165 = vmul.f32 %v8115, %v8147
        %v8166 = vmul.f32 %v8116, %v8147
        %v8167 = vmul.f32 %v8117, %v8147
        %v8168 = vmul.f32 %v8118, %v8147
        %v8169 = vmul.f32 %v8119, %v8147
        %v8170 = vmul.f32 %v8120, %v8147
        %v8171 = vmul.f32 %v8121, %v8147
        %v8172 = vmul.f32 %v8122, %v8147
        %v8173 = vmul.f32 %v8123, %v8147
        %v8174 = vmul.f32 %v8124, %v8147
        %v8175 = vmul.f32 %v8125, %v8147
        %v8176 = vmul.f32 %v8126, %v8147
        %v8177 = vmul.f32 %v8127, %v8147
        %v8178 = vmul.f32 %v8128, %v8147
        %v8179 = vmul.f32 %v8129, %v8147
        %v8180 = vmul.f32 %v8130, %v8147
        %v8181 = vmul.f32 %v8131, %v8147
        %v8182 = vmul.f32 %v8132, %v8147
        %v8183 = vmul.f32 %v8133, %v8147
        %v8184 = vmul.f32 %v8134, %v8147
        %v8185 = vmul.f32 %v8135, %v8147
        %v8186 = vmul.f32 %v8136, %v8147
        %v8187 = vmul.f32 %v8137, %v8147
        %v8188 = vmul.f32 %v8138, %v8147
        %v8189 = vmul.f32 %v8139, %v8147
        %v8190 = vmul.f32 %v8140, %v8147
        %v8191 = vmul.f32 %v8141, %v8147
        %v8192 = vmul.f32 %v8142, %v8147
        %v8193 = vmul.f32 %v8143, %v8147
        %v8194 = vmul.f32 %v8144, %v8147
        %v8195 = vmul.f32 %v8145, %v8147
        %v8244 = vrot.slane %v8148, 2
        %v8245 = vrot.slane %v8149, 2
        %v8246 = vsel %vm690, %v8244, %v8245
        %v8247 = vrot.slane %v8150, 2
        %v8248 = vsel %vm690, %v8245, %v8247
        %v8249 = vrot.slane %v8151, 2
        %v8250 = vrot.slane %v8152, 2
        %v8251 = vsel %vm690, %v8249, %v8250
        %v8252 = vrot.slane %v8153, 2
        %v8253 = vsel %vm690, %v8250, %v8252
        %v8254 = vrot.slane %v8154, 2
        %v8255 = vrot.slane %v8155, 2
        %v8256 = vsel %vm690, %v8254, %v8255
        %v8257 = vrot.slane %v8156, 2
        %v8258 = vsel %vm690, %v8255, %v8257
        %v8259 = vrot.slane %v8157, 2
        %v8260 = vrot.slane %v8158, 2
        %v8261 = vsel %vm690, %v8259, %v8260
        %v8262 = vrot.slane %v8159, 2
        %v8263 = vsel %vm690, %v8260, %v8262
        %v8264 = vrot.slane %v8160, 2
        %v8265 = vrot.slane %v8161, 2
        %v8266 = vsel %vm690, %v8264, %v8265
        %v8267 = vrot.slane %v8162, 2
        %v8268 = vsel %vm690, %v8265, %v8267
        %v8269 = vrot.slane %v8163, 2
        %v8270 = vrot.slane %v8164, 2
        %v8271 = vsel %vm690, %v8269, %v8270
        %v8272 = vrot.slane %v8165, 2
        %v8273 = vsel %vm690, %v8270, %v8272
        %v8274 = vrot.slane %v8166, 2
        %v8275 = vrot.slane %v8167, 2
        %v8276 = vsel %vm690, %v8274, %v8275
        %v8277 = vrot.slane %v8168, 2
        %v8278 = vsel %vm690, %v8275, %v8277
        %v8279 = vrot.slane %v8169, 2
        %v8280 = vrot.slane %v8170, 2
        %v8281 = vsel %vm690, %v8279, %v8280
        %v8282 = vrot.slane %v8171, 2
        %v8283 = vsel %vm690, %v8280, %v8282
        %v8284 = vrot.slane %v8172, 2
        %v8285 = vrot.slane %v8173, 2
        %v8286 = vsel %vm690, %v8284, %v8285
        %v8287 = vrot.slane %v8174, 2
        %v8288 = vsel %vm690, %v8285, %v8287
        %v8289 = vrot.slane %v8175, 2
        %v8290 = vrot.slane %v8176, 2
        %v8291 = vsel %vm690, %v8289, %v8290
        %v8292 = vrot.slane %v8177, 2
        %v8293 = vsel %vm690, %v8290, %v8292
        %v8294 = vrot.slane %v8178, 2
        %v8295 = vrot.slane %v8179, 2
        %v8296 = vsel %vm690, %v8294, %v8295
        %v8297 = vrot.slane %v8180, 2
        %v8298 = vsel %vm690, %v8295, %v8297
        %v8299 = vrot.slane %v8181, 2
        %v8300 = vrot.slane %v8182, 2
        %v8301 = vsel %vm690, %v8299, %v8300
        %v8302 = vrot.slane %v8183, 2
        %v8303 = vsel %vm690, %v8300, %v8302
        %v8304 = vrot.slane %v8184, 2
        %v8305 = vrot.slane %v8185, 2
        %v8306 = vsel %vm690, %v8304, %v8305
        %v8307 = vrot.slane %v8186, 2
        %v8308 = vsel %vm690, %v8305, %v8307
        %v8309 = vrot.slane %v8187, 2
        %v8310 = vrot.slane %v8188, 2
        %v8311 = vsel %vm690, %v8309, %v8310
        %v8312 = vrot.slane %v8189, 2
        %v8313 = vsel %vm690, %v8310, %v8312
        %v8314 = vrot.slane %v8190, 2
        %v8315 = vrot.slane %v8191, 2
        %v8316 = vsel %vm690, %v8314, %v8315
        %v8317 = vrot.slane %v8192, 2
        %v8318 = vsel %vm690, %v8315, %v8317
        %v8319 = vrot.slane %v8193, 2
        %v8320 = vrot.slane %v8194, 2
        %v8321 = vsel %vm690, %v8319, %v8320
        %v8322 = vrot.slane %v8195, 2
        %v8323 = vsel %vm690, %v8320, %v8322
        %v8356 = vadd.f32 %v8018, %v8246
        %v8357 = vadd.f32 %v8019, %v8248
        %v8358 = vadd.f32 %v8020, %v8251
        %v8359 = vadd.f32 %v8021, %v8253
        %v8360 = vadd.f32 %v8022, %v8256
        %v8361 = vadd.f32 %v8023, %v8258
        %v8362 = vadd.f32 %v8024, %v8261
        %v8363 = vadd.f32 %v8025, %v8263
        %v8364 = vadd.f32 %v8026, %v8266
        %v8365 = vadd.f32 %v8027, %v8268
        %v8366 = vadd.f32 %v8028, %v8271
        %v8367 = vadd.f32 %v8029, %v8273
        %v8368 = vadd.f32 %v8030, %v8276
        %v8369 = vadd.f32 %v8031, %v8278
        %v8370 = vadd.f32 %v8032, %v8281
        %v8371 = vadd.f32 %v8033, %v8283
        %v8372 = vadd.f32 %v8034, %v8286
        %v8373 = vadd.f32 %v8035, %v8288
        %v8374 = vadd.f32 %v8036, %v8291
        %v8375 = vadd.f32 %v8037, %v8293
        %v8376 = vadd.f32 %v8038, %v8296
        %v8377 = vadd.f32 %v8039, %v8298
        %v8378 = vadd.f32 %v8040, %v8301
        %v8379 = vadd.f32 %v8041, %v8303
        %v8380 = vadd.f32 %v8042, %v8306
        %v8381 = vadd.f32 %v8043, %v8308
        %v8382 = vadd.f32 %v8044, %v8311
        %v8383 = vadd.f32 %v8045, %v8313
        %v8384 = vadd.f32 %v8046, %v8316
        %v8385 = vadd.f32 %v8047, %v8318
        %v8386 = vadd.f32 %v8048, %v8321
        %v8387 = vadd.f32 %v8049, %v8323
        %v8388 = vld [vmem:[%s7919 + $0x10] sm:$0xc]
        %v8389 = vld [vmem:[%s7919 + $0x14] sm:$0xf]
        %v8390 = vld [vmem:[%s7919 + $0x18] sm:$0x3]
        %v8391 = vld [vmem:[%s7919 + $0x2c] sm:$0xc]
        %v8392 = vld [vmem:[%s7919 + $0x30] sm:$0xf]
        %v8393 = vld [vmem:[%s7919 + $0x34] sm:$0x3]
        %v8394 = vld [vmem:[%s7919 + $0x48] sm:$0xc]
        %v8395 = vld [vmem:[%s7919 + $0x4c] sm:$0xf]
        %v8396 = vld [vmem:[%s7919 + $0x50] sm:$0x3]
        %v8397 = vld [vmem:[%s7919 + $0x64] sm:$0xc]
        %v8398 = vld [vmem:[%s7919 + $0x68] sm:$0xf]
        %v8399 = vld [vmem:[%s7919 + $0x6c] sm:$0x3]
        %v8400 = vld [vmem:[%s7919 + $0x80] sm:$0xc]
        %v8401 = vld [vmem:[%s7919 + $0x84] sm:$0xf]
        %v8402 = vld [vmem:[%s7919 + $0x88] sm:$0x3]
        %v8403 = vld [vmem:[%s7919 + $0x9c] sm:$0xc]
        %v8404 = vld [vmem:[%s7919 + $0xa0] sm:$0xf]
        %v8405 = vld [vmem:[%s7919 + $0xa4] sm:$0x3]
        %v8406 = vld [vmem:[%s7919 + $0xb8] sm:$0xc]
        %v8407 = vld [vmem:[%s7919 + $0xbc] sm:$0xf]
        %v8408 = vld [vmem:[%s7919 + $0xc0] sm:$0x3]
        %v8409 = vld [vmem:[%s7919 + $0xd4] sm:$0xc]
        %v8410 = vld [vmem:[%s7919 + $0xd8] sm:$0xf]
        %v8411 = vld [vmem:[%s7919 + $0xdc] sm:$0x3]
        %v8412 = vld [vmem:[%s7919 + $0xf0] sm:$0xc]
        %v8413 = vld [vmem:[%s7919 + $0xf4] sm:$0xf]
        %v8414 = vld [vmem:[%s7919 + $0xf8] sm:$0x3]
        %v8415 = vld [vmem:[%s7919 + $0x10c] sm:$0xc]
        %v8416 = vld [vmem:[%s7919 + $0x110] sm:$0xf]
        %v8417 = vld [vmem:[%s7919 + $0x114] sm:$0x3]
        %v8418 = vld [vmem:[%s7919 + $0x128] sm:$0xc]
        %v8419 = vld [vmem:[%s7919 + $0x12c] sm:$0xf]
        %v8420 = vld [vmem:[%s7919 + $0x130] sm:$0x3]
        %v8421 = vld [vmem:[%s7919 + $0x144] sm:$0xc]
        %v8422 = vld [vmem:[%s7919 + $0x148] sm:$0xf]
        %v8423 = vld [vmem:[%s7919 + $0x14c] sm:$0x3]
        %v8424 = vld [vmem:[%s7919 + $0x160] sm:$0xc]
        %v8425 = vld [vmem:[%s7919 + $0x164] sm:$0xf]
        %v8426 = vld [vmem:[%s7919 + $0x168] sm:$0x3]
        %v8427 = vld [vmem:[%s7919 + $0x17c] sm:$0xc]
        %v8428 = vld [vmem:[%s7919 + $0x180] sm:$0xf]
        %v8429 = vld [vmem:[%s7919 + $0x184] sm:$0x3]
        %v8430 = vld [vmem:[%s7919 + $0x198] sm:$0xc]
        %v8431 = vld [vmem:[%s7919 + $0x19c] sm:$0xf]
        %v8432 = vld [vmem:[%s7919 + $0x1a0] sm:$0x3]
        %v8433 = vld [vmem:[%s7919 + $0x1b4] sm:$0xc]
        %v8434 = vld [vmem:[%s7919 + $0x1b8] sm:$0xf]
        %v8435 = vld [vmem:[%s7919 + $0x1bc] sm:$0x3]
        %v8436 = vunpack.c.l.bf16 %v8388
        %v8437 = vunpack.c.l.bf16 %v8389
        %v8438 = vunpack.c.l.bf16 %v8390
        %v8439 = vunpack.c.l.bf16 %v8391
        %v8440 = vunpack.c.l.bf16 %v8392
        %v8441 = vunpack.c.l.bf16 %v8393
        %v8442 = vunpack.c.l.bf16 %v8394
        %v8443 = vunpack.c.l.bf16 %v8395
        %v8444 = vunpack.c.l.bf16 %v8396
        %v8445 = vunpack.c.l.bf16 %v8397
        %v8446 = vunpack.c.l.bf16 %v8398
        %v8447 = vunpack.c.l.bf16 %v8399
        %v8448 = vunpack.c.l.bf16 %v8400
        %v8449 = vunpack.c.l.bf16 %v8401
        %v8450 = vunpack.c.l.bf16 %v8402
        %v8451 = vunpack.c.l.bf16 %v8403
        %v8452 = vunpack.c.l.bf16 %v8404
        %v8453 = vunpack.c.l.bf16 %v8405
        %v8454 = vunpack.c.l.bf16 %v8406
        %v8455 = vunpack.c.l.bf16 %v8407
        %v8456 = vunpack.c.l.bf16 %v8408
        %v8457 = vunpack.c.l.bf16 %v8409
        %v8458 = vunpack.c.l.bf16 %v8410
        %v8459 = vunpack.c.l.bf16 %v8411
        %v8460 = vunpack.c.l.bf16 %v8412
        %v8461 = vunpack.c.l.bf16 %v8413
        %v8462 = vunpack.c.l.bf16 %v8414
        %v8463 = vunpack.c.l.bf16 %v8415
        %v8464 = vunpack.c.l.bf16 %v8416
        %v8465 = vunpack.c.l.bf16 %v8417
        %v8466 = vunpack.c.l.bf16 %v8418
        %v8467 = vunpack.c.l.bf16 %v8419
        %v8468 = vunpack.c.l.bf16 %v8420
        %v8469 = vunpack.c.l.bf16 %v8421
        %v8470 = vunpack.c.l.bf16 %v8422
        %v8471 = vunpack.c.l.bf16 %v8423
        %v8472 = vunpack.c.l.bf16 %v8424
        %v8473 = vunpack.c.l.bf16 %v8425
        %v8474 = vunpack.c.l.bf16 %v8426
        %v8475 = vunpack.c.l.bf16 %v8427
        %v8476 = vunpack.c.l.bf16 %v8428
        %v8477 = vunpack.c.l.bf16 %v8429
        %v8478 = vunpack.c.l.bf16 %v8430
        %v8479 = vunpack.c.l.bf16 %v8431
        %v8480 = vunpack.c.l.bf16 %v8432
        %v8481 = vunpack.c.l.bf16 %v8433
        %v8482 = vunpack.c.l.bf16 %v8434
        %v8483 = vunpack.c.l.bf16 %v8435
        %v8484 = vld [vmem:[%s6466 + $0x8] sm:$0x1]
        %v8485 = vperm.slane %v8484, 0
        %v8486 = vmul.f32 %v8436, %v8485
        %v8487 = vmul.f32 %v8437, %v8485
        %v8488 = vmul.f32 %v8438, %v8485
        %v8489 = vmul.f32 %v8439, %v8485
        %v8490 = vmul.f32 %v8440, %v8485
        %v8491 = vmul.f32 %v8441, %v8485
        %v8492 = vmul.f32 %v8442, %v8485
        %v8493 = vmul.f32 %v8443, %v8485
        %v8494 = vmul.f32 %v8444, %v8485
        %v8495 = vmul.f32 %v8445, %v8485
        %v8496 = vmul.f32 %v8446, %v8485
        %v8497 = vmul.f32 %v8447, %v8485
        %v8498 = vmul.f32 %v8448, %v8485
        %v8499 = vmul.f32 %v8449, %v8485
        %v8500 = vmul.f32 %v8450, %v8485
        %v8501 = vmul.f32 %v8451, %v8485
        %v8502 = vmul.f32 %v8452, %v8485
        %v8503 = vmul.f32 %v8453, %v8485
        %v8504 = vmul.f32 %v8454, %v8485
        %v8505 = vmul.f32 %v8455, %v8485
        %v8506 = vmul.f32 %v8456, %v8485
        %v8507 = vmul.f32 %v8457, %v8485
        %v8508 = vmul.f32 %v8458, %v8485
        %v8509 = vmul.f32 %v8459, %v8485
        %v8510 = vmul.f32 %v8460, %v8485
        %v8511 = vmul.f32 %v8461, %v8485
        %v8512 = vmul.f32 %v8462, %v8485
        %v8513 = vmul.f32 %v8463, %v8485
        %v8514 = vmul.f32 %v8464, %v8485
        %v8515 = vmul.f32 %v8465, %v8485
        %v8516 = vmul.f32 %v8466, %v8485
        %v8517 = vmul.f32 %v8467, %v8485
        %v8518 = vmul.f32 %v8468, %v8485
        %v8519 = vmul.f32 %v8469, %v8485
        %v8520 = vmul.f32 %v8470, %v8485
        %v8521 = vmul.f32 %v8471, %v8485
        %v8522 = vmul.f32 %v8472, %v8485
        %v8523 = vmul.f32 %v8473, %v8485
        %v8524 = vmul.f32 %v8474, %v8485
        %v8525 = vmul.f32 %v8475, %v8485
        %v8526 = vmul.f32 %v8476, %v8485
        %v8527 = vmul.f32 %v8477, %v8485
        %v8528 = vmul.f32 %v8478, %v8485
        %v8529 = vmul.f32 %v8479, %v8485
        %v8530 = vmul.f32 %v8480, %v8485
        %v8531 = vmul.f32 %v8481, %v8485
        %v8532 = vmul.f32 %v8482, %v8485
        %v8533 = vmul.f32 %v8483, %v8485
        %v8582 = vrot.slane %v8486, 4
        %v8583 = vrot.slane %v8487, 4
        %v8584 = vsel %vm1439, %v8582, %v8583
        %v8585 = vrot.slane %v8488, 4
        %v8586 = vsel %vm1439, %v8583, %v8585
        %v8587 = vrot.slane %v8489, 4
        %v8588 = vrot.slane %v8490, 4
        %v8589 = vsel %vm1439, %v8587, %v8588
        %v8590 = vrot.slane %v8491, 4
        %v8591 = vsel %vm1439, %v8588, %v8590
        %v8592 = vrot.slane %v8492, 4
        %v8593 = vrot.slane %v8493, 4
        %v8594 = vsel %vm1439, %v8592, %v8593
        %v8595 = vrot.slane %v8494, 4
        %v8596 = vsel %vm1439, %v8593, %v8595
        %v8597 = vrot.slane %v8495, 4
        %v8598 = vrot.slane %v8496, 4
        %v8599 = vsel %vm1439, %v8597, %v8598
        %v8600 = vrot.slane %v8497, 4
        %v8601 = vsel %vm1439, %v8598, %v8600
        %v8602 = vrot.slane %v8498, 4
        %v8603 = vrot.slane %v8499, 4
        %v8604 = vsel %vm1439, %v8602, %v8603
        %v8605 = vrot.slane %v8500, 4
        %v8606 = vsel %vm1439, %v8603, %v8605
        %v8607 = vrot.slane %v8501, 4
        %v8608 = vrot.slane %v8502, 4
        %v8609 = vsel %vm1439, %v8607, %v8608
        %v8610 = vrot.slane %v8503, 4
        %v8611 = vsel %vm1439, %v8608, %v8610
        %v8612 = vrot.slane %v8504, 4
        %v8613 = vrot.slane %v8505, 4
        %v8614 = vsel %vm1439, %v8612, %v8613
        %v8615 = vrot.slane %v8506, 4
        %v8616 = vsel %vm1439, %v8613, %v8615
        %v8617 = vrot.slane %v8507, 4
        %v8618 = vrot.slane %v8508, 4
        %v8619 = vsel %vm1439, %v8617, %v8618
        %v8620 = vrot.slane %v8509, 4
        %v8621 = vsel %vm1439, %v8618, %v8620
        %v8622 = vrot.slane %v8510, 4
        %v8623 = vrot.slane %v8511, 4
        %v8624 = vsel %vm1439, %v8622, %v8623
        %v8625 = vrot.slane %v8512, 4
        %v8626 = vsel %vm1439, %v8623, %v8625
        %v8627 = vrot.slane %v8513, 4
        %v8628 = vrot.slane %v8514, 4
        %v8629 = vsel %vm1439, %v8627, %v8628
        %v8630 = vrot.slane %v8515, 4
        %v8631 = vsel %vm1439, %v8628, %v8630
        %v8632 = vrot.slane %v8516, 4
        %v8633 = vrot.slane %v8517, 4
        %v8634 = vsel %vm1439, %v8632, %v8633
        %v8635 = vrot.slane %v8518, 4
        %v8636 = vsel %vm1439, %v8633, %v8635
        %v8637 = vrot.slane %v8519, 4
        %v8638 = vrot.slane %v8520, 4
        %v8639 = vsel %vm1439, %v8637, %v8638
        %v8640 = vrot.slane %v8521, 4
        %v8641 = vsel %vm1439, %v8638, %v8640
        %v8642 = vrot.slane %v8522, 4
        %v8643 = vrot.slane %v8523, 4
        %v8644 = vsel %vm1439, %v8642, %v8643
        %v8645 = vrot.slane %v8524, 4
        %v8646 = vsel %vm1439, %v8643, %v8645
        %v8647 = vrot.slane %v8525, 4
        %v8648 = vrot.slane %v8526, 4
        %v8649 = vsel %vm1439, %v8647, %v8648
        %v8650 = vrot.slane %v8527, 4
        %v8651 = vsel %vm1439, %v8648, %v8650
        %v8652 = vrot.slane %v8528, 4
        %v8653 = vrot.slane %v8529, 4
        %v8654 = vsel %vm1439, %v8652, %v8653
        %v8655 = vrot.slane %v8530, 4
        %v8656 = vsel %vm1439, %v8653, %v8655
        %v8657 = vrot.slane %v8531, 4
        %v8658 = vrot.slane %v8532, 4
        %v8659 = vsel %vm1439, %v8657, %v8658
        %v8660 = vrot.slane %v8533, 4
        %v8661 = vsel %vm1439, %v8658, %v8660
        %v8694 = vadd.f32 %v8356, %v8584
        %v8695 = vadd.f32 %v8357, %v8586
        %v8696 = vadd.f32 %v8358, %v8589
        %v8697 = vadd.f32 %v8359, %v8591
        %v8698 = vadd.f32 %v8360, %v8594
        %v8699 = vadd.f32 %v8361, %v8596
        %v8700 = vadd.f32 %v8362, %v8599
        %v8701 = vadd.f32 %v8363, %v8601
        %v8702 = vadd.f32 %v8364, %v8604
        %v8703 = vadd.f32 %v8365, %v8606
        %v8704 = vadd.f32 %v8366, %v8609
        %v8705 = vadd.f32 %v8367, %v8611
        %v8706 = vadd.f32 %v8368, %v8614
        %v8707 = vadd.f32 %v8369, %v8616
        %v8708 = vadd.f32 %v8370, %v8619
        %v8709 = vadd.f32 %v8371, %v8621
        %v8710 = vadd.f32 %v8372, %v8624
        %v8711 = vadd.f32 %v8373, %v8626
        %v8712 = vadd.f32 %v8374, %v8629
        %v8713 = vadd.f32 %v8375, %v8631
        %v8714 = vadd.f32 %v8376, %v8634
        %v8715 = vadd.f32 %v8377, %v8636
        %v8716 = vadd.f32 %v8378, %v8639
        %v8717 = vadd.f32 %v8379, %v8641
        %v8718 = vadd.f32 %v8380, %v8644
        %v8719 = vadd.f32 %v8381, %v8646
        %v8720 = vadd.f32 %v8382, %v8649
        %v8721 = vadd.f32 %v8383, %v8651
        %v8722 = vadd.f32 %v8384, %v8654
        %v8723 = vadd.f32 %v8385, %v8656
        %v8724 = vadd.f32 %v8386, %v8659
        %v8725 = vadd.f32 %v8387, %v8661
        %v8726 = vld [vmem:[%s4 + $0x2] sm:$0x1]
        %v8727 = vperm.slane %v8726, 0
        %v8728 = vadd.f32 %v8694, %v8727
        %v8729 = vadd.f32 %v8695, %v8727
        %v8730 = vadd.f32 %v8696, %v8727
        %v8731 = vadd.f32 %v8697, %v8727
        %v8732 = vadd.f32 %v8698, %v8727
        %v8733 = vadd.f32 %v8699, %v8727
        %v8734 = vadd.f32 %v8700, %v8727
        %v8735 = vadd.f32 %v8701, %v8727
        %v8736 = vadd.f32 %v8702, %v8727
        %v8737 = vadd.f32 %v8703, %v8727
        %v8738 = vadd.f32 %v8704, %v8727
        %v8739 = vadd.f32 %v8705, %v8727
        %v8740 = vadd.f32 %v8706, %v8727
        %v8741 = vadd.f32 %v8707, %v8727
        %v8742 = vadd.f32 %v8708, %v8727
        %v8743 = vadd.f32 %v8709, %v8727
        %v8744 = vadd.f32 %v8710, %v8727
        %v8745 = vadd.f32 %v8711, %v8727
        %v8746 = vadd.f32 %v8712, %v8727
        %v8747 = vadd.f32 %v8713, %v8727
        %v8748 = vadd.f32 %v8714, %v8727
        %v8749 = vadd.f32 %v8715, %v8727
        %v8750 = vadd.f32 %v8716, %v8727
        %v8751 = vadd.f32 %v8717, %v8727
        %v8752 = vadd.f32 %v8718, %v8727
        %v8753 = vadd.f32 %v8719, %v8727
        %v8754 = vadd.f32 %v8720, %v8727
        %v8755 = vadd.f32 %v8721, %v8727
        %v8756 = vadd.f32 %v8722, %v8727
        %v8757 = vadd.f32 %v8723, %v8727
        %v8758 = vadd.f32 %v8724, %v8727
        %v8759 = vadd.f32 %v8725, %v8727
        %v8760 = vmax.f32 %v8728, 0.0
        %v8761 = vmax.f32 %v8729, 0.0
        %v8762 = vmax.f32 %v8730, 0.0
        %v8763 = vmax.f32 %v8731, 0.0
        %v8764 = vmax.f32 %v8732, 0.0
        %v8765 = vmax.f32 %v8733, 0.0
        %v8766 = vmax.f32 %v8734, 0.0
        %v8767 = vmax.f32 %v8735, 0.0
        %v8768 = vmax.f32 %v8736, 0.0
        %v8769 = vmax.f32 %v8737, 0.0
        %v8770 = vmax.f32 %v8738, 0.0
        %v8771 = vmax.f32 %v8739, 0.0
        %v8772 = vmax.f32 %v8740, 0.0
        %v8773 = vmax.f32 %v8741, 0.0
        %v8774 = vmax.f32 %v8742, 0.0
        %v8775 = vmax.f32 %v8743, 0.0
        %v8776 = vmax.f32 %v8744, 0.0
        %v8777 = vmax.f32 %v8745, 0.0
        %v8778 = vmax.f32 %v8746, 0.0
        %v8779 = vmax.f32 %v8747, 0.0
        %v8780 = vmax.f32 %v8748, 0.0
        %v8781 = vmax.f32 %v8749, 0.0
        %v8782 = vmax.f32 %v8750, 0.0
        %v8783 = vmax.f32 %v8751, 0.0
        %v8784 = vmax.f32 %v8752, 0.0
        %v8785 = vmax.f32 %v8753, 0.0
        %v8786 = vmax.f32 %v8754, 0.0
        %v8787 = vmax.f32 %v8755, 0.0
        %v8788 = vmax.f32 %v8756, 0.0
        %v8789 = vmax.f32 %v8757, 0.0
        %v8790 = vmax.f32 %v8758, 0.0
        %v8791 = vmax.f32 %v8759, 0.0
        %v8792 = vmin.f32 %v8760, 6.0
        %v8793 = vmin.f32 %v8761, 6.0
        %v8794 = vmin.f32 %v8762, 6.0
        %v8795 = vmin.f32 %v8763, 6.0
        %v8796 = vmin.f32 %v8764, 6.0
        %v8797 = vmin.f32 %v8765, 6.0
        %v8798 = vmin.f32 %v8766, 6.0
        %v8799 = vmin.f32 %v8767, 6.0
        %v8800 = vmin.f32 %v8768, 6.0
        %v8801 = vmin.f32 %v8769, 6.0
        %v8802 = vmin.f32 %v8770, 6.0
        %v8803 = vmin.f32 %v8771, 6.0
        %v8804 = vmin.f32 %v8772, 6.0
        %v8805 = vmin.f32 %v8773, 6.0
        %v8806 = vmin.f32 %v8774, 6.0
        %v8807 = vmin.f32 %v8775, 6.0
        %v8808 = vmin.f32 %v8776, 6.0
        %v8809 = vmin.f32 %v8777, 6.0
        %v8810 = vmin.f32 %v8778, 6.0
        %v8811 = vmin.f32 %v8779, 6.0
        %v8812 = vmin.f32 %v8780, 6.0
        %v8813 = vmin.f32 %v8781, 6.0
        %v8814 = vmin.f32 %v8782, 6.0
        %v8815 = vmin.f32 %v8783, 6.0
        %v8816 = vmin.f32 %v8784, 6.0
        %v8817 = vmin.f32 %v8785, 6.0
        %v8818 = vmin.f32 %v8786, 6.0
        %v8819 = vmin.f32 %v8787, 6.0
        %v8820 = vmin.f32 %v8788, 6.0
        %v8821 = vmin.f32 %v8789, 6.0
        %v8822 = vmin.f32 %v8790, 6.0
        %v8823 = vmin.f32 %v8791, 6.0
        %v8824 = vld [vmem:[%s5 + $0x60] sm:$0xff]
        %v8825 = vld [vmem:[%s5 + $0x68] sm:$0xff]
        %v8826 = vld [vmem:[%s5 + $0x70] sm:$0xff]
        %v8827 = vld [vmem:[%s5 + $0x78] sm:$0xff]
        %v8829 = vsel %vm3379, %v8792, 0
        %v8832 = vsel %vm3379, %v8793, 0
        %v8835 = vsel %vm3379, %v8794, 0
        %v8838 = vsel %vm3379, %v8795, 0
        %v8841 = vsel %vm3379, %v8796, 0
        %v8844 = vsel %vm3379, %v8797, 0
        %v8847 = vsel %vm3379, %v8798, 0
        %v8850 = vsel %vm3379, %v8799, 0
        %v8853 = vsel %vm3379, %v8800, 0
        %v8856 = vsel %vm3379, %v8801, 0
        %v8859 = vsel %vm3379, %v8802, 0
        %v8862 = vsel %vm3379, %v8803, 0
        %v8865 = vsel %vm3379, %v8804, 0
        %v8868 = vsel %vm3379, %v8805, 0
        %v8871 = vsel %vm3379, %v8806, 0
        %v8874 = vsel %vm3379, %v8807, 0
        %v8877 = vsel %vm3379, %v8808, 0
        %v8880 = vsel %vm3379, %v8809, 0
        %v8883 = vsel %vm3379, %v8810, 0
        %v8886 = vsel %vm3379, %v8811, 0
        %v8889 = vsel %vm3379, %v8812, 0
        %v8892 = vsel %vm3379, %v8813, 0
        %v8895 = vsel %vm3379, %v8814, 0
        %v8898 = vsel %vm3379, %v8815, 0
        %v8901 = vsel %vm3379, %v8816, 0
        %v8904 = vsel %vm3379, %v8817, 0
        %v8907 = vsel %vm3379, %v8818, 0
        %v8910 = vsel %vm3379, %v8819, 0
        %v8913 = vsel %vm3379, %v8820, 0
        %v8916 = vsel %vm3379, %v8821, 0
        %v8919 = vsel %vm3379, %v8822, 0
        %v8922 = vsel %vm3379, %v8823, 0
        %8924 = vmatpush.msra.mxu0 0.0
        %8925 = vmatpush.msra.mxu0 0.0
        %8926 = vmatpush.msra.mxu0 0.0
        %8927 = vmatpush.msra.mxu0 0.0
        %8928 = vmatpush.msra.mxu0 0.0
        %8929 = vmatpush.msra.mxu0 0.0
        %8930 = vmatpush.msra.mxu0 0.0
        %8931 = vmatpush.msra.mxu0 0.0
        %8932 = vmatpush.msra.mxu0 0.0
        %8933 = vmatpush.msra.mxu0 0.0
        %8934 = vmatpush.msra.mxu0 0.0
        %8935 = vmatpush.msra.mxu0 0.0
        %8936 = vmatpush.msra.mxu0 %v8827
        %8937 = vmatpush.msra.mxu0 %v8826
        %8938 = vmatpush.msra.mxu0 %v8825
        %8939 = vmatpush.msra.mxu0 %v8824
        %8940 = vmatmul.f32.gmra.mxu0 %v8829
        %v8941 = vpop.f32.mrf.mxu0
        %v8942 = vadd.f32 0.0, %v8941
        %8943 = vmatmul.f32.gmra.mxu0 %v8832
        %v8944 = vpop.f32.mrf.mxu0
        %v8945 = vadd.f32 0.0, %v8944
        %8946 = vmatmul.f32.gmra.mxu0 %v8835
        %v8947 = vpop.f32.mrf.mxu0
        %v8948 = vadd.f32 0.0, %v8947
        %8949 = vmatmul.f32.gmra.mxu0 %v8838
        %v8950 = vpop.f32.mrf.mxu0
        %v8951 = vadd.f32 0.0, %v8950
        %8952 = vmatmul.f32.gmra.mxu0 %v8841
        %v8953 = vpop.f32.mrf.mxu0
        %v8954 = vadd.f32 0.0, %v8953
        %8955 = vmatmul.f32.gmra.mxu0 %v8844
        %v8956 = vpop.f32.mrf.mxu0
        %v8957 = vadd.f32 0.0, %v8956
        %8958 = vmatmul.f32.gmra.mxu0 %v8847
        %v8959 = vpop.f32.mrf.mxu0
        %v8960 = vadd.f32 0.0, %v8959
        %8961 = vmatmul.f32.gmra.mxu0 %v8850
        %v8962 = vpop.f32.mrf.mxu0
        %v8963 = vadd.f32 0.0, %v8962
        %8964 = vmatmul.f32.gmra.mxu0 %v8853
        %v8965 = vpop.f32.mrf.mxu0
        %v8966 = vadd.f32 0.0, %v8965
        %8967 = vmatmul.f32.gmra.mxu0 %v8856
        %v8968 = vpop.f32.mrf.mxu0
        %v8969 = vadd.f32 0.0, %v8968
        %8970 = vmatmul.f32.gmra.mxu0 %v8859
        %v8971 = vpop.f32.mrf.mxu0
        %v8972 = vadd.f32 0.0, %v8971
        %8973 = vmatmul.f32.gmra.mxu0 %v8862
        %v8974 = vpop.f32.mrf.mxu0
        %v8975 = vadd.f32 0.0, %v8974
        %8976 = vmatmul.f32.gmra.mxu0 %v8865
        %v8977 = vpop.f32.mrf.mxu0
        %v8978 = vadd.f32 0.0, %v8977
        %8979 = vmatmul.f32.gmra.mxu0 %v8868
        %v8980 = vpop.f32.mrf.mxu0
        %v8981 = vadd.f32 0.0, %v8980
        %8982 = vmatmul.f32.gmra.mxu0 %v8871
        %v8983 = vpop.f32.mrf.mxu0
        %v8984 = vadd.f32 0.0, %v8983
        %8985 = vmatmul.f32.gmra.mxu0 %v8874
        %v8986 = vpop.f32.mrf.mxu0
        %v8987 = vadd.f32 0.0, %v8986
        %8988 = vmatmul.f32.gmra.mxu0 %v8877
        %v8989 = vpop.f32.mrf.mxu0
        %v8990 = vadd.f32 0.0, %v8989
        %8991 = vmatmul.f32.gmra.mxu0 %v8880
        %v8992 = vpop.f32.mrf.mxu0
        %v8993 = vadd.f32 0.0, %v8992
        %8994 = vmatmul.f32.gmra.mxu0 %v8883
        %v8995 = vpop.f32.mrf.mxu0
        %v8996 = vadd.f32 0.0, %v8995
        %8997 = vmatmul.f32.gmra.mxu0 %v8886
        %v8998 = vpop.f32.mrf.mxu0
        %v8999 = vadd.f32 0.0, %v8998
        %9000 = vmatmul.f32.gmra.mxu0 %v8889
        %v9001 = vpop.f32.mrf.mxu0
        %v9002 = vadd.f32 0.0, %v9001
        %9003 = vmatmul.f32.gmra.mxu0 %v8892
        %v9004 = vpop.f32.mrf.mxu0
        %v9005 = vadd.f32 0.0, %v9004
        %9006 = vmatmul.f32.gmra.mxu0 %v8895
        %v9007 = vpop.f32.mrf.mxu0
        %v9008 = vadd.f32 0.0, %v9007
        %9009 = vmatmul.f32.gmra.mxu0 %v8898
        %v9010 = vpop.f32.mrf.mxu0
        %v9011 = vadd.f32 0.0, %v9010
        %9012 = vmatmul.f32.gmra.mxu0 %v8901
        %v9013 = vpop.f32.mrf.mxu0
        %v9014 = vadd.f32 0.0, %v9013
        %9015 = vmatmul.f32.gmra.mxu0 %v8904
        %v9016 = vpop.f32.mrf.mxu0
        %v9017 = vadd.f32 0.0, %v9016
        %9018 = vmatmul.f32.gmra.mxu0 %v8907
        %v9019 = vpop.f32.mrf.mxu0
        %v9020 = vadd.f32 0.0, %v9019
        %9021 = vmatmul.f32.gmra.mxu0 %v8910
        %v9022 = vpop.f32.mrf.mxu0
        %v9023 = vadd.f32 0.0, %v9022
        %9024 = vmatmul.f32.gmra.mxu0 %v8913
        %v9025 = vpop.f32.mrf.mxu0
        %v9026 = vadd.f32 0.0, %v9025
        %9027 = vmatmul.f32.gmra.mxu0 %v8916
        %v9028 = vpop.f32.mrf.mxu0
        %v9029 = vadd.f32 0.0, %v9028
        %9030 = vmatmul.f32.gmra.mxu0 %v8919
        %v9031 = vpop.f32.mrf.mxu0
        %v9032 = vadd.f32 0.0, %v9031
        %9033 = vmatmul.f32.gmra.mxu0 %v8922
        %v9034 = vpop.f32.mrf.mxu0
        %v9035 = vadd.f32 0.0, %v9034
        %9036 = vdwg.mxu0
        %v9037 = vadd.f32 %v6370, %v8942
        %v9038 = vadd.f32 %v6371, %v8945
        %v9039 = vadd.f32 %v6372, %v8948
        %v9040 = vadd.f32 %v6373, %v8951
        %v9041 = vadd.f32 %v6374, %v8954
        %v9042 = vadd.f32 %v6375, %v8957
        %v9043 = vadd.f32 %v6376, %v8960
        %v9044 = vadd.f32 %v6377, %v8963
        %v9045 = vadd.f32 %v6378, %v8966
        %v9046 = vadd.f32 %v6379, %v8969
        %v9047 = vadd.f32 %v6380, %v8972
        %v9048 = vadd.f32 %v6381, %v8975
        %v9049 = vadd.f32 %v6382, %v8978
        %v9050 = vadd.f32 %v6383, %v8981
        %v9051 = vadd.f32 %v6384, %v8984
        %v9052 = vadd.f32 %v6385, %v8987
        %v9053 = vadd.f32 %v6386, %v8990
        %v9054 = vadd.f32 %v6387, %v8993
        %v9055 = vadd.f32 %v6388, %v8996
        %v9056 = vadd.f32 %v6389, %v8999
        %v9057 = vadd.f32 %v6390, %v9002
        %v9058 = vadd.f32 %v6391, %v9005
        %v9059 = vadd.f32 %v6392, %v9008
        %v9060 = vadd.f32 %v6393, %v9011
        %v9061 = vadd.f32 %v6394, %v9014
        %v9062 = vadd.f32 %v6395, %v9017
        %v9063 = vadd.f32 %v6396, %v9020
        %v9064 = vadd.f32 %v6397, %v9023
        %v9065 = vadd.f32 %v6398, %v9026
        %v9066 = vadd.f32 %v6399, %v9029
        %v9067 = vadd.f32 %v6400, %v9032
        %v9068 = vadd.f32 %v6401, %v9035
        %v9069 = vld [vmem:[%s344] sm:$0x1]
        %v9071 = vperm.slane %v9069, 0
        %v9073 = vadd.f32 %v9037, %v9071
        %v9074 = vadd.f32 %v9038, %v9071
        %v9075 = vadd.f32 %v9039, %v9071
        %v9076 = vadd.f32 %v9040, %v9071
        %v9077 = vadd.f32 %v9041, %v9071
        %v9078 = vadd.f32 %v9042, %v9071
        %v9079 = vadd.f32 %v9043, %v9071
        %v9080 = vadd.f32 %v9044, %v9071
        %v9081 = vadd.f32 %v9045, %v9071
        %v9082 = vadd.f32 %v9046, %v9071
        %v9083 = vadd.f32 %v9047, %v9071
        %v9084 = vadd.f32 %v9048, %v9071
        %v9085 = vadd.f32 %v9049, %v9071
        %v9086 = vadd.f32 %v9050, %v9071
        %v9087 = vadd.f32 %v9051, %v9071
        %v9088 = vadd.f32 %v9052, %v9071
        %v9089 = vadd.f32 %v9053, %v9071
        %v9090 = vadd.f32 %v9054, %v9071
        %v9091 = vadd.f32 %v9055, %v9071
        %v9092 = vadd.f32 %v9056, %v9071
        %v9093 = vadd.f32 %v9057, %v9071
        %v9094 = vadd.f32 %v9058, %v9071
        %v9095 = vadd.f32 %v9059, %v9071
        %v9096 = vadd.f32 %v9060, %v9071
        %v9097 = vadd.f32 %v9061, %v9071
        %v9098 = vadd.f32 %v9062, %v9071
        %v9099 = vadd.f32 %v9063, %v9071
        %v9100 = vadd.f32 %v9064, %v9071
        %v9101 = vadd.f32 %v9065, %v9071
        %v9102 = vadd.f32 %v9066, %v9071
        %v9103 = vadd.f32 %v9067, %v9071
        %v9104 = vadd.f32 %v9068, %v9071
        %v9105 = vld [vmem:[%s7] sm:$0x1]
        %v9107 = vperm.slane %v9105, 0
        %v9109 = vmul.f32 %v9073, %v9107
        %v9110 = vmul.f32 %v9074, %v9107
        %v9111 = vmul.f32 %v9075, %v9107
        %v9112 = vmul.f32 %v9076, %v9107
        %v9113 = vmul.f32 %v9077, %v9107
        %v9114 = vmul.f32 %v9078, %v9107
        %v9115 = vmul.f32 %v9079, %v9107
        %v9116 = vmul.f32 %v9080, %v9107
        %v9117 = vmul.f32 %v9081, %v9107
        %v9118 = vmul.f32 %v9082, %v9107
        %v9119 = vmul.f32 %v9083, %v9107
        %v9120 = vmul.f32 %v9084, %v9107
        %v9121 = vmul.f32 %v9085, %v9107
        %v9122 = vmul.f32 %v9086, %v9107
        %v9123 = vmul.f32 %v9087, %v9107
        %v9124 = vmul.f32 %v9088, %v9107
        %v9125 = vmul.f32 %v9089, %v9107
        %v9126 = vmul.f32 %v9090, %v9107
        %v9127 = vmul.f32 %v9091, %v9107
        %v9128 = vmul.f32 %v9092, %v9107
        %v9129 = vmul.f32 %v9093, %v9107
        %v9130 = vmul.f32 %v9094, %v9107
        %v9131 = vmul.f32 %v9095, %v9107
        %v9132 = vmul.f32 %v9096, %v9107
        %v9133 = vmul.f32 %v9097, %v9107
        %v9134 = vmul.f32 %v9098, %v9107
        %v9135 = vmul.f32 %v9099, %v9107
        %v9136 = vmul.f32 %v9100, %v9107
        %v9137 = vmul.f32 %v9101, %v9107
        %v9138 = vmul.f32 %v9102, %v9107
        %v9139 = vmul.f32 %v9103, %v9107
        %v9140 = vmul.f32 %v9104, %v9107
        %v9141 = vld [vmem:[%s8] sm:$0x1]
        %v9143 = vperm.slane %v9141, 0
        %v9145 = vadd.f32 %v9109, %v9143
        %v9146 = vadd.f32 %v9110, %v9143
        %v9147 = vadd.f32 %v9111, %v9143
        %v9148 = vadd.f32 %v9112, %v9143
        %v9149 = vadd.f32 %v9113, %v9143
        %v9150 = vadd.f32 %v9114, %v9143
        %v9151 = vadd.f32 %v9115, %v9143
        %v9152 = vadd.f32 %v9116, %v9143
        %v9153 = vadd.f32 %v9117, %v9143
        %v9154 = vadd.f32 %v9118, %v9143
        %v9155 = vadd.f32 %v9119, %v9143
        %v9156 = vadd.f32 %v9120, %v9143
        %v9157 = vadd.f32 %v9121, %v9143
        %v9158 = vadd.f32 %v9122, %v9143
        %v9159 = vadd.f32 %v9123, %v9143
        %v9160 = vadd.f32 %v9124, %v9143
        %v9161 = vadd.f32 %v9125, %v9143
        %v9162 = vadd.f32 %v9126, %v9143
        %v9163 = vadd.f32 %v9127, %v9143
        %v9164 = vadd.f32 %v9128, %v9143
        %v9165 = vadd.f32 %v9129, %v9143
        %v9166 = vadd.f32 %v9130, %v9143
        %v9167 = vadd.f32 %v9131, %v9143
        %v9168 = vadd.f32 %v9132, %v9143
        %v9169 = vadd.f32 %v9133, %v9143
        %v9170 = vadd.f32 %v9134, %v9143
        %v9171 = vadd.f32 %v9135, %v9143
        %v9172 = vadd.f32 %v9136, %v9143
        %v9173 = vadd.f32 %v9137, %v9143
        %v9174 = vadd.f32 %v9138, %v9143
        %v9175 = vadd.f32 %v9139, %v9143
        %v9176 = vadd.f32 %v9140, %v9143
        %v9177 = vmax.f32 %v9145, 0.0
        %v9178 = vmax.f32 %v9146, 0.0
        %v9179 = vmax.f32 %v9147, 0.0
        %v9180 = vmax.f32 %v9148, 0.0
        %v9181 = vmax.f32 %v9149, 0.0
        %v9182 = vmax.f32 %v9150, 0.0
        %v9183 = vmax.f32 %v9151, 0.0
        %v9184 = vmax.f32 %v9152, 0.0
        %v9185 = vmax.f32 %v9153, 0.0
        %v9186 = vmax.f32 %v9154, 0.0
        %v9187 = vmax.f32 %v9155, 0.0
        %v9188 = vmax.f32 %v9156, 0.0
        %v9189 = vmax.f32 %v9157, 0.0
        %v9190 = vmax.f32 %v9158, 0.0
        %v9191 = vmax.f32 %v9159, 0.0
        %v9192 = vmax.f32 %v9160, 0.0
        %v9193 = vmax.f32 %v9161, 0.0
        %v9194 = vmax.f32 %v9162, 0.0
        %v9195 = vmax.f32 %v9163, 0.0
        %v9196 = vmax.f32 %v9164, 0.0
        %v9197 = vmax.f32 %v9165, 0.0
        %v9198 = vmax.f32 %v9166, 0.0
        %v9199 = vmax.f32 %v9167, 0.0
        %v9200 = vmax.f32 %v9168, 0.0
        %v9201 = vmax.f32 %v9169, 0.0
        %v9202 = vmax.f32 %v9170, 0.0
        %v9203 = vmax.f32 %v9171, 0.0
        %v9204 = vmax.f32 %v9172, 0.0
        %v9205 = vmax.f32 %v9173, 0.0
        %v9206 = vmax.f32 %v9174, 0.0
        %v9207 = vmax.f32 %v9175, 0.0
        %v9208 = vmax.f32 %v9176, 0.0
        %v9209 = vmin.f32 %v9177, 6.0
        %v9210 = vmin.f32 %v9178, 6.0
        %v9211 = vmin.f32 %v9179, 6.0
        %v9212 = vmin.f32 %v9180, 6.0
        %v9213 = vmin.f32 %v9181, 6.0
        %v9214 = vmin.f32 %v9182, 6.0
        %v9215 = vmin.f32 %v9183, 6.0
        %v9216 = vmin.f32 %v9184, 6.0
        %v9217 = vmin.f32 %v9185, 6.0
        %v9218 = vmin.f32 %v9186, 6.0
        %v9219 = vmin.f32 %v9187, 6.0
        %v9220 = vmin.f32 %v9188, 6.0
        %v9221 = vmin.f32 %v9189, 6.0
        %v9222 = vmin.f32 %v9190, 6.0
        %v9223 = vmin.f32 %v9191, 6.0
        %v9224 = vmin.f32 %v9192, 6.0
        %v9225 = vmin.f32 %v9193, 6.0
        %v9226 = vmin.f32 %v9194, 6.0
        %v9227 = vmin.f32 %v9195, 6.0
        %v9228 = vmin.f32 %v9196, 6.0
        %v9229 = vmin.f32 %v9197, 6.0
        %v9230 = vmin.f32 %v9198, 6.0
        %v9231 = vmin.f32 %v9199, 6.0
        %v9232 = vmin.f32 %v9200, 6.0
        %v9233 = vmin.f32 %v9201, 6.0
        %v9234 = vmin.f32 %v9202, 6.0
        %v9235 = vmin.f32 %v9203, 6.0
        %v9236 = vmin.f32 %v9204, 6.0
        %v9237 = vmin.f32 %v9205, 6.0
        %v9238 = vmin.f32 %v9206, 6.0
        %v9239 = vmin.f32 %v9207, 6.0
        %v9240 = vmin.f32 %v9208, 6.0
        %9241 = vst.msk [vmem:[%s336] sm:$0xff] %vm3379, %v9209
        %9242 = vst.msk [vmem:[%s336 + $0x8] sm:$0xff] %vm3379, %v9210
        %9243 = vst.msk [vmem:[%s336 + $0x10] sm:$0xff] %vm3379, %v9211
        %9244 = vst.msk [vmem:[%s336 + $0x18] sm:$0xff] %vm3379, %v9212
        %9245 = vst.msk [vmem:[%s336 + $0x20] sm:$0xff] %vm3379, %v9213
        %9246 = vst.msk [vmem:[%s336 + $0x28] sm:$0xff] %vm3379, %v9214
        %9247 = vst.msk [vmem:[%s336 + $0x30] sm:$0xff] %vm3379, %v9215
        %9248 = vst.msk [vmem:[%s336 + $0x38] sm:$0xff] %vm3379, %v9216
        %9249 = vst.msk [vmem:[%s336 + $0x40] sm:$0xff] %vm3379, %v9217
        %9250 = vst.msk [vmem:[%s336 + $0x48] sm:$0xff] %vm3379, %v9218
        %9251 = vst.msk [vmem:[%s336 + $0x50] sm:$0xff] %vm3379, %v9219
        %9252 = vst.msk [vmem:[%s336 + $0x58] sm:$0xff] %vm3379, %v9220
        %9253 = vst.msk [vmem:[%s336 + $0x60] sm:$0xff] %vm3379, %v9221
        %9254 = vst.msk [vmem:[%s336 + $0x68] sm:$0xff] %vm3379, %v9222
        %9255 = vst.msk [vmem:[%s336 + $0x70] sm:$0xff] %vm3379, %v9223
        %9256 = vst.msk [vmem:[%s336 + $0x78] sm:$0xff] %vm3379, %v9224
        %9257 = vst.msk [vmem:[%s336 + $0x80] sm:$0xff] %vm3379, %v9225
        %9258 = vst.msk [vmem:[%s336 + $0x88] sm:$0xff] %vm3379, %v9226
        %9259 = vst.msk [vmem:[%s336 + $0x90] sm:$0xff] %vm3379, %v9227
        %9260 = vst.msk [vmem:[%s336 + $0x98] sm:$0xff] %vm3379, %v9228
        %9261 = vst.msk [vmem:[%s336 + $0xa0] sm:$0xff] %vm3379, %v9229
        %9262 = vst.msk [vmem:[%s336 + $0xa8] sm:$0xff] %vm3379, %v9230
        %9263 = vst.msk [vmem:[%s336 + $0xb0] sm:$0xff] %vm3379, %v9231
        %9264 = vst.msk [vmem:[%s336 + $0xb8] sm:$0xff] %vm3379, %v9232
        %9265 = vst.msk [vmem:[%s336 + $0xc0] sm:$0xff] %vm3379, %v9233
        %9266 = vst.msk [vmem:[%s336 + $0xc8] sm:$0xff] %vm3379, %v9234
        %9267 = vst.msk [vmem:[%s336 + $0xd0] sm:$0xff] %vm3379, %v9235
        %9268 = vst.msk [vmem:[%s336 + $0xd8] sm:$0xff] %vm3379, %v9236
        %9269 = vst.msk [vmem:[%s336 + $0xe0] sm:$0xff] %vm3379, %v9237
        %9270 = vst.msk [vmem:[%s336 + $0xe8] sm:$0xff] %vm3379, %v9238
        %9271 = vst.msk [vmem:[%s336 + $0xf0] sm:$0xff] %vm3379, %v9239
        %9272 = vst.msk [vmem:[%s336 + $0xf8] sm:$0xff] %vm3379, %v9240
        %s9273 = sand.u32 %s230, 1
        %s9274 = scalar_lea.sflag [#allocation3], %s9273
        %s9275 = sand.u32 %s230, 1
        %s9276 = smul.addr %s9275, 256
        %s9277 = scalar_lea.vmem [#allocation2], %s9276
        // Predicated region
        $region57: #{aspp_mnet_forward.3} parent=55 // pred_check
          %p9278 = pneg %p240
        $region58: #{aspp_mnet_forward.3} parent=55 // pred_check_branch
          %9280 = sbr.rel (%p9278) target = $region60
        $region59: #{aspp_mnet_forward.3} parent=55 // pred_region
          %9282 = vsyncadd %s9274, 0
          %s9283 = smul.addr %s23, 32
          %s9284 = smul.addr %s9283, 8
          %s9285 = scalar_lea.hbm %s9, %s9284
          %s9286 = sshll.u32 %s9277, 4
          %s9287 = int_to_ptr.vmem [resolvable:$true] %s9286
          %s9288 = sshll.u32 %s9285, 4
          %s9289 = int_to_ptr.hbm [resolvable:$true] %s9288
          %9294 = dma.vmem_to_hbm [thread:$0]  %s9287, 4096, %s9289, %s9274, 128, 128, 8
        $region60: #{aspp_mnet_forward.3} parent=55 // pred_fallthru
          _
      $region56: #{aspp_mnet_forward.3} parent=5 // pred_fallthru
        _
      %p9295 = scmp.le.s32.totalorder 2, %s18
      // Predicated region
      $region61: #{aspp_mnet_forward.3} parent=5 // pred_check
        %p9296 = pneg %p9295
      $region62: #{aspp_mnet_forward.3} parent=5 // pred_check_branch
        %9298 = sbr.rel (%p9296) target = $region64
      $region63: #{aspp_mnet_forward.3} parent=5 // pred_region
        %s9299 = ssub.s32 %s18, 2
        // Predicated region
        $region65: #{aspp_mnet_forward.3} parent=63 // pred_check
          %p9300 = pneg %p246
        $region66: #{aspp_mnet_forward.3} parent=63 // pred_check_branch
          %9302 = sbr.rel (%p9300) target = $region68
        $region67: #{aspp_mnet_forward.3} parent=63 // pred_region
          %s9303 = sand.u32 %s231, 1
          %s9304 = scalar_lea.sflag [#allocation3], %s9303
          %s9305 = sand.u32 %s231, 1
          %s9306 = smul.addr %s9305, 256
          %s9307 = scalar_lea.vmem [#allocation2], %s9306
          %9309 = dma.done %s9304, 4096
        $region68: #{aspp_mnet_forward.3} parent=63 // pred_fallthru
          _
      $region64: #{aspp_mnet_forward.3} parent=5 // pred_fallthru
        _
    $region6: #{aspp_mnet_forward.3} parent=1 // loop_footer
      %s22 = sadd.s32 1, %s18
    $region7: #{aspp_mnet_forward.3} parent=1 // loop_footer_branch
      %17 = sbr.rel target = $region3
    $region8: #{aspp_mnet_forward.3} parent=1 // loop_exit
      _
    %9310 = vsyncpa [#allocation3], 1
    %s9311 = scalar_lea.sflag [#allocation3], 1
    %9312 = vsyncpa %s9311, 1

</llo_original>
